<compile_context>
chip_gen: v6e
topology: v6e:2x2x1
jax: 0.10.0
libtpu: 0.0.40
codegen_flags: <defaults>
</compile_context>

<pallas_src>
import numpy as np
import jax
import jax.numpy as jnp
from jax import lax
from jax.experimental import pallas as pl
from jax.experimental.pallas import tpu as pltpu


# --------------------------------------------------------------------------
# Fused kernel: (BiLSTM-1 -> LN1 -> BiLSTM-2 -> LN2), all resident in VMEM
# --------------------------------------------------------------------------
def glstm_fused_kernel(x_ref, w1i_ref, w1h_ref, b1_ref,
                       w2i_ref, w2h_ref, b2_ref,
                       g1_ref, be1_ref, g2_ref, be2_ref,
                       out_ref, gx_sc, hf_sc, hb_sc):
    """Both grouped-BiLSTM layers + both LayerNorms fused.

    x_ref    : (T, B, H)   time-major input, all G groups side by side
    w*i_ref  : (H, 4H)     fused block-diagonal input weights (both dirs, all groups)
    w*h_ref  : (H, 4H)     fused block-diagonal recurrent weights
    b*_ref   : (1, 4H)     fused bias (b_ih + b_hh)
    g1/be1   : (1, H)      LN1 gamma/beta (layer-1 kernel layout == reference
                           "stack+flatten" layout, used as-is)
    g2/be2   : (1, H)      LN2 gamma/beta, pre-permuted to layer-2 kernel layout
    out_ref  : (T, B, H)   LN2 output in layer-2 kernel layout [fwd | bwd]
    gx_sc    : (T, B, 4H)  merged input projection (bwd gate cols time-reversed)
    hf_sc    : (T, B, H/2) forward hidden sequence (natural time order)
    hb_sc    : (T, B, H/2) backward hidden sequence (natural time order)

    Gate columns are gate-type major [i | f | g | o], each H wide and internally
    [fwd (H/2) | bwd (H/2)] -- baked into the fused weights (see builder).
    """
    T, B, H = x_ref.shape
    GHh = H // 2
    H4 = 4 * H
    unroll_t = True if T <= 32 else 8

    col = lax.broadcasted_iota(jnp.int32, (B, H4), 1)
    is_fwd_col = (col % H) < GHh          # fwd gate columns vs bwd gate columns

    # ---- parallel pass: projection + fwd/bwd merge (off the serial path) ----
    def proj_merge(gates_row):
        # gx_sc[t] <- [fwd cols of gates_row(t) | bwd cols of gates_row(T-1-t)]
        def body(t, carry):
            tr = (T - 1) - t
            ga = gates_row(t)
            gb = gates_row(tr)
            gx_sc[t] = jnp.where(is_fwd_col, ga, gb)
            gx_sc[tr] = jnp.where(is_fwd_col, gb, ga)
            return carry
        lax.fori_loop(0, (T + 1) // 2, body, 0,
                      unroll=True if T <= 64 else 4)

    # ---- serial recurrence: h/c in vregs, outputs staged to VMEM planes -----
    def recurrence(whh):
        def step(t, carry):
            h, c = carry
            gates = jnp.dot(h, whh, preferred_element_type=jnp.float32) + gx_sc[t]
            sg = jax.nn.sigmoid(gates)       # whole-vreg EUP, slice afterwards
            th = jnp.tanh(gates)
            gi = sg[:, 0 * H:1 * H]
            gf = sg[:, 1 * H:2 * H]
            gg = th[:, 2 * H:3 * H]
            go = sg[:, 3 * H:4 * H]
            c_new = gf * c + gi * gg
            h_new = go * jnp.tanh(c_new)
            hf_sc[t] = h_new[:, :GHh]              # forward hidden  -> time t
            hb_sc[(T - 1) - t] = h_new[:, GHh:]    # backward hidden -> time T-1-t
            return (h_new, c_new)
        z = jnp.zeros((B, H), jnp.float32)
        lax.fori_loop(0, T, step, (z, z), unroll=unroll_t)

    # ======================= layer 1 ==========================================
    w1i = w1i_ref[...]
    b1 = b1_ref[...]
    proj_merge(lambda t: jnp.dot(x_ref[t], w1i,
                                 preferred_element_type=jnp.float32) + b1)
    recurrence(w1h_ref[...])

    # ======================= layer 2 (LN1 folded into its projection) =========
    g1 = g1_ref[...]
    be1 = be1_ref[...]
    w2i = w2i_ref[...]
    w2i_f = w2i[:GHh, :]       # rows for forward-half input features
    w2i_b = w2i[GHh:, :]       # rows for backward-half input features
    b2 = b2_ref[...]

    def ln1_project(t):
        a = hf_sc[t]                                   # (B, GHh)
        b = hb_sc[t]                                   # (B, GHh)
        mean = (jnp.sum(a, axis=-1, keepdims=True)
                + jnp.sum(b, axis=-1, keepdims=True)) / H
        ac = a - mean
        bc = b - mean
        var = (jnp.sum(ac * ac, axis=-1, keepdims=True)
               + jnp.sum(bc * bc, axis=-1, keepdims=True)) / H
        r = lax.rsqrt(var + 1e-5)
        an = ac * r * g1[:, :GHh] + be1[:, :GHh]
        bn = bc * r * g1[:, GHh:] + be1[:, GHh:]
        return (jnp.dot(an, w2i_f, preferred_element_type=jnp.float32)
                + jnp.dot(bn, w2i_b, preferred_element_type=jnp.float32) + b2)

    proj_merge(ln1_project)
    recurrence(w2h_ref[...])

    # ======================= epilogue: LayerNorm 2, one bulk writeback ========
    g2 = g2_ref[...]
    be2 = be2_ref[...]
    a = hf_sc[...]                                     # (T, B, GHh)
    b = hb_sc[...]
    mean = (jnp.sum(a, axis=-1, keepdims=True)
            + jnp.sum(b, axis=-1, keepdims=True)) / H
    ac = a - mean
    bc = b - mean
    var = (jnp.sum(ac * ac, axis=-1, keepdims=True)
           + jnp.sum(bc * bc, axis=-1, keepdims=True)) / H
    r = lax.rsqrt(var + 1e-5)
    out_ref[:, :, :GHh] = ac * r * g2[:, :GHh] + be2[:, :GHh]
    out_ref[:, :, GHh:] = bc * r * g2[:, GHh:] + be2[:, GHh:]


# --------------------------------------------------------------------------
# Wrapper
# --------------------------------------------------------------------------
def _vmem_limit_bytes():
    try:
        cap = int(pltpu.get_tpu_info().vmem_capacity_bytes)
        return max(32 * 1024 * 1024, min((cap * 3) // 4, 96 * 1024 * 1024))
    except Exception:
        return 48 * 1024 * 1024


_VMEM_LIMIT = _vmem_limit_bytes()


def glstm_fused(seq, p):
    """seq: (T, B, H) time-major. Returns (T, B, H) in layer-2 kernel layout."""
    T, B, H = seq.shape
    H4 = 4 * H
    GHh = H // 2
    return pl.pallas_call(
        glstm_fused_kernel,
        out_shape=jax.ShapeDtypeStruct((T, B, H), jnp.float32),
        grid=(1,),
        in_specs=[
            pl.BlockSpec((T, B, H), lambda i: (0, 0, 0)),   # x
            pl.BlockSpec((H, H4), lambda i: (0, 0)),        # l1 W_ih
            pl.BlockSpec((H, H4), lambda i: (0, 0)),        # l1 W_hh
            pl.BlockSpec((1, H4), lambda i: (0, 0)),        # l1 bias
            pl.BlockSpec((H, H4), lambda i: (0, 0)),        # l2 W_ih
            pl.BlockSpec((H, H4), lambda i: (0, 0)),        # l2 W_hh
            pl.BlockSpec((1, H4), lambda i: (0, 0)),        # l2 bias
            pl.BlockSpec((1, H), lambda i: (0, 0)),         # LN1 gamma
            pl.BlockSpec((1, H), lambda i: (0, 0)),         # LN1 beta
            pl.BlockSpec((1, H), lambda i: (0, 0)),         # LN2 gamma (perm)
            pl.BlockSpec((1, H), lambda i: (0, 0)),         # LN2 beta  (perm)
        ],
        out_specs=pl.BlockSpec((T, B, H), lambda i: (0, 0, 0)),
        scratch_shapes=[
            pltpu.VMEM((T, B, H4), jnp.float32),    # merged input projection
            pltpu.VMEM((T, B, GHh), jnp.float32),   # forward hidden plane
            pltpu.VMEM((T, B, GHh), jnp.float32),   # backward hidden plane
        ],
        compiler_params=pltpu.CompilerParams(
            dimension_semantics=("arbitrary",),
            vmem_limit_bytes=_VMEM_LIMIT),
    )(seq,
      p["l1_wih_all"], p["l1_whh_all"], p["l1_b_all"],
      p["l2_wih_all"], p["l2_whh_all"], p["l2_b_all"],
      p["ln1_g2d"], p["ln1_b2d"], p["ln2_g2d_perm"], p["ln2_b2d_perm"])


def glstm_forward(x, params):
    """Exact GLSTM.forward semantics. x: (B, C, T, F) -> (B, T, C*F)."""
    B, C, T, F = x.shape
    H = C * F
    G = params["groups"]
    Hh = (H // G) // 2

    # (B, C, T, F) -> time-major (T, B, H)
    seq = jnp.transpose(x, (2, 0, 1, 3)).reshape(T, B, H)
    y = glstm_fused(seq, params)

    # single final relayout: (dir, group, hid) -> (group, dir, hid) feature order
    # (= torch.cat order), fused with the (T,B) -> (B,T) transpose needed anyway.
    return y.reshape(T, B, 2, G, Hh).transpose(1, 0, 3, 2, 4).reshape(B, T, H)


# --------------------------------------------------------------------------
# Fused block-diagonal weight construction (host-side, one-time)
# --------------------------------------------------------------------------
def _build_fused_weights(wih, whh, bsum, order):
    """Fuse per-(direction, group) LSTM weights into dense block-diagonal mats.

    wih : (2, G, 4*Hh, Dg)   whh : (2, G, 4*Hh, Hh)   bsum : (2, G, 4*Hh)
    order: 'interleave' -> within-direction hidden index p = hh*G + g
           'group'      -> within-direction hidden index p = g*Hh + hh
    Hidden layout  q = d*(G*Hh) + p   (fwd half | bwd half).
    Gate column    r = k*H + q        (k in {i, f, g, o}, gate-type major).
    Returns W_ih_all (H, 4H), W_hh_all (H, 4H), b_all (1, 4H).
    """
    wih = np.asarray(wih); whh = np.asarray(whh); bsum = np.asarray(bsum)
    _, G, four_hh, Dg = wih.shape
    Hh = four_hh // 4
    H = G * Dg
    GHh = G * Hh
    assert 2 * GHh == H

    def p_of(g, hh):
        return hh * G + g if order == "interleave" else g * Hh + hh

    Wih = np.zeros((H, 4 * H), np.float32)
    Whh = np.zeros((H, 4 * H), np.float32)
    ball = np.zeros((4 * H,), np.float32)
    for d in range(2):
        for g in range(G):
            cols = np.array([k * H + d * GHh + p_of(g, hh)
                             for k in range(4) for hh in range(Hh)])
            rows_h = np.array([d * GHh + p_of(g, hh) for hh in range(Hh)])
            Wih[g * Dg:(g + 1) * Dg, cols] = wih[d, g].T       # (Dg, 4Hh)
            Whh[np.ix_(rows_h, cols)] = whh[d, g].T            # (Hh, 4Hh)
            ball[cols] = bsum[d, g]
    return jnp.asarray(Wih), jnp.asarray(Whh), jnp.asarray(ball[None, :])


# --------------------------------------------------------------------------
# Deterministic parameter init (shapes per GLSTM.__init__)
# --------------------------------------------------------------------------
def init_params(key, hidden_size, groups):
    Dg = hidden_size // groups      # hidden_size_t
    Hh = Dg // 2                    # per-direction LSTM hidden
    H = hidden_size
    GHh = groups * Hh
    k = 1.0 / np.sqrt(Hh)
    ks = jax.random.split(key, 12)

    def u(kk, shape):
        return jax.random.uniform(kk, shape, jnp.float32, -k, k)

    params = {"groups": groups}
    for layer, base, order in (("l1", 0, "interleave"), ("l2", 3, "group")):
        wih = u(ks[base + 0], (2, groups, 4 * Hh, Dg))   # (dir, group, 4Hh, Dg)
        whh = u(ks[base + 1], (2, groups, 4 * Hh, Hh))
        bsum = u(ks[base + 2], (2, groups, 4 * Hh))      # b_ih + b_hh combined
        params[f"{layer}_wih"] = wih
        params[f"{layer}_whh"] = whh
        params[f"{layer}_bsum"] = bsum
        wih_all, whh_all, b_all = _build_fused_weights(wih, whh, bsum, order)
        params[f"{layer}_wih_all"] = wih_all
        params[f"{layer}_whh_all"] = whh_all
        params[f"{layer}_b_all"] = b_all

    params["ln1_g"] = 1.0 + 0.1 * jax.random.normal(ks[6], (H,), jnp.float32)
    params["ln1_b"] = 0.1 * jax.random.normal(ks[7], (H,), jnp.float32)
    params["ln2_g"] = 1.0 + 0.1 * jax.random.normal(ks[8], (H,), jnp.float32)
    params["ln2_b"] = 0.1 * jax.random.normal(ks[9], (H,), jnp.float32)
    params["ln1_g2d"] = params["ln1_g"].reshape(1, H)
    params["ln1_b2d"] = params["ln1_b"].reshape(1, H)

    # LN2 gamma/beta permuted from the final "concat" feature order
    # (g*2Hh + d*Hh + hh) to the layer-2 kernel layout (d*GHh + g*Hh + hh).
    perm = np.empty((H,), np.int32)
    for d in range(2):
        for g in range(groups):
            for hh in range(Hh):
                perm[d * GHh + g * Hh + hh] = g * Dg + d * Hh + hh
    params["ln2_g2d_perm"] = params["ln2_g"][perm].reshape(1, H)
    params["ln2_b2d_perm"] = params["ln2_b"][perm].reshape(1, H)
    return params


# --------------------------------------------------------------------------
# Pure-JAX reference (mirrors the PyTorch forward) for correctness checking
# --------------------------------------------------------------------------
def _lstm_dir_ref(x, wih, whh, b, reverse):
    B, T, D = x.shape
    Hh = whh.shape[1]

    def step(carry, x_t):
        h, c = carry
        gates = x_t @ wih.T + h @ whh.T + b
        i = jax.nn.sigmoid(gates[:, :Hh])
        f = jax.nn.sigmoid(gates[:, Hh:2 * Hh])
        g = jnp.tanh(gates[:, 2 * Hh:3 * Hh])
        o = jax.nn.sigmoid(gates[:, 3 * Hh:])
        c = f * c + i * g
        h = o * jnp.tanh(c)
        return (h, c), h

    xs = jnp.transpose(x, (1, 0, 2))
    if reverse:
        xs = xs[::-1]
    _, hs = lax.scan(step, (jnp.zeros((B, Hh)), jnp.zeros((B, Hh))), xs)
    if reverse:
        hs = hs[::-1]
    return jnp.transpose(hs, (1, 0, 2))


def _bilstm_ref(seq, wih, whh, b, G):
    B, T, H = seq.shape
    Dg = H // G
    outs = []
    for g in range(G):
        xgrp = seq[:, :, g * Dg:(g + 1) * Dg]
        of = _lstm_dir_ref(xgrp, wih[0, g], whh[0, g], b[0, g], False)
        ob = _lstm_dir_ref(xgrp, wih[1, g], whh[1, g], b[1, g], True)
        outs.append(jnp.concatenate([of, ob], axis=-1))
    return outs


def _ln_ref(x, g, b):
    mean = x.mean(-1, keepdims=True)
    xc = x - mean
    var = (xc * xc).mean(-1, keepdims=True)
    return xc / jnp.sqrt(var + 1e-5) * g + b


def glstm_ref(x, params):
    B, C, T, F = x.shape
    H = C * F
    G = params["groups"]
    out = jnp.transpose(x, (0, 2, 1, 3)).reshape(B, T, H)
    o1 = _bilstm_ref(out, params["l1_wih"], params["l1_whh"], params["l1_bsum"], G)
    out = jnp.stack(o1, axis=-1).reshape(B, T, H)            # stack + flatten
    out = _ln_ref(out, params["ln1_g"], params["ln1_b"])
    o2 = _bilstm_ref(out, params["l2_wih"], params["l2_whh"], params["l2_bsum"], G)
    out = jnp.concatenate(o2, axis=-1)
    out = _ln_ref(out, params["ln2_g"], params["ln2_b"])
    return out


# --------------------------------------------------------------------------
if __name__ == "__main__":
    B, C, T, F = 2, 4, 8, 8          # hidden_size = C*F = 32, groups = 4
    hidden_size = C * F
    groups = 4

    key = jax.random.PRNGKey(0)
    kx, kp = jax.random.split(key)
    x = jax.random.normal(kx, (B, C, T, F), jnp.float32)
    params = init_params(kp, hidden_size, groups)

    out = jax.jit(lambda xx: glstm_forward(xx, params))(x)
    out = jax.block_until_ready(out)

    assert out.shape == (B, T, hidden_size), out.shape
    ref = glstm_ref(x, params)
    np.testing.assert_allclose(np.asarray(out), np.asarray(ref),
                               atol=1e-4, rtol=1e-4)
    print("KERNEL_OK")
</pallas_src>

<mosaic_0001>
module attributes {stable_mosaic.version = 11 : i64} {
  func.func @glstm_fused_kernel(%arg0: i32, %arg1: memref<8x2x32xf32, #tpu.memory_space<vmem>>, %arg2: memref<32x128xf32, #tpu.memory_space<vmem>>, %arg3: memref<32x128xf32, #tpu.memory_space<vmem>>, %arg4: memref<1x128xf32, #tpu.memory_space<vmem>>, %arg5: memref<32x128xf32, #tpu.memory_space<vmem>>, %arg6: memref<32x128xf32, #tpu.memory_space<vmem>>, %arg7: memref<1x128xf32, #tpu.memory_space<vmem>>, %arg8: memref<1x32xf32, #tpu.memory_space<vmem>>, %arg9: memref<1x32xf32, #tpu.memory_space<vmem>>, %arg10: memref<1x32xf32, #tpu.memory_space<vmem>>, %arg11: memref<1x32xf32, #tpu.memory_space<vmem>>, %arg12: memref<8x2x32xf32, #tpu.memory_space<vmem>>, %arg13: memref<8x2x128xf32, #tpu.memory_space<vmem>>, %arg14: memref<8x2x16xf32, #tpu.memory_space<vmem>>, %arg15: memref<8x2x16xf32, #tpu.memory_space<vmem>>) attributes {dimension_semantics = [#tpu.dimension_semantics<arbitrary>], iteration_bounds = array<i64: 1>, scalar_prefetch = 0 : i64, scratch_operands = 3 : i64, tpu.core_type = #tpu.core_type<tc>, window_params = [{pipeline_mode = #tpu.pipeline_mode<synchronous>, transform_indices = @transform_0, window_bounds = array<i64: 8, 2, 32>}, {pipeline_mode = #tpu.pipeline_mode<synchronous>, transform_indices = @transform_1, window_bounds = array<i64: 32, 128>}, {pipeline_mode = #tpu.pipeline_mode<synchronous>, transform_indices = @transform_2, window_bounds = array<i64: 32, 128>}, {pipeline_mode = #tpu.pipeline_mode<synchronous>, transform_indices = @transform_3, window_bounds = array<i64: 1, 128>}, {pipeline_mode = #tpu.pipeline_mode<synchronous>, transform_indices = @transform_4, window_bounds = array<i64: 32, 128>}, {pipeline_mode = #tpu.pipeline_mode<synchronous>, transform_indices = @transform_5, window_bounds = array<i64: 32, 128>}, {pipeline_mode = #tpu.pipeline_mode<synchronous>, transform_indices = @transform_6, window_bounds = array<i64: 1, 128>}, {pipeline_mode = #tpu.pipeline_mode<synchronous>, transform_indices = @transform_7, window_bounds = array<i64: 1, 32>}, {pipeline_mode = #tpu.pipeline_mode<synchronous>, transform_indices = @transform_8, window_bounds = array<i64: 1, 32>}, {pipeline_mode = #tpu.pipeline_mode<synchronous>, transform_indices = @transform_9, window_bounds = array<i64: 1, 32>}, {pipeline_mode = #tpu.pipeline_mode<synchronous>, transform_indices = @transform_10, window_bounds = array<i64: 1, 32>}, {pipeline_mode = #tpu.pipeline_mode<synchronous>, transform_indices = @transform_11, window_bounds = array<i64: 8, 2, 32>}]} {
    %0 = tpu.iota {dimensions = array<i32: 1>} : vector<2x128xi32>
    %c32_i32 = arith.constant 32 : i32
    %c0_i32 = arith.constant 0 : i32
    %1 = arith.cmpi eq, %c32_i32, %c0_i32 : i32
    %c1_i32 = arith.constant 1 : i32
    %2 = arith.select %1, %c1_i32, %c32_i32 : i32
    %3 = vector.broadcast %2 : i32 to vector<2x128xi32>
    %4 = arith.remsi %0, %3 : vector<2x128xi32>
    %c0_i32_0 = arith.constant 0 : i32
    %5 = vector.broadcast %c0_i32_0 : i32 to vector<2x128xi32>
    %6 = arith.cmpi ne, %4, %5 : vector<2x128xi32>
    %c0_i32_1 = arith.constant 0 : i32
    %7 = vector.broadcast %c0_i32_1 : i32 to vector<2x128xi32>
    %8 = arith.cmpi slt, %4, %7 : vector<2x128xi32>
    %c0_i32_2 = arith.constant 0 : i32
    %9 = arith.cmpi slt, %2, %c0_i32_2 : i32
    %10 = vector.broadcast %9 : i1 to vector<2x128xi1>
    %11 = vector.broadcast %10 : vector<2x128xi1> to vector<2x128xi1>
    %12 = arith.xori %8, %11 : vector<2x128xi1>
    %13 = arith.andi %12, %6 : vector<2x128xi1>
    %14 = vector.broadcast %2 : i32 to vector<2x128xi32>
    %15 = arith.addi %4, %14 : vector<2x128xi32>
    %16 = arith.select %13, %15, %4 : vector<2x128xi1>, vector<2x128xi32>
    %c16_i32 = arith.constant 16 : i32
    %17 = vector.broadcast %c16_i32 : i32 to vector<2x128xi32>
    %18 = arith.cmpi slt, %16, %17 : vector<2x128xi32>
    %c0 = arith.constant 0 : index
    %c0_3 = arith.constant 0 : index
    %19 = vector.load %arg2[%c0, %c0_3] : memref<32x128xf32, #tpu.memory_space<vmem>>, vector<32x128xf32>
    %c0_4 = arith.constant 0 : index
    %c0_5 = arith.constant 0 : index
    %20 = vector.load %arg4[%c0_4, %c0_5] : memref<1x128xf32, #tpu.memory_space<vmem>>, vector<1x128xf32>
    %c0_i32_6 = arith.constant 0 : i32
    %c7_i32 = arith.constant 7 : i32
    %21 = arith.subi %c7_i32, %c0_i32_6 : i32
    %22 = arith.index_cast %c0_i32_6 : i32 to index
    %c0_7 = arith.constant 0 : index
    %c0_8 = arith.constant 0 : index
    %23 = vector.load %arg1[%22, %c0_7, %c0_8] : memref<8x2x32xf32, #tpu.memory_space<vmem>>, vector<1x2x32xf32>
    %24 = vector.shape_cast %23 : vector<1x2x32xf32> to vector<2x32xf32>
    %cst = arith.constant dense<0.000000e+00> : vector<2x128xf32>
    %25 = tpu.matmul %24, %19, %cst {dimension_numbers = #tpu.dot_dimension_numbers<[1], [0], [0], [1], [0, 0, 1, 1], [], []>} : vector<2x32xf32>, vector<32x128xf32>, vector<2x128xf32> -> vector<2x128xf32>
    %26 = vector.broadcast %20 : vector<1x128xf32> to vector<2x128xf32>
    %27 = arith.addf %25, %26 : vector<2x128xf32>
    %28 = arith.index_cast %21 : i32 to index
    %c0_9 = arith.constant 0 : index
    %c0_10 = arith.constant 0 : index
    %29 = vector.load %arg1[%28, %c0_9, %c0_10] : memref<8x2x32xf32, #tpu.memory_space<vmem>>, vector<1x2x32xf32>
    %30 = vector.shape_cast %29 : vector<1x2x32xf32> to vector<2x32xf32>
    %cst_11 = arith.constant dense<0.000000e+00> : vector<2x128xf32>
    %31 = tpu.matmul %30, %19, %cst_11 {dimension_numbers = #tpu.dot_dimension_numbers<[1], [0], [0], [1], [0, 0, 1, 1], [], []>} : vector<2x32xf32>, vector<32x128xf32>, vector<2x128xf32> -> vector<2x128xf32>
    %32 = vector.broadcast %20 : vector<1x128xf32> to vector<2x128xf32>
    %33 = arith.addf %31, %32 : vector<2x128xf32>
    %34 = arith.select %18, %27, %33 : vector<2x128xi1>, vector<2x128xf32>
    %35 = arith.index_cast %c0_i32_6 : i32 to index
    %c0_12 = arith.constant 0 : index
    %c0_13 = arith.constant 0 : index
    %36 = vector.load %arg13[%35, %c0_12, %c0_13] : memref<8x2x128xf32, #tpu.memory_space<vmem>>, vector<1x2x128xf32>
    %37 = vector.shape_cast %36 : vector<1x2x128xf32> to vector<2x128xf32>
    %38 = vector.shape_cast %34 : vector<2x128xf32> to vector<1x2x128xf32>
    tpu.vector_store %arg13[%35, %c0_12, %c0_13], %38 {strides = array<i32>} : memref<8x2x128xf32, #tpu.memory_space<vmem>>, vector<1x2x128xf32>,
    %39 = arith.select %18, %33, %27 : vector<2x128xi1>, vector<2x128xf32>
    %40 = arith.index_cast %21 : i32 to index
    %c0_14 = arith.constant 0 : index
    %c0_15 = arith.constant 0 : index
    %41 = vector.load %arg13[%40, %c0_14, %c0_15] : memref<8x2x128xf32, #tpu.memory_space<vmem>>, vector<1x2x128xf32>
    %42 = vector.shape_cast %41 : vector<1x2x128xf32> to vector<2x128xf32>
    %43 = vector.shape_cast %39 : vector<2x128xf32> to vector<1x2x128xf32>
    tpu.vector_store %arg13[%40, %c0_14, %c0_15], %43 {strides = array<i32>} : memref<8x2x128xf32, #tpu.memory_space<vmem>>, vector<1x2x128xf32>,
    %c1_i32_16 = arith.constant 1 : i32
    %c7_i32_17 = arith.constant 7 : i32
    %44 = arith.subi %c7_i32_17, %c1_i32_16 : i32
    %45 = arith.index_cast %c1_i32_16 : i32 to index
    %c0_18 = arith.constant 0 : index
    %c0_19 = arith.constant 0 : index
    %46 = vector.load %arg1[%45, %c0_18, %c0_19] : memref<8x2x32xf32, #tpu.memory_space<vmem>>, vector<1x2x32xf32>
    %47 = vector.shape_cast %46 : vector<1x2x32xf32> to vector<2x32xf32>
    %cst_20 = arith.constant dense<0.000000e+00> : vector<2x128xf32>
    %48 = tpu.matmul %47, %19, %cst_20 {dimension_numbers = #tpu.dot_dimension_numbers<[1], [0], [0], [1], [0, 0, 1, 1], [], []>} : vector<2x32xf32>, vector<32x128xf32>, vector<2x128xf32> -> vector<2x128xf32>
    %49 = vector.broadcast %20 : vector<1x128xf32> to vector<2x128xf32>
    %50 = arith.addf %48, %49 : vector<2x128xf32>
    %51 = arith.index_cast %44 : i32 to index
    %c0_21 = arith.constant 0 : index
    %c0_22 = arith.constant 0 : index
    %52 = vector.load %arg1[%51, %c0_21, %c0_22] : memref<8x2x32xf32, #tpu.memory_space<vmem>>, vector<1x2x32xf32>
    %53 = vector.shape_cast %52 : vector<1x2x32xf32> to vector<2x32xf32>
    %cst_23 = arith.constant dense<0.000000e+00> : vector<2x128xf32>
    %54 = tpu.matmul %53, %19, %cst_23 {dimension_numbers = #tpu.dot_dimension_numbers<[1], [0], [0], [1], [0, 0, 1, 1], [], []>} : vector<2x32xf32>, vector<32x128xf32>, vector<2x128xf32> -> vector<2x128xf32>
    %55 = vector.broadcast %20 : vector<1x128xf32> to vector<2x128xf32>
    %56 = arith.addf %54, %55 : vector<2x128xf32>
    %57 = arith.select %18, %50, %56 : vector<2x128xi1>, vector<2x128xf32>
    %58 = arith.index_cast %c1_i32_16 : i32 to index
    %c0_24 = arith.constant 0 : index
    %c0_25 = arith.constant 0 : index
    %59 = vector.load %arg13[%58, %c0_24, %c0_25] : memref<8x2x128xf32, #tpu.memory_space<vmem>>, vector<1x2x128xf32>
    %60 = vector.shape_cast %59 : vector<1x2x128xf32> to vector<2x128xf32>
    %61 = vector.shape_cast %57 : vector<2x128xf32> to vector<1x2x128xf32>
    tpu.vector_store %arg13[%58, %c0_24, %c0_25], %61 {strides = array<i32>} : memref<8x2x128xf32, #tpu.memory_space<vmem>>, vector<1x2x128xf32>,
    %62 = arith.select %18, %56, %50 : vector<2x128xi1>, vector<2x128xf32>
    %63 = arith.index_cast %44 : i32 to index
    %c0_26 = arith.constant 0 : index
    %c0_27 = arith.constant 0 : index
    %64 = vector.load %arg13[%63, %c0_26, %c0_27] : memref<8x2x128xf32, #tpu.memory_space<vmem>>, vector<1x2x128xf32>
    %65 = vector.shape_cast %64 : vector<1x2x128xf32> to vector<2x128xf32>
    %66 = vector.shape_cast %62 : vector<2x128xf32> to vector<1x2x128xf32>
    tpu.vector_store %arg13[%63, %c0_26, %c0_27], %66 {strides = array<i32>} : memref<8x2x128xf32, #tpu.memory_space<vmem>>, vector<1x2x128xf32>,
    %c2_i32 = arith.constant 2 : i32
    %c7_i32_28 = arith.constant 7 : i32
    %67 = arith.subi %c7_i32_28, %c2_i32 : i32
    %68 = arith.index_cast %c2_i32 : i32 to index
    %c0_29 = arith.constant 0 : index
    %c0_30 = arith.constant 0 : index
    %69 = vector.load %arg1[%68, %c0_29, %c0_30] : memref<8x2x32xf32, #tpu.memory_space<vmem>>, vector<1x2x32xf32>
    %70 = vector.shape_cast %69 : vector<1x2x32xf32> to vector<2x32xf32>
    %cst_31 = arith.constant dense<0.000000e+00> : vector<2x128xf32>
    %71 = tpu.matmul %70, %19, %cst_31 {dimension_numbers = #tpu.dot_dimension_numbers<[1], [0], [0], [1], [0, 0, 1, 1], [], []>} : vector<2x32xf32>, vector<32x128xf32>, vector<2x128xf32> -> vector<2x128xf32>
    %72 = vector.broadcast %20 : vector<1x128xf32> to vector<2x128xf32>
    %73 = arith.addf %71, %72 : vector<2x128xf32>
    %74 = arith.index_cast %67 : i32 to index
    %c0_32 = arith.constant 0 : index
    %c0_33 = arith.constant 0 : index
    %75 = vector.load %arg1[%74, %c0_32, %c0_33] : memref<8x2x32xf32, #tpu.memory_space<vmem>>, vector<1x2x32xf32>
    %76 = vector.shape_cast %75 : vector<1x2x32xf32> to vector<2x32xf32>
    %cst_34 = arith.constant dense<0.000000e+00> : vector<2x128xf32>
    %77 = tpu.matmul %76, %19, %cst_34 {dimension_numbers = #tpu.dot_dimension_numbers<[1], [0], [0], [1], [0, 0, 1, 1], [], []>} : vector<2x32xf32>, vector<32x128xf32>, vector<2x128xf32> -> vector<2x128xf32>
    %78 = vector.broadcast %20 : vector<1x128xf32> to vector<2x128xf32>
    %79 = arith.addf %77, %78 : vector<2x128xf32>
    %80 = arith.select %18, %73, %79 : vector<2x128xi1>, vector<2x128xf32>
    %81 = arith.index_cast %c2_i32 : i32 to index
    %c0_35 = arith.constant 0 : index
    %c0_36 = arith.constant 0 : index
    %82 = vector.load %arg13[%81, %c0_35, %c0_36] : memref<8x2x128xf32, #tpu.memory_space<vmem>>, vector<1x2x128xf32>
    %83 = vector.shape_cast %82 : vector<1x2x128xf32> to vector<2x128xf32>
    %84 = vector.shape_cast %80 : vector<2x128xf32> to vector<1x2x128xf32>
    tpu.vector_store %arg13[%81, %c0_35, %c0_36], %84 {strides = array<i32>} : memref<8x2x128xf32, #tpu.memory_space<vmem>>, vector<1x2x128xf32>,
    %85 = arith.select %18, %79, %73 : vector<2x128xi1>, vector<2x128xf32>
    %86 = arith.index_cast %67 : i32 to index
    %c0_37 = arith.constant 0 : index
    %c0_38 = arith.constant 0 : index
    %87 = vector.load %arg13[%86, %c0_37, %c0_38] : memref<8x2x128xf32, #tpu.memory_space<vmem>>, vector<1x2x128xf32>
    %88 = vector.shape_cast %87 : vector<1x2x128xf32> to vector<2x128xf32>
    %89 = vector.shape_cast %85 : vector<2x128xf32> to vector<1x2x128xf32>
    tpu.vector_store %arg13[%86, %c0_37, %c0_38], %89 {strides = array<i32>} : memref<8x2x128xf32, #tpu.memory_space<vmem>>, vector<1x2x128xf32>,
    %c3_i32 = arith.constant 3 : i32
    %c7_i32_39 = arith.constant 7 : i32
    %90 = arith.subi %c7_i32_39, %c3_i32 : i32
    %91 = arith.index_cast %c3_i32 : i32 to index
    %c0_40 = arith.constant 0 : index
    %c0_41 = arith.constant 0 : index
    %92 = vector.load %arg1[%91, %c0_40, %c0_41] : memref<8x2x32xf32, #tpu.memory_space<vmem>>, vector<1x2x32xf32>
    %93 = vector.shape_cast %92 : vector<1x2x32xf32> to vector<2x32xf32>
    %cst_42 = arith.constant dense<0.000000e+00> : vector<2x128xf32>
    %94 = tpu.matmul %93, %19, %cst_42 {dimension_numbers = #tpu.dot_dimension_numbers<[1], [0], [0], [1], [0, 0, 1, 1], [], []>} : vector<2x32xf32>, vector<32x128xf32>, vector<2x128xf32> -> vector<2x128xf32>
    %95 = vector.broadcast %20 : vector<1x128xf32> to vector<2x128xf32>
    %96 = arith.addf %94, %95 : vector<2x128xf32>
    %97 = arith.index_cast %90 : i32 to index
    %c0_43 = arith.constant 0 : index
    %c0_44 = arith.constant 0 : index
    %98 = vector.load %arg1[%97, %c0_43, %c0_44] : memref<8x2x32xf32, #tpu.memory_space<vmem>>, vector<1x2x32xf32>
    %99 = vector.shape_cast %98 : vector<1x2x32xf32> to vector<2x32xf32>
    %cst_45 = arith.constant dense<0.000000e+00> : vector<2x128xf32>
    %100 = tpu.matmul %99, %19, %cst_45 {dimension_numbers = #tpu.dot_dimension_numbers<[1], [0], [0], [1], [0, 0, 1, 1], [], []>} : vector<2x32xf32>, vector<32x128xf32>, vector<2x128xf32> -> vector<2x128xf32>
    %101 = vector.broadcast %20 : vector<1x128xf32> to vector<2x128xf32>
    %102 = arith.addf %100, %101 : vector<2x128xf32>
    %103 = arith.select %18, %96, %102 : vector<2x128xi1>, vector<2x128xf32>
    %104 = arith.index_cast %c3_i32 : i32 to index
    %c0_46 = arith.constant 0 : index
    %c0_47 = arith.constant 0 : index
    %105 = vector.load %arg13[%104, %c0_46, %c0_47] : memref<8x2x128xf32, #tpu.memory_space<vmem>>, vector<1x2x128xf32>
    %106 = vector.shape_cast %105 : vector<1x2x128xf32> to vector<2x128xf32>
    %107 = vector.shape_cast %103 : vector<2x128xf32> to vector<1x2x128xf32>
    tpu.vector_store %arg13[%104, %c0_46, %c0_47], %107 {strides = array<i32>} : memref<8x2x128xf32, #tpu.memory_space<vmem>>, vector<1x2x128xf32>,
    %108 = arith.select %18, %102, %96 : vector<2x128xi1>, vector<2x128xf32>
    %109 = arith.index_cast %90 : i32 to index
    %c0_48 = arith.constant 0 : index
    %c0_49 = arith.constant 0 : index
    %110 = vector.load %arg13[%109, %c0_48, %c0_49] : memref<8x2x128xf32, #tpu.memory_space<vmem>>, vector<1x2x128xf32>
    %111 = vector.shape_cast %110 : vector<1x2x128xf32> to vector<2x128xf32>
    %112 = vector.shape_cast %108 : vector<2x128xf32> to vector<1x2x128xf32>
    tpu.vector_store %arg13[%109, %c0_48, %c0_49], %112 {strides = array<i32>} : memref<8x2x128xf32, #tpu.memory_space<vmem>>, vector<1x2x128xf32>,
    %c4_i32 = arith.constant 4 : i32
    %c0_50 = arith.constant 0 : index
    %c0_51 = arith.constant 0 : index
    %113 = vector.load %arg3[%c0_50, %c0_51] : memref<32x128xf32, #tpu.memory_space<vmem>>, vector<32x128xf32>
    %cst_52 = arith.constant 0.000000e+00 : f32
    %114 = vector.broadcast %cst_52 : f32 to vector<2x32xf32>
    %c0_i32_53 = arith.constant 0 : i32
    %cst_54 = arith.constant dense<0.000000e+00> : vector<2x128xf32>
    %115 = tpu.matmul %114, %113, %cst_54 {dimension_numbers = #tpu.dot_dimension_numbers<[1], [0], [0], [1], [0, 0, 1, 1], [], []>} : vector<2x32xf32>, vector<32x128xf32>, vector<2x128xf32> -> vector<2x128xf32>
    %116 = arith.index_cast %c0_i32_53 : i32 to index
    %c0_55 = arith.constant 0 : index
    %c0_56 = arith.constant 0 : index
    %117 = vector.load %arg13[%116, %c0_55, %c0_56] : memref<8x2x128xf32, #tpu.memory_space<vmem>>, vector<1x2x128xf32>
    %118 = vector.shape_cast %117 : vector<1x2x128xf32> to vector<2x128xf32>
    %119 = arith.addf %115, %118 : vector<2x128xf32>
    %120 = arith.negf %119 : vector<2x128xf32>
    %121 = math.exp %120 : vector<2x128xf32>
    %cst_57 = arith.constant 1.000000e+00 : f32
    %122 = vector.broadcast %cst_57 : f32 to vector<2x128xf32>
    %123 = arith.addf %122, %121 : vector<2x128xf32>
    %124 = arith.divf %122, %123 : vector<2x128xf32>
    %125 = math.tanh %119 : vector<2x128xf32>
    %126 = vector.extract_strided_slice %124 {offsets = [0, 0], sizes = [2, 32], strides = [1, 1]} : vector<2x128xf32> to vector<2x32xf32>
    %127 = vector.extract_strided_slice %124 {offsets = [0, 32], sizes = [2, 32], strides = [1, 1]} : vector<2x128xf32> to vector<2x32xf32>
    %128 = vector.extract_strided_slice %125 {offsets = [0, 64], sizes = [2, 32], strides = [1, 1]} : vector<2x128xf32> to vector<2x32xf32>
    %129 = vector.extract_strided_slice %124 {offsets = [0, 96], sizes = [2, 32], strides = [1, 1]} : vector<2x128xf32> to vector<2x32xf32>
    %130 = arith.mulf %127, %114 : vector<2x32xf32>
    %131 = arith.mulf %126, %128 : vector<2x32xf32>
    %132 = arith.addf %130, %131 : vector<2x32xf32>
    %133 = math.tanh %132 : vector<2x32xf32>
    %134 = arith.mulf %129, %133 : vector<2x32xf32>
    %135 = vector.extract_strided_slice %134 {offsets = [0, 0], sizes = [2, 16], strides = [1, 1]} : vector<2x32xf32> to vector<2x16xf32>
    %136 = arith.index_cast %c0_i32_53 : i32 to index
    %c0_58 = arith.constant 0 : index
    %c0_59 = arith.constant 0 : index
    %137 = vector.load %arg14[%136, %c0_58, %c0_59] : memref<8x2x16xf32, #tpu.memory_space<vmem>>, vector<1x2x16xf32>
    %138 = vector.shape_cast %137 : vector<1x2x16xf32> to vector<2x16xf32>
    %139 = vector.shape_cast %135 : vector<2x16xf32> to vector<1x2x16xf32>
    tpu.vector_store %arg14[%136, %c0_58, %c0_59], %139 {strides = array<i32>} : memref<8x2x16xf32, #tpu.memory_space<vmem>>, vector<1x2x16xf32>,
    %140 = vector.extract_strided_slice %134 {offsets = [0, 16], sizes = [2, 16], strides = [1, 1]} : vector<2x32xf32> to vector<2x16xf32>
    %c7_i32_60 = arith.constant 7 : i32
    %141 = arith.subi %c7_i32_60, %c0_i32_53 : i32
    %142 = arith.index_cast %141 : i32 to index
    %c0_61 = arith.constant 0 : index
    %c0_62 = arith.constant 0 : index
    %143 = vector.load %arg15[%142, %c0_61, %c0_62] : memref<8x2x16xf32, #tpu.memory_space<vmem>>, vector<1x2x16xf32>
    %144 = vector.shape_cast %143 : vector<1x2x16xf32> to vector<2x16xf32>
    %145 = vector.shape_cast %140 : vector<2x16xf32> to vector<1x2x16xf32>
    tpu.vector_store %arg15[%142, %c0_61, %c0_62], %145 {strides = array<i32>} : memref<8x2x16xf32, #tpu.memory_space<vmem>>, vector<1x2x16xf32>,
    %c1_i32_63 = arith.constant 1 : i32
    %cst_64 = arith.constant dense<0.000000e+00> : vector<2x128xf32>
    %146 = tpu.matmul %134, %113, %cst_64 {dimension_numbers = #tpu.dot_dimension_numbers<[1], [0], [0], [1], [0, 0, 1, 1], [], []>} : vector<2x32xf32>, vector<32x128xf32>, vector<2x128xf32> -> vector<2x128xf32>
    %147 = arith.index_cast %c1_i32_63 : i32 to index
    %c0_65 = arith.constant 0 : index
    %c0_66 = arith.constant 0 : index
    %148 = vector.load %arg13[%147, %c0_65, %c0_66] : memref<8x2x128xf32, #tpu.memory_space<vmem>>, vector<1x2x128xf32>
    %149 = vector.shape_cast %148 : vector<1x2x128xf32> to vector<2x128xf32>
    %150 = arith.addf %146, %149 : vector<2x128xf32>
    %151 = arith.negf %150 : vector<2x128xf32>
    %152 = math.exp %151 : vector<2x128xf32>
    %cst_67 = arith.constant 1.000000e+00 : f32
    %153 = vector.broadcast %cst_67 : f32 to vector<2x128xf32>
    %154 = arith.addf %153, %152 : vector<2x128xf32>
    %155 = arith.divf %153, %154 : vector<2x128xf32>
    %156 = math.tanh %150 : vector<2x128xf32>
    %157 = vector.extract_strided_slice %155 {offsets = [0, 0], sizes = [2, 32], strides = [1, 1]} : vector<2x128xf32> to vector<2x32xf32>
    %158 = vector.extract_strided_slice %155 {offsets = [0, 32], sizes = [2, 32], strides = [1, 1]} : vector<2x128xf32> to vector<2x32xf32>
    %159 = vector.extract_strided_slice %156 {offsets = [0, 64], sizes = [2, 32], strides = [1, 1]} : vector<2x128xf32> to vector<2x32xf32>
    %160 = vector.extract_strided_slice %155 {offsets = [0, 96], sizes = [2, 32], strides = [1, 1]} : vector<2x128xf32> to vector<2x32xf32>
    %161 = arith.mulf %158, %132 : vector<2x32xf32>
    %162 = arith.mulf %157, %159 : vector<2x32xf32>
    %163 = arith.addf %161, %162 : vector<2x32xf32>
    %164 = math.tanh %163 : vector<2x32xf32>
    %165 = arith.mulf %160, %164 : vector<2x32xf32>
    %166 = vector.extract_strided_slice %165 {offsets = [0, 0], sizes = [2, 16], strides = [1, 1]} : vector<2x32xf32> to vector<2x16xf32>
    %167 = arith.index_cast %c1_i32_63 : i32 to index
    %c0_68 = arith.constant 0 : index
    %c0_69 = arith.constant 0 : index
    %168 = vector.load %arg14[%167, %c0_68, %c0_69] : memref<8x2x16xf32, #tpu.memory_space<vmem>>, vector<1x2x16xf32>
    %169 = vector.shape_cast %168 : vector<1x2x16xf32> to vector<2x16xf32>
    %170 = vector.shape_cast %166 : vector<2x16xf32> to vector<1x2x16xf32>
    tpu.vector_store %arg14[%167, %c0_68, %c0_69], %170 {strides = array<i32>} : memref<8x2x16xf32, #tpu.memory_space<vmem>>, vector<1x2x16xf32>,
    %171 = vector.extract_strided_slice %165 {offsets = [0, 16], sizes = [2, 16], strides = [1, 1]} : vector<2x32xf32> to vector<2x16xf32>
    %c7_i32_70 = arith.constant 7 : i32
    %172 = arith.subi %c7_i32_70, %c1_i32_63 : i32
    %173 = arith.index_cast %172 : i32 to index
    %c0_71 = arith.constant 0 : index
    %c0_72 = arith.constant 0 : index
    %174 = vector.load %arg15[%173, %c0_71, %c0_72] : memref<8x2x16xf32, #tpu.memory_space<vmem>>, vector<1x2x16xf32>
    %175 = vector.shape_cast %174 : vector<1x2x16xf32> to vector<2x16xf32>
    %176 = vector.shape_cast %171 : vector<2x16xf32> to vector<1x2x16xf32>
    tpu.vector_store %arg15[%173, %c0_71, %c0_72], %176 {strides = array<i32>} : memref<8x2x16xf32, #tpu.memory_space<vmem>>, vector<1x2x16xf32>,
    %c2_i32_73 = arith.constant 2 : i32
    %cst_74 = arith.constant dense<0.000000e+00> : vector<2x128xf32>
    %177 = tpu.matmul %165, %113, %cst_74 {dimension_numbers = #tpu.dot_dimension_numbers<[1], [0], [0], [1], [0, 0, 1, 1], [], []>} : vector<2x32xf32>, vector<32x128xf32>, vector<2x128xf32> -> vector<2x128xf32>
    %178 = arith.index_cast %c2_i32_73 : i32 to index
    %c0_75 = arith.constant 0 : index
    %c0_76 = arith.constant 0 : index
    %179 = vector.load %arg13[%178, %c0_75, %c0_76] : memref<8x2x128xf32, #tpu.memory_space<vmem>>, vector<1x2x128xf32>
    %180 = vector.shape_cast %179 : vector<1x2x128xf32> to vector<2x128xf32>
    %181 = arith.addf %177, %180 : vector<2x128xf32>
    %182 = arith.negf %181 : vector<2x128xf32>
    %183 = math.exp %182 : vector<2x128xf32>
    %cst_77 = arith.constant 1.000000e+00 : f32
    %184 = vector.broadcast %cst_77 : f32 to vector<2x128xf32>
    %185 = arith.addf %184, %183 : vector<2x128xf32>
    %186 = arith.divf %184, %185 : vector<2x128xf32>
    %187 = math.tanh %181 : vector<2x128xf32>
    %188 = vector.extract_strided_slice %186 {offsets = [0, 0], sizes = [2, 32], strides = [1, 1]} : vector<2x128xf32> to vector<2x32xf32>
    %189 = vector.extract_strided_slice %186 {offsets = [0, 32], sizes = [2, 32], strides = [1, 1]} : vector<2x128xf32> to vector<2x32xf32>
    %190 = vector.extract_strided_slice %187 {offsets = [0, 64], sizes = [2, 32], strides = [1, 1]} : vector<2x128xf32> to vector<2x32xf32>
    %191 = vector.extract_strided_slice %186 {offsets = [0, 96], sizes = [2, 32], strides = [1, 1]} : vector<2x128xf32> to vector<2x32xf32>
    %192 = arith.mulf %189, %163 : vector<2x32xf32>
    %193 = arith.mulf %188, %190 : vector<2x32xf32>
    %194 = arith.addf %192, %193 : vector<2x32xf32>
    %195 = math.tanh %194 : vector<2x32xf32>
    %196 = arith.mulf %191, %195 : vector<2x32xf32>
    %197 = vector.extract_strided_slice %196 {offsets = [0, 0], sizes = [2, 16], strides = [1, 1]} : vector<2x32xf32> to vector<2x16xf32>
    %198 = arith.index_cast %c2_i32_73 : i32 to index
    %c0_78 = arith.constant 0 : index
    %c0_79 = arith.constant 0 : index
    %199 = vector.load %arg14[%198, %c0_78, %c0_79] : memref<8x2x16xf32, #tpu.memory_space<vmem>>, vector<1x2x16xf32>
    %200 = vector.shape_cast %199 : vector<1x2x16xf32> to vector<2x16xf32>
    %201 = vector.shape_cast %197 : vector<2x16xf32> to vector<1x2x16xf32>
    tpu.vector_store %arg14[%198, %c0_78, %c0_79], %201 {strides = array<i32>} : memref<8x2x16xf32, #tpu.memory_space<vmem>>, vector<1x2x16xf32>,
    %202 = vector.extract_strided_slice %196 {offsets = [0, 16], sizes = [2, 16], strides = [1, 1]} : vector<2x32xf32> to vector<2x16xf32>
    %c7_i32_80 = arith.constant 7 : i32
    %203 = arith.subi %c7_i32_80, %c2_i32_73 : i32
    %204 = arith.index_cast %203 : i32 to index
    %c0_81 = arith.constant 0 : index
    %c0_82 = arith.constant 0 : index
    %205 = vector.load %arg15[%204, %c0_81, %c0_82] : memref<8x2x16xf32, #tpu.memory_space<vmem>>, vector<1x2x16xf32>
    %206 = vector.shape_cast %205 : vector<1x2x16xf32> to vector<2x16xf32>
    %207 = vector.shape_cast %202 : vector<2x16xf32> to vector<1x2x16xf32>
    tpu.vector_store %arg15[%204, %c0_81, %c0_82], %207 {strides = array<i32>} : memref<8x2x16xf32, #tpu.memory_space<vmem>>, vector<1x2x16xf32>,
    %c3_i32_83 = arith.constant 3 : i32
    %cst_84 = arith.constant dense<0.000000e+00> : vector<2x128xf32>
    %208 = tpu.matmul %196, %113, %cst_84 {dimension_numbers = #tpu.dot_dimension_numbers<[1], [0], [0], [1], [0, 0, 1, 1], [], []>} : vector<2x32xf32>, vector<32x128xf32>, vector<2x128xf32> -> vector<2x128xf32>
    %209 = arith.index_cast %c3_i32_83 : i32 to index
    %c0_85 = arith.constant 0 : index
    %c0_86 = arith.constant 0 : index
    %210 = vector.load %arg13[%209, %c0_85, %c0_86] : memref<8x2x128xf32, #tpu.memory_space<vmem>>, vector<1x2x128xf32>
    %211 = vector.shape_cast %210 : vector<1x2x128xf32> to vector<2x128xf32>
    %212 = arith.addf %208, %211 : vector<2x128xf32>
    %213 = arith.negf %212 : vector<2x128xf32>
    %214 = math.exp %213 : vector<2x128xf32>
    %cst_87 = arith.constant 1.000000e+00 : f32
    %215 = vector.broadcast %cst_87 : f32 to vector<2x128xf32>
    %216 = arith.addf %215, %214 : vector<2x128xf32>
    %217 = arith.divf %215, %216 : vector<2x128xf32>
    %218 = math.tanh %212 : vector<2x128xf32>
    %219 = vector.extract_strided_slice %217 {offsets = [0, 0], sizes = [2, 32], strides = [1, 1]} : vector<2x128xf32> to vector<2x32xf32>
    %220 = vector.extract_strided_slice %217 {offsets = [0, 32], sizes = [2, 32], strides = [1, 1]} : vector<2x128xf32> to vector<2x32xf32>
    %221 = vector.extract_strided_slice %218 {offsets = [0, 64], sizes = [2, 32], strides = [1, 1]} : vector<2x128xf32> to vector<2x32xf32>
    %222 = vector.extract_strided_slice %217 {offsets = [0, 96], sizes = [2, 32], strides = [1, 1]} : vector<2x128xf32> to vector<2x32xf32>
    %223 = arith.mulf %220, %194 : vector<2x32xf32>
    %224 = arith.mulf %219, %221 : vector<2x32xf32>
    %225 = arith.addf %223, %224 : vector<2x32xf32>
    %226 = math.tanh %225 : vector<2x32xf32>
    %227 = arith.mulf %222, %226 : vector<2x32xf32>
    %228 = vector.extract_strided_slice %227 {offsets = [0, 0], sizes = [2, 16], strides = [1, 1]} : vector<2x32xf32> to vector<2x16xf32>
    %229 = arith.index_cast %c3_i32_83 : i32 to index
    %c0_88 = arith.constant 0 : index
    %c0_89 = arith.constant 0 : index
    %230 = vector.load %arg14[%229, %c0_88, %c0_89] : memref<8x2x16xf32, #tpu.memory_space<vmem>>, vector<1x2x16xf32>
    %231 = vector.shape_cast %230 : vector<1x2x16xf32> to vector<2x16xf32>
    %232 = vector.shape_cast %228 : vector<2x16xf32> to vector<1x2x16xf32>
    tpu.vector_store %arg14[%229, %c0_88, %c0_89], %232 {strides = array<i32>} : memref<8x2x16xf32, #tpu.memory_space<vmem>>, vector<1x2x16xf32>,
    %233 = vector.extract_strided_slice %227 {offsets = [0, 16], sizes = [2, 16], strides = [1, 1]} : vector<2x32xf32> to vector<2x16xf32>
    %c7_i32_90 = arith.constant 7 : i32
    %234 = arith.subi %c7_i32_90, %c3_i32_83 : i32
    %235 = arith.index_cast %234 : i32 to index
    %c0_91 = arith.constant 0 : index
    %c0_92 = arith.constant 0 : index
    %236 = vector.load %arg15[%235, %c0_91, %c0_92] : memref<8x2x16xf32, #tpu.memory_space<vmem>>, vector<1x2x16xf32>
    %237 = vector.shape_cast %236 : vector<1x2x16xf32> to vector<2x16xf32>
    %238 = vector.shape_cast %233 : vector<2x16xf32> to vector<1x2x16xf32>
    tpu.vector_store %arg15[%235, %c0_91, %c0_92], %238 {strides = array<i32>} : memref<8x2x16xf32, #tpu.memory_space<vmem>>, vector<1x2x16xf32>,
    %c4_i32_93 = arith.constant 4 : i32
    %cst_94 = arith.constant dense<0.000000e+00> : vector<2x128xf32>
    %239 = tpu.matmul %227, %113, %cst_94 {dimension_numbers = #tpu.dot_dimension_numbers<[1], [0], [0], [1], [0, 0, 1, 1], [], []>} : vector<2x32xf32>, vector<32x128xf32>, vector<2x128xf32> -> vector<2x128xf32>
    %240 = arith.index_cast %c4_i32_93 : i32 to index
    %c0_95 = arith.constant 0 : index
    %c0_96 = arith.constant 0 : index
    %241 = vector.load %arg13[%240, %c0_95, %c0_96] : memref<8x2x128xf32, #tpu.memory_space<vmem>>, vector<1x2x128xf32>
    %242 = vector.shape_cast %241 : vector<1x2x128xf32> to vector<2x128xf32>
    %243 = arith.addf %239, %242 : vector<2x128xf32>
    %244 = arith.negf %243 : vector<2x128xf32>
    %245 = math.exp %244 : vector<2x128xf32>
    %cst_97 = arith.constant 1.000000e+00 : f32
    %246 = vector.broadcast %cst_97 : f32 to vector<2x128xf32>
    %247 = arith.addf %246, %245 : vector<2x128xf32>
    %248 = arith.divf %246, %247 : vector<2x128xf32>
    %249 = math.tanh %243 : vector<2x128xf32>
    %250 = vector.extract_strided_slice %248 {offsets = [0, 0], sizes = [2, 32], strides = [1, 1]} : vector<2x128xf32> to vector<2x32xf32>
    %251 = vector.extract_strided_slice %248 {offsets = [0, 32], sizes = [2, 32], strides = [1, 1]} : vector<2x128xf32> to vector<2x32xf32>
    %252 = vector.extract_strided_slice %249 {offsets = [0, 64], sizes = [2, 32], strides = [1, 1]} : vector<2x128xf32> to vector<2x32xf32>
    %253 = vector.extract_strided_slice %248 {offsets = [0, 96], sizes = [2, 32], strides = [1, 1]} : vector<2x128xf32> to vector<2x32xf32>
    %254 = arith.mulf %251, %225 : vector<2x32xf32>
    %255 = arith.mulf %250, %252 : vector<2x32xf32>
    %256 = arith.addf %254, %255 : vector<2x32xf32>
    %257 = math.tanh %256 : vector<2x32xf32>
    %258 = arith.mulf %253, %257 : vector<2x32xf32>
    %259 = vector.extract_strided_slice %258 {offsets = [0, 0], sizes = [2, 16], strides = [1, 1]} : vector<2x32xf32> to vector<2x16xf32>
    %260 = arith.index_cast %c4_i32_93 : i32 to index
    %c0_98 = arith.constant 0 : index
    %c0_99 = arith.constant 0 : index
    %261 = vector.load %arg14[%260, %c0_98, %c0_99] : memref<8x2x16xf32, #tpu.memory_space<vmem>>, vector<1x2x16xf32>
    %262 = vector.shape_cast %261 : vector<1x2x16xf32> to vector<2x16xf32>
    %263 = vector.shape_cast %259 : vector<2x16xf32> to vector<1x2x16xf32>
    tpu.vector_store %arg14[%260, %c0_98, %c0_99], %263 {strides = array<i32>} : memref<8x2x16xf32, #tpu.memory_space<vmem>>, vector<1x2x16xf32>,
    %264 = vector.extract_strided_slice %258 {offsets = [0, 16], sizes = [2, 16], strides = [1, 1]} : vector<2x32xf32> to vector<2x16xf32>
    %c7_i32_100 = arith.constant 7 : i32
    %265 = arith.subi %c7_i32_100, %c4_i32_93 : i32
    %266 = arith.index_cast %265 : i32 to index
    %c0_101 = arith.constant 0 : index
    %c0_102 = arith.constant 0 : index
    %267 = vector.load %arg15[%266, %c0_101, %c0_102] : memref<8x2x16xf32, #tpu.memory_space<vmem>>, vector<1x2x16xf32>
    %268 = vector.shape_cast %267 : vector<1x2x16xf32> to vector<2x16xf32>
    %269 = vector.shape_cast %264 : vector<2x16xf32> to vector<1x2x16xf32>
    tpu.vector_store %arg15[%266, %c0_101, %c0_102], %269 {strides = array<i32>} : memref<8x2x16xf32, #tpu.memory_space<vmem>>, vector<1x2x16xf32>,
    %c5_i32 = arith.constant 5 : i32
    %cst_103 = arith.constant dense<0.000000e+00> : vector<2x128xf32>
    %270 = tpu.matmul %258, %113, %cst_103 {dimension_numbers = #tpu.dot_dimension_numbers<[1], [0], [0], [1], [0, 0, 1, 1], [], []>} : vector<2x32xf32>, vector<32x128xf32>, vector<2x128xf32> -> vector<2x128xf32>
    %271 = arith.index_cast %c5_i32 : i32 to index
    %c0_104 = arith.constant 0 : index
    %c0_105 = arith.constant 0 : index
    %272 = vector.load %arg13[%271, %c0_104, %c0_105] : memref<8x2x128xf32, #tpu.memory_space<vmem>>, vector<1x2x128xf32>
    %273 = vector.shape_cast %272 : vector<1x2x128xf32> to vector<2x128xf32>
    %274 = arith.addf %270, %273 : vector<2x128xf32>
    %275 = arith.negf %274 : vector<2x128xf32>
    %276 = math.exp %275 : vector<2x128xf32>
    %cst_106 = arith.constant 1.000000e+00 : f32
    %277 = vector.broadcast %cst_106 : f32 to vector<2x128xf32>
    %278 = arith.addf %277, %276 : vector<2x128xf32>
    %279 = arith.divf %277, %278 : vector<2x128xf32>
    %280 = math.tanh %274 : vector<2x128xf32>
    %281 = vector.extract_strided_slice %279 {offsets = [0, 0], sizes = [2, 32], strides = [1, 1]} : vector<2x128xf32> to vector<2x32xf32>
    %282 = vector.extract_strided_slice %279 {offsets = [0, 32], sizes = [2, 32], strides = [1, 1]} : vector<2x128xf32> to vector<2x32xf32>
    %283 = vector.extract_strided_slice %280 {offsets = [0, 64], sizes = [2, 32], strides = [1, 1]} : vector<2x128xf32> to vector<2x32xf32>
    %284 = vector.extract_strided_slice %279 {offsets = [0, 96], sizes = [2, 32], strides = [1, 1]} : vector<2x128xf32> to vector<2x32xf32>
    %285 = arith.mulf %282, %256 : vector<2x32xf32>
    %286 = arith.mulf %281, %283 : vector<2x32xf32>
    %287 = arith.addf %285, %286 : vector<2x32xf32>
    %288 = math.tanh %287 : vector<2x32xf32>
    %289 = arith.mulf %284, %288 : vector<2x32xf32>
    %290 = vector.extract_strided_slice %289 {offsets = [0, 0], sizes = [2, 16], strides = [1, 1]} : vector<2x32xf32> to vector<2x16xf32>
    %291 = arith.index_cast %c5_i32 : i32 to index
    %c0_107 = arith.constant 0 : index
    %c0_108 = arith.constant 0 : index
    %292 = vector.load %arg14[%291, %c0_107, %c0_108] : memref<8x2x16xf32, #tpu.memory_space<vmem>>, vector<1x2x16xf32>
    %293 = vector.shape_cast %292 : vector<1x2x16xf32> to vector<2x16xf32>
    %294 = vector.shape_cast %290 : vector<2x16xf32> to vector<1x2x16xf32>
    tpu.vector_store %arg14[%291, %c0_107, %c0_108], %294 {strides = array<i32>} : memref<8x2x16xf32, #tpu.memory_space<vmem>>, vector<1x2x16xf32>,
    %295 = vector.extract_strided_slice %289 {offsets = [0, 16], sizes = [2, 16], strides = [1, 1]} : vector<2x32xf32> to vector<2x16xf32>
    %c7_i32_109 = arith.constant 7 : i32
    %296 = arith.subi %c7_i32_109, %c5_i32 : i32
    %297 = arith.index_cast %296 : i32 to index
    %c0_110 = arith.constant 0 : index
    %c0_111 = arith.constant 0 : index
    %298 = vector.load %arg15[%297, %c0_110, %c0_111] : memref<8x2x16xf32, #tpu.memory_space<vmem>>, vector<1x2x16xf32>
    %299 = vector.shape_cast %298 : vector<1x2x16xf32> to vector<2x16xf32>
    %300 = vector.shape_cast %295 : vector<2x16xf32> to vector<1x2x16xf32>
    tpu.vector_store %arg15[%297, %c0_110, %c0_111], %300 {strides = array<i32>} : memref<8x2x16xf32, #tpu.memory_space<vmem>>, vector<1x2x16xf32>,
    %c6_i32 = arith.constant 6 : i32
    %cst_112 = arith.constant dense<0.000000e+00> : vector<2x128xf32>
    %301 = tpu.matmul %289, %113, %cst_112 {dimension_numbers = #tpu.dot_dimension_numbers<[1], [0], [0], [1], [0, 0, 1, 1], [], []>} : vector<2x32xf32>, vector<32x128xf32>, vector<2x128xf32> -> vector<2x128xf32>
    %302 = arith.index_cast %c6_i32 : i32 to index
    %c0_113 = arith.constant 0 : index
    %c0_114 = arith.constant 0 : index
    %303 = vector.load %arg13[%302, %c0_113, %c0_114] : memref<8x2x128xf32, #tpu.memory_space<vmem>>, vector<1x2x128xf32>
    %304 = vector.shape_cast %303 : vector<1x2x128xf32> to vector<2x128xf32>
    %305 = arith.addf %301, %304 : vector<2x128xf32>
    %306 = arith.negf %305 : vector<2x128xf32>
    %307 = math.exp %306 : vector<2x128xf32>
    %cst_115 = arith.constant 1.000000e+00 : f32
    %308 = vector.broadcast %cst_115 : f32 to vector<2x128xf32>
    %309 = arith.addf %308, %307 : vector<2x128xf32>
    %310 = arith.divf %308, %309 : vector<2x128xf32>
    %311 = math.tanh %305 : vector<2x128xf32>
    %312 = vector.extract_strided_slice %310 {offsets = [0, 0], sizes = [2, 32], strides = [1, 1]} : vector<2x128xf32> to vector<2x32xf32>
    %313 = vector.extract_strided_slice %310 {offsets = [0, 32], sizes = [2, 32], strides = [1, 1]} : vector<2x128xf32> to vector<2x32xf32>
    %314 = vector.extract_strided_slice %311 {offsets = [0, 64], sizes = [2, 32], strides = [1, 1]} : vector<2x128xf32> to vector<2x32xf32>
    %315 = vector.extract_strided_slice %310 {offsets = [0, 96], sizes = [2, 32], strides = [1, 1]} : vector<2x128xf32> to vector<2x32xf32>
    %316 = arith.mulf %313, %287 : vector<2x32xf32>
    %317 = arith.mulf %312, %314 : vector<2x32xf32>
    %318 = arith.addf %316, %317 : vector<2x32xf32>
    %319 = math.tanh %318 : vector<2x32xf32>
    %320 = arith.mulf %315, %319 : vector<2x32xf32>
    %321 = vector.extract_strided_slice %320 {offsets = [0, 0], sizes = [2, 16], strides = [1, 1]} : vector<2x32xf32> to vector<2x16xf32>
    %322 = arith.index_cast %c6_i32 : i32 to index
    %c0_116 = arith.constant 0 : index
    %c0_117 = arith.constant 0 : index
    %323 = vector.load %arg14[%322, %c0_116, %c0_117] : memref<8x2x16xf32, #tpu.memory_space<vmem>>, vector<1x2x16xf32>
    %324 = vector.shape_cast %323 : vector<1x2x16xf32> to vector<2x16xf32>
    %325 = vector.shape_cast %321 : vector<2x16xf32> to vector<1x2x16xf32>
    tpu.vector_store %arg14[%322, %c0_116, %c0_117], %325 {strides = array<i32>} : memref<8x2x16xf32, #tpu.memory_space<vmem>>, vector<1x2x16xf32>,
    %326 = vector.extract_strided_slice %320 {offsets = [0, 16], sizes = [2, 16], strides = [1, 1]} : vector<2x32xf32> to vector<2x16xf32>
    %c7_i32_118 = arith.constant 7 : i32
    %327 = arith.subi %c7_i32_118, %c6_i32 : i32
    %328 = arith.index_cast %327 : i32 to index
    %c0_119 = arith.constant 0 : index
    %c0_120 = arith.constant 0 : index
    %329 = vector.load %arg15[%328, %c0_119, %c0_120] : memref<8x2x16xf32, #tpu.memory_space<vmem>>, vector<1x2x16xf32>
    %330 = vector.shape_cast %329 : vector<1x2x16xf32> to vector<2x16xf32>
    %331 = vector.shape_cast %326 : vector<2x16xf32> to vector<1x2x16xf32>
    tpu.vector_store %arg15[%328, %c0_119, %c0_120], %331 {strides = array<i32>} : memref<8x2x16xf32, #tpu.memory_space<vmem>>, vector<1x2x16xf32>,
    %c7_i32_121 = arith.constant 7 : i32
    %cst_122 = arith.constant dense<0.000000e+00> : vector<2x128xf32>
    %332 = tpu.matmul %320, %113, %cst_122 {dimension_numbers = #tpu.dot_dimension_numbers<[1], [0], [0], [1], [0, 0, 1, 1], [], []>} : vector<2x32xf32>, vector<32x128xf32>, vector<2x128xf32> -> vector<2x128xf32>
    %333 = arith.index_cast %c7_i32_121 : i32 to index
    %c0_123 = arith.constant 0 : index
    %c0_124 = arith.constant 0 : index
    %334 = vector.load %arg13[%333, %c0_123, %c0_124] : memref<8x2x128xf32, #tpu.memory_space<vmem>>, vector<1x2x128xf32>
    %335 = vector.shape_cast %334 : vector<1x2x128xf32> to vector<2x128xf32>
    %336 = arith.addf %332, %335 : vector<2x128xf32>
    %337 = arith.negf %336 : vector<2x128xf32>
    %338 = math.exp %337 : vector<2x128xf32>
    %cst_125 = arith.constant 1.000000e+00 : f32
    %339 = vector.broadcast %cst_125 : f32 to vector<2x128xf32>
    %340 = arith.addf %339, %338 : vector<2x128xf32>
    %341 = arith.divf %339, %340 : vector<2x128xf32>
    %342 = math.tanh %336 : vector<2x128xf32>
    %343 = vector.extract_strided_slice %341 {offsets = [0, 0], sizes = [2, 32], strides = [1, 1]} : vector<2x128xf32> to vector<2x32xf32>
    %344 = vector.extract_strided_slice %341 {offsets = [0, 32], sizes = [2, 32], strides = [1, 1]} : vector<2x128xf32> to vector<2x32xf32>
    %345 = vector.extract_strided_slice %342 {offsets = [0, 64], sizes = [2, 32], strides = [1, 1]} : vector<2x128xf32> to vector<2x32xf32>
    %346 = vector.extract_strided_slice %341 {offsets = [0, 96], sizes = [2, 32], strides = [1, 1]} : vector<2x128xf32> to vector<2x32xf32>
    %347 = arith.mulf %344, %318 : vector<2x32xf32>
    %348 = arith.mulf %343, %345 : vector<2x32xf32>
    %349 = arith.addf %347, %348 : vector<2x32xf32>
    %350 = math.tanh %349 : vector<2x32xf32>
    %351 = arith.mulf %346, %350 : vector<2x32xf32>
    %352 = vector.extract_strided_slice %351 {offsets = [0, 0], sizes = [2, 16], strides = [1, 1]} : vector<2x32xf32> to vector<2x16xf32>
    %353 = arith.index_cast %c7_i32_121 : i32 to index
    %c0_126 = arith.constant 0 : index
    %c0_127 = arith.constant 0 : index
    %354 = vector.load %arg14[%353, %c0_126, %c0_127] : memref<8x2x16xf32, #tpu.memory_space<vmem>>, vector<1x2x16xf32>
    %355 = vector.shape_cast %354 : vector<1x2x16xf32> to vector<2x16xf32>
    %356 = vector.shape_cast %352 : vector<2x16xf32> to vector<1x2x16xf32>
    tpu.vector_store %arg14[%353, %c0_126, %c0_127], %356 {strides = array<i32>} : memref<8x2x16xf32, #tpu.memory_space<vmem>>, vector<1x2x16xf32>,
    %357 = vector.extract_strided_slice %351 {offsets = [0, 16], sizes = [2, 16], strides = [1, 1]} : vector<2x32xf32> to vector<2x16xf32>
    %c7_i32_128 = arith.constant 7 : i32
    %358 = arith.subi %c7_i32_128, %c7_i32_121 : i32
    %359 = arith.index_cast %358 : i32 to index
    %c0_129 = arith.constant 0 : index
    %c0_130 = arith.constant 0 : index
    %360 = vector.load %arg15[%359, %c0_129, %c0_130] : memref<8x2x16xf32, #tpu.memory_space<vmem>>, vector<1x2x16xf32>
    %361 = vector.shape_cast %360 : vector<1x2x16xf32> to vector<2x16xf32>
    %362 = vector.shape_cast %357 : vector<2x16xf32> to vector<1x2x16xf32>
    tpu.vector_store %arg15[%359, %c0_129, %c0_130], %362 {strides = array<i32>} : memref<8x2x16xf32, #tpu.memory_space<vmem>>, vector<1x2x16xf32>,
    %c8_i32 = arith.constant 8 : i32
    %c0_131 = arith.constant 0 : index
    %c0_132 = arith.constant 0 : index
    %363 = vector.load %arg8[%c0_131, %c0_132] : memref<1x32xf32, #tpu.memory_space<vmem>>, vector<1x32xf32>
    %c0_133 = arith.constant 0 : index
    %c0_134 = arith.constant 0 : index
    %364 = vector.load %arg9[%c0_133, %c0_134] : memref<1x32xf32, #tpu.memory_space<vmem>>, vector<1x32xf32>
    %c0_135 = arith.constant 0 : index
    %c0_136 = arith.constant 0 : index
    %365 = vector.load %arg5[%c0_135, %c0_136] : memref<32x128xf32, #tpu.memory_space<vmem>>, vector<32x128xf32>
    %366 = vector.extract_strided_slice %365 {offsets = [0, 0], sizes = [16, 128], strides = [1, 1]} : vector<32x128xf32> to vector<16x128xf32>
    %367 = vector.extract_strided_slice %365 {offsets = [16, 0], sizes = [16, 128], strides = [1, 1]} : vector<32x128xf32> to vector<16x128xf32>
    %c0_137 = arith.constant 0 : index
    %c0_138 = arith.constant 0 : index
    %368 = vector.load %arg7[%c0_137, %c0_138] : memref<1x128xf32, #tpu.memory_space<vmem>>, vector<1x128xf32>
    %c0_i32_139 = arith.constant 0 : i32
    %c7_i32_140 = arith.constant 7 : i32
    %369 = arith.subi %c7_i32_140, %c0_i32_139 : i32
    %370 = arith.index_cast %c0_i32_139 : i32 to index
    %c0_141 = arith.constant 0 : index
    %c0_142 = arith.constant 0 : index
    %371 = vector.load %arg14[%370, %c0_141, %c0_142] : memref<8x2x16xf32, #tpu.memory_space<vmem>>, vector<1x2x16xf32>
    %372 = vector.shape_cast %371 : vector<1x2x16xf32> to vector<2x16xf32>
    %373 = arith.index_cast %c0_i32_139 : i32 to index
    %c0_143 = arith.constant 0 : index
    %c0_144 = arith.constant 0 : index
    %374 = vector.load %arg15[%373, %c0_143, %c0_144] : memref<8x2x16xf32, #tpu.memory_space<vmem>>, vector<1x2x16xf32>
    %375 = vector.shape_cast %374 : vector<1x2x16xf32> to vector<2x16xf32>
    %cst_145 = arith.constant dense<0.000000e+00> : vector<2xf32>
    %376 = vector.multi_reduction <add>, %372, %cst_145 [1] : vector<2x16xf32> to vector<2xf32>
    %377 = vector.shape_cast %376 : vector<2xf32> to vector<2x1xf32>
    %cst_146 = arith.constant dense<0.000000e+00> : vector<2xf32>
    %378 = vector.multi_reduction <add>, %375, %cst_146 [1] : vector<2x16xf32> to vector<2xf32>
    %379 = vector.shape_cast %378 : vector<2xf32> to vector<2x1xf32>
    %380 = arith.addf %377, %379 : vector<2x1xf32>
    %cst_147 = arith.constant 3.200000e+01 : f32
    %381 = vector.broadcast %cst_147 : f32 to vector<2x1xf32>
    %382 = arith.divf %380, %381 : vector<2x1xf32>
    %383 = vector.broadcast %382 : vector<2x1xf32> to vector<2x16xf32>
    %384 = arith.subf %372, %383 : vector<2x16xf32>
    %385 = vector.broadcast %382 : vector<2x1xf32> to vector<2x16xf32>
    %386 = arith.subf %375, %385 : vector<2x16xf32>
    %387 = arith.mulf %384, %384 : vector<2x16xf32>
    %cst_148 = arith.constant dense<0.000000e+00> : vector<2xf32>
    %388 = vector.multi_reduction <add>, %387, %cst_148 [1] : vector<2x16xf32> to vector<2xf32>
    %389 = vector.shape_cast %388 : vector<2xf32> to vector<2x1xf32>
    %390 = arith.mulf %386, %386 : vector<2x16xf32>
    %cst_149 = arith.constant dense<0.000000e+00> : vector<2xf32>
    %391 = vector.multi_reduction <add>, %390, %cst_149 [1] : vector<2x16xf32> to vector<2xf32>
    %392 = vector.shape_cast %391 : vector<2xf32> to vector<2x1xf32>
    %393 = arith.addf %389, %392 : vector<2x1xf32>
    %cst_150 = arith.constant 3.200000e+01 : f32
    %394 = vector.broadcast %cst_150 : f32 to vector<2x1xf32>
    %395 = arith.divf %393, %394 : vector<2x1xf32>
    %cst_151 = arith.constant 9.99999974E-6 : f32
    %396 = vector.broadcast %cst_151 : f32 to vector<2x1xf32>
    %397 = arith.addf %395, %396 : vector<2x1xf32>
    %398 = math.rsqrt %397 : vector<2x1xf32>
    %399 = vector.broadcast %398 : vector<2x1xf32> to vector<2x16xf32>
    %400 = arith.mulf %384, %399 : vector<2x16xf32>
    %401 = vector.extract_strided_slice %363 {offsets = [0, 0], sizes = [1, 16], strides = [1, 1]} : vector<1x32xf32> to vector<1x16xf32>
    %402 = vector.broadcast %401 : vector<1x16xf32> to vector<2x16xf32>
    %403 = arith.mulf %400, %402 : vector<2x16xf32>
    %404 = vector.extract_strided_slice %364 {offsets = [0, 0], sizes = [1, 16], strides = [1, 1]} : vector<1x32xf32> to vector<1x16xf32>
    %405 = vector.broadcast %404 : vector<1x16xf32> to vector<2x16xf32>
    %406 = arith.addf %403, %405 : vector<2x16xf32>
    %407 = vector.broadcast %398 : vector<2x1xf32> to vector<2x16xf32>
    %408 = arith.mulf %386, %407 : vector<2x16xf32>
    %409 = vector.extract_strided_slice %363 {offsets = [0, 16], sizes = [1, 16], strides = [1, 1]} : vector<1x32xf32> to vector<1x16xf32>
    %410 = vector.broadcast %409 : vector<1x16xf32> to vector<2x16xf32>
    %411 = arith.mulf %408, %410 : vector<2x16xf32>
    %412 = vector.extract_strided_slice %364 {offsets = [0, 16], sizes = [1, 16], strides = [1, 1]} : vector<1x32xf32> to vector<1x16xf32>
    %413 = vector.broadcast %412 : vector<1x16xf32> to vector<2x16xf32>
    %414 = arith.addf %411, %413 : vector<2x16xf32>
    %cst_152 = arith.constant dense<0.000000e+00> : vector<2x128xf32>
    %415 = tpu.matmul %406, %366, %cst_152 {dimension_numbers = #tpu.dot_dimension_numbers<[1], [0], [0], [1], [0, 0, 1, 1], [], []>} : vector<2x16xf32>, vector<16x128xf32>, vector<2x128xf32> -> vector<2x128xf32>
    %cst_153 = arith.constant dense<0.000000e+00> : vector<2x128xf32>
    %416 = tpu.matmul %414, %367, %cst_153 {dimension_numbers = #tpu.dot_dimension_numbers<[1], [0], [0], [1], [0, 0, 1, 1], [], []>} : vector<2x16xf32>, vector<16x128xf32>, vector<2x128xf32> -> vector<2x128xf32>
    %417 = arith.addf %415, %416 : vector<2x128xf32>
    %418 = vector.broadcast %368 : vector<1x128xf32> to vector<2x128xf32>
    %419 = arith.addf %417, %418 : vector<2x128xf32>
    %420 = arith.index_cast %369 : i32 to index
    %c0_154 = arith.constant 0 : index
    %c0_155 = arith.constant 0 : index
    %421 = vector.load %arg14[%420, %c0_154, %c0_155] : memref<8x2x16xf32, #tpu.memory_space<vmem>>, vector<1x2x16xf32>
    %422 = vector.shape_cast %421 : vector<1x2x16xf32> to vector<2x16xf32>
    %423 = arith.index_cast %369 : i32 to index
    %c0_156 = arith.constant 0 : index
    %c0_157 = arith.constant 0 : index
    %424 = vector.load %arg15[%423, %c0_156, %c0_157] : memref<8x2x16xf32, #tpu.memory_space<vmem>>, vector<1x2x16xf32>
    %425 = vector.shape_cast %424 : vector<1x2x16xf32> to vector<2x16xf32>
    %cst_158 = arith.constant dense<0.000000e+00> : vector<2xf32>
    %426 = vector.multi_reduction <add>, %422, %cst_158 [1] : vector<2x16xf32> to vector<2xf32>
    %427 = vector.shape_cast %426 : vector<2xf32> to vector<2x1xf32>
    %cst_159 = arith.constant dense<0.000000e+00> : vector<2xf32>
    %428 = vector.multi_reduction <add>, %425, %cst_159 [1] : vector<2x16xf32> to vector<2xf32>
    %429 = vector.shape_cast %428 : vector<2xf32> to vector<2x1xf32>
    %430 = arith.addf %427, %429 : vector<2x1xf32>
    %cst_160 = arith.constant 3.200000e+01 : f32
    %431 = vector.broadcast %cst_160 : f32 to vector<2x1xf32>
    %432 = arith.divf %430, %431 : vector<2x1xf32>
    %433 = vector.broadcast %432 : vector<2x1xf32> to vector<2x16xf32>
    %434 = arith.subf %422, %433 : vector<2x16xf32>
    %435 = vector.broadcast %432 : vector<2x1xf32> to vector<2x16xf32>
    %436 = arith.subf %425, %435 : vector<2x16xf32>
    %437 = arith.mulf %434, %434 : vector<2x16xf32>
    %cst_161 = arith.constant dense<0.000000e+00> : vector<2xf32>
    %438 = vector.multi_reduction <add>, %437, %cst_161 [1] : vector<2x16xf32> to vector<2xf32>
    %439 = vector.shape_cast %438 : vector<2xf32> to vector<2x1xf32>
    %440 = arith.mulf %436, %436 : vector<2x16xf32>
    %cst_162 = arith.constant dense<0.000000e+00> : vector<2xf32>
    %441 = vector.multi_reduction <add>, %440, %cst_162 [1] : vector<2x16xf32> to vector<2xf32>
    %442 = vector.shape_cast %441 : vector<2xf32> to vector<2x1xf32>
    %443 = arith.addf %439, %442 : vector<2x1xf32>
    %cst_163 = arith.constant 3.200000e+01 : f32
    %444 = vector.broadcast %cst_163 : f32 to vector<2x1xf32>
    %445 = arith.divf %443, %444 : vector<2x1xf32>
    %cst_164 = arith.constant 9.99999974E-6 : f32
    %446 = vector.broadcast %cst_164 : f32 to vector<2x1xf32>
    %447 = arith.addf %445, %446 : vector<2x1xf32>
    %448 = math.rsqrt %447 : vector<2x1xf32>
    %449 = vector.broadcast %448 : vector<2x1xf32> to vector<2x16xf32>
    %450 = arith.mulf %434, %449 : vector<2x16xf32>
    %451 = vector.extract_strided_slice %363 {offsets = [0, 0], sizes = [1, 16], strides = [1, 1]} : vector<1x32xf32> to vector<1x16xf32>
    %452 = vector.broadcast %451 : vector<1x16xf32> to vector<2x16xf32>
    %453 = arith.mulf %450, %452 : vector<2x16xf32>
    %454 = vector.extract_strided_slice %364 {offsets = [0, 0], sizes = [1, 16], strides = [1, 1]} : vector<1x32xf32> to vector<1x16xf32>
    %455 = vector.broadcast %454 : vector<1x16xf32> to vector<2x16xf32>
    %456 = arith.addf %453, %455 : vector<2x16xf32>
    %457 = vector.broadcast %448 : vector<2x1xf32> to vector<2x16xf32>
    %458 = arith.mulf %436, %457 : vector<2x16xf32>
    %459 = vector.extract_strided_slice %363 {offsets = [0, 16], sizes = [1, 16], strides = [1, 1]} : vector<1x32xf32> to vector<1x16xf32>
    %460 = vector.broadcast %459 : vector<1x16xf32> to vector<2x16xf32>
    %461 = arith.mulf %458, %460 : vector<2x16xf32>
    %462 = vector.extract_strided_slice %364 {offsets = [0, 16], sizes = [1, 16], strides = [1, 1]} : vector<1x32xf32> to vector<1x16xf32>
    %463 = vector.broadcast %462 : vector<1x16xf32> to vector<2x16xf32>
    %464 = arith.addf %461, %463 : vector<2x16xf32>
    %cst_165 = arith.constant dense<0.000000e+00> : vector<2x128xf32>
    %465 = tpu.matmul %456, %366, %cst_165 {dimension_numbers = #tpu.dot_dimension_numbers<[1], [0], [0], [1], [0, 0, 1, 1], [], []>} : vector<2x16xf32>, vector<16x128xf32>, vector<2x128xf32> -> vector<2x128xf32>
    %cst_166 = arith.constant dense<0.000000e+00> : vector<2x128xf32>
    %466 = tpu.matmul %464, %367, %cst_166 {dimension_numbers = #tpu.dot_dimension_numbers<[1], [0], [0], [1], [0, 0, 1, 1], [], []>} : vector<2x16xf32>, vector<16x128xf32>, vector<2x128xf32> -> vector<2x128xf32>
    %467 = arith.addf %465, %466 : vector<2x128xf32>
    %468 = vector.broadcast %368 : vector<1x128xf32> to vector<2x128xf32>
    %469 = arith.addf %467, %468 : vector<2x128xf32>
    %470 = arith.select %18, %419, %469 : vector<2x128xi1>, vector<2x128xf32>
    %471 = arith.index_cast %c0_i32_139 : i32 to index
    %c0_167 = arith.constant 0 : index
    %c0_168 = arith.constant 0 : index
    %472 = vector.load %arg13[%471, %c0_167, %c0_168] : memref<8x2x128xf32, #tpu.memory_space<vmem>>, vector<1x2x128xf32>
    %473 = vector.shape_cast %472 : vector<1x2x128xf32> to vector<2x128xf32>
    %474 = vector.shape_cast %470 : vector<2x128xf32> to vector<1x2x128xf32>
    tpu.vector_store %arg13[%471, %c0_167, %c0_168], %474 {strides = array<i32>} : memref<8x2x128xf32, #tpu.memory_space<vmem>>, vector<1x2x128xf32>,
    %475 = arith.select %18, %469, %419 : vector<2x128xi1>, vector<2x128xf32>
    %476 = arith.index_cast %369 : i32 to index
    %c0_169 = arith.constant 0 : index
    %c0_170 = arith.constant 0 : index
    %477 = vector.load %arg13[%476, %c0_169, %c0_170] : memref<8x2x128xf32, #tpu.memory_space<vmem>>, vector<1x2x128xf32>
    %478 = vector.shape_cast %477 : vector<1x2x128xf32> to vector<2x128xf32>
    %479 = vector.shape_cast %475 : vector<2x128xf32> to vector<1x2x128xf32>
    tpu.vector_store %arg13[%476, %c0_169, %c0_170], %479 {strides = array<i32>} : memref<8x2x128xf32, #tpu.memory_space<vmem>>, vector<1x2x128xf32>,
    %c1_i32_171 = arith.constant 1 : i32
    %c7_i32_172 = arith.constant 7 : i32
    %480 = arith.subi %c7_i32_172, %c1_i32_171 : i32
    %481 = arith.index_cast %c1_i32_171 : i32 to index
    %c0_173 = arith.constant 0 : index
    %c0_174 = arith.constant 0 : index
    %482 = vector.load %arg14[%481, %c0_173, %c0_174] : memref<8x2x16xf32, #tpu.memory_space<vmem>>, vector<1x2x16xf32>
    %483 = vector.shape_cast %482 : vector<1x2x16xf32> to vector<2x16xf32>
    %484 = arith.index_cast %c1_i32_171 : i32 to index
    %c0_175 = arith.constant 0 : index
    %c0_176 = arith.constant 0 : index
    %485 = vector.load %arg15[%484, %c0_175, %c0_176] : memref<8x2x16xf32, #tpu.memory_space<vmem>>, vector<1x2x16xf32>
    %486 = vector.shape_cast %485 : vector<1x2x16xf32> to vector<2x16xf32>
    %cst_177 = arith.constant dense<0.000000e+00> : vector<2xf32>
    %487 = vector.multi_reduction <add>, %483, %cst_177 [1] : vector<2x16xf32> to vector<2xf32>
    %488 = vector.shape_cast %487 : vector<2xf32> to vector<2x1xf32>
    %cst_178 = arith.constant dense<0.000000e+00> : vector<2xf32>
    %489 = vector.multi_reduction <add>, %486, %cst_178 [1] : vector<2x16xf32> to vector<2xf32>
    %490 = vector.shape_cast %489 : vector<2xf32> to vector<2x1xf32>
    %491 = arith.addf %488, %490 : vector<2x1xf32>
    %cst_179 = arith.constant 3.200000e+01 : f32
    %492 = vector.broadcast %cst_179 : f32 to vector<2x1xf32>
    %493 = arith.divf %491, %492 : vector<2x1xf32>
    %494 = vector.broadcast %493 : vector<2x1xf32> to vector<2x16xf32>
    %495 = arith.subf %483, %494 : vector<2x16xf32>
    %496 = vector.broadcast %493 : vector<2x1xf32> to vector<2x16xf32>
    %497 = arith.subf %486, %496 : vector<2x16xf32>
    %498 = arith.mulf %495, %495 : vector<2x16xf32>
    %cst_180 = arith.constant dense<0.000000e+00> : vector<2xf32>
    %499 = vector.multi_reduction <add>, %498, %cst_180 [1] : vector<2x16xf32> to vector<2xf32>
    %500 = vector.shape_cast %499 : vector<2xf32> to vector<2x1xf32>
    %501 = arith.mulf %497, %497 : vector<2x16xf32>
    %cst_181 = arith.constant dense<0.000000e+00> : vector<2xf32>
    %502 = vector.multi_reduction <add>, %501, %cst_181 [1] : vector<2x16xf32> to vector<2xf32>
    %503 = vector.shape_cast %502 : vector<2xf32> to vector<2x1xf32>
    %504 = arith.addf %500, %503 : vector<2x1xf32>
    %cst_182 = arith.constant 3.200000e+01 : f32
    %505 = vector.broadcast %cst_182 : f32 to vector<2x1xf32>
    %506 = arith.divf %504, %505 : vector<2x1xf32>
    %cst_183 = arith.constant 9.99999974E-6 : f32
    %507 = vector.broadcast %cst_183 : f32 to vector<2x1xf32>
    %508 = arith.addf %506, %507 : vector<2x1xf32>
    %509 = math.rsqrt %508 : vector<2x1xf32>
    %510 = vector.broadcast %509 : vector<2x1xf32> to vector<2x16xf32>
    %511 = arith.mulf %495, %510 : vector<2x16xf32>
    %512 = vector.extract_strided_slice %363 {offsets = [0, 0], sizes = [1, 16], strides = [1, 1]} : vector<1x32xf32> to vector<1x16xf32>
    %513 = vector.broadcast %512 : vector<1x16xf32> to vector<2x16xf32>
    %514 = arith.mulf %511, %513 : vector<2x16xf32>
    %515 = vector.extract_strided_slice %364 {offsets = [0, 0], sizes = [1, 16], strides = [1, 1]} : vector<1x32xf32> to vector<1x16xf32>
    %516 = vector.broadcast %515 : vector<1x16xf32> to vector<2x16xf32>
    %517 = arith.addf %514, %516 : vector<2x16xf32>
    %518 = vector.broadcast %509 : vector<2x1xf32> to vector<2x16xf32>
    %519 = arith.mulf %497, %518 : vector<2x16xf32>
    %520 = vector.extract_strided_slice %363 {offsets = [0, 16], sizes = [1, 16], strides = [1, 1]} : vector<1x32xf32> to vector<1x16xf32>
    %521 = vector.broadcast %520 : vector<1x16xf32> to vector<2x16xf32>
    %522 = arith.mulf %519, %521 : vector<2x16xf32>
    %523 = vector.extract_strided_slice %364 {offsets = [0, 16], sizes = [1, 16], strides = [1, 1]} : vector<1x32xf32> to vector<1x16xf32>
    %524 = vector.broadcast %523 : vector<1x16xf32> to vector<2x16xf32>
    %525 = arith.addf %522, %524 : vector<2x16xf32>
    %cst_184 = arith.constant dense<0.000000e+00> : vector<2x128xf32>
    %526 = tpu.matmul %517, %366, %cst_184 {dimension_numbers = #tpu.dot_dimension_numbers<[1], [0], [0], [1], [0, 0, 1, 1], [], []>} : vector<2x16xf32>, vector<16x128xf32>, vector<2x128xf32> -> vector<2x128xf32>
    %cst_185 = arith.constant dense<0.000000e+00> : vector<2x128xf32>
    %527 = tpu.matmul %525, %367, %cst_185 {dimension_numbers = #tpu.dot_dimension_numbers<[1], [0], [0], [1], [0, 0, 1, 1], [], []>} : vector<2x16xf32>, vector<16x128xf32>, vector<2x128xf32> -> vector<2x128xf32>
    %528 = arith.addf %526, %527 : vector<2x128xf32>
    %529 = vector.broadcast %368 : vector<1x128xf32> to vector<2x128xf32>
    %530 = arith.addf %528, %529 : vector<2x128xf32>
    %531 = arith.index_cast %480 : i32 to index
    %c0_186 = arith.constant 0 : index
    %c0_187 = arith.constant 0 : index
    %532 = vector.load %arg14[%531, %c0_186, %c0_187] : memref<8x2x16xf32, #tpu.memory_space<vmem>>, vector<1x2x16xf32>
    %533 = vector.shape_cast %532 : vector<1x2x16xf32> to vector<2x16xf32>
    %534 = arith.index_cast %480 : i32 to index
    %c0_188 = arith.constant 0 : index
    %c0_189 = arith.constant 0 : index
    %535 = vector.load %arg15[%534, %c0_188, %c0_189] : memref<8x2x16xf32, #tpu.memory_space<vmem>>, vector<1x2x16xf32>
    %536 = vector.shape_cast %535 : vector<1x2x16xf32> to vector<2x16xf32>
    %cst_190 = arith.constant dense<0.000000e+00> : vector<2xf32>
    %537 = vector.multi_reduction <add>, %533, %cst_190 [1] : vector<2x16xf32> to vector<2xf32>
    %538 = vector.shape_cast %537 : vector<2xf32> to vector<2x1xf32>
    %cst_191 = arith.constant dense<0.000000e+00> : vector<2xf32>
    %539 = vector.multi_reduction <add>, %536, %cst_191 [1] : vector<2x16xf32> to vector<2xf32>
    %540 = vector.shape_cast %539 : vector<2xf32> to vector<2x1xf32>
    %541 = arith.addf %538, %540 : vector<2x1xf32>
    %cst_192 = arith.constant 3.200000e+01 : f32
    %542 = vector.broadcast %cst_192 : f32 to vector<2x1xf32>
    %543 = arith.divf %541, %542 : vector<2x1xf32>
    %544 = vector.broadcast %543 : vector<2x1xf32> to vector<2x16xf32>
    %545 = arith.subf %533, %544 : vector<2x16xf32>
    %546 = vector.broadcast %543 : vector<2x1xf32> to vector<2x16xf32>
    %547 = arith.subf %536, %546 : vector<2x16xf32>
    %548 = arith.mulf %545, %545 : vector<2x16xf32>
    %cst_193 = arith.constant dense<0.000000e+00> : vector<2xf32>
    %549 = vector.multi_reduction <add>, %548, %cst_193 [1] : vector<2x16xf32> to vector<2xf32>
    %550 = vector.shape_cast %549 : vector<2xf32> to vector<2x1xf32>
    %551 = arith.mulf %547, %547 : vector<2x16xf32>
    %cst_194 = arith.constant dense<0.000000e+00> : vector<2xf32>
    %552 = vector.multi_reduction <add>, %551, %cst_194 [1] : vector<2x16xf32> to vector<2xf32>
    %553 = vector.shape_cast %552 : vector<2xf32> to vector<2x1xf32>
    %554 = arith.addf %550, %553 : vector<2x1xf32>
    %cst_195 = arith.constant 3.200000e+01 : f32
    %555 = vector.broadcast %cst_195 : f32 to vector<2x1xf32>
    %556 = arith.divf %554, %555 : vector<2x1xf32>
    %cst_196 = arith.constant 9.99999974E-6 : f32
    %557 = vector.broadcast %cst_196 : f32 to vector<2x1xf32>
    %558 = arith.addf %556, %557 : vector<2x1xf32>
    %559 = math.rsqrt %558 : vector<2x1xf32>
    %560 = vector.broadcast %559 : vector<2x1xf32> to vector<2x16xf32>
    %561 = arith.mulf %545, %560 : vector<2x16xf32>
    %562 = vector.extract_strided_slice %363 {offsets = [0, 0], sizes = [1, 16], strides = [1, 1]} : vector<1x32xf32> to vector<1x16xf32>
    %563 = vector.broadcast %562 : vector<1x16xf32> to vector<2x16xf32>
    %564 = arith.mulf %561, %563 : vector<2x16xf32>
    %565 = vector.extract_strided_slice %364 {offsets = [0, 0], sizes = [1, 16], strides = [1, 1]} : vector<1x32xf32> to vector<1x16xf32>
    %566 = vector.broadcast %565 : vector<1x16xf32> to vector<2x16xf32>
    %567 = arith.addf %564, %566 : vector<2x16xf32>
    %568 = vector.broadcast %559 : vector<2x1xf32> to vector<2x16xf32>
    %569 = arith.mulf %547, %568 : vector<2x16xf32>
    %570 = vector.extract_strided_slice %363 {offsets = [0, 16], sizes = [1, 16], strides = [1, 1]} : vector<1x32xf32> to vector<1x16xf32>
    %571 = vector.broadcast %570 : vector<1x16xf32> to vector<2x16xf32>
    %572 = arith.mulf %569, %571 : vector<2x16xf32>
    %573 = vector.extract_strided_slice %364 {offsets = [0, 16], sizes = [1, 16], strides = [1, 1]} : vector<1x32xf32> to vector<1x16xf32>
    %574 = vector.broadcast %573 : vector<1x16xf32> to vector<2x16xf32>
    %575 = arith.addf %572, %574 : vector<2x16xf32>
    %cst_197 = arith.constant dense<0.000000e+00> : vector<2x128xf32>
    %576 = tpu.matmul %567, %366, %cst_197 {dimension_numbers = #tpu.dot_dimension_numbers<[1], [0], [0], [1], [0, 0, 1, 1], [], []>} : vector<2x16xf32>, vector<16x128xf32>, vector<2x128xf32> -> vector<2x128xf32>
    %cst_198 = arith.constant dense<0.000000e+00> : vector<2x128xf32>
    %577 = tpu.matmul %575, %367, %cst_198 {dimension_numbers = #tpu.dot_dimension_numbers<[1], [0], [0], [1], [0, 0, 1, 1], [], []>} : vector<2x16xf32>, vector<16x128xf32>, vector<2x128xf32> -> vector<2x128xf32>
    %578 = arith.addf %576, %577 : vector<2x128xf32>
    %579 = vector.broadcast %368 : vector<1x128xf32> to vector<2x128xf32>
    %580 = arith.addf %578, %579 : vector<2x128xf32>
    %581 = arith.select %18, %530, %580 : vector<2x128xi1>, vector<2x128xf32>
    %582 = arith.index_cast %c1_i32_171 : i32 to index
    %c0_199 = arith.constant 0 : index
    %c0_200 = arith.constant 0 : index
    %583 = vector.load %arg13[%582, %c0_199, %c0_200] : memref<8x2x128xf32, #tpu.memory_space<vmem>>, vector<1x2x128xf32>
    %584 = vector.shape_cast %583 : vector<1x2x128xf32> to vector<2x128xf32>
    %585 = vector.shape_cast %581 : vector<2x128xf32> to vector<1x2x128xf32>
    tpu.vector_store %arg13[%582, %c0_199, %c0_200], %585 {strides = array<i32>} : memref<8x2x128xf32, #tpu.memory_space<vmem>>, vector<1x2x128xf32>,
    %586 = arith.select %18, %580, %530 : vector<2x128xi1>, vector<2x128xf32>
    %587 = arith.index_cast %480 : i32 to index
    %c0_201 = arith.constant 0 : index
    %c0_202 = arith.constant 0 : index
    %588 = vector.load %arg13[%587, %c0_201, %c0_202] : memref<8x2x128xf32, #tpu.memory_space<vmem>>, vector<1x2x128xf32>
    %589 = vector.shape_cast %588 : vector<1x2x128xf32> to vector<2x128xf32>
    %590 = vector.shape_cast %586 : vector<2x128xf32> to vector<1x2x128xf32>
    tpu.vector_store %arg13[%587, %c0_201, %c0_202], %590 {strides = array<i32>} : memref<8x2x128xf32, #tpu.memory_space<vmem>>, vector<1x2x128xf32>,
    %c2_i32_203 = arith.constant 2 : i32
    %c7_i32_204 = arith.constant 7 : i32
    %591 = arith.subi %c7_i32_204, %c2_i32_203 : i32
    %592 = arith.index_cast %c2_i32_203 : i32 to index
    %c0_205 = arith.constant 0 : index
    %c0_206 = arith.constant 0 : index
    %593 = vector.load %arg14[%592, %c0_205, %c0_206] : memref<8x2x16xf32, #tpu.memory_space<vmem>>, vector<1x2x16xf32>
    %594 = vector.shape_cast %593 : vector<1x2x16xf32> to vector<2x16xf32>
    %595 = arith.index_cast %c2_i32_203 : i32 to index
    %c0_207 = arith.constant 0 : index
    %c0_208 = arith.constant 0 : index
    %596 = vector.load %arg15[%595, %c0_207, %c0_208] : memref<8x2x16xf32, #tpu.memory_space<vmem>>, vector<1x2x16xf32>
    %597 = vector.shape_cast %596 : vector<1x2x16xf32> to vector<2x16xf32>
    %cst_209 = arith.constant dense<0.000000e+00> : vector<2xf32>
    %598 = vector.multi_reduction <add>, %594, %cst_209 [1] : vector<2x16xf32> to vector<2xf32>
    %599 = vector.shape_cast %598 : vector<2xf32> to vector<2x1xf32>
    %cst_210 = arith.constant dense<0.000000e+00> : vector<2xf32>
    %600 = vector.multi_reduction <add>, %597, %cst_210 [1] : vector<2x16xf32> to vector<2xf32>
    %601 = vector.shape_cast %600 : vector<2xf32> to vector<2x1xf32>
    %602 = arith.addf %599, %601 : vector<2x1xf32>
    %cst_211 = arith.constant 3.200000e+01 : f32
    %603 = vector.broadcast %cst_211 : f32 to vector<2x1xf32>
    %604 = arith.divf %602, %603 : vector<2x1xf32>
    %605 = vector.broadcast %604 : vector<2x1xf32> to vector<2x16xf32>
    %606 = arith.subf %594, %605 : vector<2x16xf32>
    %607 = vector.broadcast %604 : vector<2x1xf32> to vector<2x16xf32>
    %608 = arith.subf %597, %607 : vector<2x16xf32>
    %609 = arith.mulf %606, %606 : vector<2x16xf32>
    %cst_212 = arith.constant dense<0.000000e+00> : vector<2xf32>
    %610 = vector.multi_reduction <add>, %609, %cst_212 [1] : vector<2x16xf32> to vector<2xf32>
    %611 = vector.shape_cast %610 : vector<2xf32> to vector<2x1xf32>
    %612 = arith.mulf %608, %608 : vector<2x16xf32>
    %cst_213 = arith.constant dense<0.000000e+00> : vector<2xf32>
    %613 = vector.multi_reduction <add>, %612, %cst_213 [1] : vector<2x16xf32> to vector<2xf32>
    %614 = vector.shape_cast %613 : vector<2xf32> to vector<2x1xf32>
    %615 = arith.addf %611, %614 : vector<2x1xf32>
    %cst_214 = arith.constant 3.200000e+01 : f32
    %616 = vector.broadcast %cst_214 : f32 to vector<2x1xf32>
    %617 = arith.divf %615, %616 : vector<2x1xf32>
    %cst_215 = arith.constant 9.99999974E-6 : f32
    %618 = vector.broadcast %cst_215 : f32 to vector<2x1xf32>
    %619 = arith.addf %617, %618 : vector<2x1xf32>
    %620 = math.rsqrt %619 : vector<2x1xf32>
    %621 = vector.broadcast %620 : vector<2x1xf32> to vector<2x16xf32>
    %622 = arith.mulf %606, %621 : vector<2x16xf32>
    %623 = vector.extract_strided_slice %363 {offsets = [0, 0], sizes = [1, 16], strides = [1, 1]} : vector<1x32xf32> to vector<1x16xf32>
    %624 = vector.broadcast %623 : vector<1x16xf32> to vector<2x16xf32>
    %625 = arith.mulf %622, %624 : vector<2x16xf32>
    %626 = vector.extract_strided_slice %364 {offsets = [0, 0], sizes = [1, 16], strides = [1, 1]} : vector<1x32xf32> to vector<1x16xf32>
    %627 = vector.broadcast %626 : vector<1x16xf32> to vector<2x16xf32>
    %628 = arith.addf %625, %627 : vector<2x16xf32>
    %629 = vector.broadcast %620 : vector<2x1xf32> to vector<2x16xf32>
    %630 = arith.mulf %608, %629 : vector<2x16xf32>
    %631 = vector.extract_strided_slice %363 {offsets = [0, 16], sizes = [1, 16], strides = [1, 1]} : vector<1x32xf32> to vector<1x16xf32>
    %632 = vector.broadcast %631 : vector<1x16xf32> to vector<2x16xf32>
    %633 = arith.mulf %630, %632 : vector<2x16xf32>
    %634 = vector.extract_strided_slice %364 {offsets = [0, 16], sizes = [1, 16], strides = [1, 1]} : vector<1x32xf32> to vector<1x16xf32>
    %635 = vector.broadcast %634 : vector<1x16xf32> to vector<2x16xf32>
    %636 = arith.addf %633, %635 : vector<2x16xf32>
    %cst_216 = arith.constant dense<0.000000e+00> : vector<2x128xf32>
    %637 = tpu.matmul %628, %366, %cst_216 {dimension_numbers = #tpu.dot_dimension_numbers<[1], [0], [0], [1], [0, 0, 1, 1], [], []>} : vector<2x16xf32>, vector<16x128xf32>, vector<2x128xf32> -> vector<2x128xf32>
    %cst_217 = arith.constant dense<0.000000e+00> : vector<2x128xf32>
    %638 = tpu.matmul %636, %367, %cst_217 {dimension_numbers = #tpu.dot_dimension_numbers<[1], [0], [0], [1], [0, 0, 1, 1], [], []>} : vector<2x16xf32>, vector<16x128xf32>, vector<2x128xf32> -> vector<2x128xf32>
    %639 = arith.addf %637, %638 : vector<2x128xf32>
    %640 = vector.broadcast %368 : vector<1x128xf32> to vector<2x128xf32>
    %641 = arith.addf %639, %640 : vector<2x128xf32>
    %642 = arith.index_cast %591 : i32 to index
    %c0_218 = arith.constant 0 : index
    %c0_219 = arith.constant 0 : index
    %643 = vector.load %arg14[%642, %c0_218, %c0_219] : memref<8x2x16xf32, #tpu.memory_space<vmem>>, vector<1x2x16xf32>
    %644 = vector.shape_cast %643 : vector<1x2x16xf32> to vector<2x16xf32>
    %645 = arith.index_cast %591 : i32 to index
    %c0_220 = arith.constant 0 : index
    %c0_221 = arith.constant 0 : index
    %646 = vector.load %arg15[%645, %c0_220, %c0_221] : memref<8x2x16xf32, #tpu.memory_space<vmem>>, vector<1x2x16xf32>
    %647 = vector.shape_cast %646 : vector<1x2x16xf32> to vector<2x16xf32>
    %cst_222 = arith.constant dense<0.000000e+00> : vector<2xf32>
    %648 = vector.multi_reduction <add>, %644, %cst_222 [1] : vector<2x16xf32> to vector<2xf32>
    %649 = vector.shape_cast %648 : vector<2xf32> to vector<2x1xf32>
    %cst_223 = arith.constant dense<0.000000e+00> : vector<2xf32>
    %650 = vector.multi_reduction <add>, %647, %cst_223 [1] : vector<2x16xf32> to vector<2xf32>
    %651 = vector.shape_cast %650 : vector<2xf32> to vector<2x1xf32>
    %652 = arith.addf %649, %651 : vector<2x1xf32>
    %cst_224 = arith.constant 3.200000e+01 : f32
    %653 = vector.broadcast %cst_224 : f32 to vector<2x1xf32>
    %654 = arith.divf %652, %653 : vector<2x1xf32>
    %655 = vector.broadcast %654 : vector<2x1xf32> to vector<2x16xf32>
    %656 = arith.subf %644, %655 : vector<2x16xf32>
    %657 = vector.broadcast %654 : vector<2x1xf32> to vector<2x16xf32>
    %658 = arith.subf %647, %657 : vector<2x16xf32>
    %659 = arith.mulf %656, %656 : vector<2x16xf32>
    %cst_225 = arith.constant dense<0.000000e+00> : vector<2xf32>
    %660 = vector.multi_reduction <add>, %659, %cst_225 [1] : vector<2x16xf32> to vector<2xf32>
    %661 = vector.shape_cast %660 : vector<2xf32> to vector<2x1xf32>
    %662 = arith.mulf %658, %658 : vector<2x16xf32>
    %cst_226 = arith.constant dense<0.000000e+00> : vector<2xf32>
    %663 = vector.multi_reduction <add>, %662, %cst_226 [1] : vector<2x16xf32> to vector<2xf32>
    %664 = vector.shape_cast %663 : vector<2xf32> to vector<2x1xf32>
    %665 = arith.addf %661, %664 : vector<2x1xf32>
    %cst_227 = arith.constant 3.200000e+01 : f32
    %666 = vector.broadcast %cst_227 : f32 to vector<2x1xf32>
    %667 = arith.divf %665, %666 : vector<2x1xf32>
    %cst_228 = arith.constant 9.99999974E-6 : f32
    %668 = vector.broadcast %cst_228 : f32 to vector<2x1xf32>
    %669 = arith.addf %667, %668 : vector<2x1xf32>
    %670 = math.rsqrt %669 : vector<2x1xf32>
    %671 = vector.broadcast %670 : vector<2x1xf32> to vector<2x16xf32>
    %672 = arith.mulf %656, %671 : vector<2x16xf32>
    %673 = vector.extract_strided_slice %363 {offsets = [0, 0], sizes = [1, 16], strides = [1, 1]} : vector<1x32xf32> to vector<1x16xf32>
    %674 = vector.broadcast %673 : vector<1x16xf32> to vector<2x16xf32>
    %675 = arith.mulf %672, %674 : vector<2x16xf32>
    %676 = vector.extract_strided_slice %364 {offsets = [0, 0], sizes = [1, 16], strides = [1, 1]} : vector<1x32xf32> to vector<1x16xf32>
    %677 = vector.broadcast %676 : vector<1x16xf32> to vector<2x16xf32>
    %678 = arith.addf %675, %677 : vector<2x16xf32>
    %679 = vector.broadcast %670 : vector<2x1xf32> to vector<2x16xf32>
    %680 = arith.mulf %658, %679 : vector<2x16xf32>
    %681 = vector.extract_strided_slice %363 {offsets = [0, 16], sizes = [1, 16], strides = [1, 1]} : vector<1x32xf32> to vector<1x16xf32>
    %682 = vector.broadcast %681 : vector<1x16xf32> to vector<2x16xf32>
    %683 = arith.mulf %680, %682 : vector<2x16xf32>
    %684 = vector.extract_strided_slice %364 {offsets = [0, 16], sizes = [1, 16], strides = [1, 1]} : vector<1x32xf32> to vector<1x16xf32>
    %685 = vector.broadcast %684 : vector<1x16xf32> to vector<2x16xf32>
    %686 = arith.addf %683, %685 : vector<2x16xf32>
    %cst_229 = arith.constant dense<0.000000e+00> : vector<2x128xf32>
    %687 = tpu.matmul %678, %366, %cst_229 {dimension_numbers = #tpu.dot_dimension_numbers<[1], [0], [0], [1], [0, 0, 1, 1], [], []>} : vector<2x16xf32>, vector<16x128xf32>, vector<2x128xf32> -> vector<2x128xf32>
    %cst_230 = arith.constant dense<0.000000e+00> : vector<2x128xf32>
    %688 = tpu.matmul %686, %367, %cst_230 {dimension_numbers = #tpu.dot_dimension_numbers<[1], [0], [0], [1], [0, 0, 1, 1], [], []>} : vector<2x16xf32>, vector<16x128xf32>, vector<2x128xf32> -> vector<2x128xf32>
    %689 = arith.addf %687, %688 : vector<2x128xf32>
    %690 = vector.broadcast %368 : vector<1x128xf32> to vector<2x128xf32>
    %691 = arith.addf %689, %690 : vector<2x128xf32>
    %692 = arith.select %18, %641, %691 : vector<2x128xi1>, vector<2x128xf32>
    %693 = arith.index_cast %c2_i32_203 : i32 to index
    %c0_231 = arith.constant 0 : index
    %c0_232 = arith.constant 0 : index
    %694 = vector.load %arg13[%693, %c0_231, %c0_232] : memref<8x2x128xf32, #tpu.memory_space<vmem>>, vector<1x2x128xf32>
    %695 = vector.shape_cast %694 : vector<1x2x128xf32> to vector<2x128xf32>
    %696 = vector.shape_cast %692 : vector<2x128xf32> to vector<1x2x128xf32>
    tpu.vector_store %arg13[%693, %c0_231, %c0_232], %696 {strides = array<i32>} : memref<8x2x128xf32, #tpu.memory_space<vmem>>, vector<1x2x128xf32>,
    %697 = arith.select %18, %691, %641 : vector<2x128xi1>, vector<2x128xf32>
    %698 = arith.index_cast %591 : i32 to index
    %c0_233 = arith.constant 0 : index
    %c0_234 = arith.constant 0 : index
    %699 = vector.load %arg13[%698, %c0_233, %c0_234] : memref<8x2x128xf32, #tpu.memory_space<vmem>>, vector<1x2x128xf32>
    %700 = vector.shape_cast %699 : vector<1x2x128xf32> to vector<2x128xf32>
    %701 = vector.shape_cast %697 : vector<2x128xf32> to vector<1x2x128xf32>
    tpu.vector_store %arg13[%698, %c0_233, %c0_234], %701 {strides = array<i32>} : memref<8x2x128xf32, #tpu.memory_space<vmem>>, vector<1x2x128xf32>,
    %c3_i32_235 = arith.constant 3 : i32
    %c7_i32_236 = arith.constant 7 : i32
    %702 = arith.subi %c7_i32_236, %c3_i32_235 : i32
    %703 = arith.index_cast %c3_i32_235 : i32 to index
    %c0_237 = arith.constant 0 : index
    %c0_238 = arith.constant 0 : index
    %704 = vector.load %arg14[%703, %c0_237, %c0_238] : memref<8x2x16xf32, #tpu.memory_space<vmem>>, vector<1x2x16xf32>
    %705 = vector.shape_cast %704 : vector<1x2x16xf32> to vector<2x16xf32>
    %706 = arith.index_cast %c3_i32_235 : i32 to index
    %c0_239 = arith.constant 0 : index
    %c0_240 = arith.constant 0 : index
    %707 = vector.load %arg15[%706, %c0_239, %c0_240] : memref<8x2x16xf32, #tpu.memory_space<vmem>>, vector<1x2x16xf32>
    %708 = vector.shape_cast %707 : vector<1x2x16xf32> to vector<2x16xf32>
    %cst_241 = arith.constant dense<0.000000e+00> : vector<2xf32>
    %709 = vector.multi_reduction <add>, %705, %cst_241 [1] : vector<2x16xf32> to vector<2xf32>
    %710 = vector.shape_cast %709 : vector<2xf32> to vector<2x1xf32>
    %cst_242 = arith.constant dense<0.000000e+00> : vector<2xf32>
    %711 = vector.multi_reduction <add>, %708, %cst_242 [1] : vector<2x16xf32> to vector<2xf32>
    %712 = vector.shape_cast %711 : vector<2xf32> to vector<2x1xf32>
    %713 = arith.addf %710, %712 : vector<2x1xf32>
    %cst_243 = arith.constant 3.200000e+01 : f32
    %714 = vector.broadcast %cst_243 : f32 to vector<2x1xf32>
    %715 = arith.divf %713, %714 : vector<2x1xf32>
    %716 = vector.broadcast %715 : vector<2x1xf32> to vector<2x16xf32>
    %717 = arith.subf %705, %716 : vector<2x16xf32>
    %718 = vector.broadcast %715 : vector<2x1xf32> to vector<2x16xf32>
    %719 = arith.subf %708, %718 : vector<2x16xf32>
    %720 = arith.mulf %717, %717 : vector<2x16xf32>
    %cst_244 = arith.constant dense<0.000000e+00> : vector<2xf32>
    %721 = vector.multi_reduction <add>, %720, %cst_244 [1] : vector<2x16xf32> to vector<2xf32>
    %722 = vector.shape_cast %721 : vector<2xf32> to vector<2x1xf32>
    %723 = arith.mulf %719, %719 : vector<2x16xf32>
    %cst_245 = arith.constant dense<0.000000e+00> : vector<2xf32>
    %724 = vector.multi_reduction <add>, %723, %cst_245 [1] : vector<2x16xf32> to vector<2xf32>
    %725 = vector.shape_cast %724 : vector<2xf32> to vector<2x1xf32>
    %726 = arith.addf %722, %725 : vector<2x1xf32>
    %cst_246 = arith.constant 3.200000e+01 : f32
    %727 = vector.broadcast %cst_246 : f32 to vector<2x1xf32>
    %728 = arith.divf %726, %727 : vector<2x1xf32>
    %cst_247 = arith.constant 9.99999974E-6 : f32
    %729 = vector.broadcast %cst_247 : f32 to vector<2x1xf32>
    %730 = arith.addf %728, %729 : vector<2x1xf32>
    %731 = math.rsqrt %730 : vector<2x1xf32>
    %732 = vector.broadcast %731 : vector<2x1xf32> to vector<2x16xf32>
    %733 = arith.mulf %717, %732 : vector<2x16xf32>
    %734 = vector.extract_strided_slice %363 {offsets = [0, 0], sizes = [1, 16], strides = [1, 1]} : vector<1x32xf32> to vector<1x16xf32>
    %735 = vector.broadcast %734 : vector<1x16xf32> to vector<2x16xf32>
    %736 = arith.mulf %733, %735 : vector<2x16xf32>
    %737 = vector.extract_strided_slice %364 {offsets = [0, 0], sizes = [1, 16], strides = [1, 1]} : vector<1x32xf32> to vector<1x16xf32>
    %738 = vector.broadcast %737 : vector<1x16xf32> to vector<2x16xf32>
    %739 = arith.addf %736, %738 : vector<2x16xf32>
    %740 = vector.broadcast %731 : vector<2x1xf32> to vector<2x16xf32>
    %741 = arith.mulf %719, %740 : vector<2x16xf32>
    %742 = vector.extract_strided_slice %363 {offsets = [0, 16], sizes = [1, 16], strides = [1, 1]} : vector<1x32xf32> to vector<1x16xf32>
    %743 = vector.broadcast %742 : vector<1x16xf32> to vector<2x16xf32>
    %744 = arith.mulf %741, %743 : vector<2x16xf32>
    %745 = vector.extract_strided_slice %364 {offsets = [0, 16], sizes = [1, 16], strides = [1, 1]} : vector<1x32xf32> to vector<1x16xf32>
    %746 = vector.broadcast %745 : vector<1x16xf32> to vector<2x16xf32>
    %747 = arith.addf %744, %746 : vector<2x16xf32>
    %cst_248 = arith.constant dense<0.000000e+00> : vector<2x128xf32>
    %748 = tpu.matmul %739, %366, %cst_248 {dimension_numbers = #tpu.dot_dimension_numbers<[1], [0], [0], [1], [0, 0, 1, 1], [], []>} : vector<2x16xf32>, vector<16x128xf32>, vector<2x128xf32> -> vector<2x128xf32>
    %cst_249 = arith.constant dense<0.000000e+00> : vector<2x128xf32>
    %749 = tpu.matmul %747, %367, %cst_249 {dimension_numbers = #tpu.dot_dimension_numbers<[1], [0], [0], [1], [0, 0, 1, 1], [], []>} : vector<2x16xf32>, vector<16x128xf32>, vector<2x128xf32> -> vector<2x128xf32>
    %750 = arith.addf %748, %749 : vector<2x128xf32>
    %751 = vector.broadcast %368 : vector<1x128xf32> to vector<2x128xf32>
    %752 = arith.addf %750, %751 : vector<2x128xf32>
    %753 = arith.index_cast %702 : i32 to index
    %c0_250 = arith.constant 0 : index
    %c0_251 = arith.constant 0 : index
    %754 = vector.load %arg14[%753, %c0_250, %c0_251] : memref<8x2x16xf32, #tpu.memory_space<vmem>>, vector<1x2x16xf32>
    %755 = vector.shape_cast %754 : vector<1x2x16xf32> to vector<2x16xf32>
    %756 = arith.index_cast %702 : i32 to index
    %c0_252 = arith.constant 0 : index
    %c0_253 = arith.constant 0 : index
    %757 = vector.load %arg15[%756, %c0_252, %c0_253] : memref<8x2x16xf32, #tpu.memory_space<vmem>>, vector<1x2x16xf32>
    %758 = vector.shape_cast %757 : vector<1x2x16xf32> to vector<2x16xf32>
    %cst_254 = arith.constant dense<0.000000e+00> : vector<2xf32>
    %759 = vector.multi_reduction <add>, %755, %cst_254 [1] : vector<2x16xf32> to vector<2xf32>
    %760 = vector.shape_cast %759 : vector<2xf32> to vector<2x1xf32>
    %cst_255 = arith.constant dense<0.000000e+00> : vector<2xf32>
    %761 = vector.multi_reduction <add>, %758, %cst_255 [1] : vector<2x16xf32> to vector<2xf32>
    %762 = vector.shape_cast %761 : vector<2xf32> to vector<2x1xf32>
    %763 = arith.addf %760, %762 : vector<2x1xf32>
    %cst_256 = arith.constant 3.200000e+01 : f32
    %764 = vector.broadcast %cst_256 : f32 to vector<2x1xf32>
    %765 = arith.divf %763, %764 : vector<2x1xf32>
    %766 = vector.broadcast %765 : vector<2x1xf32> to vector<2x16xf32>
    %767 = arith.subf %755, %766 : vector<2x16xf32>
    %768 = vector.broadcast %765 : vector<2x1xf32> to vector<2x16xf32>
    %769 = arith.subf %758, %768 : vector<2x16xf32>
    %770 = arith.mulf %767, %767 : vector<2x16xf32>
    %cst_257 = arith.constant dense<0.000000e+00> : vector<2xf32>
    %771 = vector.multi_reduction <add>, %770, %cst_257 [1] : vector<2x16xf32> to vector<2xf32>
    %772 = vector.shape_cast %771 : vector<2xf32> to vector<2x1xf32>
    %773 = arith.mulf %769, %769 : vector<2x16xf32>
    %cst_258 = arith.constant dense<0.000000e+00> : vector<2xf32>
    %774 = vector.multi_reduction <add>, %773, %cst_258 [1] : vector<2x16xf32> to vector<2xf32>
    %775 = vector.shape_cast %774 : vector<2xf32> to vector<2x1xf32>
    %776 = arith.addf %772, %775 : vector<2x1xf32>
    %cst_259 = arith.constant 3.200000e+01 : f32
    %777 = vector.broadcast %cst_259 : f32 to vector<2x1xf32>
    %778 = arith.divf %776, %777 : vector<2x1xf32>
    %cst_260 = arith.constant 9.99999974E-6 : f32
    %779 = vector.broadcast %cst_260 : f32 to vector<2x1xf32>
    %780 = arith.addf %778, %779 : vector<2x1xf32>
    %781 = math.rsqrt %780 : vector<2x1xf32>
    %782 = vector.broadcast %781 : vector<2x1xf32> to vector<2x16xf32>
    %783 = arith.mulf %767, %782 : vector<2x16xf32>
    %784 = vector.extract_strided_slice %363 {offsets = [0, 0], sizes = [1, 16], strides = [1, 1]} : vector<1x32xf32> to vector<1x16xf32>
    %785 = vector.broadcast %784 : vector<1x16xf32> to vector<2x16xf32>
    %786 = arith.mulf %783, %785 : vector<2x16xf32>
    %787 = vector.extract_strided_slice %364 {offsets = [0, 0], sizes = [1, 16], strides = [1, 1]} : vector<1x32xf32> to vector<1x16xf32>
    %788 = vector.broadcast %787 : vector<1x16xf32> to vector<2x16xf32>
    %789 = arith.addf %786, %788 : vector<2x16xf32>
    %790 = vector.broadcast %781 : vector<2x1xf32> to vector<2x16xf32>
    %791 = arith.mulf %769, %790 : vector<2x16xf32>
    %792 = vector.extract_strided_slice %363 {offsets = [0, 16], sizes = [1, 16], strides = [1, 1]} : vector<1x32xf32> to vector<1x16xf32>
    %793 = vector.broadcast %792 : vector<1x16xf32> to vector<2x16xf32>
    %794 = arith.mulf %791, %793 : vector<2x16xf32>
    %795 = vector.extract_strided_slice %364 {offsets = [0, 16], sizes = [1, 16], strides = [1, 1]} : vector<1x32xf32> to vector<1x16xf32>
    %796 = vector.broadcast %795 : vector<1x16xf32> to vector<2x16xf32>
    %797 = arith.addf %794, %796 : vector<2x16xf32>
    %cst_261 = arith.constant dense<0.000000e+00> : vector<2x128xf32>
    %798 = tpu.matmul %789, %366, %cst_261 {dimension_numbers = #tpu.dot_dimension_numbers<[1], [0], [0], [1], [0, 0, 1, 1], [], []>} : vector<2x16xf32>, vector<16x128xf32>, vector<2x128xf32> -> vector<2x128xf32>
    %cst_262 = arith.constant dense<0.000000e+00> : vector<2x128xf32>
    %799 = tpu.matmul %797, %367, %cst_262 {dimension_numbers = #tpu.dot_dimension_numbers<[1], [0], [0], [1], [0, 0, 1, 1], [], []>} : vector<2x16xf32>, vector<16x128xf32>, vector<2x128xf32> -> vector<2x128xf32>
    %800 = arith.addf %798, %799 : vector<2x128xf32>
    %801 = vector.broadcast %368 : vector<1x128xf32> to vector<2x128xf32>
    %802 = arith.addf %800, %801 : vector<2x128xf32>
    %803 = arith.select %18, %752, %802 : vector<2x128xi1>, vector<2x128xf32>
    %804 = arith.index_cast %c3_i32_235 : i32 to index
    %c0_263 = arith.constant 0 : index
    %c0_264 = arith.constant 0 : index
    %805 = vector.load %arg13[%804, %c0_263, %c0_264] : memref<8x2x128xf32, #tpu.memory_space<vmem>>, vector<1x2x128xf32>
    %806 = vector.shape_cast %805 : vector<1x2x128xf32> to vector<2x128xf32>
    %807 = vector.shape_cast %803 : vector<2x128xf32> to vector<1x2x128xf32>
    tpu.vector_store %arg13[%804, %c0_263, %c0_264], %807 {strides = array<i32>} : memref<8x2x128xf32, #tpu.memory_space<vmem>>, vector<1x2x128xf32>,
    %808 = arith.select %18, %802, %752 : vector<2x128xi1>, vector<2x128xf32>
    %809 = arith.index_cast %702 : i32 to index
    %c0_265 = arith.constant 0 : index
    %c0_266 = arith.constant 0 : index
    %810 = vector.load %arg13[%809, %c0_265, %c0_266] : memref<8x2x128xf32, #tpu.memory_space<vmem>>, vector<1x2x128xf32>
    %811 = vector.shape_cast %810 : vector<1x2x128xf32> to vector<2x128xf32>
    %812 = vector.shape_cast %808 : vector<2x128xf32> to vector<1x2x128xf32>
    tpu.vector_store %arg13[%809, %c0_265, %c0_266], %812 {strides = array<i32>} : memref<8x2x128xf32, #tpu.memory_space<vmem>>, vector<1x2x128xf32>,
    %c4_i32_267 = arith.constant 4 : i32
    %c0_268 = arith.constant 0 : index
    %c0_269 = arith.constant 0 : index
    %813 = vector.load %arg6[%c0_268, %c0_269] : memref<32x128xf32, #tpu.memory_space<vmem>>, vector<32x128xf32>
    %cst_270 = arith.constant 0.000000e+00 : f32
    %814 = vector.broadcast %cst_270 : f32 to vector<2x32xf32>
    %c0_i32_271 = arith.constant 0 : i32
    %cst_272 = arith.constant dense<0.000000e+00> : vector<2x128xf32>
    %815 = tpu.matmul %814, %813, %cst_272 {dimension_numbers = #tpu.dot_dimension_numbers<[1], [0], [0], [1], [0, 0, 1, 1], [], []>} : vector<2x32xf32>, vector<32x128xf32>, vector<2x128xf32> -> vector<2x128xf32>
    %816 = arith.index_cast %c0_i32_271 : i32 to index
    %c0_273 = arith.constant 0 : index
    %c0_274 = arith.constant 0 : index
    %817 = vector.load %arg13[%816, %c0_273, %c0_274] : memref<8x2x128xf32, #tpu.memory_space<vmem>>, vector<1x2x128xf32>
    %818 = vector.shape_cast %817 : vector<1x2x128xf32> to vector<2x128xf32>
    %819 = arith.addf %815, %818 : vector<2x128xf32>
    %820 = arith.negf %819 : vector<2x128xf32>
    %821 = math.exp %820 : vector<2x128xf32>
    %cst_275 = arith.constant 1.000000e+00 : f32
    %822 = vector.broadcast %cst_275 : f32 to vector<2x128xf32>
    %823 = arith.addf %822, %821 : vector<2x128xf32>
    %824 = arith.divf %822, %823 : vector<2x128xf32>
    %825 = math.tanh %819 : vector<2x128xf32>
    %826 = vector.extract_strided_slice %824 {offsets = [0, 0], sizes = [2, 32], strides = [1, 1]} : vector<2x128xf32> to vector<2x32xf32>
    %827 = vector.extract_strided_slice %824 {offsets = [0, 32], sizes = [2, 32], strides = [1, 1]} : vector<2x128xf32> to vector<2x32xf32>
    %828 = vector.extract_strided_slice %825 {offsets = [0, 64], sizes = [2, 32], strides = [1, 1]} : vector<2x128xf32> to vector<2x32xf32>
    %829 = vector.extract_strided_slice %824 {offsets = [0, 96], sizes = [2, 32], strides = [1, 1]} : vector<2x128xf32> to vector<2x32xf32>
    %830 = arith.mulf %827, %814 : vector<2x32xf32>
    %831 = arith.mulf %826, %828 : vector<2x32xf32>
    %832 = arith.addf %830, %831 : vector<2x32xf32>
    %833 = math.tanh %832 : vector<2x32xf32>
    %834 = arith.mulf %829, %833 : vector<2x32xf32>
    %835 = vector.extract_strided_slice %834 {offsets = [0, 0], sizes = [2, 16], strides = [1, 1]} : vector<2x32xf32> to vector<2x16xf32>
    %836 = arith.index_cast %c0_i32_271 : i32 to index
    %c0_276 = arith.constant 0 : index
    %c0_277 = arith.constant 0 : index
    %837 = vector.load %arg14[%836, %c0_276, %c0_277] : memref<8x2x16xf32, #tpu.memory_space<vmem>>, vector<1x2x16xf32>
    %838 = vector.shape_cast %837 : vector<1x2x16xf32> to vector<2x16xf32>
    %839 = vector.shape_cast %835 : vector<2x16xf32> to vector<1x2x16xf32>
    tpu.vector_store %arg14[%836, %c0_276, %c0_277], %839 {strides = array<i32>} : memref<8x2x16xf32, #tpu.memory_space<vmem>>, vector<1x2x16xf32>,
    %840 = vector.extract_strided_slice %834 {offsets = [0, 16], sizes = [2, 16], strides = [1, 1]} : vector<2x32xf32> to vector<2x16xf32>
    %c7_i32_278 = arith.constant 7 : i32
    %841 = arith.subi %c7_i32_278, %c0_i32_271 : i32
    %842 = arith.index_cast %841 : i32 to index
    %c0_279 = arith.constant 0 : index
    %c0_280 = arith.constant 0 : index
    %843 = vector.load %arg15[%842, %c0_279, %c0_280] : memref<8x2x16xf32, #tpu.memory_space<vmem>>, vector<1x2x16xf32>
    %844 = vector.shape_cast %843 : vector<1x2x16xf32> to vector<2x16xf32>
    %845 = vector.shape_cast %840 : vector<2x16xf32> to vector<1x2x16xf32>
    tpu.vector_store %arg15[%842, %c0_279, %c0_280], %845 {strides = array<i32>} : memref<8x2x16xf32, #tpu.memory_space<vmem>>, vector<1x2x16xf32>,
    %c1_i32_281 = arith.constant 1 : i32
    %cst_282 = arith.constant dense<0.000000e+00> : vector<2x128xf32>
    %846 = tpu.matmul %834, %813, %cst_282 {dimension_numbers = #tpu.dot_dimension_numbers<[1], [0], [0], [1], [0, 0, 1, 1], [], []>} : vector<2x32xf32>, vector<32x128xf32>, vector<2x128xf32> -> vector<2x128xf32>
    %847 = arith.index_cast %c1_i32_281 : i32 to index
    %c0_283 = arith.constant 0 : index
    %c0_284 = arith.constant 0 : index
    %848 = vector.load %arg13[%847, %c0_283, %c0_284] : memref<8x2x128xf32, #tpu.memory_space<vmem>>, vector<1x2x128xf32>
    %849 = vector.shape_cast %848 : vector<1x2x128xf32> to vector<2x128xf32>
    %850 = arith.addf %846, %849 : vector<2x128xf32>
    %851 = arith.negf %850 : vector<2x128xf32>
    %852 = math.exp %851 : vector<2x128xf32>
    %cst_285 = arith.constant 1.000000e+00 : f32
    %853 = vector.broadcast %cst_285 : f32 to vector<2x128xf32>
    %854 = arith.addf %853, %852 : vector<2x128xf32>
    %855 = arith.divf %853, %854 : vector<2x128xf32>
    %856 = math.tanh %850 : vector<2x128xf32>
    %857 = vector.extract_strided_slice %855 {offsets = [0, 0], sizes = [2, 32], strides = [1, 1]} : vector<2x128xf32> to vector<2x32xf32>
    %858 = vector.extract_strided_slice %855 {offsets = [0, 32], sizes = [2, 32], strides = [1, 1]} : vector<2x128xf32> to vector<2x32xf32>
    %859 = vector.extract_strided_slice %856 {offsets = [0, 64], sizes = [2, 32], strides = [1, 1]} : vector<2x128xf32> to vector<2x32xf32>
    %860 = vector.extract_strided_slice %855 {offsets = [0, 96], sizes = [2, 32], strides = [1, 1]} : vector<2x128xf32> to vector<2x32xf32>
    %861 = arith.mulf %858, %832 : vector<2x32xf32>
    %862 = arith.mulf %857, %859 : vector<2x32xf32>
    %863 = arith.addf %861, %862 : vector<2x32xf32>
    %864 = math.tanh %863 : vector<2x32xf32>
    %865 = arith.mulf %860, %864 : vector<2x32xf32>
    %866 = vector.extract_strided_slice %865 {offsets = [0, 0], sizes = [2, 16], strides = [1, 1]} : vector<2x32xf32> to vector<2x16xf32>
    %867 = arith.index_cast %c1_i32_281 : i32 to index
    %c0_286 = arith.constant 0 : index
    %c0_287 = arith.constant 0 : index
    %868 = vector.load %arg14[%867, %c0_286, %c0_287] : memref<8x2x16xf32, #tpu.memory_space<vmem>>, vector<1x2x16xf32>
    %869 = vector.shape_cast %868 : vector<1x2x16xf32> to vector<2x16xf32>
    %870 = vector.shape_cast %866 : vector<2x16xf32> to vector<1x2x16xf32>
    tpu.vector_store %arg14[%867, %c0_286, %c0_287], %870 {strides = array<i32>} : memref<8x2x16xf32, #tpu.memory_space<vmem>>, vector<1x2x16xf32>,
    %871 = vector.extract_strided_slice %865 {offsets = [0, 16], sizes = [2, 16], strides = [1, 1]} : vector<2x32xf32> to vector<2x16xf32>
    %c7_i32_288 = arith.constant 7 : i32
    %872 = arith.subi %c7_i32_288, %c1_i32_281 : i32
    %873 = arith.index_cast %872 : i32 to index
    %c0_289 = arith.constant 0 : index
    %c0_290 = arith.constant 0 : index
    %874 = vector.load %arg15[%873, %c0_289, %c0_290] : memref<8x2x16xf32, #tpu.memory_space<vmem>>, vector<1x2x16xf32>
    %875 = vector.shape_cast %874 : vector<1x2x16xf32> to vector<2x16xf32>
    %876 = vector.shape_cast %871 : vector<2x16xf32> to vector<1x2x16xf32>
    tpu.vector_store %arg15[%873, %c0_289, %c0_290], %876 {strides = array<i32>} : memref<8x2x16xf32, #tpu.memory_space<vmem>>, vector<1x2x16xf32>,
    %c2_i32_291 = arith.constant 2 : i32
    %cst_292 = arith.constant dense<0.000000e+00> : vector<2x128xf32>
    %877 = tpu.matmul %865, %813, %cst_292 {dimension_numbers = #tpu.dot_dimension_numbers<[1], [0], [0], [1], [0, 0, 1, 1], [], []>} : vector<2x32xf32>, vector<32x128xf32>, vector<2x128xf32> -> vector<2x128xf32>
    %878 = arith.index_cast %c2_i32_291 : i32 to index
    %c0_293 = arith.constant 0 : index
    %c0_294 = arith.constant 0 : index
    %879 = vector.load %arg13[%878, %c0_293, %c0_294] : memref<8x2x128xf32, #tpu.memory_space<vmem>>, vector<1x2x128xf32>
    %880 = vector.shape_cast %879 : vector<1x2x128xf32> to vector<2x128xf32>
    %881 = arith.addf %877, %880 : vector<2x128xf32>
    %882 = arith.negf %881 : vector<2x128xf32>
    %883 = math.exp %882 : vector<2x128xf32>
    %cst_295 = arith.constant 1.000000e+00 : f32
    %884 = vector.broadcast %cst_295 : f32 to vector<2x128xf32>
    %885 = arith.addf %884, %883 : vector<2x128xf32>
    %886 = arith.divf %884, %885 : vector<2x128xf32>
    %887 = math.tanh %881 : vector<2x128xf32>
    %888 = vector.extract_strided_slice %886 {offsets = [0, 0], sizes = [2, 32], strides = [1, 1]} : vector<2x128xf32> to vector<2x32xf32>
    %889 = vector.extract_strided_slice %886 {offsets = [0, 32], sizes = [2, 32], strides = [1, 1]} : vector<2x128xf32> to vector<2x32xf32>
    %890 = vector.extract_strided_slice %887 {offsets = [0, 64], sizes = [2, 32], strides = [1, 1]} : vector<2x128xf32> to vector<2x32xf32>
    %891 = vector.extract_strided_slice %886 {offsets = [0, 96], sizes = [2, 32], strides = [1, 1]} : vector<2x128xf32> to vector<2x32xf32>
    %892 = arith.mulf %889, %863 : vector<2x32xf32>
    %893 = arith.mulf %888, %890 : vector<2x32xf32>
    %894 = arith.addf %892, %893 : vector<2x32xf32>
    %895 = math.tanh %894 : vector<2x32xf32>
    %896 = arith.mulf %891, %895 : vector<2x32xf32>
    %897 = vector.extract_strided_slice %896 {offsets = [0, 0], sizes = [2, 16], strides = [1, 1]} : vector<2x32xf32> to vector<2x16xf32>
    %898 = arith.index_cast %c2_i32_291 : i32 to index
    %c0_296 = arith.constant 0 : index
    %c0_297 = arith.constant 0 : index
    %899 = vector.load %arg14[%898, %c0_296, %c0_297] : memref<8x2x16xf32, #tpu.memory_space<vmem>>, vector<1x2x16xf32>
    %900 = vector.shape_cast %899 : vector<1x2x16xf32> to vector<2x16xf32>
    %901 = vector.shape_cast %897 : vector<2x16xf32> to vector<1x2x16xf32>
    tpu.vector_store %arg14[%898, %c0_296, %c0_297], %901 {strides = array<i32>} : memref<8x2x16xf32, #tpu.memory_space<vmem>>, vector<1x2x16xf32>,
    %902 = vector.extract_strided_slice %896 {offsets = [0, 16], sizes = [2, 16], strides = [1, 1]} : vector<2x32xf32> to vector<2x16xf32>
    %c7_i32_298 = arith.constant 7 : i32
    %903 = arith.subi %c7_i32_298, %c2_i32_291 : i32
    %904 = arith.index_cast %903 : i32 to index
    %c0_299 = arith.constant 0 : index
    %c0_300 = arith.constant 0 : index
    %905 = vector.load %arg15[%904, %c0_299, %c0_300] : memref<8x2x16xf32, #tpu.memory_space<vmem>>, vector<1x2x16xf32>
    %906 = vector.shape_cast %905 : vector<1x2x16xf32> to vector<2x16xf32>
    %907 = vector.shape_cast %902 : vector<2x16xf32> to vector<1x2x16xf32>
    tpu.vector_store %arg15[%904, %c0_299, %c0_300], %907 {strides = array<i32>} : memref<8x2x16xf32, #tpu.memory_space<vmem>>, vector<1x2x16xf32>,
    %c3_i32_301 = arith.constant 3 : i32
    %cst_302 = arith.constant dense<0.000000e+00> : vector<2x128xf32>
    %908 = tpu.matmul %896, %813, %cst_302 {dimension_numbers = #tpu.dot_dimension_numbers<[1], [0], [0], [1], [0, 0, 1, 1], [], []>} : vector<2x32xf32>, vector<32x128xf32>, vector<2x128xf32> -> vector<2x128xf32>
    %909 = arith.index_cast %c3_i32_301 : i32 to index
    %c0_303 = arith.constant 0 : index
    %c0_304 = arith.constant 0 : index
    %910 = vector.load %arg13[%909, %c0_303, %c0_304] : memref<8x2x128xf32, #tpu.memory_space<vmem>>, vector<1x2x128xf32>
    %911 = vector.shape_cast %910 : vector<1x2x128xf32> to vector<2x128xf32>
    %912 = arith.addf %908, %911 : vector<2x128xf32>
    %913 = arith.negf %912 : vector<2x128xf32>
    %914 = math.exp %913 : vector<2x128xf32>
    %cst_305 = arith.constant 1.000000e+00 : f32
    %915 = vector.broadcast %cst_305 : f32 to vector<2x128xf32>
    %916 = arith.addf %915, %914 : vector<2x128xf32>
    %917 = arith.divf %915, %916 : vector<2x128xf32>
    %918 = math.tanh %912 : vector<2x128xf32>
    %919 = vector.extract_strided_slice %917 {offsets = [0, 0], sizes = [2, 32], strides = [1, 1]} : vector<2x128xf32> to vector<2x32xf32>
    %920 = vector.extract_strided_slice %917 {offsets = [0, 32], sizes = [2, 32], strides = [1, 1]} : vector<2x128xf32> to vector<2x32xf32>
    %921 = vector.extract_strided_slice %918 {offsets = [0, 64], sizes = [2, 32], strides = [1, 1]} : vector<2x128xf32> to vector<2x32xf32>
    %922 = vector.extract_strided_slice %917 {offsets = [0, 96], sizes = [2, 32], strides = [1, 1]} : vector<2x128xf32> to vector<2x32xf32>
    %923 = arith.mulf %920, %894 : vector<2x32xf32>
    %924 = arith.mulf %919, %921 : vector<2x32xf32>
    %925 = arith.addf %923, %924 : vector<2x32xf32>
    %926 = math.tanh %925 : vector<2x32xf32>
    %927 = arith.mulf %922, %926 : vector<2x32xf32>
    %928 = vector.extract_strided_slice %927 {offsets = [0, 0], sizes = [2, 16], strides = [1, 1]} : vector<2x32xf32> to vector<2x16xf32>
    %929 = arith.index_cast %c3_i32_301 : i32 to index
    %c0_306 = arith.constant 0 : index
    %c0_307 = arith.constant 0 : index
    %930 = vector.load %arg14[%929, %c0_306, %c0_307] : memref<8x2x16xf32, #tpu.memory_space<vmem>>, vector<1x2x16xf32>
    %931 = vector.shape_cast %930 : vector<1x2x16xf32> to vector<2x16xf32>
    %932 = vector.shape_cast %928 : vector<2x16xf32> to vector<1x2x16xf32>
    tpu.vector_store %arg14[%929, %c0_306, %c0_307], %932 {strides = array<i32>} : memref<8x2x16xf32, #tpu.memory_space<vmem>>, vector<1x2x16xf32>,
    %933 = vector.extract_strided_slice %927 {offsets = [0, 16], sizes = [2, 16], strides = [1, 1]} : vector<2x32xf32> to vector<2x16xf32>
    %c7_i32_308 = arith.constant 7 : i32
    %934 = arith.subi %c7_i32_308, %c3_i32_301 : i32
    %935 = arith.index_cast %934 : i32 to index
    %c0_309 = arith.constant 0 : index
    %c0_310 = arith.constant 0 : index
    %936 = vector.load %arg15[%935, %c0_309, %c0_310] : memref<8x2x16xf32, #tpu.memory_space<vmem>>, vector<1x2x16xf32>
    %937 = vector.shape_cast %936 : vector<1x2x16xf32> to vector<2x16xf32>
    %938 = vector.shape_cast %933 : vector<2x16xf32> to vector<1x2x16xf32>
    tpu.vector_store %arg15[%935, %c0_309, %c0_310], %938 {strides = array<i32>} : memref<8x2x16xf32, #tpu.memory_space<vmem>>, vector<1x2x16xf32>,
    %c4_i32_311 = arith.constant 4 : i32
    %cst_312 = arith.constant dense<0.000000e+00> : vector<2x128xf32>
    %939 = tpu.matmul %927, %813, %cst_312 {dimension_numbers = #tpu.dot_dimension_numbers<[1], [0], [0], [1], [0, 0, 1, 1], [], []>} : vector<2x32xf32>, vector<32x128xf32>, vector<2x128xf32> -> vector<2x128xf32>
    %940 = arith.index_cast %c4_i32_311 : i32 to index
    %c0_313 = arith.constant 0 : index
    %c0_314 = arith.constant 0 : index
    %941 = vector.load %arg13[%940, %c0_313, %c0_314] : memref<8x2x128xf32, #tpu.memory_space<vmem>>, vector<1x2x128xf32>
    %942 = vector.shape_cast %941 : vector<1x2x128xf32> to vector<2x128xf32>
    %943 = arith.addf %939, %942 : vector<2x128xf32>
    %944 = arith.negf %943 : vector<2x128xf32>
    %945 = math.exp %944 : vector<2x128xf32>
    %cst_315 = arith.constant 1.000000e+00 : f32
    %946 = vector.broadcast %cst_315 : f32 to vector<2x128xf32>
    %947 = arith.addf %946, %945 : vector<2x128xf32>
    %948 = arith.divf %946, %947 : vector<2x128xf32>
    %949 = math.tanh %943 : vector<2x128xf32>
    %950 = vector.extract_strided_slice %948 {offsets = [0, 0], sizes = [2, 32], strides = [1, 1]} : vector<2x128xf32> to vector<2x32xf32>
    %951 = vector.extract_strided_slice %948 {offsets = [0, 32], sizes = [2, 32], strides = [1, 1]} : vector<2x128xf32> to vector<2x32xf32>
    %952 = vector.extract_strided_slice %949 {offsets = [0, 64], sizes = [2, 32], strides = [1, 1]} : vector<2x128xf32> to vector<2x32xf32>
    %953 = vector.extract_strided_slice %948 {offsets = [0, 96], sizes = [2, 32], strides = [1, 1]} : vector<2x128xf32> to vector<2x32xf32>
    %954 = arith.mulf %951, %925 : vector<2x32xf32>
    %955 = arith.mulf %950, %952 : vector<2x32xf32>
    %956 = arith.addf %954, %955 : vector<2x32xf32>
    %957 = math.tanh %956 : vector<2x32xf32>
    %958 = arith.mulf %953, %957 : vector<2x32xf32>
    %959 = vector.extract_strided_slice %958 {offsets = [0, 0], sizes = [2, 16], strides = [1, 1]} : vector<2x32xf32> to vector<2x16xf32>
    %960 = arith.index_cast %c4_i32_311 : i32 to index
    %c0_316 = arith.constant 0 : index
    %c0_317 = arith.constant 0 : index
    %961 = vector.load %arg14[%960, %c0_316, %c0_317] : memref<8x2x16xf32, #tpu.memory_space<vmem>>, vector<1x2x16xf32>
    %962 = vector.shape_cast %961 : vector<1x2x16xf32> to vector<2x16xf32>
    %963 = vector.shape_cast %959 : vector<2x16xf32> to vector<1x2x16xf32>
    tpu.vector_store %arg14[%960, %c0_316, %c0_317], %963 {strides = array<i32>} : memref<8x2x16xf32, #tpu.memory_space<vmem>>, vector<1x2x16xf32>,
    %964 = vector.extract_strided_slice %958 {offsets = [0, 16], sizes = [2, 16], strides = [1, 1]} : vector<2x32xf32> to vector<2x16xf32>
    %c7_i32_318 = arith.constant 7 : i32
    %965 = arith.subi %c7_i32_318, %c4_i32_311 : i32
    %966 = arith.index_cast %965 : i32 to index
    %c0_319 = arith.constant 0 : index
    %c0_320 = arith.constant 0 : index
    %967 = vector.load %arg15[%966, %c0_319, %c0_320] : memref<8x2x16xf32, #tpu.memory_space<vmem>>, vector<1x2x16xf32>
    %968 = vector.shape_cast %967 : vector<1x2x16xf32> to vector<2x16xf32>
    %969 = vector.shape_cast %964 : vector<2x16xf32> to vector<1x2x16xf32>
    tpu.vector_store %arg15[%966, %c0_319, %c0_320], %969 {strides = array<i32>} : memref<8x2x16xf32, #tpu.memory_space<vmem>>, vector<1x2x16xf32>,
    %c5_i32_321 = arith.constant 5 : i32
    %cst_322 = arith.constant dense<0.000000e+00> : vector<2x128xf32>
    %970 = tpu.matmul %958, %813, %cst_322 {dimension_numbers = #tpu.dot_dimension_numbers<[1], [0], [0], [1], [0, 0, 1, 1], [], []>} : vector<2x32xf32>, vector<32x128xf32>, vector<2x128xf32> -> vector<2x128xf32>
    %971 = arith.index_cast %c5_i32_321 : i32 to index
    %c0_323 = arith.constant 0 : index
    %c0_324 = arith.constant 0 : index
    %972 = vector.load %arg13[%971, %c0_323, %c0_324] : memref<8x2x128xf32, #tpu.memory_space<vmem>>, vector<1x2x128xf32>
    %973 = vector.shape_cast %972 : vector<1x2x128xf32> to vector<2x128xf32>
    %974 = arith.addf %970, %973 : vector<2x128xf32>
    %975 = arith.negf %974 : vector<2x128xf32>
    %976 = math.exp %975 : vector<2x128xf32>
    %cst_325 = arith.constant 1.000000e+00 : f32
    %977 = vector.broadcast %cst_325 : f32 to vector<2x128xf32>
    %978 = arith.addf %977, %976 : vector<2x128xf32>
    %979 = arith.divf %977, %978 : vector<2x128xf32>
    %980 = math.tanh %974 : vector<2x128xf32>
    %981 = vector.extract_strided_slice %979 {offsets = [0, 0], sizes = [2, 32], strides = [1, 1]} : vector<2x128xf32> to vector<2x32xf32>
    %982 = vector.extract_strided_slice %979 {offsets = [0, 32], sizes = [2, 32], strides = [1, 1]} : vector<2x128xf32> to vector<2x32xf32>
    %983 = vector.extract_strided_slice %980 {offsets = [0, 64], sizes = [2, 32], strides = [1, 1]} : vector<2x128xf32> to vector<2x32xf32>
    %984 = vector.extract_strided_slice %979 {offsets = [0, 96], sizes = [2, 32], strides = [1, 1]} : vector<2x128xf32> to vector<2x32xf32>
    %985 = arith.mulf %982, %956 : vector<2x32xf32>
    %986 = arith.mulf %981, %983 : vector<2x32xf32>
    %987 = arith.addf %985, %986 : vector<2x32xf32>
    %988 = math.tanh %987 : vector<2x32xf32>
    %989 = arith.mulf %984, %988 : vector<2x32xf32>
    %990 = vector.extract_strided_slice %989 {offsets = [0, 0], sizes = [2, 16], strides = [1, 1]} : vector<2x32xf32> to vector<2x16xf32>
    %991 = arith.index_cast %c5_i32_321 : i32 to index
    %c0_326 = arith.constant 0 : index
    %c0_327 = arith.constant 0 : index
    %992 = vector.load %arg14[%991, %c0_326, %c0_327] : memref<8x2x16xf32, #tpu.memory_space<vmem>>, vector<1x2x16xf32>
    %993 = vector.shape_cast %992 : vector<1x2x16xf32> to vector<2x16xf32>
    %994 = vector.shape_cast %990 : vector<2x16xf32> to vector<1x2x16xf32>
    tpu.vector_store %arg14[%991, %c0_326, %c0_327], %994 {strides = array<i32>} : memref<8x2x16xf32, #tpu.memory_space<vmem>>, vector<1x2x16xf32>,
    %995 = vector.extract_strided_slice %989 {offsets = [0, 16], sizes = [2, 16], strides = [1, 1]} : vector<2x32xf32> to vector<2x16xf32>
    %c7_i32_328 = arith.constant 7 : i32
    %996 = arith.subi %c7_i32_328, %c5_i32_321 : i32
    %997 = arith.index_cast %996 : i32 to index
    %c0_329 = arith.constant 0 : index
    %c0_330 = arith.constant 0 : index
    %998 = vector.load %arg15[%997, %c0_329, %c0_330] : memref<8x2x16xf32, #tpu.memory_space<vmem>>, vector<1x2x16xf32>
    %999 = vector.shape_cast %998 : vector<1x2x16xf32> to vector<2x16xf32>
    %1000 = vector.shape_cast %995 : vector<2x16xf32> to vector<1x2x16xf32>
    tpu.vector_store %arg15[%997, %c0_329, %c0_330], %1000 {strides = array<i32>} : memref<8x2x16xf32, #tpu.memory_space<vmem>>, vector<1x2x16xf32>,
    %c6_i32_331 = arith.constant 6 : i32
    %cst_332 = arith.constant dense<0.000000e+00> : vector<2x128xf32>
    %1001 = tpu.matmul %989, %813, %cst_332 {dimension_numbers = #tpu.dot_dimension_numbers<[1], [0], [0], [1], [0, 0, 1, 1], [], []>} : vector<2x32xf32>, vector<32x128xf32>, vector<2x128xf32> -> vector<2x128xf32>
    %1002 = arith.index_cast %c6_i32_331 : i32 to index
    %c0_333 = arith.constant 0 : index
    %c0_334 = arith.constant 0 : index
    %1003 = vector.load %arg13[%1002, %c0_333, %c0_334] : memref<8x2x128xf32, #tpu.memory_space<vmem>>, vector<1x2x128xf32>
    %1004 = vector.shape_cast %1003 : vector<1x2x128xf32> to vector<2x128xf32>
    %1005 = arith.addf %1001, %1004 : vector<2x128xf32>
    %1006 = arith.negf %1005 : vector<2x128xf32>
    %1007 = math.exp %1006 : vector<2x128xf32>
    %cst_335 = arith.constant 1.000000e+00 : f32
    %1008 = vector.broadcast %cst_335 : f32 to vector<2x128xf32>
    %1009 = arith.addf %1008, %1007 : vector<2x128xf32>
    %1010 = arith.divf %1008, %1009 : vector<2x128xf32>
    %1011 = math.tanh %1005 : vector<2x128xf32>
    %1012 = vector.extract_strided_slice %1010 {offsets = [0, 0], sizes = [2, 32], strides = [1, 1]} : vector<2x128xf32> to vector<2x32xf32>
    %1013 = vector.extract_strided_slice %1010 {offsets = [0, 32], sizes = [2, 32], strides = [1, 1]} : vector<2x128xf32> to vector<2x32xf32>
    %1014 = vector.extract_strided_slice %1011 {offsets = [0, 64], sizes = [2, 32], strides = [1, 1]} : vector<2x128xf32> to vector<2x32xf32>
    %1015 = vector.extract_strided_slice %1010 {offsets = [0, 96], sizes = [2, 32], strides = [1, 1]} : vector<2x128xf32> to vector<2x32xf32>
    %1016 = arith.mulf %1013, %987 : vector<2x32xf32>
    %1017 = arith.mulf %1012, %1014 : vector<2x32xf32>
    %1018 = arith.addf %1016, %1017 : vector<2x32xf32>
    %1019 = math.tanh %1018 : vector<2x32xf32>
    %1020 = arith.mulf %1015, %1019 : vector<2x32xf32>
    %1021 = vector.extract_strided_slice %1020 {offsets = [0, 0], sizes = [2, 16], strides = [1, 1]} : vector<2x32xf32> to vector<2x16xf32>
    %1022 = arith.index_cast %c6_i32_331 : i32 to index
    %c0_336 = arith.constant 0 : index
    %c0_337 = arith.constant 0 : index
    %1023 = vector.load %arg14[%1022, %c0_336, %c0_337] : memref<8x2x16xf32, #tpu.memory_space<vmem>>, vector<1x2x16xf32>
    %1024 = vector.shape_cast %1023 : vector<1x2x16xf32> to vector<2x16xf32>
    %1025 = vector.shape_cast %1021 : vector<2x16xf32> to vector<1x2x16xf32>
    tpu.vector_store %arg14[%1022, %c0_336, %c0_337], %1025 {strides = array<i32>} : memref<8x2x16xf32, #tpu.memory_space<vmem>>, vector<1x2x16xf32>,
    %1026 = vector.extract_strided_slice %1020 {offsets = [0, 16], sizes = [2, 16], strides = [1, 1]} : vector<2x32xf32> to vector<2x16xf32>
    %c7_i32_338 = arith.constant 7 : i32
    %1027 = arith.subi %c7_i32_338, %c6_i32_331 : i32
    %1028 = arith.index_cast %1027 : i32 to index
    %c0_339 = arith.constant 0 : index
    %c0_340 = arith.constant 0 : index
    %1029 = vector.load %arg15[%1028, %c0_339, %c0_340] : memref<8x2x16xf32, #tpu.memory_space<vmem>>, vector<1x2x16xf32>
    %1030 = vector.shape_cast %1029 : vector<1x2x16xf32> to vector<2x16xf32>
    %1031 = vector.shape_cast %1026 : vector<2x16xf32> to vector<1x2x16xf32>
    tpu.vector_store %arg15[%1028, %c0_339, %c0_340], %1031 {strides = array<i32>} : memref<8x2x16xf32, #tpu.memory_space<vmem>>, vector<1x2x16xf32>,
    %c7_i32_341 = arith.constant 7 : i32
    %cst_342 = arith.constant dense<0.000000e+00> : vector<2x128xf32>
    %1032 = tpu.matmul %1020, %813, %cst_342 {dimension_numbers = #tpu.dot_dimension_numbers<[1], [0], [0], [1], [0, 0, 1, 1], [], []>} : vector<2x32xf32>, vector<32x128xf32>, vector<2x128xf32> -> vector<2x128xf32>
    %1033 = arith.index_cast %c7_i32_341 : i32 to index
    %c0_343 = arith.constant 0 : index
    %c0_344 = arith.constant 0 : index
    %1034 = vector.load %arg13[%1033, %c0_343, %c0_344] : memref<8x2x128xf32, #tpu.memory_space<vmem>>, vector<1x2x128xf32>
    %1035 = vector.shape_cast %1034 : vector<1x2x128xf32> to vector<2x128xf32>
    %1036 = arith.addf %1032, %1035 : vector<2x128xf32>
    %1037 = arith.negf %1036 : vector<2x128xf32>
    %1038 = math.exp %1037 : vector<2x128xf32>
    %cst_345 = arith.constant 1.000000e+00 : f32
    %1039 = vector.broadcast %cst_345 : f32 to vector<2x128xf32>
    %1040 = arith.addf %1039, %1038 : vector<2x128xf32>
    %1041 = arith.divf %1039, %1040 : vector<2x128xf32>
    %1042 = math.tanh %1036 : vector<2x128xf32>
    %1043 = vector.extract_strided_slice %1041 {offsets = [0, 0], sizes = [2, 32], strides = [1, 1]} : vector<2x128xf32> to vector<2x32xf32>
    %1044 = vector.extract_strided_slice %1041 {offsets = [0, 32], sizes = [2, 32], strides = [1, 1]} : vector<2x128xf32> to vector<2x32xf32>
    %1045 = vector.extract_strided_slice %1042 {offsets = [0, 64], sizes = [2, 32], strides = [1, 1]} : vector<2x128xf32> to vector<2x32xf32>
    %1046 = vector.extract_strided_slice %1041 {offsets = [0, 96], sizes = [2, 32], strides = [1, 1]} : vector<2x128xf32> to vector<2x32xf32>
    %1047 = arith.mulf %1044, %1018 : vector<2x32xf32>
    %1048 = arith.mulf %1043, %1045 : vector<2x32xf32>
    %1049 = arith.addf %1047, %1048 : vector<2x32xf32>
    %1050 = math.tanh %1049 : vector<2x32xf32>
    %1051 = arith.mulf %1046, %1050 : vector<2x32xf32>
    %1052 = vector.extract_strided_slice %1051 {offsets = [0, 0], sizes = [2, 16], strides = [1, 1]} : vector<2x32xf32> to vector<2x16xf32>
    %1053 = arith.index_cast %c7_i32_341 : i32 to index
    %c0_346 = arith.constant 0 : index
    %c0_347 = arith.constant 0 : index
    %1054 = vector.load %arg14[%1053, %c0_346, %c0_347] : memref<8x2x16xf32, #tpu.memory_space<vmem>>, vector<1x2x16xf32>
    %1055 = vector.shape_cast %1054 : vector<1x2x16xf32> to vector<2x16xf32>
    %1056 = vector.shape_cast %1052 : vector<2x16xf32> to vector<1x2x16xf32>
    tpu.vector_store %arg14[%1053, %c0_346, %c0_347], %1056 {strides = array<i32>} : memref<8x2x16xf32, #tpu.memory_space<vmem>>, vector<1x2x16xf32>,
    %1057 = vector.extract_strided_slice %1051 {offsets = [0, 16], sizes = [2, 16], strides = [1, 1]} : vector<2x32xf32> to vector<2x16xf32>
    %c7_i32_348 = arith.constant 7 : i32
    %1058 = arith.subi %c7_i32_348, %c7_i32_341 : i32
    %1059 = arith.index_cast %1058 : i32 to index
    %c0_349 = arith.constant 0 : index
    %c0_350 = arith.constant 0 : index
    %1060 = vector.load %arg15[%1059, %c0_349, %c0_350] : memref<8x2x16xf32, #tpu.memory_space<vmem>>, vector<1x2x16xf32>
    %1061 = vector.shape_cast %1060 : vector<1x2x16xf32> to vector<2x16xf32>
    %1062 = vector.shape_cast %1057 : vector<2x16xf32> to vector<1x2x16xf32>
    tpu.vector_store %arg15[%1059, %c0_349, %c0_350], %1062 {strides = array<i32>} : memref<8x2x16xf32, #tpu.memory_space<vmem>>, vector<1x2x16xf32>,
    %c8_i32_351 = arith.constant 8 : i32
    %c0_352 = arith.constant 0 : index
    %c0_353 = arith.constant 0 : index
    %1063 = vector.load %arg10[%c0_352, %c0_353] : memref<1x32xf32, #tpu.memory_space<vmem>>, vector<1x32xf32>
    %c0_354 = arith.constant 0 : index
    %c0_355 = arith.constant 0 : index
    %1064 = vector.load %arg11[%c0_354, %c0_355] : memref<1x32xf32, #tpu.memory_space<vmem>>, vector<1x32xf32>
    %c0_356 = arith.constant 0 : index
    %c0_357 = arith.constant 0 : index
    %c0_358 = arith.constant 0 : index
    %1065 = vector.load %arg14[%c0_356, %c0_357, %c0_358] : memref<8x2x16xf32, #tpu.memory_space<vmem>>, vector<8x2x16xf32>
    %c0_359 = arith.constant 0 : index
    %c0_360 = arith.constant 0 : index
    %c0_361 = arith.constant 0 : index
    %1066 = vector.load %arg15[%c0_359, %c0_360, %c0_361] : memref<8x2x16xf32, #tpu.memory_space<vmem>>, vector<8x2x16xf32>
    %cst_362 = arith.constant dense<0.000000e+00> : vector<8x2xf32>
    %1067 = vector.multi_reduction <add>, %1065, %cst_362 [2] : vector<8x2x16xf32> to vector<8x2xf32>
    %1068 = vector.shape_cast %1067 : vector<8x2xf32> to vector<8x2x1xf32>
    %cst_363 = arith.constant dense<0.000000e+00> : vector<8x2xf32>
    %1069 = vector.multi_reduction <add>, %1066, %cst_363 [2] : vector<8x2x16xf32> to vector<8x2xf32>
    %1070 = vector.shape_cast %1069 : vector<8x2xf32> to vector<8x2x1xf32>
    %1071 = arith.addf %1068, %1070 : vector<8x2x1xf32>
    %cst_364 = arith.constant 3.200000e+01 : f32
    %1072 = vector.broadcast %cst_364 : f32 to vector<8x2x1xf32>
    %1073 = arith.divf %1071, %1072 : vector<8x2x1xf32>
    %1074 = vector.broadcast %1073 : vector<8x2x1xf32> to vector<8x2x16xf32>
    %1075 = arith.subf %1065, %1074 : vector<8x2x16xf32>
    %1076 = vector.broadcast %1073 : vector<8x2x1xf32> to vector<8x2x16xf32>
    %1077 = arith.subf %1066, %1076 : vector<8x2x16xf32>
    %1078 = arith.mulf %1075, %1075 : vector<8x2x16xf32>
    %cst_365 = arith.constant dense<0.000000e+00> : vector<8x2xf32>
    %1079 = vector.multi_reduction <add>, %1078, %cst_365 [2] : vector<8x2x16xf32> to vector<8x2xf32>
    %1080 = vector.shape_cast %1079 : vector<8x2xf32> to vector<8x2x1xf32>
    %1081 = arith.mulf %1077, %1077 : vector<8x2x16xf32>
    %cst_366 = arith.constant dense<0.000000e+00> : vector<8x2xf32>
    %1082 = vector.multi_reduction <add>, %1081, %cst_366 [2] : vector<8x2x16xf32> to vector<8x2xf32>
    %1083 = vector.shape_cast %1082 : vector<8x2xf32> to vector<8x2x1xf32>
    %1084 = arith.addf %1080, %1083 : vector<8x2x1xf32>
    %cst_367 = arith.constant 3.200000e+01 : f32
    %1085 = vector.broadcast %cst_367 : f32 to vector<8x2x1xf32>
    %1086 = arith.divf %1084, %1085 : vector<8x2x1xf32>
    %cst_368 = arith.constant 9.99999974E-6 : f32
    %1087 = vector.broadcast %cst_368 : f32 to vector<8x2x1xf32>
    %1088 = arith.addf %1086, %1087 : vector<8x2x1xf32>
    %1089 = math.rsqrt %1088 : vector<8x2x1xf32>
    %1090 = vector.broadcast %1089 : vector<8x2x1xf32> to vector<8x2x16xf32>
    %1091 = arith.mulf %1075, %1090 : vector<8x2x16xf32>
    %1092 = vector.extract_strided_slice %1063 {offsets = [0, 0], sizes = [1, 16], strides = [1, 1]} : vector<1x32xf32> to vector<1x16xf32>
    %1093 = vector.shape_cast %1092 : vector<1x16xf32> to vector<1x1x16xf32>
    %1094 = vector.broadcast %1093 : vector<1x1x16xf32> to vector<8x2x16xf32>
    %1095 = arith.mulf %1091, %1094 : vector<8x2x16xf32>
    %1096 = vector.extract_strided_slice %1064 {offsets = [0, 0], sizes = [1, 16], strides = [1, 1]} : vector<1x32xf32> to vector<1x16xf32>
    %1097 = vector.shape_cast %1096 : vector<1x16xf32> to vector<1x1x16xf32>
    %1098 = vector.broadcast %1097 : vector<1x1x16xf32> to vector<8x2x16xf32>
    %1099 = arith.addf %1095, %1098 : vector<8x2x16xf32>
    %c0_369 = arith.constant 0 : index
    %c0_370 = arith.constant 0 : index
    %c0_371 = arith.constant 0 : index
    %1100 = vector.load %arg12[%c0_369, %c0_370, %c0_371] : memref<8x2x32xf32, #tpu.memory_space<vmem>>, vector<8x2x16xf32>
    tpu.vector_store %arg12[%c0_369, %c0_370, %c0_371], %1099 {strides = array<i32>} : memref<8x2x32xf32, #tpu.memory_space<vmem>>, vector<8x2x16xf32>,
    %1101 = vector.broadcast %1089 : vector<8x2x1xf32> to vector<8x2x16xf32>
    %1102 = arith.mulf %1077, %1101 : vector<8x2x16xf32>
    %1103 = vector.extract_strided_slice %1063 {offsets = [0, 16], sizes = [1, 16], strides = [1, 1]} : vector<1x32xf32> to vector<1x16xf32>
    %1104 = vector.shape_cast %1103 : vector<1x16xf32> to vector<1x1x16xf32>
    %1105 = vector.broadcast %1104 : vector<1x1x16xf32> to vector<8x2x16xf32>
    %1106 = arith.mulf %1102, %1105 : vector<8x2x16xf32>
    %1107 = vector.extract_strided_slice %1064 {offsets = [0, 16], sizes = [1, 16], strides = [1, 1]} : vector<1x32xf32> to vector<1x16xf32>
    %1108 = vector.shape_cast %1107 : vector<1x16xf32> to vector<1x1x16xf32>
    %1109 = vector.broadcast %1108 : vector<1x1x16xf32> to vector<8x2x16xf32>
    %1110 = arith.addf %1106, %1109 : vector<8x2x16xf32>
    %c0_372 = arith.constant 0 : index
    %c0_373 = arith.constant 0 : index
    %c16 = arith.constant 16 : index
    %1111 = vector.load %arg12[%c0_372, %c0_373, %c16] : memref<8x2x32xf32, #tpu.memory_space<vmem>>, vector<8x2x16xf32>
    tpu.vector_store %arg12[%c0_372, %c0_373, %c16], %1110 {strides = array<i32>} : memref<8x2x32xf32, #tpu.memory_space<vmem>>, vector<8x2x16xf32>,
    return
  }
  func.func @transform_0(%arg0: i32) -> (i32, i32, i32) {
    %c0_i32 = arith.constant 0 : i32
    %c0_i32_0 = arith.constant 0 : i32
    %c0_i32_1 = arith.constant 0 : i32
    %c0_i32_2 = arith.constant 0 : i32
    return %c0_i32, %c0_i32_0, %c0_i32_1 : i32, i32, i32
  }
  func.func @transform_1(%arg0: i32) -> (i32, i32) {
    %c0_i32 = arith.constant 0 : i32
    %c0_i32_0 = arith.constant 0 : i32
    %c0_i32_1 = arith.constant 0 : i32
    return %c0_i32, %c0_i32_0 : i32, i32
  }
  func.func @transform_2(%arg0: i32) -> (i32, i32) {
    %c0_i32 = arith.constant 0 : i32
    %c0_i32_0 = arith.constant 0 : i32
    %c0_i32_1 = arith.constant 0 : i32
    return %c0_i32, %c0_i32_0 : i32, i32
  }
  func.func @transform_3(%arg0: i32) -> (i32, i32) {
    %c0_i32 = arith.constant 0 : i32
    %c0_i32_0 = arith.constant 0 : i32
    %c0_i32_1 = arith.constant 0 : i32
    return %c0_i32, %c0_i32_0 : i32, i32
  }
  func.func @transform_4(%arg0: i32) -> (i32, i32) {
    %c0_i32 = arith.constant 0 : i32
    %c0_i32_0 = arith.constant 0 : i32
    %c0_i32_1 = arith.constant 0 : i32
    return %c0_i32, %c0_i32_0 : i32, i32
  }
  func.func @transform_5(%arg0: i32) -> (i32, i32) {
    %c0_i32 = arith.constant 0 : i32
    %c0_i32_0 = arith.constant 0 : i32
    %c0_i32_1 = arith.constant 0 : i32
    return %c0_i32, %c0_i32_0 : i32, i32
  }
  func.func @transform_6(%arg0: i32) -> (i32, i32) {
    %c0_i32 = arith.constant 0 : i32
    %c0_i32_0 = arith.constant 0 : i32
    %c0_i32_1 = arith.constant 0 : i32
    return %c0_i32, %c0_i32_0 : i32, i32
  }
  func.func @transform_7(%arg0: i32) -> (i32, i32) {
    %c0_i32 = arith.constant 0 : i32
    %c0_i32_0 = arith.constant 0 : i32
    %c0_i32_1 = arith.constant 0 : i32
    return %c0_i32, %c0_i32_0 : i32, i32
  }
  func.func @transform_8(%arg0: i32) -> (i32, i32) {
    %c0_i32 = arith.constant 0 : i32
    %c0_i32_0 = arith.constant 0 : i32
    %c0_i32_1 = arith.constant 0 : i32
    return %c0_i32, %c0_i32_0 : i32, i32
  }
  func.func @transform_9(%arg0: i32) -> (i32, i32) {
    %c0_i32 = arith.constant 0 : i32
    %c0_i32_0 = arith.constant 0 : i32
    %c0_i32_1 = arith.constant 0 : i32
    return %c0_i32, %c0_i32_0 : i32, i32
  }
  func.func @transform_10(%arg0: i32) -> (i32, i32) {
    %c0_i32 = arith.constant 0 : i32
    %c0_i32_0 = arith.constant 0 : i32
    %c0_i32_1 = arith.constant 0 : i32
    return %c0_i32, %c0_i32_0 : i32, i32
  }
  func.func @transform_11(%arg0: i32) -> (i32, i32, i32) {
    %c0_i32 = arith.constant 0 : i32
    %c0_i32_0 = arith.constant 0 : i32
    %c0_i32_1 = arith.constant 0 : i32
    %c0_i32_2 = arith.constant 0 : i32
    return %c0_i32, %c0_i32_0, %c0_i32_1 : i32, i32, i32
  }
}

</mosaic_0001>

<llo_original>
// kernel: _lambda_.1
$region0: #{_lambda_.1}
  #allocation0 [shape = 'u32[]', space=smem, size = 0x4, offset = 0x4, fixed_abs, tag = 'smem constant byte address 0x4 - core index']
  #allocation1 [shape = 'u32[144,128]{1,0:T(1,128)}', space=vmem, size = 0x12000, scoped, tag = 'internal scratch']
  #allocation2 [shape = 'f32[8,2,128]{2,1,0:T(2,128)}', space=vmem, size = 0x2000, scoped, tag = 'scratch operand']
  #allocation3 [shape = 'f32[8,2,16]{2,1,0:T(2,128)}', space=vmem, size = 0x2000, scoped, tag = 'scratch operand']
  #allocation4 [shape = 'f32[8,2,16]{2,1,0:T(2,128)}', space=vmem, size = 0x2000, scoped, tag = 'scratch operand']
  %s0 = inlined_call_operand.vmem [shape: f32[8,2,32], index: 0, kind: input, shape index: {}]
  %s1 = inlined_call_operand.vmem [shape: f32[32,128], index: 1, kind: input, shape index: {}]
  %s2 = inlined_call_operand.vmem [shape: f32[32,128], index: 2, kind: input, shape index: {}]
  %s3 = inlined_call_operand.vmem [shape: f32[1,128], index: 3, kind: input, shape index: {}]
  %s4 = inlined_call_operand.vmem [shape: f32[32,128], index: 4, kind: input, shape index: {}]
  %s5 = inlined_call_operand.vmem [shape: f32[32,128], index: 5, kind: input, shape index: {}]
  %s6 = inlined_call_operand.vmem [shape: f32[1,128], index: 6, kind: input, shape index: {}]
  %s7 = inlined_call_operand.vmem [shape: f32[1,32], index: 7, kind: input, shape index: {}]
  %s8 = inlined_call_operand.vmem [shape: f32[1,32], index: 8, kind: input, shape index: {}]
  %s9 = inlined_call_operand.vmem [shape: f32[1,32], index: 9, kind: input, shape index: {}]
  %s10 = inlined_call_operand.vmem [shape: f32[1,32], index: 10, kind: input, shape index: {}]
  %s11 = inlined_call_operand.vmem [shape: f32[8,2,32], index: 11, kind: output, shape index: {}]
  %s12 = sld [smem:[#allocation0]]
  $region54: #{_lambda_.1} parent=0
    _
  %s14 = ssub.s32 1, %s12
  %s15 = scalar_select 0, %s14, %s12
  // Predicated region
  $region2: #{_lambda_.1} parent=0 // pred_check
    _
  $region3: #{_lambda_.1} parent=0 // pred_check_branch
    %17 = sbr.rel (0) target = $region5
  $region4: #{_lambda_.1} parent=0 // pred_region
    _
  $region5: #{_lambda_.1} parent=0 // pred_fallthru
    _
  // Predicated region
  $region6: #{_lambda_.1} parent=0 // pred_check
    _
  $region7: #{_lambda_.1} parent=0 // pred_check_branch
    %19 = sbr.rel (0) target = $region9
  $region8: #{_lambda_.1} parent=0 // pred_region
    _
  $region9: #{_lambda_.1} parent=0 // pred_fallthru
    _
  // Predicated region
  $region10: #{_lambda_.1} parent=0 // pred_check
    _
  $region11: #{_lambda_.1} parent=0 // pred_check_branch
    %21 = sbr.rel (0) target = $region13
  $region12: #{_lambda_.1} parent=0 // pred_region
    _
  $region13: #{_lambda_.1} parent=0 // pred_fallthru
    _
  // Predicated region
  $region14: #{_lambda_.1} parent=0 // pred_check
    _
  $region15: #{_lambda_.1} parent=0 // pred_check_branch
    %23 = sbr.rel (0) target = $region17
  $region16: #{_lambda_.1} parent=0 // pred_region
    _
  $region17: #{_lambda_.1} parent=0 // pred_fallthru
    _
  // Predicated region
  $region18: #{_lambda_.1} parent=0 // pred_check
    _
  $region19: #{_lambda_.1} parent=0 // pred_check_branch
    %25 = sbr.rel (0) target = $region21
  $region20: #{_lambda_.1} parent=0 // pred_region
    _
  $region21: #{_lambda_.1} parent=0 // pred_fallthru
    _
  // Predicated region
  $region22: #{_lambda_.1} parent=0 // pred_check
    _
  $region23: #{_lambda_.1} parent=0 // pred_check_branch
    %27 = sbr.rel (0) target = $region25
  $region24: #{_lambda_.1} parent=0 // pred_region
    _
  $region25: #{_lambda_.1} parent=0 // pred_fallthru
    _
  // Predicated region
  $region26: #{_lambda_.1} parent=0 // pred_check
    _
  $region27: #{_lambda_.1} parent=0 // pred_check_branch
    %29 = sbr.rel (0) target = $region29
  $region28: #{_lambda_.1} parent=0 // pred_region
    _
  $region29: #{_lambda_.1} parent=0 // pred_fallthru
    _
  // Predicated region
  $region30: #{_lambda_.1} parent=0 // pred_check
    _
  $region31: #{_lambda_.1} parent=0 // pred_check_branch
    %31 = sbr.rel (0) target = $region33
  $region32: #{_lambda_.1} parent=0 // pred_region
    _
  $region33: #{_lambda_.1} parent=0 // pred_fallthru
    _
  // Predicated region
  $region34: #{_lambda_.1} parent=0 // pred_check
    _
  $region35: #{_lambda_.1} parent=0 // pred_check_branch
    %33 = sbr.rel (0) target = $region37
  $region36: #{_lambda_.1} parent=0 // pred_region
    _
  $region37: #{_lambda_.1} parent=0 // pred_fallthru
    _
  // Predicated region
  $region38: #{_lambda_.1} parent=0 // pred_check
    _
  $region39: #{_lambda_.1} parent=0 // pred_check_branch
    %35 = sbr.rel (0) target = $region41
  $region40: #{_lambda_.1} parent=0 // pred_region
    _
  $region41: #{_lambda_.1} parent=0 // pred_fallthru
    _
  // Predicated region
  $region42: #{_lambda_.1} parent=0 // pred_check
    _
  $region43: #{_lambda_.1} parent=0 // pred_check_branch
    %37 = sbr.rel (0) target = $region45
  $region44: #{_lambda_.1} parent=0 // pred_region
    _
  $region45: #{_lambda_.1} parent=0 // pred_fallthru
    _
  %v38 = vlaneseq
  %v39 = vand.u32 %v38, 127
  %vm40 = vcmp.lt.s32.totalorder %v39, 0
  %v41 = vsub.s32 0, %v39
  %v42 = vsel %vm40, %v41, %v39
  %v43 = vshrl.u32 %v42, 5
  %v44 = vand.u32 %v42, 31
  %v45 = vsub.s32 0, %v44
  %v46 = vsel %vm40, %v45, %v44
  %vm47 = vcmp.ne.s32.totalorder %v46, 0
  %vm48 = vcmp.lt.s32.totalorder %v46, 0
  %vm49 = vmand %vm48, %vm47
  %v50 = vadd.s32 %v46, 32
  %v51 = vsel %vm49, %v50, %v46
  %vm52 = vcmp.lt.s32.totalorder %v51, 16
  %v53 = vld [vmem:[%s1] sm:$0xff]
  %v54 = vld [vmem:[%s1 + $0x8] sm:$0xff]
  %v55 = vld [vmem:[%s1 + $0x10] sm:$0xff]
  %v56 = vld [vmem:[%s1 + $0x18] sm:$0xff]
  %v57 = vld [vmem:[%s3] sm:$0x1]
  %v58 = vld [vmem:[%s0] sm:$0x3]
  %v60 = vlaneseq
  %v61 = vshrl.u32 %v60, 7
  %v62 = vsub.s32 0, %v61
  %v63 = vrot.slane %v57, %v62
  %vm65 = vcmask 261120
  %v67 = vsel %vm65, %v58, 0
  %69 = vmatprep.subr.mxu0 0.0
  %70 = vmatpush1.msra.mxu0 0.0
  %71 = vmatprep.subr.mxu0 0.0
  %72 = vmatpush1.msra.mxu0 0.0
  %73 = vmatprep.subr.mxu0 0.0
  %74 = vmatpush1.msra.mxu0 0.0
  %75 = vmatprep.subr.mxu0 0.0
  %76 = vmatpush1.msra.mxu0 0.0
  %77 = vmatprep.subr.mxu0 0.0
  %78 = vmatpush1.msra.mxu0 0.0
  %79 = vmatprep.subr.mxu0 0.0
  %80 = vmatpush1.msra.mxu0 0.0
  %81 = vmatprep.subr.mxu0 0.0
  %82 = vmatpush1.msra.mxu0 0.0
  %83 = vmatprep.subr.mxu0 0.0
  %84 = vmatpush1.msra.mxu0 0.0
  %85 = vmatprep.subr.mxu0 0.0
  %86 = vmatpush1.msra.mxu0 0.0
  %87 = vmatprep.subr.mxu0 0.0
  %88 = vmatpush1.msra.mxu0 0.0
  %89 = vmatprep.subr.mxu0 0.0
  %90 = vmatpush1.msra.mxu0 0.0
  %91 = vmatprep.subr.mxu0 0.0
  %92 = vmatpush1.msra.mxu0 0.0
  %93 = vmatprep.subr.mxu0 0.0
  %94 = vmatpush1.msra.mxu0 %v56
  %95 = vmatprep.subr.mxu0 0.0
  %96 = vmatpush1.msra.mxu0 %v55
  %97 = vmatprep.subr.mxu0 0.0
  %98 = vmatpush1.msra.mxu0 %v54
  %99 = vmatprep.subr.mxu0 0.0
  %100 = vmatpush1.msra.mxu0 %v53
  %101 = vmatprep.subr.mxu0 0.0
  %102 = vmatpush2.msra.mxu0 0.0
  %103 = vmatprep.subr.mxu0 0.0
  %104 = vmatpush2.msra.mxu0 0.0
  %105 = vmatprep.subr.mxu0 0.0
  %106 = vmatpush2.msra.mxu0 0.0
  %107 = vmatprep.subr.mxu0 0.0
  %108 = vmatpush2.msra.mxu0 0.0
  %109 = vmatprep.subr.mxu0 0.0
  %110 = vmatpush2.msra.mxu0 0.0
  %111 = vmatprep.subr.mxu0 0.0
  %112 = vmatpush2.msra.mxu0 0.0
  %113 = vmatprep.subr.mxu0 0.0
  %114 = vmatpush2.msra.mxu0 0.0
  %115 = vmatprep.subr.mxu0 0.0
  %116 = vmatpush2.msra.mxu0 0.0
  %117 = vmatprep.subr.mxu0 0.0
  %118 = vmatpush2.msra.mxu0 0.0
  %119 = vmatprep.subr.mxu0 0.0
  %120 = vmatpush2.msra.mxu0 0.0
  %121 = vmatprep.subr.mxu0 0.0
  %122 = vmatpush2.msra.mxu0 0.0
  %123 = vmatprep.subr.mxu0 0.0
  %124 = vmatpush2.msra.mxu0 0.0
  %125 = vmatprep.subr.mxu0 0.0
  %126 = vmatpush2.msra.mxu0 0.0
  %127 = vmatprep.subr.mxu0 0.0
  %128 = vmatpush2.msra.mxu0 0.0
  %129 = vmatprep.subr.mxu0 0.0
  %130 = vmatpush2.msra.mxu0 0.0
  %131 = vmatprep.subr.mxu0 0.0
  %132 = vmatpush2.msra.mxu0 0.0
  %133 = vmatprep.mubr.f32.mxu0 0.0
  %134 = vmatmul.mubr.f32.gmra.mxu0 %v67
  %v135 = vpop.f32.mrf.mxu0
  %v136 = vadd.f32 %v63, %v135
  %v137 = vpop.f32.mrf.mxu0
  %138 = vdwg.mxu0
  %s139 = scalar_lea.vmem %s0, 14
  %v140 = vld [vmem:[%s139] sm:$0x3]
  %v142 = vsel %vm65, %v140, 0
  %144 = vmatprep.subr.mxu0 0.0
  %145 = vmatpush1.msra.mxu0 0.0
  %146 = vmatprep.subr.mxu0 0.0
  %147 = vmatpush1.msra.mxu0 0.0
  %148 = vmatprep.subr.mxu0 0.0
  %149 = vmatpush1.msra.mxu0 0.0
  %150 = vmatprep.subr.mxu0 0.0
  %151 = vmatpush1.msra.mxu0 0.0
  %152 = vmatprep.subr.mxu0 0.0
  %153 = vmatpush1.msra.mxu0 0.0
  %154 = vmatprep.subr.mxu0 0.0
  %155 = vmatpush1.msra.mxu0 0.0
  %156 = vmatprep.subr.mxu0 0.0
  %157 = vmatpush1.msra.mxu0 0.0
  %158 = vmatprep.subr.mxu0 0.0
  %159 = vmatpush1.msra.mxu0 0.0
  %160 = vmatprep.subr.mxu0 0.0
  %161 = vmatpush1.msra.mxu0 0.0
  %162 = vmatprep.subr.mxu0 0.0
  %163 = vmatpush1.msra.mxu0 0.0
  %164 = vmatprep.subr.mxu0 0.0
  %165 = vmatpush1.msra.mxu0 0.0
  %166 = vmatprep.subr.mxu0 0.0
  %167 = vmatpush1.msra.mxu0 0.0
  %168 = vmatprep.subr.mxu0 0.0
  %169 = vmatpush1.msra.mxu0 %v56
  %170 = vmatprep.subr.mxu0 0.0
  %171 = vmatpush1.msra.mxu0 %v55
  %172 = vmatprep.subr.mxu0 0.0
  %173 = vmatpush1.msra.mxu0 %v54
  %174 = vmatprep.subr.mxu0 0.0
  %175 = vmatpush1.msra.mxu0 %v53
  %176 = vmatprep.subr.mxu0 0.0
  %177 = vmatpush2.msra.mxu0 0.0
  %178 = vmatprep.subr.mxu0 0.0
  %179 = vmatpush2.msra.mxu0 0.0
  %180 = vmatprep.subr.mxu0 0.0
  %181 = vmatpush2.msra.mxu0 0.0
  %182 = vmatprep.subr.mxu0 0.0
  %183 = vmatpush2.msra.mxu0 0.0
  %184 = vmatprep.subr.mxu0 0.0
  %185 = vmatpush2.msra.mxu0 0.0
  %186 = vmatprep.subr.mxu0 0.0
  %187 = vmatpush2.msra.mxu0 0.0
  %188 = vmatprep.subr.mxu0 0.0
  %189 = vmatpush2.msra.mxu0 0.0
  %190 = vmatprep.subr.mxu0 0.0
  %191 = vmatpush2.msra.mxu0 0.0
  %192 = vmatprep.subr.mxu0 0.0
  %193 = vmatpush2.msra.mxu0 0.0
  %194 = vmatprep.subr.mxu0 0.0
  %195 = vmatpush2.msra.mxu0 0.0
  %196 = vmatprep.subr.mxu0 0.0
  %197 = vmatpush2.msra.mxu0 0.0
  %198 = vmatprep.subr.mxu0 0.0
  %199 = vmatpush2.msra.mxu0 0.0
  %200 = vmatprep.subr.mxu0 0.0
  %201 = vmatpush2.msra.mxu0 0.0
  %202 = vmatprep.subr.mxu0 0.0
  %203 = vmatpush2.msra.mxu0 0.0
  %204 = vmatprep.subr.mxu0 0.0
  %205 = vmatpush2.msra.mxu0 0.0
  %206 = vmatprep.subr.mxu0 0.0
  %207 = vmatpush2.msra.mxu0 0.0
  %208 = vmatprep.mubr.f32.mxu0 0.0
  %209 = vmatmul.mubr.f32.gmra.mxu0 %v142
  %v210 = vpop.f32.mrf.mxu0
  %v211 = vadd.f32 %v63, %v210
  %v212 = vpop.f32.mrf.mxu0
  %213 = vdwg.mxu0
  %v214 = vsel %vm52, %v136, %v211
  %215 = vst [vmem:[#allocation2] sm:$0x3] %v214
  %v216 = vsel %vm52, %v211, %v136
  %s217 = scalar_lea.vmem [#allocation2], 14
  %218 = vst [vmem:[%s217] sm:$0x3] %v216
  %s219 = scalar_lea.vmem %s0, 2
  %v220 = vld [vmem:[%s219] sm:$0x3]
  %v222 = vsel %vm65, %v220, 0
  %224 = vmatprep.subr.mxu0 0.0
  %225 = vmatpush1.msra.mxu0 0.0
  %226 = vmatprep.subr.mxu0 0.0
  %227 = vmatpush1.msra.mxu0 0.0
  %228 = vmatprep.subr.mxu0 0.0
  %229 = vmatpush1.msra.mxu0 0.0
  %230 = vmatprep.subr.mxu0 0.0
  %231 = vmatpush1.msra.mxu0 0.0
  %232 = vmatprep.subr.mxu0 0.0
  %233 = vmatpush1.msra.mxu0 0.0
  %234 = vmatprep.subr.mxu0 0.0
  %235 = vmatpush1.msra.mxu0 0.0
  %236 = vmatprep.subr.mxu0 0.0
  %237 = vmatpush1.msra.mxu0 0.0
  %238 = vmatprep.subr.mxu0 0.0
  %239 = vmatpush1.msra.mxu0 0.0
  %240 = vmatprep.subr.mxu0 0.0
  %241 = vmatpush1.msra.mxu0 0.0
  %242 = vmatprep.subr.mxu0 0.0
  %243 = vmatpush1.msra.mxu0 0.0
  %244 = vmatprep.subr.mxu0 0.0
  %245 = vmatpush1.msra.mxu0 0.0
  %246 = vmatprep.subr.mxu0 0.0
  %247 = vmatpush1.msra.mxu0 0.0
  %248 = vmatprep.subr.mxu0 0.0
  %249 = vmatpush1.msra.mxu0 %v56
  %250 = vmatprep.subr.mxu0 0.0
  %251 = vmatpush1.msra.mxu0 %v55
  %252 = vmatprep.subr.mxu0 0.0
  %253 = vmatpush1.msra.mxu0 %v54
  %254 = vmatprep.subr.mxu0 0.0
  %255 = vmatpush1.msra.mxu0 %v53
  %256 = vmatprep.subr.mxu0 0.0
  %257 = vmatpush2.msra.mxu0 0.0
  %258 = vmatprep.subr.mxu0 0.0
  %259 = vmatpush2.msra.mxu0 0.0
  %260 = vmatprep.subr.mxu0 0.0
  %261 = vmatpush2.msra.mxu0 0.0
  %262 = vmatprep.subr.mxu0 0.0
  %263 = vmatpush2.msra.mxu0 0.0
  %264 = vmatprep.subr.mxu0 0.0
  %265 = vmatpush2.msra.mxu0 0.0
  %266 = vmatprep.subr.mxu0 0.0
  %267 = vmatpush2.msra.mxu0 0.0
  %268 = vmatprep.subr.mxu0 0.0
  %269 = vmatpush2.msra.mxu0 0.0
  %270 = vmatprep.subr.mxu0 0.0
  %271 = vmatpush2.msra.mxu0 0.0
  %272 = vmatprep.subr.mxu0 0.0
  %273 = vmatpush2.msra.mxu0 0.0
  %274 = vmatprep.subr.mxu0 0.0
  %275 = vmatpush2.msra.mxu0 0.0
  %276 = vmatprep.subr.mxu0 0.0
  %277 = vmatpush2.msra.mxu0 0.0
  %278 = vmatprep.subr.mxu0 0.0
  %279 = vmatpush2.msra.mxu0 0.0
  %280 = vmatprep.subr.mxu0 0.0
  %281 = vmatpush2.msra.mxu0 0.0
  %282 = vmatprep.subr.mxu0 0.0
  %283 = vmatpush2.msra.mxu0 0.0
  %284 = vmatprep.subr.mxu0 0.0
  %285 = vmatpush2.msra.mxu0 0.0
  %286 = vmatprep.subr.mxu0 0.0
  %287 = vmatpush2.msra.mxu0 0.0
  %288 = vmatprep.mubr.f32.mxu0 0.0
  %289 = vmatmul.mubr.f32.gmra.mxu0 %v222
  %v290 = vpop.f32.mrf.mxu0
  %v291 = vadd.f32 %v63, %v290
  %v292 = vpop.f32.mrf.mxu0
  %293 = vdwg.mxu0
  %s294 = scalar_lea.vmem %s0, 12
  %v295 = vld [vmem:[%s294] sm:$0x3]
  %v297 = vsel %vm65, %v295, 0
  %299 = vmatprep.subr.mxu0 0.0
  %300 = vmatpush1.msra.mxu0 0.0
  %301 = vmatprep.subr.mxu0 0.0
  %302 = vmatpush1.msra.mxu0 0.0
  %303 = vmatprep.subr.mxu0 0.0
  %304 = vmatpush1.msra.mxu0 0.0
  %305 = vmatprep.subr.mxu0 0.0
  %306 = vmatpush1.msra.mxu0 0.0
  %307 = vmatprep.subr.mxu0 0.0
  %308 = vmatpush1.msra.mxu0 0.0
  %309 = vmatprep.subr.mxu0 0.0
  %310 = vmatpush1.msra.mxu0 0.0
  %311 = vmatprep.subr.mxu0 0.0
  %312 = vmatpush1.msra.mxu0 0.0
  %313 = vmatprep.subr.mxu0 0.0
  %314 = vmatpush1.msra.mxu0 0.0
  %315 = vmatprep.subr.mxu0 0.0
  %316 = vmatpush1.msra.mxu0 0.0
  %317 = vmatprep.subr.mxu0 0.0
  %318 = vmatpush1.msra.mxu0 0.0
  %319 = vmatprep.subr.mxu0 0.0
  %320 = vmatpush1.msra.mxu0 0.0
  %321 = vmatprep.subr.mxu0 0.0
  %322 = vmatpush1.msra.mxu0 0.0
  %323 = vmatprep.subr.mxu0 0.0
  %324 = vmatpush1.msra.mxu0 %v56
  %325 = vmatprep.subr.mxu0 0.0
  %326 = vmatpush1.msra.mxu0 %v55
  %327 = vmatprep.subr.mxu0 0.0
  %328 = vmatpush1.msra.mxu0 %v54
  %329 = vmatprep.subr.mxu0 0.0
  %330 = vmatpush1.msra.mxu0 %v53
  %331 = vmatprep.subr.mxu0 0.0
  %332 = vmatpush2.msra.mxu0 0.0
  %333 = vmatprep.subr.mxu0 0.0
  %334 = vmatpush2.msra.mxu0 0.0
  %335 = vmatprep.subr.mxu0 0.0
  %336 = vmatpush2.msra.mxu0 0.0
  %337 = vmatprep.subr.mxu0 0.0
  %338 = vmatpush2.msra.mxu0 0.0
  %339 = vmatprep.subr.mxu0 0.0
  %340 = vmatpush2.msra.mxu0 0.0
  %341 = vmatprep.subr.mxu0 0.0
  %342 = vmatpush2.msra.mxu0 0.0
  %343 = vmatprep.subr.mxu0 0.0
  %344 = vmatpush2.msra.mxu0 0.0
  %345 = vmatprep.subr.mxu0 0.0
  %346 = vmatpush2.msra.mxu0 0.0
  %347 = vmatprep.subr.mxu0 0.0
  %348 = vmatpush2.msra.mxu0 0.0
  %349 = vmatprep.subr.mxu0 0.0
  %350 = vmatpush2.msra.mxu0 0.0
  %351 = vmatprep.subr.mxu0 0.0
  %352 = vmatpush2.msra.mxu0 0.0
  %353 = vmatprep.subr.mxu0 0.0
  %354 = vmatpush2.msra.mxu0 0.0
  %355 = vmatprep.subr.mxu0 0.0
  %356 = vmatpush2.msra.mxu0 0.0
  %357 = vmatprep.subr.mxu0 0.0
  %358 = vmatpush2.msra.mxu0 0.0
  %359 = vmatprep.subr.mxu0 0.0
  %360 = vmatpush2.msra.mxu0 0.0
  %361 = vmatprep.subr.mxu0 0.0
  %362 = vmatpush2.msra.mxu0 0.0
  %363 = vmatprep.mubr.f32.mxu0 0.0
  %364 = vmatmul.mubr.f32.gmra.mxu0 %v297
  %v365 = vpop.f32.mrf.mxu0
  %v366 = vadd.f32 %v63, %v365
  %v367 = vpop.f32.mrf.mxu0
  %368 = vdwg.mxu0
  %v369 = vsel %vm52, %v291, %v366
  %s370 = scalar_lea.vmem [#allocation2], 2
  %371 = vst [vmem:[%s370] sm:$0x3] %v369
  %v372 = vsel %vm52, %v366, %v291
  %s373 = scalar_lea.vmem [#allocation2], 12
  %374 = vst [vmem:[%s373] sm:$0x3] %v372
  %s375 = scalar_lea.vmem %s0, 4
  %v376 = vld [vmem:[%s375] sm:$0x3]
  %v378 = vsel %vm65, %v376, 0
  %380 = vmatprep.subr.mxu0 0.0
  %381 = vmatpush1.msra.mxu0 0.0
  %382 = vmatprep.subr.mxu0 0.0
  %383 = vmatpush1.msra.mxu0 0.0
  %384 = vmatprep.subr.mxu0 0.0
  %385 = vmatpush1.msra.mxu0 0.0
  %386 = vmatprep.subr.mxu0 0.0
  %387 = vmatpush1.msra.mxu0 0.0
  %388 = vmatprep.subr.mxu0 0.0
  %389 = vmatpush1.msra.mxu0 0.0
  %390 = vmatprep.subr.mxu0 0.0
  %391 = vmatpush1.msra.mxu0 0.0
  %392 = vmatprep.subr.mxu0 0.0
  %393 = vmatpush1.msra.mxu0 0.0
  %394 = vmatprep.subr.mxu0 0.0
  %395 = vmatpush1.msra.mxu0 0.0
  %396 = vmatprep.subr.mxu0 0.0
  %397 = vmatpush1.msra.mxu0 0.0
  %398 = vmatprep.subr.mxu0 0.0
  %399 = vmatpush1.msra.mxu0 0.0
  %400 = vmatprep.subr.mxu0 0.0
  %401 = vmatpush1.msra.mxu0 0.0
  %402 = vmatprep.subr.mxu0 0.0
  %403 = vmatpush1.msra.mxu0 0.0
  %404 = vmatprep.subr.mxu0 0.0
  %405 = vmatpush1.msra.mxu0 %v56
  %406 = vmatprep.subr.mxu0 0.0
  %407 = vmatpush1.msra.mxu0 %v55
  %408 = vmatprep.subr.mxu0 0.0
  %409 = vmatpush1.msra.mxu0 %v54
  %410 = vmatprep.subr.mxu0 0.0
  %411 = vmatpush1.msra.mxu0 %v53
  %412 = vmatprep.subr.mxu0 0.0
  %413 = vmatpush2.msra.mxu0 0.0
  %414 = vmatprep.subr.mxu0 0.0
  %415 = vmatpush2.msra.mxu0 0.0
  %416 = vmatprep.subr.mxu0 0.0
  %417 = vmatpush2.msra.mxu0 0.0
  %418 = vmatprep.subr.mxu0 0.0
  %419 = vmatpush2.msra.mxu0 0.0
  %420 = vmatprep.subr.mxu0 0.0
  %421 = vmatpush2.msra.mxu0 0.0
  %422 = vmatprep.subr.mxu0 0.0
  %423 = vmatpush2.msra.mxu0 0.0
  %424 = vmatprep.subr.mxu0 0.0
  %425 = vmatpush2.msra.mxu0 0.0
  %426 = vmatprep.subr.mxu0 0.0
  %427 = vmatpush2.msra.mxu0 0.0
  %428 = vmatprep.subr.mxu0 0.0
  %429 = vmatpush2.msra.mxu0 0.0
  %430 = vmatprep.subr.mxu0 0.0
  %431 = vmatpush2.msra.mxu0 0.0
  %432 = vmatprep.subr.mxu0 0.0
  %433 = vmatpush2.msra.mxu0 0.0
  %434 = vmatprep.subr.mxu0 0.0
  %435 = vmatpush2.msra.mxu0 0.0
  %436 = vmatprep.subr.mxu0 0.0
  %437 = vmatpush2.msra.mxu0 0.0
  %438 = vmatprep.subr.mxu0 0.0
  %439 = vmatpush2.msra.mxu0 0.0
  %440 = vmatprep.subr.mxu0 0.0
  %441 = vmatpush2.msra.mxu0 0.0
  %442 = vmatprep.subr.mxu0 0.0
  %443 = vmatpush2.msra.mxu0 0.0
  %444 = vmatprep.mubr.f32.mxu0 0.0
  %445 = vmatmul.mubr.f32.gmra.mxu0 %v378
  %v446 = vpop.f32.mrf.mxu0
  %v447 = vadd.f32 %v63, %v446
  %v448 = vpop.f32.mrf.mxu0
  %449 = vdwg.mxu0
  %s450 = scalar_lea.vmem %s0, 10
  %v451 = vld [vmem:[%s450] sm:$0x3]
  %v453 = vsel %vm65, %v451, 0
  %455 = vmatprep.subr.mxu0 0.0
  %456 = vmatpush1.msra.mxu0 0.0
  %457 = vmatprep.subr.mxu0 0.0
  %458 = vmatpush1.msra.mxu0 0.0
  %459 = vmatprep.subr.mxu0 0.0
  %460 = vmatpush1.msra.mxu0 0.0
  %461 = vmatprep.subr.mxu0 0.0
  %462 = vmatpush1.msra.mxu0 0.0
  %463 = vmatprep.subr.mxu0 0.0
  %464 = vmatpush1.msra.mxu0 0.0
  %465 = vmatprep.subr.mxu0 0.0
  %466 = vmatpush1.msra.mxu0 0.0
  %467 = vmatprep.subr.mxu0 0.0
  %468 = vmatpush1.msra.mxu0 0.0
  %469 = vmatprep.subr.mxu0 0.0
  %470 = vmatpush1.msra.mxu0 0.0
  %471 = vmatprep.subr.mxu0 0.0
  %472 = vmatpush1.msra.mxu0 0.0
  %473 = vmatprep.subr.mxu0 0.0
  %474 = vmatpush1.msra.mxu0 0.0
  %475 = vmatprep.subr.mxu0 0.0
  %476 = vmatpush1.msra.mxu0 0.0
  %477 = vmatprep.subr.mxu0 0.0
  %478 = vmatpush1.msra.mxu0 0.0
  %479 = vmatprep.subr.mxu0 0.0
  %480 = vmatpush1.msra.mxu0 %v56
  %481 = vmatprep.subr.mxu0 0.0
  %482 = vmatpush1.msra.mxu0 %v55
  %483 = vmatprep.subr.mxu0 0.0
  %484 = vmatpush1.msra.mxu0 %v54
  %485 = vmatprep.subr.mxu0 0.0
  %486 = vmatpush1.msra.mxu0 %v53
  %487 = vmatprep.subr.mxu0 0.0
  %488 = vmatpush2.msra.mxu0 0.0
  %489 = vmatprep.subr.mxu0 0.0
  %490 = vmatpush2.msra.mxu0 0.0
  %491 = vmatprep.subr.mxu0 0.0
  %492 = vmatpush2.msra.mxu0 0.0
  %493 = vmatprep.subr.mxu0 0.0
  %494 = vmatpush2.msra.mxu0 0.0
  %495 = vmatprep.subr.mxu0 0.0
  %496 = vmatpush2.msra.mxu0 0.0
  %497 = vmatprep.subr.mxu0 0.0
  %498 = vmatpush2.msra.mxu0 0.0
  %499 = vmatprep.subr.mxu0 0.0
  %500 = vmatpush2.msra.mxu0 0.0
  %501 = vmatprep.subr.mxu0 0.0
  %502 = vmatpush2.msra.mxu0 0.0
  %503 = vmatprep.subr.mxu0 0.0
  %504 = vmatpush2.msra.mxu0 0.0
  %505 = vmatprep.subr.mxu0 0.0
  %506 = vmatpush2.msra.mxu0 0.0
  %507 = vmatprep.subr.mxu0 0.0
  %508 = vmatpush2.msra.mxu0 0.0
  %509 = vmatprep.subr.mxu0 0.0
  %510 = vmatpush2.msra.mxu0 0.0
  %511 = vmatprep.subr.mxu0 0.0
  %512 = vmatpush2.msra.mxu0 0.0
  %513 = vmatprep.subr.mxu0 0.0
  %514 = vmatpush2.msra.mxu0 0.0
  %515 = vmatprep.subr.mxu0 0.0
  %516 = vmatpush2.msra.mxu0 0.0
  %517 = vmatprep.subr.mxu0 0.0
  %518 = vmatpush2.msra.mxu0 0.0
  %519 = vmatprep.mubr.f32.mxu0 0.0
  %520 = vmatmul.mubr.f32.gmra.mxu0 %v453
  %v521 = vpop.f32.mrf.mxu0
  %v522 = vadd.f32 %v63, %v521
  %v523 = vpop.f32.mrf.mxu0
  %524 = vdwg.mxu0
  %v525 = vsel %vm52, %v447, %v522
  %s526 = scalar_lea.vmem [#allocation2], 4
  %527 = vst [vmem:[%s526] sm:$0x3] %v525
  %v528 = vsel %vm52, %v522, %v447
  %s529 = scalar_lea.vmem [#allocation2], 10
  %530 = vst [vmem:[%s529] sm:$0x3] %v528
  %s531 = scalar_lea.vmem %s0, 6
  %v532 = vld [vmem:[%s531] sm:$0x3]
  %v534 = vsel %vm65, %v532, 0
  %536 = vmatprep.subr.mxu0 0.0
  %537 = vmatpush1.msra.mxu0 0.0
  %538 = vmatprep.subr.mxu0 0.0
  %539 = vmatpush1.msra.mxu0 0.0
  %540 = vmatprep.subr.mxu0 0.0
  %541 = vmatpush1.msra.mxu0 0.0
  %542 = vmatprep.subr.mxu0 0.0
  %543 = vmatpush1.msra.mxu0 0.0
  %544 = vmatprep.subr.mxu0 0.0
  %545 = vmatpush1.msra.mxu0 0.0
  %546 = vmatprep.subr.mxu0 0.0
  %547 = vmatpush1.msra.mxu0 0.0
  %548 = vmatprep.subr.mxu0 0.0
  %549 = vmatpush1.msra.mxu0 0.0
  %550 = vmatprep.subr.mxu0 0.0
  %551 = vmatpush1.msra.mxu0 0.0
  %552 = vmatprep.subr.mxu0 0.0
  %553 = vmatpush1.msra.mxu0 0.0
  %554 = vmatprep.subr.mxu0 0.0
  %555 = vmatpush1.msra.mxu0 0.0
  %556 = vmatprep.subr.mxu0 0.0
  %557 = vmatpush1.msra.mxu0 0.0
  %558 = vmatprep.subr.mxu0 0.0
  %559 = vmatpush1.msra.mxu0 0.0
  %560 = vmatprep.subr.mxu0 0.0
  %561 = vmatpush1.msra.mxu0 %v56
  %562 = vmatprep.subr.mxu0 0.0
  %563 = vmatpush1.msra.mxu0 %v55
  %564 = vmatprep.subr.mxu0 0.0
  %565 = vmatpush1.msra.mxu0 %v54
  %566 = vmatprep.subr.mxu0 0.0
  %567 = vmatpush1.msra.mxu0 %v53
  %568 = vmatprep.subr.mxu0 0.0
  %569 = vmatpush2.msra.mxu0 0.0
  %570 = vmatprep.subr.mxu0 0.0
  %571 = vmatpush2.msra.mxu0 0.0
  %572 = vmatprep.subr.mxu0 0.0
  %573 = vmatpush2.msra.mxu0 0.0
  %574 = vmatprep.subr.mxu0 0.0
  %575 = vmatpush2.msra.mxu0 0.0
  %576 = vmatprep.subr.mxu0 0.0
  %577 = vmatpush2.msra.mxu0 0.0
  %578 = vmatprep.subr.mxu0 0.0
  %579 = vmatpush2.msra.mxu0 0.0
  %580 = vmatprep.subr.mxu0 0.0
  %581 = vmatpush2.msra.mxu0 0.0
  %582 = vmatprep.subr.mxu0 0.0
  %583 = vmatpush2.msra.mxu0 0.0
  %584 = vmatprep.subr.mxu0 0.0
  %585 = vmatpush2.msra.mxu0 0.0
  %586 = vmatprep.subr.mxu0 0.0
  %587 = vmatpush2.msra.mxu0 0.0
  %588 = vmatprep.subr.mxu0 0.0
  %589 = vmatpush2.msra.mxu0 0.0
  %590 = vmatprep.subr.mxu0 0.0
  %591 = vmatpush2.msra.mxu0 0.0
  %592 = vmatprep.subr.mxu0 0.0
  %593 = vmatpush2.msra.mxu0 0.0
  %594 = vmatprep.subr.mxu0 0.0
  %595 = vmatpush2.msra.mxu0 0.0
  %596 = vmatprep.subr.mxu0 0.0
  %597 = vmatpush2.msra.mxu0 0.0
  %598 = vmatprep.subr.mxu0 0.0
  %599 = vmatpush2.msra.mxu0 0.0
  %600 = vmatprep.mubr.f32.mxu0 0.0
  %601 = vmatmul.mubr.f32.gmra.mxu0 %v534
  %v602 = vpop.f32.mrf.mxu0
  %v603 = vadd.f32 %v63, %v602
  %v604 = vpop.f32.mrf.mxu0
  %605 = vdwg.mxu0
  %s606 = scalar_lea.vmem %s0, 8
  %v607 = vld [vmem:[%s606] sm:$0x3]
  %v609 = vsel %vm65, %v607, 0
  %611 = vmatprep.subr.mxu0 0.0
  %612 = vmatpush1.msra.mxu0 0.0
  %613 = vmatprep.subr.mxu0 0.0
  %614 = vmatpush1.msra.mxu0 0.0
  %615 = vmatprep.subr.mxu0 0.0
  %616 = vmatpush1.msra.mxu0 0.0
  %617 = vmatprep.subr.mxu0 0.0
  %618 = vmatpush1.msra.mxu0 0.0
  %619 = vmatprep.subr.mxu0 0.0
  %620 = vmatpush1.msra.mxu0 0.0
  %621 = vmatprep.subr.mxu0 0.0
  %622 = vmatpush1.msra.mxu0 0.0
  %623 = vmatprep.subr.mxu0 0.0
  %624 = vmatpush1.msra.mxu0 0.0
  %625 = vmatprep.subr.mxu0 0.0
  %626 = vmatpush1.msra.mxu0 0.0
  %627 = vmatprep.subr.mxu0 0.0
  %628 = vmatpush1.msra.mxu0 0.0
  %629 = vmatprep.subr.mxu0 0.0
  %630 = vmatpush1.msra.mxu0 0.0
  %631 = vmatprep.subr.mxu0 0.0
  %632 = vmatpush1.msra.mxu0 0.0
  %633 = vmatprep.subr.mxu0 0.0
  %634 = vmatpush1.msra.mxu0 0.0
  %635 = vmatprep.subr.mxu0 0.0
  %636 = vmatpush1.msra.mxu0 %v56
  %637 = vmatprep.subr.mxu0 0.0
  %638 = vmatpush1.msra.mxu0 %v55
  %639 = vmatprep.subr.mxu0 0.0
  %640 = vmatpush1.msra.mxu0 %v54
  %641 = vmatprep.subr.mxu0 0.0
  %642 = vmatpush1.msra.mxu0 %v53
  %643 = vmatprep.subr.mxu0 0.0
  %644 = vmatpush2.msra.mxu0 0.0
  %645 = vmatprep.subr.mxu0 0.0
  %646 = vmatpush2.msra.mxu0 0.0
  %647 = vmatprep.subr.mxu0 0.0
  %648 = vmatpush2.msra.mxu0 0.0
  %649 = vmatprep.subr.mxu0 0.0
  %650 = vmatpush2.msra.mxu0 0.0
  %651 = vmatprep.subr.mxu0 0.0
  %652 = vmatpush2.msra.mxu0 0.0
  %653 = vmatprep.subr.mxu0 0.0
  %654 = vmatpush2.msra.mxu0 0.0
  %655 = vmatprep.subr.mxu0 0.0
  %656 = vmatpush2.msra.mxu0 0.0
  %657 = vmatprep.subr.mxu0 0.0
  %658 = vmatpush2.msra.mxu0 0.0
  %659 = vmatprep.subr.mxu0 0.0
  %660 = vmatpush2.msra.mxu0 0.0
  %661 = vmatprep.subr.mxu0 0.0
  %662 = vmatpush2.msra.mxu0 0.0
  %663 = vmatprep.subr.mxu0 0.0
  %664 = vmatpush2.msra.mxu0 0.0
  %665 = vmatprep.subr.mxu0 0.0
  %666 = vmatpush2.msra.mxu0 0.0
  %667 = vmatprep.subr.mxu0 0.0
  %668 = vmatpush2.msra.mxu0 0.0
  %669 = vmatprep.subr.mxu0 0.0
  %670 = vmatpush2.msra.mxu0 0.0
  %671 = vmatprep.subr.mxu0 0.0
  %672 = vmatpush2.msra.mxu0 0.0
  %673 = vmatprep.subr.mxu0 0.0
  %674 = vmatpush2.msra.mxu0 0.0
  %675 = vmatprep.mubr.f32.mxu0 0.0
  %676 = vmatmul.mubr.f32.gmra.mxu0 %v609
  %v677 = vpop.f32.mrf.mxu0
  %v678 = vadd.f32 %v63, %v677
  %v679 = vpop.f32.mrf.mxu0
  %680 = vdwg.mxu0
  %v681 = vsel %vm52, %v603, %v678
  %s682 = scalar_lea.vmem [#allocation2], 6
  %683 = vst [vmem:[%s682] sm:$0x3] %v681
  %v684 = vsel %vm52, %v678, %v603
  %s685 = scalar_lea.vmem [#allocation2], 8
  %686 = vst [vmem:[%s685] sm:$0x3] %v684
  %v687 = vld [vmem:[%s2] sm:$0xff]
  %v688 = vld [vmem:[%s2 + $0x8] sm:$0xff]
  %v689 = vld [vmem:[%s2 + $0x10] sm:$0xff]
  %v690 = vld [vmem:[%s2 + $0x18] sm:$0xff]
  %v691 = vld [vmem:[#allocation2] sm:$0x3]
  %v693 = vsel %vm65, 0.0, 0
  %695 = vmatprep.subr.mxu0 0.0
  %696 = vmatpush1.msra.mxu0 0.0
  %697 = vmatprep.subr.mxu0 0.0
  %698 = vmatpush1.msra.mxu0 0.0
  %699 = vmatprep.subr.mxu0 0.0
  %700 = vmatpush1.msra.mxu0 0.0
  %701 = vmatprep.subr.mxu0 0.0
  %702 = vmatpush1.msra.mxu0 0.0
  %703 = vmatprep.subr.mxu0 0.0
  %704 = vmatpush1.msra.mxu0 0.0
  %705 = vmatprep.subr.mxu0 0.0
  %706 = vmatpush1.msra.mxu0 0.0
  %707 = vmatprep.subr.mxu0 0.0
  %708 = vmatpush1.msra.mxu0 0.0
  %709 = vmatprep.subr.mxu0 0.0
  %710 = vmatpush1.msra.mxu0 0.0
  %711 = vmatprep.subr.mxu0 0.0
  %712 = vmatpush1.msra.mxu0 0.0
  %713 = vmatprep.subr.mxu0 0.0
  %714 = vmatpush1.msra.mxu0 0.0
  %715 = vmatprep.subr.mxu0 0.0
  %716 = vmatpush1.msra.mxu0 0.0
  %717 = vmatprep.subr.mxu0 0.0
  %718 = vmatpush1.msra.mxu0 0.0
  %719 = vmatprep.subr.mxu0 0.0
  %720 = vmatpush1.msra.mxu0 %v690
  %721 = vmatprep.subr.mxu0 0.0
  %722 = vmatpush1.msra.mxu0 %v689
  %723 = vmatprep.subr.mxu0 0.0
  %724 = vmatpush1.msra.mxu0 %v688
  %725 = vmatprep.subr.mxu0 0.0
  %726 = vmatpush1.msra.mxu0 %v687
  %727 = vmatprep.subr.mxu0 0.0
  %728 = vmatpush2.msra.mxu0 0.0
  %729 = vmatprep.subr.mxu0 0.0
  %730 = vmatpush2.msra.mxu0 0.0
  %731 = vmatprep.subr.mxu0 0.0
  %732 = vmatpush2.msra.mxu0 0.0
  %733 = vmatprep.subr.mxu0 0.0
  %734 = vmatpush2.msra.mxu0 0.0
  %735 = vmatprep.subr.mxu0 0.0
  %736 = vmatpush2.msra.mxu0 0.0
  %737 = vmatprep.subr.mxu0 0.0
  %738 = vmatpush2.msra.mxu0 0.0
  %739 = vmatprep.subr.mxu0 0.0
  %740 = vmatpush2.msra.mxu0 0.0
  %741 = vmatprep.subr.mxu0 0.0
  %742 = vmatpush2.msra.mxu0 0.0
  %743 = vmatprep.subr.mxu0 0.0
  %744 = vmatpush2.msra.mxu0 0.0
  %745 = vmatprep.subr.mxu0 0.0
  %746 = vmatpush2.msra.mxu0 0.0
  %747 = vmatprep.subr.mxu0 0.0
  %748 = vmatpush2.msra.mxu0 0.0
  %749 = vmatprep.subr.mxu0 0.0
  %750 = vmatpush2.msra.mxu0 0.0
  %751 = vmatprep.subr.mxu0 0.0
  %752 = vmatpush2.msra.mxu0 0.0
  %753 = vmatprep.subr.mxu0 0.0
  %754 = vmatpush2.msra.mxu0 0.0
  %755 = vmatprep.subr.mxu0 0.0
  %756 = vmatpush2.msra.mxu0 0.0
  %757 = vmatprep.subr.mxu0 0.0
  %758 = vmatpush2.msra.mxu0 0.0
  %759 = vmatprep.mubr.f32.mxu0 0.0
  %760 = vmatmul.mubr.f32.gmra.mxu0 %v693
  %v761 = vpop.f32.mrf.mxu0
  %v762 = vadd.f32 %v691, %v761
  %v763 = vpop.f32.mrf.mxu0
  %764 = vdwg.mxu0
  %v765 = vxor.u32 %v762, 2147483648
  %v766 = vmul.f32 %v765, 1.442695
  %v767 = vpow.pop %v766
  %v768 = vadd.f32 %v767, 1.0
  %v769 = vrcp.pop %v768
  %v770 = vmul.f32 1.0, %v769
  %v771 = vtanh.pop %v762
  %v772 = vmul.f32 %v770, 0.0
  %774 = vrot.lane.b32.xlu0 %v771, 64
  %v775 = vpop.permute.xlu0 %774
  %v777 = vmul.f32 %v770, %v775
  %779 = vrot.lane.b32.xlu0 %v777, 32
  %v780 = vpop.permute.xlu0 %779
  %v782 = vadd.f32 %v772, %v780
  %v783 = vtanh.pop %v782
  %785 = vrot.lane.b32.xlu0 %v783, 64
  %v786 = vpop.permute.xlu0 %785
  %v788 = vmul.f32 %v770, %v786
  %790 = vrot.lane.b32.xlu0 %v788, 32
  %v791 = vpop.permute.xlu0 %790
  %vm793 = vcmask 123904
  %794 = vst.msk [vmem:[#allocation3] sm:$0x3] %vm793, %v791
  %795 = vrot.lane.b32.xlu0 %v788, 16
  %v796 = vpop.permute.xlu0 %795
  %s798 = scalar_lea.vmem [#allocation4], 14
  %799 = vst.msk [vmem:[%s798] sm:$0x3] %vm793, %v796
  %v800 = vld [vmem:[%s370] sm:$0x3]
  %v801 = vsel %vm65, %v791, 0
  %803 = vmatprep.subr.mxu0 0.0
  %804 = vmatpush1.msra.mxu0 0.0
  %805 = vmatprep.subr.mxu0 0.0
  %806 = vmatpush1.msra.mxu0 0.0
  %807 = vmatprep.subr.mxu0 0.0
  %808 = vmatpush1.msra.mxu0 0.0
  %809 = vmatprep.subr.mxu0 0.0
  %810 = vmatpush1.msra.mxu0 0.0
  %811 = vmatprep.subr.mxu0 0.0
  %812 = vmatpush1.msra.mxu0 0.0
  %813 = vmatprep.subr.mxu0 0.0
  %814 = vmatpush1.msra.mxu0 0.0
  %815 = vmatprep.subr.mxu0 0.0
  %816 = vmatpush1.msra.mxu0 0.0
  %817 = vmatprep.subr.mxu0 0.0
  %818 = vmatpush1.msra.mxu0 0.0
  %819 = vmatprep.subr.mxu0 0.0
  %820 = vmatpush1.msra.mxu0 0.0
  %821 = vmatprep.subr.mxu0 0.0
  %822 = vmatpush1.msra.mxu0 0.0
  %823 = vmatprep.subr.mxu0 0.0
  %824 = vmatpush1.msra.mxu0 0.0
  %825 = vmatprep.subr.mxu0 0.0
  %826 = vmatpush1.msra.mxu0 0.0
  %827 = vmatprep.subr.mxu0 0.0
  %828 = vmatpush1.msra.mxu0 %v690
  %829 = vmatprep.subr.mxu0 0.0
  %830 = vmatpush1.msra.mxu0 %v689
  %831 = vmatprep.subr.mxu0 0.0
  %832 = vmatpush1.msra.mxu0 %v688
  %833 = vmatprep.subr.mxu0 0.0
  %834 = vmatpush1.msra.mxu0 %v687
  %835 = vmatprep.subr.mxu0 0.0
  %836 = vmatpush2.msra.mxu0 0.0
  %837 = vmatprep.subr.mxu0 0.0
  %838 = vmatpush2.msra.mxu0 0.0
  %839 = vmatprep.subr.mxu0 0.0
  %840 = vmatpush2.msra.mxu0 0.0
  %841 = vmatprep.subr.mxu0 0.0
  %842 = vmatpush2.msra.mxu0 0.0
  %843 = vmatprep.subr.mxu0 0.0
  %844 = vmatpush2.msra.mxu0 0.0
  %845 = vmatprep.subr.mxu0 0.0
  %846 = vmatpush2.msra.mxu0 0.0
  %847 = vmatprep.subr.mxu0 0.0
  %848 = vmatpush2.msra.mxu0 0.0
  %849 = vmatprep.subr.mxu0 0.0
  %850 = vmatpush2.msra.mxu0 0.0
  %851 = vmatprep.subr.mxu0 0.0
  %852 = vmatpush2.msra.mxu0 0.0
  %853 = vmatprep.subr.mxu0 0.0
  %854 = vmatpush2.msra.mxu0 0.0
  %855 = vmatprep.subr.mxu0 0.0
  %856 = vmatpush2.msra.mxu0 0.0
  %857 = vmatprep.subr.mxu0 0.0
  %858 = vmatpush2.msra.mxu0 0.0
  %859 = vmatprep.subr.mxu0 0.0
  %860 = vmatpush2.msra.mxu0 0.0
  %861 = vmatprep.subr.mxu0 0.0
  %862 = vmatpush2.msra.mxu0 0.0
  %863 = vmatprep.subr.mxu0 0.0
  %864 = vmatpush2.msra.mxu0 0.0
  %865 = vmatprep.subr.mxu0 0.0
  %866 = vmatpush2.msra.mxu0 0.0
  %867 = vmatprep.mubr.f32.mxu0 0.0
  %868 = vmatmul.mubr.f32.gmra.mxu0 %v801
  %v869 = vpop.f32.mrf.mxu0
  %v870 = vadd.f32 %v800, %v869
  %v871 = vpop.f32.mrf.mxu0
  %872 = vdwg.mxu0
  %v873 = vxor.u32 %v870, 2147483648
  %v874 = vmul.f32 %v873, 1.442695
  %v875 = vpow.pop %v874
  %v876 = vadd.f32 %v875, 1.0
  %v877 = vrcp.pop %v876
  %v878 = vmul.f32 1.0, %v877
  %v879 = vtanh.pop %v870
  %v880 = vmul.f32 %v878, %v782
  %882 = vrot.lane.b32.xlu0 %v879, 64
  %v883 = vpop.permute.xlu0 %882
  %v885 = vmul.f32 %v878, %v883
  %887 = vrot.lane.b32.xlu0 %v885, 32
  %v888 = vpop.permute.xlu0 %887
  %v890 = vadd.f32 %v880, %v888
  %v891 = vtanh.pop %v890
  %893 = vrot.lane.b32.xlu0 %v891, 64
  %v894 = vpop.permute.xlu0 %893
  %v896 = vmul.f32 %v878, %v894
  %898 = vrot.lane.b32.xlu0 %v896, 32
  %v899 = vpop.permute.xlu0 %898
  %s901 = scalar_lea.vmem [#allocation3], 2
  %902 = vst.msk [vmem:[%s901] sm:$0x3] %vm793, %v899
  %903 = vrot.lane.b32.xlu0 %v896, 16
  %v904 = vpop.permute.xlu0 %903
  %s906 = scalar_lea.vmem [#allocation4], 12
  %907 = vst.msk [vmem:[%s906] sm:$0x3] %vm793, %v904
  %v908 = vld [vmem:[%s526] sm:$0x3]
  %v909 = vsel %vm65, %v899, 0
  %911 = vmatprep.subr.mxu0 0.0
  %912 = vmatpush1.msra.mxu0 0.0
  %913 = vmatprep.subr.mxu0 0.0
  %914 = vmatpush1.msra.mxu0 0.0
  %915 = vmatprep.subr.mxu0 0.0
  %916 = vmatpush1.msra.mxu0 0.0
  %917 = vmatprep.subr.mxu0 0.0
  %918 = vmatpush1.msra.mxu0 0.0
  %919 = vmatprep.subr.mxu0 0.0
  %920 = vmatpush1.msra.mxu0 0.0
  %921 = vmatprep.subr.mxu0 0.0
  %922 = vmatpush1.msra.mxu0 0.0
  %923 = vmatprep.subr.mxu0 0.0
  %924 = vmatpush1.msra.mxu0 0.0
  %925 = vmatprep.subr.mxu0 0.0
  %926 = vmatpush1.msra.mxu0 0.0
  %927 = vmatprep.subr.mxu0 0.0
  %928 = vmatpush1.msra.mxu0 0.0
  %929 = vmatprep.subr.mxu0 0.0
  %930 = vmatpush1.msra.mxu0 0.0
  %931 = vmatprep.subr.mxu0 0.0
  %932 = vmatpush1.msra.mxu0 0.0
  %933 = vmatprep.subr.mxu0 0.0
  %934 = vmatpush1.msra.mxu0 0.0
  %935 = vmatprep.subr.mxu0 0.0
  %936 = vmatpush1.msra.mxu0 %v690
  %937 = vmatprep.subr.mxu0 0.0
  %938 = vmatpush1.msra.mxu0 %v689
  %939 = vmatprep.subr.mxu0 0.0
  %940 = vmatpush1.msra.mxu0 %v688
  %941 = vmatprep.subr.mxu0 0.0
  %942 = vmatpush1.msra.mxu0 %v687
  %943 = vmatprep.subr.mxu0 0.0
  %944 = vmatpush2.msra.mxu0 0.0
  %945 = vmatprep.subr.mxu0 0.0
  %946 = vmatpush2.msra.mxu0 0.0
  %947 = vmatprep.subr.mxu0 0.0
  %948 = vmatpush2.msra.mxu0 0.0
  %949 = vmatprep.subr.mxu0 0.0
  %950 = vmatpush2.msra.mxu0 0.0
  %951 = vmatprep.subr.mxu0 0.0
  %952 = vmatpush2.msra.mxu0 0.0
  %953 = vmatprep.subr.mxu0 0.0
  %954 = vmatpush2.msra.mxu0 0.0
  %955 = vmatprep.subr.mxu0 0.0
  %956 = vmatpush2.msra.mxu0 0.0
  %957 = vmatprep.subr.mxu0 0.0
  %958 = vmatpush2.msra.mxu0 0.0
  %959 = vmatprep.subr.mxu0 0.0
  %960 = vmatpush2.msra.mxu0 0.0
  %961 = vmatprep.subr.mxu0 0.0
  %962 = vmatpush2.msra.mxu0 0.0
  %963 = vmatprep.subr.mxu0 0.0
  %964 = vmatpush2.msra.mxu0 0.0
  %965 = vmatprep.subr.mxu0 0.0
  %966 = vmatpush2.msra.mxu0 0.0
  %967 = vmatprep.subr.mxu0 0.0
  %968 = vmatpush2.msra.mxu0 0.0
  %969 = vmatprep.subr.mxu0 0.0
  %970 = vmatpush2.msra.mxu0 0.0
  %971 = vmatprep.subr.mxu0 0.0
  %972 = vmatpush2.msra.mxu0 0.0
  %973 = vmatprep.subr.mxu0 0.0
  %974 = vmatpush2.msra.mxu0 0.0
  %975 = vmatprep.mubr.f32.mxu0 0.0
  %976 = vmatmul.mubr.f32.gmra.mxu0 %v909
  %v977 = vpop.f32.mrf.mxu0
  %v978 = vadd.f32 %v908, %v977
  %v979 = vpop.f32.mrf.mxu0
  %980 = vdwg.mxu0
  %v981 = vxor.u32 %v978, 2147483648
  %v982 = vmul.f32 %v981, 1.442695
  %v983 = vpow.pop %v982
  %v984 = vadd.f32 %v983, 1.0
  %v985 = vrcp.pop %v984
  %v986 = vmul.f32 1.0, %v985
  %v987 = vtanh.pop %v978
  %v988 = vmul.f32 %v986, %v890
  %990 = vrot.lane.b32.xlu0 %v987, 64
  %v991 = vpop.permute.xlu0 %990
  %v993 = vmul.f32 %v986, %v991
  %995 = vrot.lane.b32.xlu0 %v993, 32
  %v996 = vpop.permute.xlu0 %995
  %v998 = vadd.f32 %v988, %v996
  %v999 = vtanh.pop %v998
  %1001 = vrot.lane.b32.xlu0 %v999, 64
  %v1002 = vpop.permute.xlu0 %1001
  %v1004 = vmul.f32 %v986, %v1002
  %1006 = vrot.lane.b32.xlu0 %v1004, 32
  %v1007 = vpop.permute.xlu0 %1006
  %s1009 = scalar_lea.vmem [#allocation3], 4
  %1010 = vst.msk [vmem:[%s1009] sm:$0x3] %vm793, %v1007
  %1011 = vrot.lane.b32.xlu0 %v1004, 16
  %v1012 = vpop.permute.xlu0 %1011
  %s1014 = scalar_lea.vmem [#allocation4], 10
  %1015 = vst.msk [vmem:[%s1014] sm:$0x3] %vm793, %v1012
  %v1016 = vld [vmem:[%s682] sm:$0x3]
  %v1017 = vsel %vm65, %v1007, 0
  %1019 = vmatprep.subr.mxu0 0.0
  %1020 = vmatpush1.msra.mxu0 0.0
  %1021 = vmatprep.subr.mxu0 0.0
  %1022 = vmatpush1.msra.mxu0 0.0
  %1023 = vmatprep.subr.mxu0 0.0
  %1024 = vmatpush1.msra.mxu0 0.0
  %1025 = vmatprep.subr.mxu0 0.0
  %1026 = vmatpush1.msra.mxu0 0.0
  %1027 = vmatprep.subr.mxu0 0.0
  %1028 = vmatpush1.msra.mxu0 0.0
  %1029 = vmatprep.subr.mxu0 0.0
  %1030 = vmatpush1.msra.mxu0 0.0
  %1031 = vmatprep.subr.mxu0 0.0
  %1032 = vmatpush1.msra.mxu0 0.0
  %1033 = vmatprep.subr.mxu0 0.0
  %1034 = vmatpush1.msra.mxu0 0.0
  %1035 = vmatprep.subr.mxu0 0.0
  %1036 = vmatpush1.msra.mxu0 0.0
  %1037 = vmatprep.subr.mxu0 0.0
  %1038 = vmatpush1.msra.mxu0 0.0
  %1039 = vmatprep.subr.mxu0 0.0
  %1040 = vmatpush1.msra.mxu0 0.0
  %1041 = vmatprep.subr.mxu0 0.0
  %1042 = vmatpush1.msra.mxu0 0.0
  %1043 = vmatprep.subr.mxu0 0.0
  %1044 = vmatpush1.msra.mxu0 %v690
  %1045 = vmatprep.subr.mxu0 0.0
  %1046 = vmatpush1.msra.mxu0 %v689
  %1047 = vmatprep.subr.mxu0 0.0
  %1048 = vmatpush1.msra.mxu0 %v688
  %1049 = vmatprep.subr.mxu0 0.0
  %1050 = vmatpush1.msra.mxu0 %v687
  %1051 = vmatprep.subr.mxu0 0.0
  %1052 = vmatpush2.msra.mxu0 0.0
  %1053 = vmatprep.subr.mxu0 0.0
  %1054 = vmatpush2.msra.mxu0 0.0
  %1055 = vmatprep.subr.mxu0 0.0
  %1056 = vmatpush2.msra.mxu0 0.0
  %1057 = vmatprep.subr.mxu0 0.0
  %1058 = vmatpush2.msra.mxu0 0.0
  %1059 = vmatprep.subr.mxu0 0.0
  %1060 = vmatpush2.msra.mxu0 0.0
  %1061 = vmatprep.subr.mxu0 0.0
  %1062 = vmatpush2.msra.mxu0 0.0
  %1063 = vmatprep.subr.mxu0 0.0
  %1064 = vmatpush2.msra.mxu0 0.0
  %1065 = vmatprep.subr.mxu0 0.0
  %1066 = vmatpush2.msra.mxu0 0.0
  %1067 = vmatprep.subr.mxu0 0.0
  %1068 = vmatpush2.msra.mxu0 0.0
  %1069 = vmatprep.subr.mxu0 0.0
  %1070 = vmatpush2.msra.mxu0 0.0
  %1071 = vmatprep.subr.mxu0 0.0
  %1072 = vmatpush2.msra.mxu0 0.0
  %1073 = vmatprep.subr.mxu0 0.0
  %1074 = vmatpush2.msra.mxu0 0.0
  %1075 = vmatprep.subr.mxu0 0.0
  %1076 = vmatpush2.msra.mxu0 0.0
  %1077 = vmatprep.subr.mxu0 0.0
  %1078 = vmatpush2.msra.mxu0 0.0
  %1079 = vmatprep.subr.mxu0 0.0
  %1080 = vmatpush2.msra.mxu0 0.0
  %1081 = vmatprep.subr.mxu0 0.0
  %1082 = vmatpush2.msra.mxu0 0.0
  %1083 = vmatprep.mubr.f32.mxu0 0.0
  %1084 = vmatmul.mubr.f32.gmra.mxu0 %v1017
  %v1085 = vpop.f32.mrf.mxu0
  %v1086 = vadd.f32 %v1016, %v1085
  %v1087 = vpop.f32.mrf.mxu0
  %1088 = vdwg.mxu0
  %v1089 = vxor.u32 %v1086, 2147483648
  %v1090 = vmul.f32 %v1089, 1.442695
  %v1091 = vpow.pop %v1090
  %v1092 = vadd.f32 %v1091, 1.0
  %v1093 = vrcp.pop %v1092
  %v1094 = vmul.f32 1.0, %v1093
  %v1095 = vtanh.pop %v1086
  %v1096 = vmul.f32 %v1094, %v998
  %1098 = vrot.lane.b32.xlu0 %v1095, 64
  %v1099 = vpop.permute.xlu0 %1098
  %v1101 = vmul.f32 %v1094, %v1099
  %1103 = vrot.lane.b32.xlu0 %v1101, 32
  %v1104 = vpop.permute.xlu0 %1103
  %v1106 = vadd.f32 %v1096, %v1104
  %v1107 = vtanh.pop %v1106
  %1109 = vrot.lane.b32.xlu0 %v1107, 64
  %v1110 = vpop.permute.xlu0 %1109
  %v1112 = vmul.f32 %v1094, %v1110
  %1114 = vrot.lane.b32.xlu0 %v1112, 32
  %v1115 = vpop.permute.xlu0 %1114
  %s1117 = scalar_lea.vmem [#allocation3], 6
  %1118 = vst.msk [vmem:[%s1117] sm:$0x3] %vm793, %v1115
  %1119 = vrot.lane.b32.xlu0 %v1112, 16
  %v1120 = vpop.permute.xlu0 %1119
  %s1122 = scalar_lea.vmem [#allocation4], 8
  %1123 = vst.msk [vmem:[%s1122] sm:$0x3] %vm793, %v1120
  %v1124 = vld [vmem:[%s685] sm:$0x3]
  %v1125 = vsel %vm65, %v1115, 0
  %1127 = vmatprep.subr.mxu0 0.0
  %1128 = vmatpush1.msra.mxu0 0.0
  %1129 = vmatprep.subr.mxu0 0.0
  %1130 = vmatpush1.msra.mxu0 0.0
  %1131 = vmatprep.subr.mxu0 0.0
  %1132 = vmatpush1.msra.mxu0 0.0
  %1133 = vmatprep.subr.mxu0 0.0
  %1134 = vmatpush1.msra.mxu0 0.0
  %1135 = vmatprep.subr.mxu0 0.0
  %1136 = vmatpush1.msra.mxu0 0.0
  %1137 = vmatprep.subr.mxu0 0.0
  %1138 = vmatpush1.msra.mxu0 0.0
  %1139 = vmatprep.subr.mxu0 0.0
  %1140 = vmatpush1.msra.mxu0 0.0
  %1141 = vmatprep.subr.mxu0 0.0
  %1142 = vmatpush1.msra.mxu0 0.0
  %1143 = vmatprep.subr.mxu0 0.0
  %1144 = vmatpush1.msra.mxu0 0.0
  %1145 = vmatprep.subr.mxu0 0.0
  %1146 = vmatpush1.msra.mxu0 0.0
  %1147 = vmatprep.subr.mxu0 0.0
  %1148 = vmatpush1.msra.mxu0 0.0
  %1149 = vmatprep.subr.mxu0 0.0
  %1150 = vmatpush1.msra.mxu0 0.0
  %1151 = vmatprep.subr.mxu0 0.0
  %1152 = vmatpush1.msra.mxu0 %v690
  %1153 = vmatprep.subr.mxu0 0.0
  %1154 = vmatpush1.msra.mxu0 %v689
  %1155 = vmatprep.subr.mxu0 0.0
  %1156 = vmatpush1.msra.mxu0 %v688
  %1157 = vmatprep.subr.mxu0 0.0
  %1158 = vmatpush1.msra.mxu0 %v687
  %1159 = vmatprep.subr.mxu0 0.0
  %1160 = vmatpush2.msra.mxu0 0.0
  %1161 = vmatprep.subr.mxu0 0.0
  %1162 = vmatpush2.msra.mxu0 0.0
  %1163 = vmatprep.subr.mxu0 0.0
  %1164 = vmatpush2.msra.mxu0 0.0
  %1165 = vmatprep.subr.mxu0 0.0
  %1166 = vmatpush2.msra.mxu0 0.0
  %1167 = vmatprep.subr.mxu0 0.0
  %1168 = vmatpush2.msra.mxu0 0.0
  %1169 = vmatprep.subr.mxu0 0.0
  %1170 = vmatpush2.msra.mxu0 0.0
  %1171 = vmatprep.subr.mxu0 0.0
  %1172 = vmatpush2.msra.mxu0 0.0
  %1173 = vmatprep.subr.mxu0 0.0
  %1174 = vmatpush2.msra.mxu0 0.0
  %1175 = vmatprep.subr.mxu0 0.0
  %1176 = vmatpush2.msra.mxu0 0.0
  %1177 = vmatprep.subr.mxu0 0.0
  %1178 = vmatpush2.msra.mxu0 0.0
  %1179 = vmatprep.subr.mxu0 0.0
  %1180 = vmatpush2.msra.mxu0 0.0
  %1181 = vmatprep.subr.mxu0 0.0
  %1182 = vmatpush2.msra.mxu0 0.0
  %1183 = vmatprep.subr.mxu0 0.0
  %1184 = vmatpush2.msra.mxu0 0.0
  %1185 = vmatprep.subr.mxu0 0.0
  %1186 = vmatpush2.msra.mxu0 0.0
  %1187 = vmatprep.subr.mxu0 0.0
  %1188 = vmatpush2.msra.mxu0 0.0
  %1189 = vmatprep.subr.mxu0 0.0
  %1190 = vmatpush2.msra.mxu0 0.0
  %1191 = vmatprep.mubr.f32.mxu0 0.0
  %1192 = vmatmul.mubr.f32.gmra.mxu0 %v1125
  %v1193 = vpop.f32.mrf.mxu0
  %v1194 = vadd.f32 %v1124, %v1193
  %v1195 = vpop.f32.mrf.mxu0
  %1196 = vdwg.mxu0
  %v1197 = vxor.u32 %v1194, 2147483648
  %v1198 = vmul.f32 %v1197, 1.442695
  %v1199 = vpow.pop %v1198
  %v1200 = vadd.f32 %v1199, 1.0
  %v1201 = vrcp.pop %v1200
  %v1202 = vmul.f32 1.0, %v1201
  %v1203 = vtanh.pop %v1194
  %v1204 = vmul.f32 %v1202, %v1106
  %1206 = vrot.lane.b32.xlu0 %v1203, 64
  %v1207 = vpop.permute.xlu0 %1206
  %v1209 = vmul.f32 %v1202, %v1207
  %1211 = vrot.lane.b32.xlu0 %v1209, 32
  %v1212 = vpop.permute.xlu0 %1211
  %v1214 = vadd.f32 %v1204, %v1212
  %v1215 = vtanh.pop %v1214
  %1217 = vrot.lane.b32.xlu0 %v1215, 64
  %v1218 = vpop.permute.xlu0 %1217
  %v1220 = vmul.f32 %v1202, %v1218
  %1222 = vrot.lane.b32.xlu0 %v1220, 32
  %v1223 = vpop.permute.xlu0 %1222
  %s1225 = scalar_lea.vmem [#allocation3], 8
  %1226 = vst.msk [vmem:[%s1225] sm:$0x3] %vm793, %v1223
  %1227 = vrot.lane.b32.xlu0 %v1220, 16
  %v1228 = vpop.permute.xlu0 %1227
  %s1230 = scalar_lea.vmem [#allocation4], 6
  %1231 = vst.msk [vmem:[%s1230] sm:$0x3] %vm793, %v1228
  %v1232 = vld [vmem:[%s529] sm:$0x3]
  %v1233 = vsel %vm65, %v1223, 0
  %1235 = vmatprep.subr.mxu0 0.0
  %1236 = vmatpush1.msra.mxu0 0.0
  %1237 = vmatprep.subr.mxu0 0.0
  %1238 = vmatpush1.msra.mxu0 0.0
  %1239 = vmatprep.subr.mxu0 0.0
  %1240 = vmatpush1.msra.mxu0 0.0
  %1241 = vmatprep.subr.mxu0 0.0
  %1242 = vmatpush1.msra.mxu0 0.0
  %1243 = vmatprep.subr.mxu0 0.0
  %1244 = vmatpush1.msra.mxu0 0.0
  %1245 = vmatprep.subr.mxu0 0.0
  %1246 = vmatpush1.msra.mxu0 0.0
  %1247 = vmatprep.subr.mxu0 0.0
  %1248 = vmatpush1.msra.mxu0 0.0
  %1249 = vmatprep.subr.mxu0 0.0
  %1250 = vmatpush1.msra.mxu0 0.0
  %1251 = vmatprep.subr.mxu0 0.0
  %1252 = vmatpush1.msra.mxu0 0.0
  %1253 = vmatprep.subr.mxu0 0.0
  %1254 = vmatpush1.msra.mxu0 0.0
  %1255 = vmatprep.subr.mxu0 0.0
  %1256 = vmatpush1.msra.mxu0 0.0
  %1257 = vmatprep.subr.mxu0 0.0
  %1258 = vmatpush1.msra.mxu0 0.0
  %1259 = vmatprep.subr.mxu0 0.0
  %1260 = vmatpush1.msra.mxu0 %v690
  %1261 = vmatprep.subr.mxu0 0.0
  %1262 = vmatpush1.msra.mxu0 %v689
  %1263 = vmatprep.subr.mxu0 0.0
  %1264 = vmatpush1.msra.mxu0 %v688
  %1265 = vmatprep.subr.mxu0 0.0
  %1266 = vmatpush1.msra.mxu0 %v687
  %1267 = vmatprep.subr.mxu0 0.0
  %1268 = vmatpush2.msra.mxu0 0.0
  %1269 = vmatprep.subr.mxu0 0.0
  %1270 = vmatpush2.msra.mxu0 0.0
  %1271 = vmatprep.subr.mxu0 0.0
  %1272 = vmatpush2.msra.mxu0 0.0
  %1273 = vmatprep.subr.mxu0 0.0
  %1274 = vmatpush2.msra.mxu0 0.0
  %1275 = vmatprep.subr.mxu0 0.0
  %1276 = vmatpush2.msra.mxu0 0.0
  %1277 = vmatprep.subr.mxu0 0.0
  %1278 = vmatpush2.msra.mxu0 0.0
  %1279 = vmatprep.subr.mxu0 0.0
  %1280 = vmatpush2.msra.mxu0 0.0
  %1281 = vmatprep.subr.mxu0 0.0
  %1282 = vmatpush2.msra.mxu0 0.0
  %1283 = vmatprep.subr.mxu0 0.0
  %1284 = vmatpush2.msra.mxu0 0.0
  %1285 = vmatprep.subr.mxu0 0.0
  %1286 = vmatpush2.msra.mxu0 0.0
  %1287 = vmatprep.subr.mxu0 0.0
  %1288 = vmatpush2.msra.mxu0 0.0
  %1289 = vmatprep.subr.mxu0 0.0
  %1290 = vmatpush2.msra.mxu0 0.0
  %1291 = vmatprep.subr.mxu0 0.0
  %1292 = vmatpush2.msra.mxu0 0.0
  %1293 = vmatprep.subr.mxu0 0.0
  %1294 = vmatpush2.msra.mxu0 0.0
  %1295 = vmatprep.subr.mxu0 0.0
  %1296 = vmatpush2.msra.mxu0 0.0
  %1297 = vmatprep.subr.mxu0 0.0
  %1298 = vmatpush2.msra.mxu0 0.0
  %1299 = vmatprep.mubr.f32.mxu0 0.0
  %1300 = vmatmul.mubr.f32.gmra.mxu0 %v1233
  %v1301 = vpop.f32.mrf.mxu0
  %v1302 = vadd.f32 %v1232, %v1301
  %v1303 = vpop.f32.mrf.mxu0
  %1304 = vdwg.mxu0
  %v1305 = vxor.u32 %v1302, 2147483648
  %v1306 = vmul.f32 %v1305, 1.442695
  %v1307 = vpow.pop %v1306
  %v1308 = vadd.f32 %v1307, 1.0
  %v1309 = vrcp.pop %v1308
  %v1310 = vmul.f32 1.0, %v1309
  %v1311 = vtanh.pop %v1302
  %v1312 = vmul.f32 %v1310, %v1214
  %1314 = vrot.lane.b32.xlu0 %v1311, 64
  %v1315 = vpop.permute.xlu0 %1314
  %v1317 = vmul.f32 %v1310, %v1315
  %1319 = vrot.lane.b32.xlu0 %v1317, 32
  %v1320 = vpop.permute.xlu0 %1319
  %v1322 = vadd.f32 %v1312, %v1320
  %v1323 = vtanh.pop %v1322
  %1325 = vrot.lane.b32.xlu0 %v1323, 64
  %v1326 = vpop.permute.xlu0 %1325
  %v1328 = vmul.f32 %v1310, %v1326
  %1330 = vrot.lane.b32.xlu0 %v1328, 32
  %v1331 = vpop.permute.xlu0 %1330
  %s1333 = scalar_lea.vmem [#allocation3], 10
  %1334 = vst.msk [vmem:[%s1333] sm:$0x3] %vm793, %v1331
  %1335 = vrot.lane.b32.xlu0 %v1328, 16
  %v1336 = vpop.permute.xlu0 %1335
  %s1338 = scalar_lea.vmem [#allocation4], 4
  %1339 = vst.msk [vmem:[%s1338] sm:$0x3] %vm793, %v1336
  %v1340 = vld [vmem:[%s373] sm:$0x3]
  %v1341 = vsel %vm65, %v1331, 0
  %1343 = vmatprep.subr.mxu0 0.0
  %1344 = vmatpush1.msra.mxu0 0.0
  %1345 = vmatprep.subr.mxu0 0.0
  %1346 = vmatpush1.msra.mxu0 0.0
  %1347 = vmatprep.subr.mxu0 0.0
  %1348 = vmatpush1.msra.mxu0 0.0
  %1349 = vmatprep.subr.mxu0 0.0
  %1350 = vmatpush1.msra.mxu0 0.0
  %1351 = vmatprep.subr.mxu0 0.0
  %1352 = vmatpush1.msra.mxu0 0.0
  %1353 = vmatprep.subr.mxu0 0.0
  %1354 = vmatpush1.msra.mxu0 0.0
  %1355 = vmatprep.subr.mxu0 0.0
  %1356 = vmatpush1.msra.mxu0 0.0
  %1357 = vmatprep.subr.mxu0 0.0
  %1358 = vmatpush1.msra.mxu0 0.0
  %1359 = vmatprep.subr.mxu0 0.0
  %1360 = vmatpush1.msra.mxu0 0.0
  %1361 = vmatprep.subr.mxu0 0.0
  %1362 = vmatpush1.msra.mxu0 0.0
  %1363 = vmatprep.subr.mxu0 0.0
  %1364 = vmatpush1.msra.mxu0 0.0
  %1365 = vmatprep.subr.mxu0 0.0
  %1366 = vmatpush1.msra.mxu0 0.0
  %1367 = vmatprep.subr.mxu0 0.0
  %1368 = vmatpush1.msra.mxu0 %v690
  %1369 = vmatprep.subr.mxu0 0.0
  %1370 = vmatpush1.msra.mxu0 %v689
  %1371 = vmatprep.subr.mxu0 0.0
  %1372 = vmatpush1.msra.mxu0 %v688
  %1373 = vmatprep.subr.mxu0 0.0
  %1374 = vmatpush1.msra.mxu0 %v687
  %1375 = vmatprep.subr.mxu0 0.0
  %1376 = vmatpush2.msra.mxu0 0.0
  %1377 = vmatprep.subr.mxu0 0.0
  %1378 = vmatpush2.msra.mxu0 0.0
  %1379 = vmatprep.subr.mxu0 0.0
  %1380 = vmatpush2.msra.mxu0 0.0
  %1381 = vmatprep.subr.mxu0 0.0
  %1382 = vmatpush2.msra.mxu0 0.0
  %1383 = vmatprep.subr.mxu0 0.0
  %1384 = vmatpush2.msra.mxu0 0.0
  %1385 = vmatprep.subr.mxu0 0.0
  %1386 = vmatpush2.msra.mxu0 0.0
  %1387 = vmatprep.subr.mxu0 0.0
  %1388 = vmatpush2.msra.mxu0 0.0
  %1389 = vmatprep.subr.mxu0 0.0
  %1390 = vmatpush2.msra.mxu0 0.0
  %1391 = vmatprep.subr.mxu0 0.0
  %1392 = vmatpush2.msra.mxu0 0.0
  %1393 = vmatprep.subr.mxu0 0.0
  %1394 = vmatpush2.msra.mxu0 0.0
  %1395 = vmatprep.subr.mxu0 0.0
  %1396 = vmatpush2.msra.mxu0 0.0
  %1397 = vmatprep.subr.mxu0 0.0
  %1398 = vmatpush2.msra.mxu0 0.0
  %1399 = vmatprep.subr.mxu0 0.0
  %1400 = vmatpush2.msra.mxu0 0.0
  %1401 = vmatprep.subr.mxu0 0.0
  %1402 = vmatpush2.msra.mxu0 0.0
  %1403 = vmatprep.subr.mxu0 0.0
  %1404 = vmatpush2.msra.mxu0 0.0
  %1405 = vmatprep.subr.mxu0 0.0
  %1406 = vmatpush2.msra.mxu0 0.0
  %1407 = vmatprep.mubr.f32.mxu0 0.0
  %1408 = vmatmul.mubr.f32.gmra.mxu0 %v1341
  %v1409 = vpop.f32.mrf.mxu0
  %v1410 = vadd.f32 %v1340, %v1409
  %v1411 = vpop.f32.mrf.mxu0
  %1412 = vdwg.mxu0
  %v1413 = vxor.u32 %v1410, 2147483648
  %v1414 = vmul.f32 %v1413, 1.442695
  %v1415 = vpow.pop %v1414
  %v1416 = vadd.f32 %v1415, 1.0
  %v1417 = vrcp.pop %v1416
  %v1418 = vmul.f32 1.0, %v1417
  %v1419 = vtanh.pop %v1410
  %v1420 = vmul.f32 %v1418, %v1322
  %1422 = vrot.lane.b32.xlu0 %v1419, 64
  %v1423 = vpop.permute.xlu0 %1422
  %v1425 = vmul.f32 %v1418, %v1423
  %1427 = vrot.lane.b32.xlu0 %v1425, 32
  %v1428 = vpop.permute.xlu0 %1427
  %v1430 = vadd.f32 %v1420, %v1428
  %v1431 = vtanh.pop %v1430
  %1433 = vrot.lane.b32.xlu0 %v1431, 64
  %v1434 = vpop.permute.xlu0 %1433
  %v1436 = vmul.f32 %v1418, %v1434
  %1438 = vrot.lane.b32.xlu0 %v1436, 32
  %v1439 = vpop.permute.xlu0 %1438
  %s1441 = scalar_lea.vmem [#allocation3], 12
  %1442 = vst.msk [vmem:[%s1441] sm:$0x3] %vm793, %v1439
  %1443 = vrot.lane.b32.xlu0 %v1436, 16
  %v1444 = vpop.permute.xlu0 %1443
  %s1446 = scalar_lea.vmem [#allocation4], 2
  %1447 = vst.msk [vmem:[%s1446] sm:$0x3] %vm793, %v1444
  %v1448 = vld [vmem:[%s217] sm:$0x3]
  %v1449 = vsel %vm65, %v1439, 0
  %1451 = vmatprep.subr.mxu0 0.0
  %1452 = vmatpush1.msra.mxu0 0.0
  %1453 = vmatprep.subr.mxu0 0.0
  %1454 = vmatpush1.msra.mxu0 0.0
  %1455 = vmatprep.subr.mxu0 0.0
  %1456 = vmatpush1.msra.mxu0 0.0
  %1457 = vmatprep.subr.mxu0 0.0
  %1458 = vmatpush1.msra.mxu0 0.0
  %1459 = vmatprep.subr.mxu0 0.0
  %1460 = vmatpush1.msra.mxu0 0.0
  %1461 = vmatprep.subr.mxu0 0.0
  %1462 = vmatpush1.msra.mxu0 0.0
  %1463 = vmatprep.subr.mxu0 0.0
  %1464 = vmatpush1.msra.mxu0 0.0
  %1465 = vmatprep.subr.mxu0 0.0
  %1466 = vmatpush1.msra.mxu0 0.0
  %1467 = vmatprep.subr.mxu0 0.0
  %1468 = vmatpush1.msra.mxu0 0.0
  %1469 = vmatprep.subr.mxu0 0.0
  %1470 = vmatpush1.msra.mxu0 0.0
  %1471 = vmatprep.subr.mxu0 0.0
  %1472 = vmatpush1.msra.mxu0 0.0
  %1473 = vmatprep.subr.mxu0 0.0
  %1474 = vmatpush1.msra.mxu0 0.0
  %1475 = vmatprep.subr.mxu0 0.0
  %1476 = vmatpush1.msra.mxu0 %v690
  %1477 = vmatprep.subr.mxu0 0.0
  %1478 = vmatpush1.msra.mxu0 %v689
  %1479 = vmatprep.subr.mxu0 0.0
  %1480 = vmatpush1.msra.mxu0 %v688
  %1481 = vmatprep.subr.mxu0 0.0
  %1482 = vmatpush1.msra.mxu0 %v687
  %1483 = vmatprep.subr.mxu0 0.0
  %1484 = vmatpush2.msra.mxu0 0.0
  %1485 = vmatprep.subr.mxu0 0.0
  %1486 = vmatpush2.msra.mxu0 0.0
  %1487 = vmatprep.subr.mxu0 0.0
  %1488 = vmatpush2.msra.mxu0 0.0
  %1489 = vmatprep.subr.mxu0 0.0
  %1490 = vmatpush2.msra.mxu0 0.0
  %1491 = vmatprep.subr.mxu0 0.0
  %1492 = vmatpush2.msra.mxu0 0.0
  %1493 = vmatprep.subr.mxu0 0.0
  %1494 = vmatpush2.msra.mxu0 0.0
  %1495 = vmatprep.subr.mxu0 0.0
  %1496 = vmatpush2.msra.mxu0 0.0
  %1497 = vmatprep.subr.mxu0 0.0
  %1498 = vmatpush2.msra.mxu0 0.0
  %1499 = vmatprep.subr.mxu0 0.0
  %1500 = vmatpush2.msra.mxu0 0.0
  %1501 = vmatprep.subr.mxu0 0.0
  %1502 = vmatpush2.msra.mxu0 0.0
  %1503 = vmatprep.subr.mxu0 0.0
  %1504 = vmatpush2.msra.mxu0 0.0
  %1505 = vmatprep.subr.mxu0 0.0
  %1506 = vmatpush2.msra.mxu0 0.0
  %1507 = vmatprep.subr.mxu0 0.0
  %1508 = vmatpush2.msra.mxu0 0.0
  %1509 = vmatprep.subr.mxu0 0.0
  %1510 = vmatpush2.msra.mxu0 0.0
  %1511 = vmatprep.subr.mxu0 0.0
  %1512 = vmatpush2.msra.mxu0 0.0
  %1513 = vmatprep.subr.mxu0 0.0
  %1514 = vmatpush2.msra.mxu0 0.0
  %1515 = vmatprep.mubr.f32.mxu0 0.0
  %1516 = vmatmul.mubr.f32.gmra.mxu0 %v1449
  %v1517 = vpop.f32.mrf.mxu0
  %v1518 = vadd.f32 %v1448, %v1517
  %v1519 = vpop.f32.mrf.mxu0
  %1520 = vdwg.mxu0
  %v1521 = vxor.u32 %v1518, 2147483648
  %v1522 = vmul.f32 %v1521, 1.442695
  %v1523 = vpow.pop %v1522
  %v1524 = vadd.f32 %v1523, 1.0
  %v1525 = vrcp.pop %v1524
  %v1526 = vmul.f32 1.0, %v1525
  %v1527 = vtanh.pop %v1518
  %v1528 = vmul.f32 %v1526, %v1430
  %1530 = vrot.lane.b32.xlu0 %v1527, 64
  %v1531 = vpop.permute.xlu0 %1530
  %v1533 = vmul.f32 %v1526, %v1531
  %1535 = vrot.lane.b32.xlu0 %v1533, 32
  %v1536 = vpop.permute.xlu0 %1535
  %v1538 = vadd.f32 %v1528, %v1536
  %v1539 = vtanh.pop %v1538
  %1541 = vrot.lane.b32.xlu0 %v1539, 64
  %v1542 = vpop.permute.xlu0 %1541
  %v1544 = vmul.f32 %v1526, %v1542
  %1546 = vrot.lane.b32.xlu0 %v1544, 32
  %v1547 = vpop.permute.xlu0 %1546
  %s1549 = scalar_lea.vmem [#allocation3], 14
  %1550 = vst.msk [vmem:[%s1549] sm:$0x3] %vm793, %v1547
  %1551 = vrot.lane.b32.xlu0 %v1544, 16
  %v1552 = vpop.permute.xlu0 %1551
  %1554 = vst.msk [vmem:[#allocation4] sm:$0x3] %vm793, %v1552
  %v1555 = vld [vmem:[%s7] sm:$0x1]
  %v1556 = vld [vmem:[%s8] sm:$0x1]
  %v1557 = vld [vmem:[%s4] sm:$0xff]
  %v1558 = vld [vmem:[%s4 + $0x8] sm:$0xff]
  %v1559 = vld [vmem:[%s4 + $0x10] sm:$0xff]
  %v1560 = vld [vmem:[%s4 + $0x18] sm:$0xff]
  %v1561 = vld [vmem:[%s6] sm:$0x1]
  %v1562 = vld [vmem:[#allocation3] sm:$0x3]
  %v1563 = vld [vmem:[#allocation4] sm:$0x3]
  %v1564 = vsel %vm793, %v1562, 0.0
  %1565 = vadd.xlane.f32.xlu0 %v1564
  %v1566 = vpop.xlane.xlu0 %1565
  %v1567 = vsel %vm793, %v1563, 0.0
  %1568 = vadd.xlane.f32.xlu0 %v1567
  %v1569 = vpop.xlane.xlu0 %1568
  %v1570 = vadd.f32 %v1566, %v1569
  %v1571 = vrcp.pop 32.0
  %v1572 = vmul.f32 %v1570, %v1571
  %v1573 = vsub.f32 %v1562, %v1572
  %v1574 = vsub.f32 %v1563, %v1572
  %v1575 = vmul.f32 %v1573, %v1573
  %v1576 = vsel %vm793, %v1575, 0.0
  %1577 = vadd.xlane.f32.xlu0 %v1576
  %v1578 = vpop.xlane.xlu0 %1577
  %v1579 = vmul.f32 %v1574, %v1574
  %v1580 = vsel %vm793, %v1579, 0.0
  %1581 = vadd.xlane.f32.xlu0 %v1580
  %v1582 = vpop.xlane.xlu0 %1581
  %v1583 = vadd.f32 %v1578, %v1582
  %v1584 = vmul.f32 %v1583, %v1571
  %v1585 = vadd.f32 %v1584, 1e-05
  %v1586 = vrsqrt.pop %v1585
  %v1587 = vmul.f32 %v1573, %v1586
  %v1589 = vlaneseq
  %v1590 = vshrl.u32 %v1589, 7
  %v1591 = vsub.s32 0, %v1590
  %v1592 = vrot.slane %v1555, %v1591
  %v1594 = vmul.f32 %v1587, %v1592
  %v1596 = vlaneseq
  %v1597 = vshrl.u32 %v1596, 7
  %v1598 = vsub.s32 0, %v1597
  %v1599 = vrot.slane %v1556, %v1598
  %v1601 = vadd.f32 %v1594, %v1599
  %v1602 = vmul.f32 %v1574, %v1586
  %1603 = vrot.lane.b32.xlu0 %v1592, 112
  %v1604 = vpop.permute.xlu0 %1603
  %v1606 = vmul.f32 %v1602, %v1604
  %1607 = vrot.lane.b32.xlu0 %v1599, 112
  %v1608 = vpop.permute.xlu0 %1607
  %v1610 = vadd.f32 %v1606, %v1608
  %vm1611 = vcmask 130048
  %v1613 = vsel %vm1611, %v1610, 0
  %1615 = vmatprep.subr.mxu0 0.0
  %1616 = vmatpush1.msra.mxu0 0.0
  %1617 = vmatprep.subr.mxu0 0.0
  %1618 = vmatpush1.msra.mxu0 0.0
  %1619 = vmatprep.subr.mxu0 0.0
  %1620 = vmatpush1.msra.mxu0 0.0
  %1621 = vmatprep.subr.mxu0 0.0
  %1622 = vmatpush1.msra.mxu0 0.0
  %1623 = vmatprep.subr.mxu0 0.0
  %1624 = vmatpush1.msra.mxu0 0.0
  %1625 = vmatprep.subr.mxu0 0.0
  %1626 = vmatpush1.msra.mxu0 0.0
  %1627 = vmatprep.subr.mxu0 0.0
  %1628 = vmatpush1.msra.mxu0 0.0
  %1629 = vmatprep.subr.mxu0 0.0
  %1630 = vmatpush1.msra.mxu0 0.0
  %1631 = vmatprep.subr.mxu0 0.0
  %1632 = vmatpush1.msra.mxu0 0.0
  %1633 = vmatprep.subr.mxu0 0.0
  %1634 = vmatpush1.msra.mxu0 0.0
  %1635 = vmatprep.subr.mxu0 0.0
  %1636 = vmatpush1.msra.mxu0 0.0
  %1637 = vmatprep.subr.mxu0 0.0
  %1638 = vmatpush1.msra.mxu0 0.0
  %1639 = vmatprep.subr.mxu0 0.0
  %1640 = vmatpush1.msra.mxu0 0.0
  %1641 = vmatprep.subr.mxu0 0.0
  %1642 = vmatpush1.msra.mxu0 0.0
  %1643 = vmatprep.subr.mxu0 0.0
  %1644 = vmatpush1.msra.mxu0 %v1560
  %1645 = vmatprep.subr.mxu0 0.0
  %1646 = vmatpush1.msra.mxu0 %v1559
  %1647 = vmatprep.subr.mxu0 0.0
  %1648 = vmatpush2.msra.mxu0 0.0
  %1649 = vmatprep.subr.mxu0 0.0
  %1650 = vmatpush2.msra.mxu0 0.0
  %1651 = vmatprep.subr.mxu0 0.0
  %1652 = vmatpush2.msra.mxu0 0.0
  %1653 = vmatprep.subr.mxu0 0.0
  %1654 = vmatpush2.msra.mxu0 0.0
  %1655 = vmatprep.subr.mxu0 0.0
  %1656 = vmatpush2.msra.mxu0 0.0
  %1657 = vmatprep.subr.mxu0 0.0
  %1658 = vmatpush2.msra.mxu0 0.0
  %1659 = vmatprep.subr.mxu0 0.0
  %1660 = vmatpush2.msra.mxu0 0.0
  %1661 = vmatprep.subr.mxu0 0.0
  %1662 = vmatpush2.msra.mxu0 0.0
  %1663 = vmatprep.subr.mxu0 0.0
  %1664 = vmatpush2.msra.mxu0 0.0
  %1665 = vmatprep.subr.mxu0 0.0
  %1666 = vmatpush2.msra.mxu0 0.0
  %1667 = vmatprep.subr.mxu0 0.0
  %1668 = vmatpush2.msra.mxu0 0.0
  %1669 = vmatprep.subr.mxu0 0.0
  %1670 = vmatpush2.msra.mxu0 0.0
  %1671 = vmatprep.subr.mxu0 0.0
  %1672 = vmatpush2.msra.mxu0 0.0
  %1673 = vmatprep.subr.mxu0 0.0
  %1674 = vmatpush2.msra.mxu0 0.0
  %1675 = vmatprep.subr.mxu0 0.0
  %1676 = vmatpush2.msra.mxu0 0.0
  %1677 = vmatprep.subr.mxu0 0.0
  %1678 = vmatpush2.msra.mxu0 0.0
  %1679 = vmatprep.mubr.f32.mxu0 0.0
  %1680 = vmatmul.mubr.f32.gmra.mxu0 %v1613
  %v1681 = vpop.f32.mrf.mxu0
  %v1682 = vadd.f32 0.0, %v1681
  %v1683 = vpop.f32.mrf.mxu0
  %1684 = vdwg.mxu0
  %v1686 = vsel %vm1611, %v1601, 0
  %1688 = vmatprep.subr.mxu0 0.0
  %1689 = vmatpush1.msra.mxu0 0.0
  %1690 = vmatprep.subr.mxu0 0.0
  %1691 = vmatpush1.msra.mxu0 0.0
  %1692 = vmatprep.subr.mxu0 0.0
  %1693 = vmatpush1.msra.mxu0 0.0
  %1694 = vmatprep.subr.mxu0 0.0
  %1695 = vmatpush1.msra.mxu0 0.0
  %1696 = vmatprep.subr.mxu0 0.0
  %1697 = vmatpush1.msra.mxu0 0.0
  %1698 = vmatprep.subr.mxu0 0.0
  %1699 = vmatpush1.msra.mxu0 0.0
  %1700 = vmatprep.subr.mxu0 0.0
  %1701 = vmatpush1.msra.mxu0 0.0
  %1702 = vmatprep.subr.mxu0 0.0
  %1703 = vmatpush1.msra.mxu0 0.0
  %1704 = vmatprep.subr.mxu0 0.0
  %1705 = vmatpush1.msra.mxu0 0.0
  %1706 = vmatprep.subr.mxu0 0.0
  %1707 = vmatpush1.msra.mxu0 0.0
  %1708 = vmatprep.subr.mxu0 0.0
  %1709 = vmatpush1.msra.mxu0 0.0
  %1710 = vmatprep.subr.mxu0 0.0
  %1711 = vmatpush1.msra.mxu0 0.0
  %1712 = vmatprep.subr.mxu0 0.0
  %1713 = vmatpush1.msra.mxu0 0.0
  %1714 = vmatprep.subr.mxu0 0.0
  %1715 = vmatpush1.msra.mxu0 0.0
  %1716 = vmatprep.subr.mxu0 0.0
  %1717 = vmatpush1.msra.mxu0 %v1558
  %1718 = vmatprep.subr.mxu0 0.0
  %1719 = vmatpush1.msra.mxu0 %v1557
  %1720 = vmatprep.subr.mxu0 0.0
  %1721 = vmatpush2.msra.mxu0 0.0
  %1722 = vmatprep.subr.mxu0 0.0
  %1723 = vmatpush2.msra.mxu0 0.0
  %1724 = vmatprep.subr.mxu0 0.0
  %1725 = vmatpush2.msra.mxu0 0.0
  %1726 = vmatprep.subr.mxu0 0.0
  %1727 = vmatpush2.msra.mxu0 0.0
  %1728 = vmatprep.subr.mxu0 0.0
  %1729 = vmatpush2.msra.mxu0 0.0
  %1730 = vmatprep.subr.mxu0 0.0
  %1731 = vmatpush2.msra.mxu0 0.0
  %1732 = vmatprep.subr.mxu0 0.0
  %1733 = vmatpush2.msra.mxu0 0.0
  %1734 = vmatprep.subr.mxu0 0.0
  %1735 = vmatpush2.msra.mxu0 0.0
  %1736 = vmatprep.subr.mxu0 0.0
  %1737 = vmatpush2.msra.mxu0 0.0
  %1738 = vmatprep.subr.mxu0 0.0
  %1739 = vmatpush2.msra.mxu0 0.0
  %1740 = vmatprep.subr.mxu0 0.0
  %1741 = vmatpush2.msra.mxu0 0.0
  %1742 = vmatprep.subr.mxu0 0.0
  %1743 = vmatpush2.msra.mxu0 0.0
  %1744 = vmatprep.subr.mxu0 0.0
  %1745 = vmatpush2.msra.mxu0 0.0
  %1746 = vmatprep.subr.mxu0 0.0
  %1747 = vmatpush2.msra.mxu0 0.0
  %1748 = vmatprep.subr.mxu0 0.0
  %1749 = vmatpush2.msra.mxu0 0.0
  %1750 = vmatprep.subr.mxu0 0.0
  %1751 = vmatpush2.msra.mxu0 0.0
  %1752 = vmatprep.mubr.f32.mxu0 0.0
  %1753 = vmatmul.mubr.f32.gmra.mxu0 %v1686
  %v1754 = vpop.f32.mrf.mxu0
  %v1755 = vadd.f32 %v1682, %v1754
  %v1756 = vpop.f32.mrf.mxu0
  %1757 = vdwg.mxu0
  %v1759 = vlaneseq
  %v1760 = vshrl.u32 %v1759, 7
  %v1761 = vsub.s32 0, %v1760
  %v1762 = vrot.slane %v1561, %v1761
  %v1764 = vadd.f32 %v1755, %v1762
  %v1765 = vld [vmem:[%s1549] sm:$0x3]
  %v1766 = vld [vmem:[%s798] sm:$0x3]
  %v1767 = vsel %vm793, %v1765, 0.0
  %1768 = vadd.xlane.f32.xlu0 %v1767
  %v1769 = vpop.xlane.xlu0 %1768
  %v1770 = vsel %vm793, %v1766, 0.0
  %1771 = vadd.xlane.f32.xlu0 %v1770
  %v1772 = vpop.xlane.xlu0 %1771
  %v1773 = vadd.f32 %v1769, %v1772
  %v1774 = vmul.f32 %v1773, %v1571
  %v1775 = vsub.f32 %v1765, %v1774
  %v1776 = vsub.f32 %v1766, %v1774
  %v1777 = vmul.f32 %v1775, %v1775
  %v1778 = vsel %vm793, %v1777, 0.0
  %1779 = vadd.xlane.f32.xlu0 %v1778
  %v1780 = vpop.xlane.xlu0 %1779
  %v1781 = vmul.f32 %v1776, %v1776
  %v1782 = vsel %vm793, %v1781, 0.0
  %1783 = vadd.xlane.f32.xlu0 %v1782
  %v1784 = vpop.xlane.xlu0 %1783
  %v1785 = vadd.f32 %v1780, %v1784
  %v1786 = vmul.f32 %v1785, %v1571
  %v1787 = vadd.f32 %v1786, 1e-05
  %v1788 = vrsqrt.pop %v1787
  %v1789 = vmul.f32 %v1775, %v1788
  %v1790 = vmul.f32 %v1789, %v1592
  %v1791 = vadd.f32 %v1790, %v1599
  %v1792 = vmul.f32 %v1776, %v1788
  %v1793 = vmul.f32 %v1792, %v1604
  %v1794 = vadd.f32 %v1793, %v1608
  %v1796 = vsel %vm1611, %v1794, 0
  %1798 = vmatprep.subr.mxu0 0.0
  %1799 = vmatpush1.msra.mxu0 0.0
  %1800 = vmatprep.subr.mxu0 0.0
  %1801 = vmatpush1.msra.mxu0 0.0
  %1802 = vmatprep.subr.mxu0 0.0
  %1803 = vmatpush1.msra.mxu0 0.0
  %1804 = vmatprep.subr.mxu0 0.0
  %1805 = vmatpush1.msra.mxu0 0.0
  %1806 = vmatprep.subr.mxu0 0.0
  %1807 = vmatpush1.msra.mxu0 0.0
  %1808 = vmatprep.subr.mxu0 0.0
  %1809 = vmatpush1.msra.mxu0 0.0
  %1810 = vmatprep.subr.mxu0 0.0
  %1811 = vmatpush1.msra.mxu0 0.0
  %1812 = vmatprep.subr.mxu0 0.0
  %1813 = vmatpush1.msra.mxu0 0.0
  %1814 = vmatprep.subr.mxu0 0.0
  %1815 = vmatpush1.msra.mxu0 0.0
  %1816 = vmatprep.subr.mxu0 0.0
  %1817 = vmatpush1.msra.mxu0 0.0
  %1818 = vmatprep.subr.mxu0 0.0
  %1819 = vmatpush1.msra.mxu0 0.0
  %1820 = vmatprep.subr.mxu0 0.0
  %1821 = vmatpush1.msra.mxu0 0.0
  %1822 = vmatprep.subr.mxu0 0.0
  %1823 = vmatpush1.msra.mxu0 0.0
  %1824 = vmatprep.subr.mxu0 0.0
  %1825 = vmatpush1.msra.mxu0 0.0
  %1826 = vmatprep.subr.mxu0 0.0
  %1827 = vmatpush1.msra.mxu0 %v1560
  %1828 = vmatprep.subr.mxu0 0.0
  %1829 = vmatpush1.msra.mxu0 %v1559
  %1830 = vmatprep.subr.mxu0 0.0
  %1831 = vmatpush2.msra.mxu0 0.0
  %1832 = vmatprep.subr.mxu0 0.0
  %1833 = vmatpush2.msra.mxu0 0.0
  %1834 = vmatprep.subr.mxu0 0.0
  %1835 = vmatpush2.msra.mxu0 0.0
  %1836 = vmatprep.subr.mxu0 0.0
  %1837 = vmatpush2.msra.mxu0 0.0
  %1838 = vmatprep.subr.mxu0 0.0
  %1839 = vmatpush2.msra.mxu0 0.0
  %1840 = vmatprep.subr.mxu0 0.0
  %1841 = vmatpush2.msra.mxu0 0.0
  %1842 = vmatprep.subr.mxu0 0.0
  %1843 = vmatpush2.msra.mxu0 0.0
  %1844 = vmatprep.subr.mxu0 0.0
  %1845 = vmatpush2.msra.mxu0 0.0
  %1846 = vmatprep.subr.mxu0 0.0
  %1847 = vmatpush2.msra.mxu0 0.0
  %1848 = vmatprep.subr.mxu0 0.0
  %1849 = vmatpush2.msra.mxu0 0.0
  %1850 = vmatprep.subr.mxu0 0.0
  %1851 = vmatpush2.msra.mxu0 0.0
  %1852 = vmatprep.subr.mxu0 0.0
  %1853 = vmatpush2.msra.mxu0 0.0
  %1854 = vmatprep.subr.mxu0 0.0
  %1855 = vmatpush2.msra.mxu0 0.0
  %1856 = vmatprep.subr.mxu0 0.0
  %1857 = vmatpush2.msra.mxu0 0.0
  %1858 = vmatprep.subr.mxu0 0.0
  %1859 = vmatpush2.msra.mxu0 0.0
  %1860 = vmatprep.subr.mxu0 0.0
  %1861 = vmatpush2.msra.mxu0 0.0
  %1862 = vmatprep.mubr.f32.mxu0 0.0
  %1863 = vmatmul.mubr.f32.gmra.mxu0 %v1796
  %v1864 = vpop.f32.mrf.mxu0
  %v1865 = vadd.f32 0.0, %v1864
  %v1866 = vpop.f32.mrf.mxu0
  %1867 = vdwg.mxu0
  %v1869 = vsel %vm1611, %v1791, 0
  %1871 = vmatprep.subr.mxu0 0.0
  %1872 = vmatpush1.msra.mxu0 0.0
  %1873 = vmatprep.subr.mxu0 0.0
  %1874 = vmatpush1.msra.mxu0 0.0
  %1875 = vmatprep.subr.mxu0 0.0
  %1876 = vmatpush1.msra.mxu0 0.0
  %1877 = vmatprep.subr.mxu0 0.0
  %1878 = vmatpush1.msra.mxu0 0.0
  %1879 = vmatprep.subr.mxu0 0.0
  %1880 = vmatpush1.msra.mxu0 0.0
  %1881 = vmatprep.subr.mxu0 0.0
  %1882 = vmatpush1.msra.mxu0 0.0
  %1883 = vmatprep.subr.mxu0 0.0
  %1884 = vmatpush1.msra.mxu0 0.0
  %1885 = vmatprep.subr.mxu0 0.0
  %1886 = vmatpush1.msra.mxu0 0.0
  %1887 = vmatprep.subr.mxu0 0.0
  %1888 = vmatpush1.msra.mxu0 0.0
  %1889 = vmatprep.subr.mxu0 0.0
  %1890 = vmatpush1.msra.mxu0 0.0
  %1891 = vmatprep.subr.mxu0 0.0
  %1892 = vmatpush1.msra.mxu0 0.0
  %1893 = vmatprep.subr.mxu0 0.0
  %1894 = vmatpush1.msra.mxu0 0.0
  %1895 = vmatprep.subr.mxu0 0.0
  %1896 = vmatpush1.msra.mxu0 0.0
  %1897 = vmatprep.subr.mxu0 0.0
  %1898 = vmatpush1.msra.mxu0 0.0
  %1899 = vmatprep.subr.mxu0 0.0
  %1900 = vmatpush1.msra.mxu0 %v1558
  %1901 = vmatprep.subr.mxu0 0.0
  %1902 = vmatpush1.msra.mxu0 %v1557
  %1903 = vmatprep.subr.mxu0 0.0
  %1904 = vmatpush2.msra.mxu0 0.0
  %1905 = vmatprep.subr.mxu0 0.0
  %1906 = vmatpush2.msra.mxu0 0.0
  %1907 = vmatprep.subr.mxu0 0.0
  %1908 = vmatpush2.msra.mxu0 0.0
  %1909 = vmatprep.subr.mxu0 0.0
  %1910 = vmatpush2.msra.mxu0 0.0
  %1911 = vmatprep.subr.mxu0 0.0
  %1912 = vmatpush2.msra.mxu0 0.0
  %1913 = vmatprep.subr.mxu0 0.0
  %1914 = vmatpush2.msra.mxu0 0.0
  %1915 = vmatprep.subr.mxu0 0.0
  %1916 = vmatpush2.msra.mxu0 0.0
  %1917 = vmatprep.subr.mxu0 0.0
  %1918 = vmatpush2.msra.mxu0 0.0
  %1919 = vmatprep.subr.mxu0 0.0
  %1920 = vmatpush2.msra.mxu0 0.0
  %1921 = vmatprep.subr.mxu0 0.0
  %1922 = vmatpush2.msra.mxu0 0.0
  %1923 = vmatprep.subr.mxu0 0.0
  %1924 = vmatpush2.msra.mxu0 0.0
  %1925 = vmatprep.subr.mxu0 0.0
  %1926 = vmatpush2.msra.mxu0 0.0
  %1927 = vmatprep.subr.mxu0 0.0
  %1928 = vmatpush2.msra.mxu0 0.0
  %1929 = vmatprep.subr.mxu0 0.0
  %1930 = vmatpush2.msra.mxu0 0.0
  %1931 = vmatprep.subr.mxu0 0.0
  %1932 = vmatpush2.msra.mxu0 0.0
  %1933 = vmatprep.subr.mxu0 0.0
  %1934 = vmatpush2.msra.mxu0 0.0
  %1935 = vmatprep.mubr.f32.mxu0 0.0
  %1936 = vmatmul.mubr.f32.gmra.mxu0 %v1869
  %v1937 = vpop.f32.mrf.mxu0
  %v1938 = vadd.f32 %v1865, %v1937
  %v1939 = vpop.f32.mrf.mxu0
  %1940 = vdwg.mxu0
  %v1941 = vadd.f32 %v1938, %v1762
  %v1942 = vsel %vm52, %v1764, %v1941
  %1943 = vst [vmem:[#allocation2] sm:$0x3] %v1942
  %v1944 = vsel %vm52, %v1941, %v1764
  %1945 = vst [vmem:[%s217] sm:$0x3] %v1944
  %v1946 = vld [vmem:[%s901] sm:$0x3]
  %v1947 = vld [vmem:[%s1446] sm:$0x3]
  %v1948 = vsel %vm793, %v1946, 0.0
  %1949 = vadd.xlane.f32.xlu0 %v1948
  %v1950 = vpop.xlane.xlu0 %1949
  %v1951 = vsel %vm793, %v1947, 0.0
  %1952 = vadd.xlane.f32.xlu0 %v1951
  %v1953 = vpop.xlane.xlu0 %1952
  %v1954 = vadd.f32 %v1950, %v1953
  %v1955 = vmul.f32 %v1954, %v1571
  %v1956 = vsub.f32 %v1946, %v1955
  %v1957 = vsub.f32 %v1947, %v1955
  %v1958 = vmul.f32 %v1956, %v1956
  %v1959 = vsel %vm793, %v1958, 0.0
  %1960 = vadd.xlane.f32.xlu0 %v1959
  %v1961 = vpop.xlane.xlu0 %1960
  %v1962 = vmul.f32 %v1957, %v1957
  %v1963 = vsel %vm793, %v1962, 0.0
  %1964 = vadd.xlane.f32.xlu0 %v1963
  %v1965 = vpop.xlane.xlu0 %1964
  %v1966 = vadd.f32 %v1961, %v1965
  %v1967 = vmul.f32 %v1966, %v1571
  %v1968 = vadd.f32 %v1967, 1e-05
  %v1969 = vrsqrt.pop %v1968
  %v1970 = vmul.f32 %v1956, %v1969
  %v1971 = vmul.f32 %v1970, %v1592
  %v1972 = vadd.f32 %v1971, %v1599
  %v1973 = vmul.f32 %v1957, %v1969
  %v1974 = vmul.f32 %v1973, %v1604
  %v1975 = vadd.f32 %v1974, %v1608
  %v1977 = vsel %vm1611, %v1975, 0
  %1979 = vmatprep.subr.mxu0 0.0
  %1980 = vmatpush1.msra.mxu0 0.0
  %1981 = vmatprep.subr.mxu0 0.0
  %1982 = vmatpush1.msra.mxu0 0.0
  %1983 = vmatprep.subr.mxu0 0.0
  %1984 = vmatpush1.msra.mxu0 0.0
  %1985 = vmatprep.subr.mxu0 0.0
  %1986 = vmatpush1.msra.mxu0 0.0
  %1987 = vmatprep.subr.mxu0 0.0
  %1988 = vmatpush1.msra.mxu0 0.0
  %1989 = vmatprep.subr.mxu0 0.0
  %1990 = vmatpush1.msra.mxu0 0.0
  %1991 = vmatprep.subr.mxu0 0.0
  %1992 = vmatpush1.msra.mxu0 0.0
  %1993 = vmatprep.subr.mxu0 0.0
  %1994 = vmatpush1.msra.mxu0 0.0
  %1995 = vmatprep.subr.mxu0 0.0
  %1996 = vmatpush1.msra.mxu0 0.0
  %1997 = vmatprep.subr.mxu0 0.0
  %1998 = vmatpush1.msra.mxu0 0.0
  %1999 = vmatprep.subr.mxu0 0.0
  %2000 = vmatpush1.msra.mxu0 0.0
  %2001 = vmatprep.subr.mxu0 0.0
  %2002 = vmatpush1.msra.mxu0 0.0
  %2003 = vmatprep.subr.mxu0 0.0
  %2004 = vmatpush1.msra.mxu0 0.0
  %2005 = vmatprep.subr.mxu0 0.0
  %2006 = vmatpush1.msra.mxu0 0.0
  %2007 = vmatprep.subr.mxu0 0.0
  %2008 = vmatpush1.msra.mxu0 %v1560
  %2009 = vmatprep.subr.mxu0 0.0
  %2010 = vmatpush1.msra.mxu0 %v1559
  %2011 = vmatprep.subr.mxu0 0.0
  %2012 = vmatpush2.msra.mxu0 0.0
  %2013 = vmatprep.subr.mxu0 0.0
  %2014 = vmatpush2.msra.mxu0 0.0
  %2015 = vmatprep.subr.mxu0 0.0
  %2016 = vmatpush2.msra.mxu0 0.0
  %2017 = vmatprep.subr.mxu0 0.0
  %2018 = vmatpush2.msra.mxu0 0.0
  %2019 = vmatprep.subr.mxu0 0.0
  %2020 = vmatpush2.msra.mxu0 0.0
  %2021 = vmatprep.subr.mxu0 0.0
  %2022 = vmatpush2.msra.mxu0 0.0
  %2023 = vmatprep.subr.mxu0 0.0
  %2024 = vmatpush2.msra.mxu0 0.0
  %2025 = vmatprep.subr.mxu0 0.0
  %2026 = vmatpush2.msra.mxu0 0.0
  %2027 = vmatprep.subr.mxu0 0.0
  %2028 = vmatpush2.msra.mxu0 0.0
  %2029 = vmatprep.subr.mxu0 0.0
  %2030 = vmatpush2.msra.mxu0 0.0
  %2031 = vmatprep.subr.mxu0 0.0
  %2032 = vmatpush2.msra.mxu0 0.0
  %2033 = vmatprep.subr.mxu0 0.0
  %2034 = vmatpush2.msra.mxu0 0.0
  %2035 = vmatprep.subr.mxu0 0.0
  %2036 = vmatpush2.msra.mxu0 0.0
  %2037 = vmatprep.subr.mxu0 0.0
  %2038 = vmatpush2.msra.mxu0 0.0
  %2039 = vmatprep.subr.mxu0 0.0
  %2040 = vmatpush2.msra.mxu0 0.0
  %2041 = vmatprep.subr.mxu0 0.0
  %2042 = vmatpush2.msra.mxu0 0.0
  %2043 = vmatprep.mubr.f32.mxu0 0.0
  %2044 = vmatmul.mubr.f32.gmra.mxu0 %v1977
  %v2045 = vpop.f32.mrf.mxu0
  %v2046 = vadd.f32 0.0, %v2045
  %v2047 = vpop.f32.mrf.mxu0
  %2048 = vdwg.mxu0
  %v2050 = vsel %vm1611, %v1972, 0
  %2052 = vmatprep.subr.mxu0 0.0
  %2053 = vmatpush1.msra.mxu0 0.0
  %2054 = vmatprep.subr.mxu0 0.0
  %2055 = vmatpush1.msra.mxu0 0.0
  %2056 = vmatprep.subr.mxu0 0.0
  %2057 = vmatpush1.msra.mxu0 0.0
  %2058 = vmatprep.subr.mxu0 0.0
  %2059 = vmatpush1.msra.mxu0 0.0
  %2060 = vmatprep.subr.mxu0 0.0
  %2061 = vmatpush1.msra.mxu0 0.0
  %2062 = vmatprep.subr.mxu0 0.0
  %2063 = vmatpush1.msra.mxu0 0.0
  %2064 = vmatprep.subr.mxu0 0.0
  %2065 = vmatpush1.msra.mxu0 0.0
  %2066 = vmatprep.subr.mxu0 0.0
  %2067 = vmatpush1.msra.mxu0 0.0
  %2068 = vmatprep.subr.mxu0 0.0
  %2069 = vmatpush1.msra.mxu0 0.0
  %2070 = vmatprep.subr.mxu0 0.0
  %2071 = vmatpush1.msra.mxu0 0.0
  %2072 = vmatprep.subr.mxu0 0.0
  %2073 = vmatpush1.msra.mxu0 0.0
  %2074 = vmatprep.subr.mxu0 0.0
  %2075 = vmatpush1.msra.mxu0 0.0
  %2076 = vmatprep.subr.mxu0 0.0
  %2077 = vmatpush1.msra.mxu0 0.0
  %2078 = vmatprep.subr.mxu0 0.0
  %2079 = vmatpush1.msra.mxu0 0.0
  %2080 = vmatprep.subr.mxu0 0.0
  %2081 = vmatpush1.msra.mxu0 %v1558
  %2082 = vmatprep.subr.mxu0 0.0
  %2083 = vmatpush1.msra.mxu0 %v1557
  %2084 = vmatprep.subr.mxu0 0.0
  %2085 = vmatpush2.msra.mxu0 0.0
  %2086 = vmatprep.subr.mxu0 0.0
  %2087 = vmatpush2.msra.mxu0 0.0
  %2088 = vmatprep.subr.mxu0 0.0
  %2089 = vmatpush2.msra.mxu0 0.0
  %2090 = vmatprep.subr.mxu0 0.0
  %2091 = vmatpush2.msra.mxu0 0.0
  %2092 = vmatprep.subr.mxu0 0.0
  %2093 = vmatpush2.msra.mxu0 0.0
  %2094 = vmatprep.subr.mxu0 0.0
  %2095 = vmatpush2.msra.mxu0 0.0
  %2096 = vmatprep.subr.mxu0 0.0
  %2097 = vmatpush2.msra.mxu0 0.0
  %2098 = vmatprep.subr.mxu0 0.0
  %2099 = vmatpush2.msra.mxu0 0.0
  %2100 = vmatprep.subr.mxu0 0.0
  %2101 = vmatpush2.msra.mxu0 0.0
  %2102 = vmatprep.subr.mxu0 0.0
  %2103 = vmatpush2.msra.mxu0 0.0
  %2104 = vmatprep.subr.mxu0 0.0
  %2105 = vmatpush2.msra.mxu0 0.0
  %2106 = vmatprep.subr.mxu0 0.0
  %2107 = vmatpush2.msra.mxu0 0.0
  %2108 = vmatprep.subr.mxu0 0.0
  %2109 = vmatpush2.msra.mxu0 0.0
  %2110 = vmatprep.subr.mxu0 0.0
  %2111 = vmatpush2.msra.mxu0 0.0
  %2112 = vmatprep.subr.mxu0 0.0
  %2113 = vmatpush2.msra.mxu0 0.0
  %2114 = vmatprep.subr.mxu0 0.0
  %2115 = vmatpush2.msra.mxu0 0.0
  %2116 = vmatprep.mubr.f32.mxu0 0.0
  %2117 = vmatmul.mubr.f32.gmra.mxu0 %v2050
  %v2118 = vpop.f32.mrf.mxu0
  %v2119 = vadd.f32 %v2046, %v2118
  %v2120 = vpop.f32.mrf.mxu0
  %2121 = vdwg.mxu0
  %v2122 = vadd.f32 %v2119, %v1762
  %v2123 = vld [vmem:[%s1441] sm:$0x3]
  %v2124 = vld [vmem:[%s906] sm:$0x3]
  %v2125 = vsel %vm793, %v2123, 0.0
  %2126 = vadd.xlane.f32.xlu0 %v2125
  %v2127 = vpop.xlane.xlu0 %2126
  %v2128 = vsel %vm793, %v2124, 0.0
  %2129 = vadd.xlane.f32.xlu0 %v2128
  %v2130 = vpop.xlane.xlu0 %2129
  %v2131 = vadd.f32 %v2127, %v2130
  %v2132 = vmul.f32 %v2131, %v1571
  %v2133 = vsub.f32 %v2123, %v2132
  %v2134 = vsub.f32 %v2124, %v2132
  %v2135 = vmul.f32 %v2133, %v2133
  %v2136 = vsel %vm793, %v2135, 0.0
  %2137 = vadd.xlane.f32.xlu0 %v2136
  %v2138 = vpop.xlane.xlu0 %2137
  %v2139 = vmul.f32 %v2134, %v2134
  %v2140 = vsel %vm793, %v2139, 0.0
  %2141 = vadd.xlane.f32.xlu0 %v2140
  %v2142 = vpop.xlane.xlu0 %2141
  %v2143 = vadd.f32 %v2138, %v2142
  %v2144 = vmul.f32 %v2143, %v1571
  %v2145 = vadd.f32 %v2144, 1e-05
  %v2146 = vrsqrt.pop %v2145
  %v2147 = vmul.f32 %v2133, %v2146
  %v2148 = vmul.f32 %v2147, %v1592
  %v2149 = vadd.f32 %v2148, %v1599
  %v2150 = vmul.f32 %v2134, %v2146
  %v2151 = vmul.f32 %v2150, %v1604
  %v2152 = vadd.f32 %v2151, %v1608
  %v2154 = vsel %vm1611, %v2152, 0
  %2156 = vmatprep.subr.mxu0 0.0
  %2157 = vmatpush1.msra.mxu0 0.0
  %2158 = vmatprep.subr.mxu0 0.0
  %2159 = vmatpush1.msra.mxu0 0.0
  %2160 = vmatprep.subr.mxu0 0.0
  %2161 = vmatpush1.msra.mxu0 0.0
  %2162 = vmatprep.subr.mxu0 0.0
  %2163 = vmatpush1.msra.mxu0 0.0
  %2164 = vmatprep.subr.mxu0 0.0
  %2165 = vmatpush1.msra.mxu0 0.0
  %2166 = vmatprep.subr.mxu0 0.0
  %2167 = vmatpush1.msra.mxu0 0.0
  %2168 = vmatprep.subr.mxu0 0.0
  %2169 = vmatpush1.msra.mxu0 0.0
  %2170 = vmatprep.subr.mxu0 0.0
  %2171 = vmatpush1.msra.mxu0 0.0
  %2172 = vmatprep.subr.mxu0 0.0
  %2173 = vmatpush1.msra.mxu0 0.0
  %2174 = vmatprep.subr.mxu0 0.0
  %2175 = vmatpush1.msra.mxu0 0.0
  %2176 = vmatprep.subr.mxu0 0.0
  %2177 = vmatpush1.msra.mxu0 0.0
  %2178 = vmatprep.subr.mxu0 0.0
  %2179 = vmatpush1.msra.mxu0 0.0
  %2180 = vmatprep.subr.mxu0 0.0
  %2181 = vmatpush1.msra.mxu0 0.0
  %2182 = vmatprep.subr.mxu0 0.0
  %2183 = vmatpush1.msra.mxu0 0.0
  %2184 = vmatprep.subr.mxu0 0.0
  %2185 = vmatpush1.msra.mxu0 %v1560
  %2186 = vmatprep.subr.mxu0 0.0
  %2187 = vmatpush1.msra.mxu0 %v1559
  %2188 = vmatprep.subr.mxu0 0.0
  %2189 = vmatpush2.msra.mxu0 0.0
  %2190 = vmatprep.subr.mxu0 0.0
  %2191 = vmatpush2.msra.mxu0 0.0
  %2192 = vmatprep.subr.mxu0 0.0
  %2193 = vmatpush2.msra.mxu0 0.0
  %2194 = vmatprep.subr.mxu0 0.0
  %2195 = vmatpush2.msra.mxu0 0.0
  %2196 = vmatprep.subr.mxu0 0.0
  %2197 = vmatpush2.msra.mxu0 0.0
  %2198 = vmatprep.subr.mxu0 0.0
  %2199 = vmatpush2.msra.mxu0 0.0
  %2200 = vmatprep.subr.mxu0 0.0
  %2201 = vmatpush2.msra.mxu0 0.0
  %2202 = vmatprep.subr.mxu0 0.0
  %2203 = vmatpush2.msra.mxu0 0.0
  %2204 = vmatprep.subr.mxu0 0.0
  %2205 = vmatpush2.msra.mxu0 0.0
  %2206 = vmatprep.subr.mxu0 0.0
  %2207 = vmatpush2.msra.mxu0 0.0
  %2208 = vmatprep.subr.mxu0 0.0
  %2209 = vmatpush2.msra.mxu0 0.0
  %2210 = vmatprep.subr.mxu0 0.0
  %2211 = vmatpush2.msra.mxu0 0.0
  %2212 = vmatprep.subr.mxu0 0.0
  %2213 = vmatpush2.msra.mxu0 0.0
  %2214 = vmatprep.subr.mxu0 0.0
  %2215 = vmatpush2.msra.mxu0 0.0
  %2216 = vmatprep.subr.mxu0 0.0
  %2217 = vmatpush2.msra.mxu0 0.0
  %2218 = vmatprep.subr.mxu0 0.0
  %2219 = vmatpush2.msra.mxu0 0.0
  %2220 = vmatprep.mubr.f32.mxu0 0.0
  %2221 = vmatmul.mubr.f32.gmra.mxu0 %v2154
  %v2222 = vpop.f32.mrf.mxu0
  %v2223 = vadd.f32 0.0, %v2222
  %v2224 = vpop.f32.mrf.mxu0
  %2225 = vdwg.mxu0
  %v2227 = vsel %vm1611, %v2149, 0
  %2229 = vmatprep.subr.mxu0 0.0
  %2230 = vmatpush1.msra.mxu0 0.0
  %2231 = vmatprep.subr.mxu0 0.0
  %2232 = vmatpush1.msra.mxu0 0.0
  %2233 = vmatprep.subr.mxu0 0.0
  %2234 = vmatpush1.msra.mxu0 0.0
  %2235 = vmatprep.subr.mxu0 0.0
  %2236 = vmatpush1.msra.mxu0 0.0
  %2237 = vmatprep.subr.mxu0 0.0
  %2238 = vmatpush1.msra.mxu0 0.0
  %2239 = vmatprep.subr.mxu0 0.0
  %2240 = vmatpush1.msra.mxu0 0.0
  %2241 = vmatprep.subr.mxu0 0.0
  %2242 = vmatpush1.msra.mxu0 0.0
  %2243 = vmatprep.subr.mxu0 0.0
  %2244 = vmatpush1.msra.mxu0 0.0
  %2245 = vmatprep.subr.mxu0 0.0
  %2246 = vmatpush1.msra.mxu0 0.0
  %2247 = vmatprep.subr.mxu0 0.0
  %2248 = vmatpush1.msra.mxu0 0.0
  %2249 = vmatprep.subr.mxu0 0.0
  %2250 = vmatpush1.msra.mxu0 0.0
  %2251 = vmatprep.subr.mxu0 0.0
  %2252 = vmatpush1.msra.mxu0 0.0
  %2253 = vmatprep.subr.mxu0 0.0
  %2254 = vmatpush1.msra.mxu0 0.0
  %2255 = vmatprep.subr.mxu0 0.0
  %2256 = vmatpush1.msra.mxu0 0.0
  %2257 = vmatprep.subr.mxu0 0.0
  %2258 = vmatpush1.msra.mxu0 %v1558
  %2259 = vmatprep.subr.mxu0 0.0
  %2260 = vmatpush1.msra.mxu0 %v1557
  %2261 = vmatprep.subr.mxu0 0.0
  %2262 = vmatpush2.msra.mxu0 0.0
  %2263 = vmatprep.subr.mxu0 0.0
  %2264 = vmatpush2.msra.mxu0 0.0
  %2265 = vmatprep.subr.mxu0 0.0
  %2266 = vmatpush2.msra.mxu0 0.0
  %2267 = vmatprep.subr.mxu0 0.0
  %2268 = vmatpush2.msra.mxu0 0.0
  %2269 = vmatprep.subr.mxu0 0.0
  %2270 = vmatpush2.msra.mxu0 0.0
  %2271 = vmatprep.subr.mxu0 0.0
  %2272 = vmatpush2.msra.mxu0 0.0
  %2273 = vmatprep.subr.mxu0 0.0
  %2274 = vmatpush2.msra.mxu0 0.0
  %2275 = vmatprep.subr.mxu0 0.0
  %2276 = vmatpush2.msra.mxu0 0.0
  %2277 = vmatprep.subr.mxu0 0.0
  %2278 = vmatpush2.msra.mxu0 0.0
  %2279 = vmatprep.subr.mxu0 0.0
  %2280 = vmatpush2.msra.mxu0 0.0
  %2281 = vmatprep.subr.mxu0 0.0
  %2282 = vmatpush2.msra.mxu0 0.0
  %2283 = vmatprep.subr.mxu0 0.0
  %2284 = vmatpush2.msra.mxu0 0.0
  %2285 = vmatprep.subr.mxu0 0.0
  %2286 = vmatpush2.msra.mxu0 0.0
  %2287 = vmatprep.subr.mxu0 0.0
  %2288 = vmatpush2.msra.mxu0 0.0
  %2289 = vmatprep.subr.mxu0 0.0
  %2290 = vmatpush2.msra.mxu0 0.0
  %2291 = vmatprep.subr.mxu0 0.0
  %2292 = vmatpush2.msra.mxu0 0.0
  %2293 = vmatprep.mubr.f32.mxu0 0.0
  %2294 = vmatmul.mubr.f32.gmra.mxu0 %v2227
  %v2295 = vpop.f32.mrf.mxu0
  %v2296 = vadd.f32 %v2223, %v2295
  %v2297 = vpop.f32.mrf.mxu0
  %2298 = vdwg.mxu0
  %v2299 = vadd.f32 %v2296, %v1762
  %v2300 = vsel %vm52, %v2122, %v2299
  %2301 = vst [vmem:[%s370] sm:$0x3] %v2300
  %v2302 = vsel %vm52, %v2299, %v2122
  %2303 = vst [vmem:[%s373] sm:$0x3] %v2302
  %v2304 = vld [vmem:[%s1009] sm:$0x3]
  %v2305 = vld [vmem:[%s1338] sm:$0x3]
  %v2306 = vsel %vm793, %v2304, 0.0
  %2307 = vadd.xlane.f32.xlu0 %v2306
  %v2308 = vpop.xlane.xlu0 %2307
  %v2309 = vsel %vm793, %v2305, 0.0
  %2310 = vadd.xlane.f32.xlu0 %v2309
  %v2311 = vpop.xlane.xlu0 %2310
  %v2312 = vadd.f32 %v2308, %v2311
  %v2313 = vmul.f32 %v2312, %v1571
  %v2314 = vsub.f32 %v2304, %v2313
  %v2315 = vsub.f32 %v2305, %v2313
  %v2316 = vmul.f32 %v2314, %v2314
  %v2317 = vsel %vm793, %v2316, 0.0
  %2318 = vadd.xlane.f32.xlu0 %v2317
  %v2319 = vpop.xlane.xlu0 %2318
  %v2320 = vmul.f32 %v2315, %v2315
  %v2321 = vsel %vm793, %v2320, 0.0
  %2322 = vadd.xlane.f32.xlu0 %v2321
  %v2323 = vpop.xlane.xlu0 %2322
  %v2324 = vadd.f32 %v2319, %v2323
  %v2325 = vmul.f32 %v2324, %v1571
  %v2326 = vadd.f32 %v2325, 1e-05
  %v2327 = vrsqrt.pop %v2326
  %v2328 = vmul.f32 %v2314, %v2327
  %v2329 = vmul.f32 %v2328, %v1592
  %v2330 = vadd.f32 %v2329, %v1599
  %v2331 = vmul.f32 %v2315, %v2327
  %v2332 = vmul.f32 %v2331, %v1604
  %v2333 = vadd.f32 %v2332, %v1608
  %v2335 = vsel %vm1611, %v2333, 0
  %2337 = vmatprep.subr.mxu0 0.0
  %2338 = vmatpush1.msra.mxu0 0.0
  %2339 = vmatprep.subr.mxu0 0.0
  %2340 = vmatpush1.msra.mxu0 0.0
  %2341 = vmatprep.subr.mxu0 0.0
  %2342 = vmatpush1.msra.mxu0 0.0
  %2343 = vmatprep.subr.mxu0 0.0
  %2344 = vmatpush1.msra.mxu0 0.0
  %2345 = vmatprep.subr.mxu0 0.0
  %2346 = vmatpush1.msra.mxu0 0.0
  %2347 = vmatprep.subr.mxu0 0.0
  %2348 = vmatpush1.msra.mxu0 0.0
  %2349 = vmatprep.subr.mxu0 0.0
  %2350 = vmatpush1.msra.mxu0 0.0
  %2351 = vmatprep.subr.mxu0 0.0
  %2352 = vmatpush1.msra.mxu0 0.0
  %2353 = vmatprep.subr.mxu0 0.0
  %2354 = vmatpush1.msra.mxu0 0.0
  %2355 = vmatprep.subr.mxu0 0.0
  %2356 = vmatpush1.msra.mxu0 0.0
  %2357 = vmatprep.subr.mxu0 0.0
  %2358 = vmatpush1.msra.mxu0 0.0
  %2359 = vmatprep.subr.mxu0 0.0
  %2360 = vmatpush1.msra.mxu0 0.0
  %2361 = vmatprep.subr.mxu0 0.0
  %2362 = vmatpush1.msra.mxu0 0.0
  %2363 = vmatprep.subr.mxu0 0.0
  %2364 = vmatpush1.msra.mxu0 0.0
  %2365 = vmatprep.subr.mxu0 0.0
  %2366 = vmatpush1.msra.mxu0 %v1560
  %2367 = vmatprep.subr.mxu0 0.0
  %2368 = vmatpush1.msra.mxu0 %v1559
  %2369 = vmatprep.subr.mxu0 0.0
  %2370 = vmatpush2.msra.mxu0 0.0
  %2371 = vmatprep.subr.mxu0 0.0
  %2372 = vmatpush2.msra.mxu0 0.0
  %2373 = vmatprep.subr.mxu0 0.0
  %2374 = vmatpush2.msra.mxu0 0.0
  %2375 = vmatprep.subr.mxu0 0.0
  %2376 = vmatpush2.msra.mxu0 0.0
  %2377 = vmatprep.subr.mxu0 0.0
  %2378 = vmatpush2.msra.mxu0 0.0
  %2379 = vmatprep.subr.mxu0 0.0
  %2380 = vmatpush2.msra.mxu0 0.0
  %2381 = vmatprep.subr.mxu0 0.0
  %2382 = vmatpush2.msra.mxu0 0.0
  %2383 = vmatprep.subr.mxu0 0.0
  %2384 = vmatpush2.msra.mxu0 0.0
  %2385 = vmatprep.subr.mxu0 0.0
  %2386 = vmatpush2.msra.mxu0 0.0
  %2387 = vmatprep.subr.mxu0 0.0
  %2388 = vmatpush2.msra.mxu0 0.0
  %2389 = vmatprep.subr.mxu0 0.0
  %2390 = vmatpush2.msra.mxu0 0.0
  %2391 = vmatprep.subr.mxu0 0.0
  %2392 = vmatpush2.msra.mxu0 0.0
  %2393 = vmatprep.subr.mxu0 0.0
  %2394 = vmatpush2.msra.mxu0 0.0
  %2395 = vmatprep.subr.mxu0 0.0
  %2396 = vmatpush2.msra.mxu0 0.0
  %2397 = vmatprep.subr.mxu0 0.0
  %2398 = vmatpush2.msra.mxu0 0.0
  %2399 = vmatprep.subr.mxu0 0.0
  %2400 = vmatpush2.msra.mxu0 0.0
  %2401 = vmatprep.mubr.f32.mxu0 0.0
  %2402 = vmatmul.mubr.f32.gmra.mxu0 %v2335
  %v2403 = vpop.f32.mrf.mxu0
  %v2404 = vadd.f32 0.0, %v2403
  %v2405 = vpop.f32.mrf.mxu0
  %2406 = vdwg.mxu0
  %v2408 = vsel %vm1611, %v2330, 0
  %2410 = vmatprep.subr.mxu0 0.0
  %2411 = vmatpush1.msra.mxu0 0.0
  %2412 = vmatprep.subr.mxu0 0.0
  %2413 = vmatpush1.msra.mxu0 0.0
  %2414 = vmatprep.subr.mxu0 0.0
  %2415 = vmatpush1.msra.mxu0 0.0
  %2416 = vmatprep.subr.mxu0 0.0
  %2417 = vmatpush1.msra.mxu0 0.0
  %2418 = vmatprep.subr.mxu0 0.0
  %2419 = vmatpush1.msra.mxu0 0.0
  %2420 = vmatprep.subr.mxu0 0.0
  %2421 = vmatpush1.msra.mxu0 0.0
  %2422 = vmatprep.subr.mxu0 0.0
  %2423 = vmatpush1.msra.mxu0 0.0
  %2424 = vmatprep.subr.mxu0 0.0
  %2425 = vmatpush1.msra.mxu0 0.0
  %2426 = vmatprep.subr.mxu0 0.0
  %2427 = vmatpush1.msra.mxu0 0.0
  %2428 = vmatprep.subr.mxu0 0.0
  %2429 = vmatpush1.msra.mxu0 0.0
  %2430 = vmatprep.subr.mxu0 0.0
  %2431 = vmatpush1.msra.mxu0 0.0
  %2432 = vmatprep.subr.mxu0 0.0
  %2433 = vmatpush1.msra.mxu0 0.0
  %2434 = vmatprep.subr.mxu0 0.0
  %2435 = vmatpush1.msra.mxu0 0.0
  %2436 = vmatprep.subr.mxu0 0.0
  %2437 = vmatpush1.msra.mxu0 0.0
  %2438 = vmatprep.subr.mxu0 0.0
  %2439 = vmatpush1.msra.mxu0 %v1558
  %2440 = vmatprep.subr.mxu0 0.0
  %2441 = vmatpush1.msra.mxu0 %v1557
  %2442 = vmatprep.subr.mxu0 0.0
  %2443 = vmatpush2.msra.mxu0 0.0
  %2444 = vmatprep.subr.mxu0 0.0
  %2445 = vmatpush2.msra.mxu0 0.0
  %2446 = vmatprep.subr.mxu0 0.0
  %2447 = vmatpush2.msra.mxu0 0.0
  %2448 = vmatprep.subr.mxu0 0.0
  %2449 = vmatpush2.msra.mxu0 0.0
  %2450 = vmatprep.subr.mxu0 0.0
  %2451 = vmatpush2.msra.mxu0 0.0
  %2452 = vmatprep.subr.mxu0 0.0
  %2453 = vmatpush2.msra.mxu0 0.0
  %2454 = vmatprep.subr.mxu0 0.0
  %2455 = vmatpush2.msra.mxu0 0.0
  %2456 = vmatprep.subr.mxu0 0.0
  %2457 = vmatpush2.msra.mxu0 0.0
  %2458 = vmatprep.subr.mxu0 0.0
  %2459 = vmatpush2.msra.mxu0 0.0
  %2460 = vmatprep.subr.mxu0 0.0
  %2461 = vmatpush2.msra.mxu0 0.0
  %2462 = vmatprep.subr.mxu0 0.0
  %2463 = vmatpush2.msra.mxu0 0.0
  %2464 = vmatprep.subr.mxu0 0.0
  %2465 = vmatpush2.msra.mxu0 0.0
  %2466 = vmatprep.subr.mxu0 0.0
  %2467 = vmatpush2.msra.mxu0 0.0
  %2468 = vmatprep.subr.mxu0 0.0
  %2469 = vmatpush2.msra.mxu0 0.0
  %2470 = vmatprep.subr.mxu0 0.0
  %2471 = vmatpush2.msra.mxu0 0.0
  %2472 = vmatprep.subr.mxu0 0.0
  %2473 = vmatpush2.msra.mxu0 0.0
  %2474 = vmatprep.mubr.f32.mxu0 0.0
  %2475 = vmatmul.mubr.f32.gmra.mxu0 %v2408
  %v2476 = vpop.f32.mrf.mxu0
  %v2477 = vadd.f32 %v2404, %v2476
  %v2478 = vpop.f32.mrf.mxu0
  %2479 = vdwg.mxu0
  %v2480 = vadd.f32 %v2477, %v1762
  %v2481 = vld [vmem:[%s1333] sm:$0x3]
  %v2482 = vld [vmem:[%s1014] sm:$0x3]
  %v2483 = vsel %vm793, %v2481, 0.0
  %2484 = vadd.xlane.f32.xlu0 %v2483
  %v2485 = vpop.xlane.xlu0 %2484
  %v2486 = vsel %vm793, %v2482, 0.0
  %2487 = vadd.xlane.f32.xlu0 %v2486
  %v2488 = vpop.xlane.xlu0 %2487
  %v2489 = vadd.f32 %v2485, %v2488
  %v2490 = vmul.f32 %v2489, %v1571
  %v2491 = vsub.f32 %v2481, %v2490
  %v2492 = vsub.f32 %v2482, %v2490
  %v2493 = vmul.f32 %v2491, %v2491
  %v2494 = vsel %vm793, %v2493, 0.0
  %2495 = vadd.xlane.f32.xlu0 %v2494
  %v2496 = vpop.xlane.xlu0 %2495
  %v2497 = vmul.f32 %v2492, %v2492
  %v2498 = vsel %vm793, %v2497, 0.0
  %2499 = vadd.xlane.f32.xlu0 %v2498
  %v2500 = vpop.xlane.xlu0 %2499
  %v2501 = vadd.f32 %v2496, %v2500
  %v2502 = vmul.f32 %v2501, %v1571
  %v2503 = vadd.f32 %v2502, 1e-05
  %v2504 = vrsqrt.pop %v2503
  %v2505 = vmul.f32 %v2491, %v2504
  %v2506 = vmul.f32 %v2505, %v1592
  %v2507 = vadd.f32 %v2506, %v1599
  %v2508 = vmul.f32 %v2492, %v2504
  %v2509 = vmul.f32 %v2508, %v1604
  %v2510 = vadd.f32 %v2509, %v1608
  %v2512 = vsel %vm1611, %v2510, 0
  %2514 = vmatprep.subr.mxu0 0.0
  %2515 = vmatpush1.msra.mxu0 0.0
  %2516 = vmatprep.subr.mxu0 0.0
  %2517 = vmatpush1.msra.mxu0 0.0
  %2518 = vmatprep.subr.mxu0 0.0
  %2519 = vmatpush1.msra.mxu0 0.0
  %2520 = vmatprep.subr.mxu0 0.0
  %2521 = vmatpush1.msra.mxu0 0.0
  %2522 = vmatprep.subr.mxu0 0.0
  %2523 = vmatpush1.msra.mxu0 0.0
  %2524 = vmatprep.subr.mxu0 0.0
  %2525 = vmatpush1.msra.mxu0 0.0
  %2526 = vmatprep.subr.mxu0 0.0
  %2527 = vmatpush1.msra.mxu0 0.0
  %2528 = vmatprep.subr.mxu0 0.0
  %2529 = vmatpush1.msra.mxu0 0.0
  %2530 = vmatprep.subr.mxu0 0.0
  %2531 = vmatpush1.msra.mxu0 0.0
  %2532 = vmatprep.subr.mxu0 0.0
  %2533 = vmatpush1.msra.mxu0 0.0
  %2534 = vmatprep.subr.mxu0 0.0
  %2535 = vmatpush1.msra.mxu0 0.0
  %2536 = vmatprep.subr.mxu0 0.0
  %2537 = vmatpush1.msra.mxu0 0.0
  %2538 = vmatprep.subr.mxu0 0.0
  %2539 = vmatpush1.msra.mxu0 0.0
  %2540 = vmatprep.subr.mxu0 0.0
  %2541 = vmatpush1.msra.mxu0 0.0
  %2542 = vmatprep.subr.mxu0 0.0
  %2543 = vmatpush1.msra.mxu0 %v1560
  %2544 = vmatprep.subr.mxu0 0.0
  %2545 = vmatpush1.msra.mxu0 %v1559
  %2546 = vmatprep.subr.mxu0 0.0
  %2547 = vmatpush2.msra.mxu0 0.0
  %2548 = vmatprep.subr.mxu0 0.0
  %2549 = vmatpush2.msra.mxu0 0.0
  %2550 = vmatprep.subr.mxu0 0.0
  %2551 = vmatpush2.msra.mxu0 0.0
  %2552 = vmatprep.subr.mxu0 0.0
  %2553 = vmatpush2.msra.mxu0 0.0
  %2554 = vmatprep.subr.mxu0 0.0
  %2555 = vmatpush2.msra.mxu0 0.0
  %2556 = vmatprep.subr.mxu0 0.0
  %2557 = vmatpush2.msra.mxu0 0.0
  %2558 = vmatprep.subr.mxu0 0.0
  %2559 = vmatpush2.msra.mxu0 0.0
  %2560 = vmatprep.subr.mxu0 0.0
  %2561 = vmatpush2.msra.mxu0 0.0
  %2562 = vmatprep.subr.mxu0 0.0
  %2563 = vmatpush2.msra.mxu0 0.0
  %2564 = vmatprep.subr.mxu0 0.0
  %2565 = vmatpush2.msra.mxu0 0.0
  %2566 = vmatprep.subr.mxu0 0.0
  %2567 = vmatpush2.msra.mxu0 0.0
  %2568 = vmatprep.subr.mxu0 0.0
  %2569 = vmatpush2.msra.mxu0 0.0
  %2570 = vmatprep.subr.mxu0 0.0
  %2571 = vmatpush2.msra.mxu0 0.0
  %2572 = vmatprep.subr.mxu0 0.0
  %2573 = vmatpush2.msra.mxu0 0.0
  %2574 = vmatprep.subr.mxu0 0.0
  %2575 = vmatpush2.msra.mxu0 0.0
  %2576 = vmatprep.subr.mxu0 0.0
  %2577 = vmatpush2.msra.mxu0 0.0
  %2578 = vmatprep.mubr.f32.mxu0 0.0
  %2579 = vmatmul.mubr.f32.gmra.mxu0 %v2512
  %v2580 = vpop.f32.mrf.mxu0
  %v2581 = vadd.f32 0.0, %v2580
  %v2582 = vpop.f32.mrf.mxu0
  %2583 = vdwg.mxu0
  %v2585 = vsel %vm1611, %v2507, 0
  %2587 = vmatprep.subr.mxu0 0.0
  %2588 = vmatpush1.msra.mxu0 0.0
  %2589 = vmatprep.subr.mxu0 0.0
  %2590 = vmatpush1.msra.mxu0 0.0
  %2591 = vmatprep.subr.mxu0 0.0
  %2592 = vmatpush1.msra.mxu0 0.0
  %2593 = vmatprep.subr.mxu0 0.0
  %2594 = vmatpush1.msra.mxu0 0.0
  %2595 = vmatprep.subr.mxu0 0.0
  %2596 = vmatpush1.msra.mxu0 0.0
  %2597 = vmatprep.subr.mxu0 0.0
  %2598 = vmatpush1.msra.mxu0 0.0
  %2599 = vmatprep.subr.mxu0 0.0
  %2600 = vmatpush1.msra.mxu0 0.0
  %2601 = vmatprep.subr.mxu0 0.0
  %2602 = vmatpush1.msra.mxu0 0.0
  %2603 = vmatprep.subr.mxu0 0.0
  %2604 = vmatpush1.msra.mxu0 0.0
  %2605 = vmatprep.subr.mxu0 0.0
  %2606 = vmatpush1.msra.mxu0 0.0
  %2607 = vmatprep.subr.mxu0 0.0
  %2608 = vmatpush1.msra.mxu0 0.0
  %2609 = vmatprep.subr.mxu0 0.0
  %2610 = vmatpush1.msra.mxu0 0.0
  %2611 = vmatprep.subr.mxu0 0.0
  %2612 = vmatpush1.msra.mxu0 0.0
  %2613 = vmatprep.subr.mxu0 0.0
  %2614 = vmatpush1.msra.mxu0 0.0
  %2615 = vmatprep.subr.mxu0 0.0
  %2616 = vmatpush1.msra.mxu0 %v1558
  %2617 = vmatprep.subr.mxu0 0.0
  %2618 = vmatpush1.msra.mxu0 %v1557
  %2619 = vmatprep.subr.mxu0 0.0
  %2620 = vmatpush2.msra.mxu0 0.0
  %2621 = vmatprep.subr.mxu0 0.0
  %2622 = vmatpush2.msra.mxu0 0.0
  %2623 = vmatprep.subr.mxu0 0.0
  %2624 = vmatpush2.msra.mxu0 0.0
  %2625 = vmatprep.subr.mxu0 0.0
  %2626 = vmatpush2.msra.mxu0 0.0
  %2627 = vmatprep.subr.mxu0 0.0
  %2628 = vmatpush2.msra.mxu0 0.0
  %2629 = vmatprep.subr.mxu0 0.0
  %2630 = vmatpush2.msra.mxu0 0.0
  %2631 = vmatprep.subr.mxu0 0.0
  %2632 = vmatpush2.msra.mxu0 0.0
  %2633 = vmatprep.subr.mxu0 0.0
  %2634 = vmatpush2.msra.mxu0 0.0
  %2635 = vmatprep.subr.mxu0 0.0
  %2636 = vmatpush2.msra.mxu0 0.0
  %2637 = vmatprep.subr.mxu0 0.0
  %2638 = vmatpush2.msra.mxu0 0.0
  %2639 = vmatprep.subr.mxu0 0.0
  %2640 = vmatpush2.msra.mxu0 0.0
  %2641 = vmatprep.subr.mxu0 0.0
  %2642 = vmatpush2.msra.mxu0 0.0
  %2643 = vmatprep.subr.mxu0 0.0
  %2644 = vmatpush2.msra.mxu0 0.0
  %2645 = vmatprep.subr.mxu0 0.0
  %2646 = vmatpush2.msra.mxu0 0.0
  %2647 = vmatprep.subr.mxu0 0.0
  %2648 = vmatpush2.msra.mxu0 0.0
  %2649 = vmatprep.subr.mxu0 0.0
  %2650 = vmatpush2.msra.mxu0 0.0
  %2651 = vmatprep.mubr.f32.mxu0 0.0
  %2652 = vmatmul.mubr.f32.gmra.mxu0 %v2585
  %v2653 = vpop.f32.mrf.mxu0
  %v2654 = vadd.f32 %v2581, %v2653
  %v2655 = vpop.f32.mrf.mxu0
  %2656 = vdwg.mxu0
  %v2657 = vadd.f32 %v2654, %v1762
  %v2658 = vsel %vm52, %v2480, %v2657
  %2659 = vst [vmem:[%s526] sm:$0x3] %v2658
  %v2660 = vsel %vm52, %v2657, %v2480
  %2661 = vst [vmem:[%s529] sm:$0x3] %v2660
  %v2662 = vld [vmem:[%s1117] sm:$0x3]
  %v2663 = vld [vmem:[%s1230] sm:$0x3]
  %v2664 = vsel %vm793, %v2662, 0.0
  %2665 = vadd.xlane.f32.xlu0 %v2664
  %v2666 = vpop.xlane.xlu0 %2665
  %v2667 = vsel %vm793, %v2663, 0.0
  %2668 = vadd.xlane.f32.xlu0 %v2667
  %v2669 = vpop.xlane.xlu0 %2668
  %v2670 = vadd.f32 %v2666, %v2669
  %v2671 = vmul.f32 %v2670, %v1571
  %v2672 = vsub.f32 %v2662, %v2671
  %v2673 = vsub.f32 %v2663, %v2671
  %v2674 = vmul.f32 %v2672, %v2672
  %v2675 = vsel %vm793, %v2674, 0.0
  %2676 = vadd.xlane.f32.xlu0 %v2675
  %v2677 = vpop.xlane.xlu0 %2676
  %v2678 = vmul.f32 %v2673, %v2673
  %v2679 = vsel %vm793, %v2678, 0.0
  %2680 = vadd.xlane.f32.xlu0 %v2679
  %v2681 = vpop.xlane.xlu0 %2680
  %v2682 = vadd.f32 %v2677, %v2681
  %v2683 = vmul.f32 %v2682, %v1571
  %v2684 = vadd.f32 %v2683, 1e-05
  %v2685 = vrsqrt.pop %v2684
  %v2686 = vmul.f32 %v2672, %v2685
  %v2687 = vmul.f32 %v2686, %v1592
  %v2688 = vadd.f32 %v2687, %v1599
  %v2689 = vmul.f32 %v2673, %v2685
  %v2690 = vmul.f32 %v2689, %v1604
  %v2691 = vadd.f32 %v2690, %v1608
  %v2693 = vsel %vm1611, %v2691, 0
  %2695 = vmatprep.subr.mxu0 0.0
  %2696 = vmatpush1.msra.mxu0 0.0
  %2697 = vmatprep.subr.mxu0 0.0
  %2698 = vmatpush1.msra.mxu0 0.0
  %2699 = vmatprep.subr.mxu0 0.0
  %2700 = vmatpush1.msra.mxu0 0.0
  %2701 = vmatprep.subr.mxu0 0.0
  %2702 = vmatpush1.msra.mxu0 0.0
  %2703 = vmatprep.subr.mxu0 0.0
  %2704 = vmatpush1.msra.mxu0 0.0
  %2705 = vmatprep.subr.mxu0 0.0
  %2706 = vmatpush1.msra.mxu0 0.0
  %2707 = vmatprep.subr.mxu0 0.0
  %2708 = vmatpush1.msra.mxu0 0.0
  %2709 = vmatprep.subr.mxu0 0.0
  %2710 = vmatpush1.msra.mxu0 0.0
  %2711 = vmatprep.subr.mxu0 0.0
  %2712 = vmatpush1.msra.mxu0 0.0
  %2713 = vmatprep.subr.mxu0 0.0
  %2714 = vmatpush1.msra.mxu0 0.0
  %2715 = vmatprep.subr.mxu0 0.0
  %2716 = vmatpush1.msra.mxu0 0.0
  %2717 = vmatprep.subr.mxu0 0.0
  %2718 = vmatpush1.msra.mxu0 0.0
  %2719 = vmatprep.subr.mxu0 0.0
  %2720 = vmatpush1.msra.mxu0 0.0
  %2721 = vmatprep.subr.mxu0 0.0
  %2722 = vmatpush1.msra.mxu0 0.0
  %2723 = vmatprep.subr.mxu0 0.0
  %2724 = vmatpush1.msra.mxu0 %v1560
  %2725 = vmatprep.subr.mxu0 0.0
  %2726 = vmatpush1.msra.mxu0 %v1559
  %2727 = vmatprep.subr.mxu0 0.0
  %2728 = vmatpush2.msra.mxu0 0.0
  %2729 = vmatprep.subr.mxu0 0.0
  %2730 = vmatpush2.msra.mxu0 0.0
  %2731 = vmatprep.subr.mxu0 0.0
  %2732 = vmatpush2.msra.mxu0 0.0
  %2733 = vmatprep.subr.mxu0 0.0
  %2734 = vmatpush2.msra.mxu0 0.0
  %2735 = vmatprep.subr.mxu0 0.0
  %2736 = vmatpush2.msra.mxu0 0.0
  %2737 = vmatprep.subr.mxu0 0.0
  %2738 = vmatpush2.msra.mxu0 0.0
  %2739 = vmatprep.subr.mxu0 0.0
  %2740 = vmatpush2.msra.mxu0 0.0
  %2741 = vmatprep.subr.mxu0 0.0
  %2742 = vmatpush2.msra.mxu0 0.0
  %2743 = vmatprep.subr.mxu0 0.0
  %2744 = vmatpush2.msra.mxu0 0.0
  %2745 = vmatprep.subr.mxu0 0.0
  %2746 = vmatpush2.msra.mxu0 0.0
  %2747 = vmatprep.subr.mxu0 0.0
  %2748 = vmatpush2.msra.mxu0 0.0
  %2749 = vmatprep.subr.mxu0 0.0
  %2750 = vmatpush2.msra.mxu0 0.0
  %2751 = vmatprep.subr.mxu0 0.0
  %2752 = vmatpush2.msra.mxu0 0.0
  %2753 = vmatprep.subr.mxu0 0.0
  %2754 = vmatpush2.msra.mxu0 0.0
  %2755 = vmatprep.subr.mxu0 0.0
  %2756 = vmatpush2.msra.mxu0 0.0
  %2757 = vmatprep.subr.mxu0 0.0
  %2758 = vmatpush2.msra.mxu0 0.0
  %2759 = vmatprep.mubr.f32.mxu0 0.0
  %2760 = vmatmul.mubr.f32.gmra.mxu0 %v2693
  %v2761 = vpop.f32.mrf.mxu0
  %v2762 = vadd.f32 0.0, %v2761
  %v2763 = vpop.f32.mrf.mxu0
  %2764 = vdwg.mxu0
  %v2766 = vsel %vm1611, %v2688, 0
  %2768 = vmatprep.subr.mxu0 0.0
  %2769 = vmatpush1.msra.mxu0 0.0
  %2770 = vmatprep.subr.mxu0 0.0
  %2771 = vmatpush1.msra.mxu0 0.0
  %2772 = vmatprep.subr.mxu0 0.0
  %2773 = vmatpush1.msra.mxu0 0.0
  %2774 = vmatprep.subr.mxu0 0.0
  %2775 = vmatpush1.msra.mxu0 0.0
  %2776 = vmatprep.subr.mxu0 0.0
  %2777 = vmatpush1.msra.mxu0 0.0
  %2778 = vmatprep.subr.mxu0 0.0
  %2779 = vmatpush1.msra.mxu0 0.0
  %2780 = vmatprep.subr.mxu0 0.0
  %2781 = vmatpush1.msra.mxu0 0.0
  %2782 = vmatprep.subr.mxu0 0.0
  %2783 = vmatpush1.msra.mxu0 0.0
  %2784 = vmatprep.subr.mxu0 0.0
  %2785 = vmatpush1.msra.mxu0 0.0
  %2786 = vmatprep.subr.mxu0 0.0
  %2787 = vmatpush1.msra.mxu0 0.0
  %2788 = vmatprep.subr.mxu0 0.0
  %2789 = vmatpush1.msra.mxu0 0.0
  %2790 = vmatprep.subr.mxu0 0.0
  %2791 = vmatpush1.msra.mxu0 0.0
  %2792 = vmatprep.subr.mxu0 0.0
  %2793 = vmatpush1.msra.mxu0 0.0
  %2794 = vmatprep.subr.mxu0 0.0
  %2795 = vmatpush1.msra.mxu0 0.0
  %2796 = vmatprep.subr.mxu0 0.0
  %2797 = vmatpush1.msra.mxu0 %v1558
  %2798 = vmatprep.subr.mxu0 0.0
  %2799 = vmatpush1.msra.mxu0 %v1557
  %2800 = vmatprep.subr.mxu0 0.0
  %2801 = vmatpush2.msra.mxu0 0.0
  %2802 = vmatprep.subr.mxu0 0.0
  %2803 = vmatpush2.msra.mxu0 0.0
  %2804 = vmatprep.subr.mxu0 0.0
  %2805 = vmatpush2.msra.mxu0 0.0
  %2806 = vmatprep.subr.mxu0 0.0
  %2807 = vmatpush2.msra.mxu0 0.0
  %2808 = vmatprep.subr.mxu0 0.0
  %2809 = vmatpush2.msra.mxu0 0.0
  %2810 = vmatprep.subr.mxu0 0.0
  %2811 = vmatpush2.msra.mxu0 0.0
  %2812 = vmatprep.subr.mxu0 0.0
  %2813 = vmatpush2.msra.mxu0 0.0
  %2814 = vmatprep.subr.mxu0 0.0
  %2815 = vmatpush2.msra.mxu0 0.0
  %2816 = vmatprep.subr.mxu0 0.0
  %2817 = vmatpush2.msra.mxu0 0.0
  %2818 = vmatprep.subr.mxu0 0.0
  %2819 = vmatpush2.msra.mxu0 0.0
  %2820 = vmatprep.subr.mxu0 0.0
  %2821 = vmatpush2.msra.mxu0 0.0
  %2822 = vmatprep.subr.mxu0 0.0
  %2823 = vmatpush2.msra.mxu0 0.0
  %2824 = vmatprep.subr.mxu0 0.0
  %2825 = vmatpush2.msra.mxu0 0.0
  %2826 = vmatprep.subr.mxu0 0.0
  %2827 = vmatpush2.msra.mxu0 0.0
  %2828 = vmatprep.subr.mxu0 0.0
  %2829 = vmatpush2.msra.mxu0 0.0
  %2830 = vmatprep.subr.mxu0 0.0
  %2831 = vmatpush2.msra.mxu0 0.0
  %2832 = vmatprep.mubr.f32.mxu0 0.0
  %2833 = vmatmul.mubr.f32.gmra.mxu0 %v2766
  %v2834 = vpop.f32.mrf.mxu0
  %v2835 = vadd.f32 %v2762, %v2834
  %v2836 = vpop.f32.mrf.mxu0
  %2837 = vdwg.mxu0
  %v2838 = vadd.f32 %v2835, %v1762
  %v2839 = vld [vmem:[%s1225] sm:$0x3]
  %v2840 = vld [vmem:[%s1122] sm:$0x3]
  %v2841 = vsel %vm793, %v2839, 0.0
  %2842 = vadd.xlane.f32.xlu0 %v2841
  %v2843 = vpop.xlane.xlu0 %2842
  %v2844 = vsel %vm793, %v2840, 0.0
  %2845 = vadd.xlane.f32.xlu0 %v2844
  %v2846 = vpop.xlane.xlu0 %2845
  %v2847 = vadd.f32 %v2843, %v2846
  %v2848 = vmul.f32 %v2847, %v1571
  %v2849 = vsub.f32 %v2839, %v2848
  %v2850 = vsub.f32 %v2840, %v2848
  %v2851 = vmul.f32 %v2849, %v2849
  %v2852 = vsel %vm793, %v2851, 0.0
  %2853 = vadd.xlane.f32.xlu0 %v2852
  %v2854 = vpop.xlane.xlu0 %2853
  %v2855 = vmul.f32 %v2850, %v2850
  %v2856 = vsel %vm793, %v2855, 0.0
  %2857 = vadd.xlane.f32.xlu0 %v2856
  %v2858 = vpop.xlane.xlu0 %2857
  %v2859 = vadd.f32 %v2854, %v2858
  %v2860 = vmul.f32 %v2859, %v1571
  %v2861 = vadd.f32 %v2860, 1e-05
  %v2862 = vrsqrt.pop %v2861
  %v2863 = vmul.f32 %v2849, %v2862
  %v2864 = vmul.f32 %v2863, %v1592
  %v2865 = vadd.f32 %v2864, %v1599
  %v2866 = vmul.f32 %v2850, %v2862
  %v2867 = vmul.f32 %v2866, %v1604
  %v2868 = vadd.f32 %v2867, %v1608
  %v2870 = vsel %vm1611, %v2868, 0
  %2872 = vmatprep.subr.mxu0 0.0
  %2873 = vmatpush1.msra.mxu0 0.0
  %2874 = vmatprep.subr.mxu0 0.0
  %2875 = vmatpush1.msra.mxu0 0.0
  %2876 = vmatprep.subr.mxu0 0.0
  %2877 = vmatpush1.msra.mxu0 0.0
  %2878 = vmatprep.subr.mxu0 0.0
  %2879 = vmatpush1.msra.mxu0 0.0
  %2880 = vmatprep.subr.mxu0 0.0
  %2881 = vmatpush1.msra.mxu0 0.0
  %2882 = vmatprep.subr.mxu0 0.0
  %2883 = vmatpush1.msra.mxu0 0.0
  %2884 = vmatprep.subr.mxu0 0.0
  %2885 = vmatpush1.msra.mxu0 0.0
  %2886 = vmatprep.subr.mxu0 0.0
  %2887 = vmatpush1.msra.mxu0 0.0
  %2888 = vmatprep.subr.mxu0 0.0
  %2889 = vmatpush1.msra.mxu0 0.0
  %2890 = vmatprep.subr.mxu0 0.0
  %2891 = vmatpush1.msra.mxu0 0.0
  %2892 = vmatprep.subr.mxu0 0.0
  %2893 = vmatpush1.msra.mxu0 0.0
  %2894 = vmatprep.subr.mxu0 0.0
  %2895 = vmatpush1.msra.mxu0 0.0
  %2896 = vmatprep.subr.mxu0 0.0
  %2897 = vmatpush1.msra.mxu0 0.0
  %2898 = vmatprep.subr.mxu0 0.0
  %2899 = vmatpush1.msra.mxu0 0.0
  %2900 = vmatprep.subr.mxu0 0.0
  %2901 = vmatpush1.msra.mxu0 %v1560
  %2902 = vmatprep.subr.mxu0 0.0
  %2903 = vmatpush1.msra.mxu0 %v1559
  %2904 = vmatprep.subr.mxu0 0.0
  %2905 = vmatpush2.msra.mxu0 0.0
  %2906 = vmatprep.subr.mxu0 0.0
  %2907 = vmatpush2.msra.mxu0 0.0
  %2908 = vmatprep.subr.mxu0 0.0
  %2909 = vmatpush2.msra.mxu0 0.0
  %2910 = vmatprep.subr.mxu0 0.0
  %2911 = vmatpush2.msra.mxu0 0.0
  %2912 = vmatprep.subr.mxu0 0.0
  %2913 = vmatpush2.msra.mxu0 0.0
  %2914 = vmatprep.subr.mxu0 0.0
  %2915 = vmatpush2.msra.mxu0 0.0
  %2916 = vmatprep.subr.mxu0 0.0
  %2917 = vmatpush2.msra.mxu0 0.0
  %2918 = vmatprep.subr.mxu0 0.0
  %2919 = vmatpush2.msra.mxu0 0.0
  %2920 = vmatprep.subr.mxu0 0.0
  %2921 = vmatpush2.msra.mxu0 0.0
  %2922 = vmatprep.subr.mxu0 0.0
  %2923 = vmatpush2.msra.mxu0 0.0
  %2924 = vmatprep.subr.mxu0 0.0
  %2925 = vmatpush2.msra.mxu0 0.0
  %2926 = vmatprep.subr.mxu0 0.0
  %2927 = vmatpush2.msra.mxu0 0.0
  %2928 = vmatprep.subr.mxu0 0.0
  %2929 = vmatpush2.msra.mxu0 0.0
  %2930 = vmatprep.subr.mxu0 0.0
  %2931 = vmatpush2.msra.mxu0 0.0
  %2932 = vmatprep.subr.mxu0 0.0
  %2933 = vmatpush2.msra.mxu0 0.0
  %2934 = vmatprep.subr.mxu0 0.0
  %2935 = vmatpush2.msra.mxu0 0.0
  %2936 = vmatprep.mubr.f32.mxu0 0.0
  %2937 = vmatmul.mubr.f32.gmra.mxu0 %v2870
  %v2938 = vpop.f32.mrf.mxu0
  %v2939 = vadd.f32 0.0, %v2938
  %v2940 = vpop.f32.mrf.mxu0
  %2941 = vdwg.mxu0
  %v2943 = vsel %vm1611, %v2865, 0
  %2945 = vmatprep.subr.mxu0 0.0
  %2946 = vmatpush1.msra.mxu0 0.0
  %2947 = vmatprep.subr.mxu0 0.0
  %2948 = vmatpush1.msra.mxu0 0.0
  %2949 = vmatprep.subr.mxu0 0.0
  %2950 = vmatpush1.msra.mxu0 0.0
  %2951 = vmatprep.subr.mxu0 0.0
  %2952 = vmatpush1.msra.mxu0 0.0
  %2953 = vmatprep.subr.mxu0 0.0
  %2954 = vmatpush1.msra.mxu0 0.0
  %2955 = vmatprep.subr.mxu0 0.0
  %2956 = vmatpush1.msra.mxu0 0.0
  %2957 = vmatprep.subr.mxu0 0.0
  %2958 = vmatpush1.msra.mxu0 0.0
  %2959 = vmatprep.subr.mxu0 0.0
  %2960 = vmatpush1.msra.mxu0 0.0
  %2961 = vmatprep.subr.mxu0 0.0
  %2962 = vmatpush1.msra.mxu0 0.0
  %2963 = vmatprep.subr.mxu0 0.0
  %2964 = vmatpush1.msra.mxu0 0.0
  %2965 = vmatprep.subr.mxu0 0.0
  %2966 = vmatpush1.msra.mxu0 0.0
  %2967 = vmatprep.subr.mxu0 0.0
  %2968 = vmatpush1.msra.mxu0 0.0
  %2969 = vmatprep.subr.mxu0 0.0
  %2970 = vmatpush1.msra.mxu0 0.0
  %2971 = vmatprep.subr.mxu0 0.0
  %2972 = vmatpush1.msra.mxu0 0.0
  %2973 = vmatprep.subr.mxu0 0.0
  %2974 = vmatpush1.msra.mxu0 %v1558
  %2975 = vmatprep.subr.mxu0 0.0
  %2976 = vmatpush1.msra.mxu0 %v1557
  %2977 = vmatprep.subr.mxu0 0.0
  %2978 = vmatpush2.msra.mxu0 0.0
  %2979 = vmatprep.subr.mxu0 0.0
  %2980 = vmatpush2.msra.mxu0 0.0
  %2981 = vmatprep.subr.mxu0 0.0
  %2982 = vmatpush2.msra.mxu0 0.0
  %2983 = vmatprep.subr.mxu0 0.0
  %2984 = vmatpush2.msra.mxu0 0.0
  %2985 = vmatprep.subr.mxu0 0.0
  %2986 = vmatpush2.msra.mxu0 0.0
  %2987 = vmatprep.subr.mxu0 0.0
  %2988 = vmatpush2.msra.mxu0 0.0
  %2989 = vmatprep.subr.mxu0 0.0
  %2990 = vmatpush2.msra.mxu0 0.0
  %2991 = vmatprep.subr.mxu0 0.0
  %2992 = vmatpush2.msra.mxu0 0.0
  %2993 = vmatprep.subr.mxu0 0.0
  %2994 = vmatpush2.msra.mxu0 0.0
  %2995 = vmatprep.subr.mxu0 0.0
  %2996 = vmatpush2.msra.mxu0 0.0
  %2997 = vmatprep.subr.mxu0 0.0
  %2998 = vmatpush2.msra.mxu0 0.0
  %2999 = vmatprep.subr.mxu0 0.0
  %3000 = vmatpush2.msra.mxu0 0.0
  %3001 = vmatprep.subr.mxu0 0.0
  %3002 = vmatpush2.msra.mxu0 0.0
  %3003 = vmatprep.subr.mxu0 0.0
  %3004 = vmatpush2.msra.mxu0 0.0
  %3005 = vmatprep.subr.mxu0 0.0
  %3006 = vmatpush2.msra.mxu0 0.0
  %3007 = vmatprep.subr.mxu0 0.0
  %3008 = vmatpush2.msra.mxu0 0.0
  %3009 = vmatprep.mubr.f32.mxu0 0.0
  %3010 = vmatmul.mubr.f32.gmra.mxu0 %v2943
  %v3011 = vpop.f32.mrf.mxu0
  %v3012 = vadd.f32 %v2939, %v3011
  %v3013 = vpop.f32.mrf.mxu0
  %3014 = vdwg.mxu0
  %v3015 = vadd.f32 %v3012, %v1762
  %v3016 = vsel %vm52, %v2838, %v3015
  %3017 = vst [vmem:[%s682] sm:$0x3] %v3016
  %v3018 = vsel %vm52, %v3015, %v2838
  %3019 = vst [vmem:[%s685] sm:$0x3] %v3018
  %v3020 = vld [vmem:[%s5] sm:$0xff]
  %v3021 = vld [vmem:[%s5 + $0x8] sm:$0xff]
  %v3022 = vld [vmem:[%s5 + $0x10] sm:$0xff]
  %v3023 = vld [vmem:[%s5 + $0x18] sm:$0xff]
  %v3024 = vld [vmem:[#allocation2] sm:$0x3]
  %3025 = vmatprep.subr.mxu0 0.0
  %3026 = vmatpush1.msra.mxu0 0.0
  %3027 = vmatprep.subr.mxu0 0.0
  %3028 = vmatpush1.msra.mxu0 0.0
  %3029 = vmatprep.subr.mxu0 0.0
  %3030 = vmatpush1.msra.mxu0 0.0
  %3031 = vmatprep.subr.mxu0 0.0
  %3032 = vmatpush1.msra.mxu0 0.0
  %3033 = vmatprep.subr.mxu0 0.0
  %3034 = vmatpush1.msra.mxu0 0.0
  %3035 = vmatprep.subr.mxu0 0.0
  %3036 = vmatpush1.msra.mxu0 0.0
  %3037 = vmatprep.subr.mxu0 0.0
  %3038 = vmatpush1.msra.mxu0 0.0
  %3039 = vmatprep.subr.mxu0 0.0
  %3040 = vmatpush1.msra.mxu0 0.0
  %3041 = vmatprep.subr.mxu0 0.0
  %3042 = vmatpush1.msra.mxu0 0.0
  %3043 = vmatprep.subr.mxu0 0.0
  %3044 = vmatpush1.msra.mxu0 0.0
  %3045 = vmatprep.subr.mxu0 0.0
  %3046 = vmatpush1.msra.mxu0 0.0
  %3047 = vmatprep.subr.mxu0 0.0
  %3048 = vmatpush1.msra.mxu0 0.0
  %3049 = vmatprep.subr.mxu0 0.0
  %3050 = vmatpush1.msra.mxu0 %v3023
  %3051 = vmatprep.subr.mxu0 0.0
  %3052 = vmatpush1.msra.mxu0 %v3022
  %3053 = vmatprep.subr.mxu0 0.0
  %3054 = vmatpush1.msra.mxu0 %v3021
  %3055 = vmatprep.subr.mxu0 0.0
  %3056 = vmatpush1.msra.mxu0 %v3020
  %3057 = vmatprep.subr.mxu0 0.0
  %3058 = vmatpush2.msra.mxu0 0.0
  %3059 = vmatprep.subr.mxu0 0.0
  %3060 = vmatpush2.msra.mxu0 0.0
  %3061 = vmatprep.subr.mxu0 0.0
  %3062 = vmatpush2.msra.mxu0 0.0
  %3063 = vmatprep.subr.mxu0 0.0
  %3064 = vmatpush2.msra.mxu0 0.0
  %3065 = vmatprep.subr.mxu0 0.0
  %3066 = vmatpush2.msra.mxu0 0.0
  %3067 = vmatprep.subr.mxu0 0.0
  %3068 = vmatpush2.msra.mxu0 0.0
  %3069 = vmatprep.subr.mxu0 0.0
  %3070 = vmatpush2.msra.mxu0 0.0
  %3071 = vmatprep.subr.mxu0 0.0
  %3072 = vmatpush2.msra.mxu0 0.0
  %3073 = vmatprep.subr.mxu0 0.0
  %3074 = vmatpush2.msra.mxu0 0.0
  %3075 = vmatprep.subr.mxu0 0.0
  %3076 = vmatpush2.msra.mxu0 0.0
  %3077 = vmatprep.subr.mxu0 0.0
  %3078 = vmatpush2.msra.mxu0 0.0
  %3079 = vmatprep.subr.mxu0 0.0
  %3080 = vmatpush2.msra.mxu0 0.0
  %3081 = vmatprep.subr.mxu0 0.0
  %3082 = vmatpush2.msra.mxu0 0.0
  %3083 = vmatprep.subr.mxu0 0.0
  %3084 = vmatpush2.msra.mxu0 0.0
  %3085 = vmatprep.subr.mxu0 0.0
  %3086 = vmatpush2.msra.mxu0 0.0
  %3087 = vmatprep.subr.mxu0 0.0
  %3088 = vmatpush2.msra.mxu0 0.0
  %3089 = vmatprep.mubr.f32.mxu0 0.0
  %3090 = vmatmul.mubr.f32.gmra.mxu0 %v693
  %v3091 = vpop.f32.mrf.mxu0
  %v3092 = vadd.f32 %v3024, %v3091
  %v3093 = vpop.f32.mrf.mxu0
  %3094 = vdwg.mxu0
  %v3095 = vxor.u32 %v3092, 2147483648
  %v3096 = vmul.f32 %v3095, 1.442695
  %v3097 = vpow.pop %v3096
  %v3098 = vadd.f32 %v3097, 1.0
  %v3099 = vrcp.pop %v3098
  %v3100 = vmul.f32 1.0, %v3099
  %v3101 = vtanh.pop %v3092
  %v3102 = vmul.f32 %v3100, 0.0
  %3104 = vrot.lane.b32.xlu0 %v3101, 64
  %v3105 = vpop.permute.xlu0 %3104
  %v3107 = vmul.f32 %v3100, %v3105
  %3109 = vrot.lane.b32.xlu0 %v3107, 32
  %v3110 = vpop.permute.xlu0 %3109
  %v3112 = vadd.f32 %v3102, %v3110
  %v3113 = vtanh.pop %v3112
  %3115 = vrot.lane.b32.xlu0 %v3113, 64
  %v3116 = vpop.permute.xlu0 %3115
  %v3118 = vmul.f32 %v3100, %v3116
  %3120 = vrot.lane.b32.xlu0 %v3118, 32
  %v3121 = vpop.permute.xlu0 %3120
  %3123 = vst.msk [vmem:[#allocation3] sm:$0x3] %vm793, %v3121
  %3124 = vrot.lane.b32.xlu0 %v3118, 16
  %v3125 = vpop.permute.xlu0 %3124
  %3127 = vst.msk [vmem:[%s798] sm:$0x3] %vm793, %v3125
  %v3128 = vld [vmem:[%s370] sm:$0x3]
  %v3129 = vsel %vm65, %v3121, 0
  %3131 = vmatprep.subr.mxu0 0.0
  %3132 = vmatpush1.msra.mxu0 0.0
  %3133 = vmatprep.subr.mxu0 0.0
  %3134 = vmatpush1.msra.mxu0 0.0
  %3135 = vmatprep.subr.mxu0 0.0
  %3136 = vmatpush1.msra.mxu0 0.0
  %3137 = vmatprep.subr.mxu0 0.0
  %3138 = vmatpush1.msra.mxu0 0.0
  %3139 = vmatprep.subr.mxu0 0.0
  %3140 = vmatpush1.msra.mxu0 0.0
  %3141 = vmatprep.subr.mxu0 0.0
  %3142 = vmatpush1.msra.mxu0 0.0
  %3143 = vmatprep.subr.mxu0 0.0
  %3144 = vmatpush1.msra.mxu0 0.0
  %3145 = vmatprep.subr.mxu0 0.0
  %3146 = vmatpush1.msra.mxu0 0.0
  %3147 = vmatprep.subr.mxu0 0.0
  %3148 = vmatpush1.msra.mxu0 0.0
  %3149 = vmatprep.subr.mxu0 0.0
  %3150 = vmatpush1.msra.mxu0 0.0
  %3151 = vmatprep.subr.mxu0 0.0
  %3152 = vmatpush1.msra.mxu0 0.0
  %3153 = vmatprep.subr.mxu0 0.0
  %3154 = vmatpush1.msra.mxu0 0.0
  %3155 = vmatprep.subr.mxu0 0.0
  %3156 = vmatpush1.msra.mxu0 %v3023
  %3157 = vmatprep.subr.mxu0 0.0
  %3158 = vmatpush1.msra.mxu0 %v3022
  %3159 = vmatprep.subr.mxu0 0.0
  %3160 = vmatpush1.msra.mxu0 %v3021
  %3161 = vmatprep.subr.mxu0 0.0
  %3162 = vmatpush1.msra.mxu0 %v3020
  %3163 = vmatprep.subr.mxu0 0.0
  %3164 = vmatpush2.msra.mxu0 0.0
  %3165 = vmatprep.subr.mxu0 0.0
  %3166 = vmatpush2.msra.mxu0 0.0
  %3167 = vmatprep.subr.mxu0 0.0
  %3168 = vmatpush2.msra.mxu0 0.0
  %3169 = vmatprep.subr.mxu0 0.0
  %3170 = vmatpush2.msra.mxu0 0.0
  %3171 = vmatprep.subr.mxu0 0.0
  %3172 = vmatpush2.msra.mxu0 0.0
  %3173 = vmatprep.subr.mxu0 0.0
  %3174 = vmatpush2.msra.mxu0 0.0
  %3175 = vmatprep.subr.mxu0 0.0
  %3176 = vmatpush2.msra.mxu0 0.0
  %3177 = vmatprep.subr.mxu0 0.0
  %3178 = vmatpush2.msra.mxu0 0.0
  %3179 = vmatprep.subr.mxu0 0.0
  %3180 = vmatpush2.msra.mxu0 0.0
  %3181 = vmatprep.subr.mxu0 0.0
  %3182 = vmatpush2.msra.mxu0 0.0
  %3183 = vmatprep.subr.mxu0 0.0
  %3184 = vmatpush2.msra.mxu0 0.0
  %3185 = vmatprep.subr.mxu0 0.0
  %3186 = vmatpush2.msra.mxu0 0.0
  %3187 = vmatprep.subr.mxu0 0.0
  %3188 = vmatpush2.msra.mxu0 0.0
  %3189 = vmatprep.subr.mxu0 0.0
  %3190 = vmatpush2.msra.mxu0 0.0
  %3191 = vmatprep.subr.mxu0 0.0
  %3192 = vmatpush2.msra.mxu0 0.0
  %3193 = vmatprep.subr.mxu0 0.0
  %3194 = vmatpush2.msra.mxu0 0.0
  %3195 = vmatprep.mubr.f32.mxu0 0.0
  %3196 = vmatmul.mubr.f32.gmra.mxu0 %v3129
  %v3197 = vpop.f32.mrf.mxu0
  %v3198 = vadd.f32 %v3128, %v3197
  %v3199 = vpop.f32.mrf.mxu0
  %3200 = vdwg.mxu0
  %v3201 = vxor.u32 %v3198, 2147483648
  %v3202 = vmul.f32 %v3201, 1.442695
  %v3203 = vpow.pop %v3202
  %v3204 = vadd.f32 %v3203, 1.0
  %v3205 = vrcp.pop %v3204
  %v3206 = vmul.f32 1.0, %v3205
  %v3207 = vtanh.pop %v3198
  %v3208 = vmul.f32 %v3206, %v3112
  %3210 = vrot.lane.b32.xlu0 %v3207, 64
  %v3211 = vpop.permute.xlu0 %3210
  %v3213 = vmul.f32 %v3206, %v3211
  %3215 = vrot.lane.b32.xlu0 %v3213, 32
  %v3216 = vpop.permute.xlu0 %3215
  %v3218 = vadd.f32 %v3208, %v3216
  %v3219 = vtanh.pop %v3218
  %3221 = vrot.lane.b32.xlu0 %v3219, 64
  %v3222 = vpop.permute.xlu0 %3221
  %v3224 = vmul.f32 %v3206, %v3222
  %3226 = vrot.lane.b32.xlu0 %v3224, 32
  %v3227 = vpop.permute.xlu0 %3226
  %3229 = vst.msk [vmem:[%s901] sm:$0x3] %vm793, %v3227
  %3230 = vrot.lane.b32.xlu0 %v3224, 16
  %v3231 = vpop.permute.xlu0 %3230
  %3233 = vst.msk [vmem:[%s906] sm:$0x3] %vm793, %v3231
  %v3234 = vld [vmem:[%s526] sm:$0x3]
  %v3235 = vsel %vm65, %v3227, 0
  %3237 = vmatprep.subr.mxu0 0.0
  %3238 = vmatpush1.msra.mxu0 0.0
  %3239 = vmatprep.subr.mxu0 0.0
  %3240 = vmatpush1.msra.mxu0 0.0
  %3241 = vmatprep.subr.mxu0 0.0
  %3242 = vmatpush1.msra.mxu0 0.0
  %3243 = vmatprep.subr.mxu0 0.0
  %3244 = vmatpush1.msra.mxu0 0.0
  %3245 = vmatprep.subr.mxu0 0.0
  %3246 = vmatpush1.msra.mxu0 0.0
  %3247 = vmatprep.subr.mxu0 0.0
  %3248 = vmatpush1.msra.mxu0 0.0
  %3249 = vmatprep.subr.mxu0 0.0
  %3250 = vmatpush1.msra.mxu0 0.0
  %3251 = vmatprep.subr.mxu0 0.0
  %3252 = vmatpush1.msra.mxu0 0.0
  %3253 = vmatprep.subr.mxu0 0.0
  %3254 = vmatpush1.msra.mxu0 0.0
  %3255 = vmatprep.subr.mxu0 0.0
  %3256 = vmatpush1.msra.mxu0 0.0
  %3257 = vmatprep.subr.mxu0 0.0
  %3258 = vmatpush1.msra.mxu0 0.0
  %3259 = vmatprep.subr.mxu0 0.0
  %3260 = vmatpush1.msra.mxu0 0.0
  %3261 = vmatprep.subr.mxu0 0.0
  %3262 = vmatpush1.msra.mxu0 %v3023
  %3263 = vmatprep.subr.mxu0 0.0
  %3264 = vmatpush1.msra.mxu0 %v3022
  %3265 = vmatprep.subr.mxu0 0.0
  %3266 = vmatpush1.msra.mxu0 %v3021
  %3267 = vmatprep.subr.mxu0 0.0
  %3268 = vmatpush1.msra.mxu0 %v3020
  %3269 = vmatprep.subr.mxu0 0.0
  %3270 = vmatpush2.msra.mxu0 0.0
  %3271 = vmatprep.subr.mxu0 0.0
  %3272 = vmatpush2.msra.mxu0 0.0
  %3273 = vmatprep.subr.mxu0 0.0
  %3274 = vmatpush2.msra.mxu0 0.0
  %3275 = vmatprep.subr.mxu0 0.0
  %3276 = vmatpush2.msra.mxu0 0.0
  %3277 = vmatprep.subr.mxu0 0.0
  %3278 = vmatpush2.msra.mxu0 0.0
  %3279 = vmatprep.subr.mxu0 0.0
  %3280 = vmatpush2.msra.mxu0 0.0
  %3281 = vmatprep.subr.mxu0 0.0
  %3282 = vmatpush2.msra.mxu0 0.0
  %3283 = vmatprep.subr.mxu0 0.0
  %3284 = vmatpush2.msra.mxu0 0.0
  %3285 = vmatprep.subr.mxu0 0.0
  %3286 = vmatpush2.msra.mxu0 0.0
  %3287 = vmatprep.subr.mxu0 0.0
  %3288 = vmatpush2.msra.mxu0 0.0
  %3289 = vmatprep.subr.mxu0 0.0
  %3290 = vmatpush2.msra.mxu0 0.0
  %3291 = vmatprep.subr.mxu0 0.0
  %3292 = vmatpush2.msra.mxu0 0.0
  %3293 = vmatprep.subr.mxu0 0.0
  %3294 = vmatpush2.msra.mxu0 0.0
  %3295 = vmatprep.subr.mxu0 0.0
  %3296 = vmatpush2.msra.mxu0 0.0
  %3297 = vmatprep.subr.mxu0 0.0
  %3298 = vmatpush2.msra.mxu0 0.0
  %3299 = vmatprep.subr.mxu0 0.0
  %3300 = vmatpush2.msra.mxu0 0.0
  %3301 = vmatprep.mubr.f32.mxu0 0.0
  %3302 = vmatmul.mubr.f32.gmra.mxu0 %v3235
  %v3303 = vpop.f32.mrf.mxu0
  %v3304 = vadd.f32 %v3234, %v3303
  %v3305 = vpop.f32.mrf.mxu0
  %3306 = vdwg.mxu0
  %v3307 = vxor.u32 %v3304, 2147483648
  %v3308 = vmul.f32 %v3307, 1.442695
  %v3309 = vpow.pop %v3308
  %v3310 = vadd.f32 %v3309, 1.0
  %v3311 = vrcp.pop %v3310
  %v3312 = vmul.f32 1.0, %v3311
  %v3313 = vtanh.pop %v3304
  %v3314 = vmul.f32 %v3312, %v3218
  %3316 = vrot.lane.b32.xlu0 %v3313, 64
  %v3317 = vpop.permute.xlu0 %3316
  %v3319 = vmul.f32 %v3312, %v3317
  %3321 = vrot.lane.b32.xlu0 %v3319, 32
  %v3322 = vpop.permute.xlu0 %3321
  %v3324 = vadd.f32 %v3314, %v3322
  %v3325 = vtanh.pop %v3324
  %3327 = vrot.lane.b32.xlu0 %v3325, 64
  %v3328 = vpop.permute.xlu0 %3327
  %v3330 = vmul.f32 %v3312, %v3328
  %3332 = vrot.lane.b32.xlu0 %v3330, 32
  %v3333 = vpop.permute.xlu0 %3332
  %3335 = vst.msk [vmem:[%s1009] sm:$0x3] %vm793, %v3333
  %3336 = vrot.lane.b32.xlu0 %v3330, 16
  %v3337 = vpop.permute.xlu0 %3336
  %3339 = vst.msk [vmem:[%s1014] sm:$0x3] %vm793, %v3337
  %v3340 = vld [vmem:[%s682] sm:$0x3]
  %v3341 = vsel %vm65, %v3333, 0
  %3343 = vmatprep.subr.mxu0 0.0
  %3344 = vmatpush1.msra.mxu0 0.0
  %3345 = vmatprep.subr.mxu0 0.0
  %3346 = vmatpush1.msra.mxu0 0.0
  %3347 = vmatprep.subr.mxu0 0.0
  %3348 = vmatpush1.msra.mxu0 0.0
  %3349 = vmatprep.subr.mxu0 0.0
  %3350 = vmatpush1.msra.mxu0 0.0
  %3351 = vmatprep.subr.mxu0 0.0
  %3352 = vmatpush1.msra.mxu0 0.0
  %3353 = vmatprep.subr.mxu0 0.0
  %3354 = vmatpush1.msra.mxu0 0.0
  %3355 = vmatprep.subr.mxu0 0.0
  %3356 = vmatpush1.msra.mxu0 0.0
  %3357 = vmatprep.subr.mxu0 0.0
  %3358 = vmatpush1.msra.mxu0 0.0
  %3359 = vmatprep.subr.mxu0 0.0
  %3360 = vmatpush1.msra.mxu0 0.0
  %3361 = vmatprep.subr.mxu0 0.0
  %3362 = vmatpush1.msra.mxu0 0.0
  %3363 = vmatprep.subr.mxu0 0.0
  %3364 = vmatpush1.msra.mxu0 0.0
  %3365 = vmatprep.subr.mxu0 0.0
  %3366 = vmatpush1.msra.mxu0 0.0
  %3367 = vmatprep.subr.mxu0 0.0
  %3368 = vmatpush1.msra.mxu0 %v3023
  %3369 = vmatprep.subr.mxu0 0.0
  %3370 = vmatpush1.msra.mxu0 %v3022
  %3371 = vmatprep.subr.mxu0 0.0
  %3372 = vmatpush1.msra.mxu0 %v3021
  %3373 = vmatprep.subr.mxu0 0.0
  %3374 = vmatpush1.msra.mxu0 %v3020
  %3375 = vmatprep.subr.mxu0 0.0
  %3376 = vmatpush2.msra.mxu0 0.0
  %3377 = vmatprep.subr.mxu0 0.0
  %3378 = vmatpush2.msra.mxu0 0.0
  %3379 = vmatprep.subr.mxu0 0.0
  %3380 = vmatpush2.msra.mxu0 0.0
  %3381 = vmatprep.subr.mxu0 0.0
  %3382 = vmatpush2.msra.mxu0 0.0
  %3383 = vmatprep.subr.mxu0 0.0
  %3384 = vmatpush2.msra.mxu0 0.0
  %3385 = vmatprep.subr.mxu0 0.0
  %3386 = vmatpush2.msra.mxu0 0.0
  %3387 = vmatprep.subr.mxu0 0.0
  %3388 = vmatpush2.msra.mxu0 0.0
  %3389 = vmatprep.subr.mxu0 0.0
  %3390 = vmatpush2.msra.mxu0 0.0
  %3391 = vmatprep.subr.mxu0 0.0
  %3392 = vmatpush2.msra.mxu0 0.0
  %3393 = vmatprep.subr.mxu0 0.0
  %3394 = vmatpush2.msra.mxu0 0.0
  %3395 = vmatprep.subr.mxu0 0.0
  %3396 = vmatpush2.msra.mxu0 0.0
  %3397 = vmatprep.subr.mxu0 0.0
  %3398 = vmatpush2.msra.mxu0 0.0
  %3399 = vmatprep.subr.mxu0 0.0
  %3400 = vmatpush2.msra.mxu0 0.0
  %3401 = vmatprep.subr.mxu0 0.0
  %3402 = vmatpush2.msra.mxu0 0.0
  %3403 = vmatprep.subr.mxu0 0.0
  %3404 = vmatpush2.msra.mxu0 0.0
  %3405 = vmatprep.subr.mxu0 0.0
  %3406 = vmatpush2.msra.mxu0 0.0
  %3407 = vmatprep.mubr.f32.mxu0 0.0
  %3408 = vmatmul.mubr.f32.gmra.mxu0 %v3341
  %v3409 = vpop.f32.mrf.mxu0
  %v3410 = vadd.f32 %v3340, %v3409
  %v3411 = vpop.f32.mrf.mxu0
  %3412 = vdwg.mxu0
  %v3413 = vxor.u32 %v3410, 2147483648
  %v3414 = vmul.f32 %v3413, 1.442695
  %v3415 = vpow.pop %v3414
  %v3416 = vadd.f32 %v3415, 1.0
  %v3417 = vrcp.pop %v3416
  %v3418 = vmul.f32 1.0, %v3417
  %v3419 = vtanh.pop %v3410
  %v3420 = vmul.f32 %v3418, %v3324
  %3422 = vrot.lane.b32.xlu0 %v3419, 64
  %v3423 = vpop.permute.xlu0 %3422
  %v3425 = vmul.f32 %v3418, %v3423
  %3427 = vrot.lane.b32.xlu0 %v3425, 32
  %v3428 = vpop.permute.xlu0 %3427
  %v3430 = vadd.f32 %v3420, %v3428
  %v3431 = vtanh.pop %v3430
  %3433 = vrot.lane.b32.xlu0 %v3431, 64
  %v3434 = vpop.permute.xlu0 %3433
  %v3436 = vmul.f32 %v3418, %v3434
  %3438 = vrot.lane.b32.xlu0 %v3436, 32
  %v3439 = vpop.permute.xlu0 %3438
  %3441 = vst.msk [vmem:[%s1117] sm:$0x3] %vm793, %v3439
  %3442 = vrot.lane.b32.xlu0 %v3436, 16
  %v3443 = vpop.permute.xlu0 %3442
  %3445 = vst.msk [vmem:[%s1122] sm:$0x3] %vm793, %v3443
  %v3446 = vld [vmem:[%s685] sm:$0x3]
  %v3447 = vsel %vm65, %v3439, 0
  %3449 = vmatprep.subr.mxu0 0.0
  %3450 = vmatpush1.msra.mxu0 0.0
  %3451 = vmatprep.subr.mxu0 0.0
  %3452 = vmatpush1.msra.mxu0 0.0
  %3453 = vmatprep.subr.mxu0 0.0
  %3454 = vmatpush1.msra.mxu0 0.0
  %3455 = vmatprep.subr.mxu0 0.0
  %3456 = vmatpush1.msra.mxu0 0.0
  %3457 = vmatprep.subr.mxu0 0.0
  %3458 = vmatpush1.msra.mxu0 0.0
  %3459 = vmatprep.subr.mxu0 0.0
  %3460 = vmatpush1.msra.mxu0 0.0
  %3461 = vmatprep.subr.mxu0 0.0
  %3462 = vmatpush1.msra.mxu0 0.0
  %3463 = vmatprep.subr.mxu0 0.0
  %3464 = vmatpush1.msra.mxu0 0.0
  %3465 = vmatprep.subr.mxu0 0.0
  %3466 = vmatpush1.msra.mxu0 0.0
  %3467 = vmatprep.subr.mxu0 0.0
  %3468 = vmatpush1.msra.mxu0 0.0
  %3469 = vmatprep.subr.mxu0 0.0
  %3470 = vmatpush1.msra.mxu0 0.0
  %3471 = vmatprep.subr.mxu0 0.0
  %3472 = vmatpush1.msra.mxu0 0.0
  %3473 = vmatprep.subr.mxu0 0.0
  %3474 = vmatpush1.msra.mxu0 %v3023
  %3475 = vmatprep.subr.mxu0 0.0
  %3476 = vmatpush1.msra.mxu0 %v3022
  %3477 = vmatprep.subr.mxu0 0.0
  %3478 = vmatpush1.msra.mxu0 %v3021
  %3479 = vmatprep.subr.mxu0 0.0
  %3480 = vmatpush1.msra.mxu0 %v3020
  %3481 = vmatprep.subr.mxu0 0.0
  %3482 = vmatpush2.msra.mxu0 0.0
  %3483 = vmatprep.subr.mxu0 0.0
  %3484 = vmatpush2.msra.mxu0 0.0
  %3485 = vmatprep.subr.mxu0 0.0
  %3486 = vmatpush2.msra.mxu0 0.0
  %3487 = vmatprep.subr.mxu0 0.0
  %3488 = vmatpush2.msra.mxu0 0.0
  %3489 = vmatprep.subr.mxu0 0.0
  %3490 = vmatpush2.msra.mxu0 0.0
  %3491 = vmatprep.subr.mxu0 0.0
  %3492 = vmatpush2.msra.mxu0 0.0
  %3493 = vmatprep.subr.mxu0 0.0
  %3494 = vmatpush2.msra.mxu0 0.0
  %3495 = vmatprep.subr.mxu0 0.0
  %3496 = vmatpush2.msra.mxu0 0.0
  %3497 = vmatprep.subr.mxu0 0.0
  %3498 = vmatpush2.msra.mxu0 0.0
  %3499 = vmatprep.subr.mxu0 0.0
  %3500 = vmatpush2.msra.mxu0 0.0
  %3501 = vmatprep.subr.mxu0 0.0
  %3502 = vmatpush2.msra.mxu0 0.0
  %3503 = vmatprep.subr.mxu0 0.0
  %3504 = vmatpush2.msra.mxu0 0.0
  %3505 = vmatprep.subr.mxu0 0.0
  %3506 = vmatpush2.msra.mxu0 0.0
  %3507 = vmatprep.subr.mxu0 0.0
  %3508 = vmatpush2.msra.mxu0 0.0
  %3509 = vmatprep.subr.mxu0 0.0
  %3510 = vmatpush2.msra.mxu0 0.0
  %3511 = vmatprep.subr.mxu0 0.0
  %3512 = vmatpush2.msra.mxu0 0.0
  %3513 = vmatprep.mubr.f32.mxu0 0.0
  %3514 = vmatmul.mubr.f32.gmra.mxu0 %v3447
  %v3515 = vpop.f32.mrf.mxu0
  %v3516 = vadd.f32 %v3446, %v3515
  %v3517 = vpop.f32.mrf.mxu0
  %3518 = vdwg.mxu0
  %v3519 = vxor.u32 %v3516, 2147483648
  %v3520 = vmul.f32 %v3519, 1.442695
  %v3521 = vpow.pop %v3520
  %v3522 = vadd.f32 %v3521, 1.0
  %v3523 = vrcp.pop %v3522
  %v3524 = vmul.f32 1.0, %v3523
  %v3525 = vtanh.pop %v3516
  %v3526 = vmul.f32 %v3524, %v3430
  %3528 = vrot.lane.b32.xlu0 %v3525, 64
  %v3529 = vpop.permute.xlu0 %3528
  %v3531 = vmul.f32 %v3524, %v3529
  %3533 = vrot.lane.b32.xlu0 %v3531, 32
  %v3534 = vpop.permute.xlu0 %3533
  %v3536 = vadd.f32 %v3526, %v3534
  %v3537 = vtanh.pop %v3536
  %3539 = vrot.lane.b32.xlu0 %v3537, 64
  %v3540 = vpop.permute.xlu0 %3539
  %v3542 = vmul.f32 %v3524, %v3540
  %3544 = vrot.lane.b32.xlu0 %v3542, 32
  %v3545 = vpop.permute.xlu0 %3544
  %3547 = vst.msk [vmem:[%s1225] sm:$0x3] %vm793, %v3545
  %3548 = vrot.lane.b32.xlu0 %v3542, 16
  %v3549 = vpop.permute.xlu0 %3548
  %3551 = vst.msk [vmem:[%s1230] sm:$0x3] %vm793, %v3549
  %v3552 = vld [vmem:[%s529] sm:$0x3]
  %v3553 = vsel %vm65, %v3545, 0
  %3555 = vmatprep.subr.mxu0 0.0
  %3556 = vmatpush1.msra.mxu0 0.0
  %3557 = vmatprep.subr.mxu0 0.0
  %3558 = vmatpush1.msra.mxu0 0.0
  %3559 = vmatprep.subr.mxu0 0.0
  %3560 = vmatpush1.msra.mxu0 0.0
  %3561 = vmatprep.subr.mxu0 0.0
  %3562 = vmatpush1.msra.mxu0 0.0
  %3563 = vmatprep.subr.mxu0 0.0
  %3564 = vmatpush1.msra.mxu0 0.0
  %3565 = vmatprep.subr.mxu0 0.0
  %3566 = vmatpush1.msra.mxu0 0.0
  %3567 = vmatprep.subr.mxu0 0.0
  %3568 = vmatpush1.msra.mxu0 0.0
  %3569 = vmatprep.subr.mxu0 0.0
  %3570 = vmatpush1.msra.mxu0 0.0
  %3571 = vmatprep.subr.mxu0 0.0
  %3572 = vmatpush1.msra.mxu0 0.0
  %3573 = vmatprep.subr.mxu0 0.0
  %3574 = vmatpush1.msra.mxu0 0.0
  %3575 = vmatprep.subr.mxu0 0.0
  %3576 = vmatpush1.msra.mxu0 0.0
  %3577 = vmatprep.subr.mxu0 0.0
  %3578 = vmatpush1.msra.mxu0 0.0
  %3579 = vmatprep.subr.mxu0 0.0
  %3580 = vmatpush1.msra.mxu0 %v3023
  %3581 = vmatprep.subr.mxu0 0.0
  %3582 = vmatpush1.msra.mxu0 %v3022
  %3583 = vmatprep.subr.mxu0 0.0
  %3584 = vmatpush1.msra.mxu0 %v3021
  %3585 = vmatprep.subr.mxu0 0.0
  %3586 = vmatpush1.msra.mxu0 %v3020
  %3587 = vmatprep.subr.mxu0 0.0
  %3588 = vmatpush2.msra.mxu0 0.0
  %3589 = vmatprep.subr.mxu0 0.0
  %3590 = vmatpush2.msra.mxu0 0.0
  %3591 = vmatprep.subr.mxu0 0.0
  %3592 = vmatpush2.msra.mxu0 0.0
  %3593 = vmatprep.subr.mxu0 0.0
  %3594 = vmatpush2.msra.mxu0 0.0
  %3595 = vmatprep.subr.mxu0 0.0
  %3596 = vmatpush2.msra.mxu0 0.0
  %3597 = vmatprep.subr.mxu0 0.0
  %3598 = vmatpush2.msra.mxu0 0.0
  %3599 = vmatprep.subr.mxu0 0.0
  %3600 = vmatpush2.msra.mxu0 0.0
  %3601 = vmatprep.subr.mxu0 0.0
  %3602 = vmatpush2.msra.mxu0 0.0
  %3603 = vmatprep.subr.mxu0 0.0
  %3604 = vmatpush2.msra.mxu0 0.0
  %3605 = vmatprep.subr.mxu0 0.0
  %3606 = vmatpush2.msra.mxu0 0.0
  %3607 = vmatprep.subr.mxu0 0.0
  %3608 = vmatpush2.msra.mxu0 0.0
  %3609 = vmatprep.subr.mxu0 0.0
  %3610 = vmatpush2.msra.mxu0 0.0
  %3611 = vmatprep.subr.mxu0 0.0
  %3612 = vmatpush2.msra.mxu0 0.0
  %3613 = vmatprep.subr.mxu0 0.0
  %3614 = vmatpush2.msra.mxu0 0.0
  %3615 = vmatprep.subr.mxu0 0.0
  %3616 = vmatpush2.msra.mxu0 0.0
  %3617 = vmatprep.subr.mxu0 0.0
  %3618 = vmatpush2.msra.mxu0 0.0
  %3619 = vmatprep.mubr.f32.mxu0 0.0
  %3620 = vmatmul.mubr.f32.gmra.mxu0 %v3553
  %v3621 = vpop.f32.mrf.mxu0
  %v3622 = vadd.f32 %v3552, %v3621
  %v3623 = vpop.f32.mrf.mxu0
  %3624 = vdwg.mxu0
  %v3625 = vxor.u32 %v3622, 2147483648
  %v3626 = vmul.f32 %v3625, 1.442695
  %v3627 = vpow.pop %v3626
  %v3628 = vadd.f32 %v3627, 1.0
  %v3629 = vrcp.pop %v3628
  %v3630 = vmul.f32 1.0, %v3629
  %v3631 = vtanh.pop %v3622
  %v3632 = vmul.f32 %v3630, %v3536
  %3634 = vrot.lane.b32.xlu0 %v3631, 64
  %v3635 = vpop.permute.xlu0 %3634
  %v3637 = vmul.f32 %v3630, %v3635
  %3639 = vrot.lane.b32.xlu0 %v3637, 32
  %v3640 = vpop.permute.xlu0 %3639
  %v3642 = vadd.f32 %v3632, %v3640
  %v3643 = vtanh.pop %v3642
  %3645 = vrot.lane.b32.xlu0 %v3643, 64
  %v3646 = vpop.permute.xlu0 %3645
  %v3648 = vmul.f32 %v3630, %v3646
  %3650 = vrot.lane.b32.xlu0 %v3648, 32
  %v3651 = vpop.permute.xlu0 %3650
  %3653 = vst.msk [vmem:[%s1333] sm:$0x3] %vm793, %v3651
  %3654 = vrot.lane.b32.xlu0 %v3648, 16
  %v3655 = vpop.permute.xlu0 %3654
  %3657 = vst.msk [vmem:[%s1338] sm:$0x3] %vm793, %v3655
  %v3658 = vld [vmem:[%s373] sm:$0x3]
  %v3659 = vsel %vm65, %v3651, 0
  %3661 = vmatprep.subr.mxu0 0.0
  %3662 = vmatpush1.msra.mxu0 0.0
  %3663 = vmatprep.subr.mxu0 0.0
  %3664 = vmatpush1.msra.mxu0 0.0
  %3665 = vmatprep.subr.mxu0 0.0
  %3666 = vmatpush1.msra.mxu0 0.0
  %3667 = vmatprep.subr.mxu0 0.0
  %3668 = vmatpush1.msra.mxu0 0.0
  %3669 = vmatprep.subr.mxu0 0.0
  %3670 = vmatpush1.msra.mxu0 0.0
  %3671 = vmatprep.subr.mxu0 0.0
  %3672 = vmatpush1.msra.mxu0 0.0
  %3673 = vmatprep.subr.mxu0 0.0
  %3674 = vmatpush1.msra.mxu0 0.0
  %3675 = vmatprep.subr.mxu0 0.0
  %3676 = vmatpush1.msra.mxu0 0.0
  %3677 = vmatprep.subr.mxu0 0.0
  %3678 = vmatpush1.msra.mxu0 0.0
  %3679 = vmatprep.subr.mxu0 0.0
  %3680 = vmatpush1.msra.mxu0 0.0
  %3681 = vmatprep.subr.mxu0 0.0
  %3682 = vmatpush1.msra.mxu0 0.0
  %3683 = vmatprep.subr.mxu0 0.0
  %3684 = vmatpush1.msra.mxu0 0.0
  %3685 = vmatprep.subr.mxu0 0.0
  %3686 = vmatpush1.msra.mxu0 %v3023
  %3687 = vmatprep.subr.mxu0 0.0
  %3688 = vmatpush1.msra.mxu0 %v3022
  %3689 = vmatprep.subr.mxu0 0.0
  %3690 = vmatpush1.msra.mxu0 %v3021
  %3691 = vmatprep.subr.mxu0 0.0
  %3692 = vmatpush1.msra.mxu0 %v3020
  %3693 = vmatprep.subr.mxu0 0.0
  %3694 = vmatpush2.msra.mxu0 0.0
  %3695 = vmatprep.subr.mxu0 0.0
  %3696 = vmatpush2.msra.mxu0 0.0
  %3697 = vmatprep.subr.mxu0 0.0
  %3698 = vmatpush2.msra.mxu0 0.0
  %3699 = vmatprep.subr.mxu0 0.0
  %3700 = vmatpush2.msra.mxu0 0.0
  %3701 = vmatprep.subr.mxu0 0.0
  %3702 = vmatpush2.msra.mxu0 0.0
  %3703 = vmatprep.subr.mxu0 0.0
  %3704 = vmatpush2.msra.mxu0 0.0
  %3705 = vmatprep.subr.mxu0 0.0
  %3706 = vmatpush2.msra.mxu0 0.0
  %3707 = vmatprep.subr.mxu0 0.0
  %3708 = vmatpush2.msra.mxu0 0.0
  %3709 = vmatprep.subr.mxu0 0.0
  %3710 = vmatpush2.msra.mxu0 0.0
  %3711 = vmatprep.subr.mxu0 0.0
  %3712 = vmatpush2.msra.mxu0 0.0
  %3713 = vmatprep.subr.mxu0 0.0
  %3714 = vmatpush2.msra.mxu0 0.0
  %3715 = vmatprep.subr.mxu0 0.0
  %3716 = vmatpush2.msra.mxu0 0.0
  %3717 = vmatprep.subr.mxu0 0.0
  %3718 = vmatpush2.msra.mxu0 0.0
  %3719 = vmatprep.subr.mxu0 0.0
  %3720 = vmatpush2.msra.mxu0 0.0
  %3721 = vmatprep.subr.mxu0 0.0
  %3722 = vmatpush2.msra.mxu0 0.0
  %3723 = vmatprep.subr.mxu0 0.0
  %3724 = vmatpush2.msra.mxu0 0.0
  %3725 = vmatprep.mubr.f32.mxu0 0.0
  %3726 = vmatmul.mubr.f32.gmra.mxu0 %v3659
  %v3727 = vpop.f32.mrf.mxu0
  %v3728 = vadd.f32 %v3658, %v3727
  %v3729 = vpop.f32.mrf.mxu0
  %3730 = vdwg.mxu0
  %v3731 = vxor.u32 %v3728, 2147483648
  %v3732 = vmul.f32 %v3731, 1.442695
  %v3733 = vpow.pop %v3732
  %v3734 = vadd.f32 %v3733, 1.0
  %v3735 = vrcp.pop %v3734
  %v3736 = vmul.f32 1.0, %v3735
  %v3737 = vtanh.pop %v3728
  %v3738 = vmul.f32 %v3736, %v3642
  %3740 = vrot.lane.b32.xlu0 %v3737, 64
  %v3741 = vpop.permute.xlu0 %3740
  %v3743 = vmul.f32 %v3736, %v3741
  %3745 = vrot.lane.b32.xlu0 %v3743, 32
  %v3746 = vpop.permute.xlu0 %3745
  %v3748 = vadd.f32 %v3738, %v3746
  %v3749 = vtanh.pop %v3748
  %3751 = vrot.lane.b32.xlu0 %v3749, 64
  %v3752 = vpop.permute.xlu0 %3751
  %v3754 = vmul.f32 %v3736, %v3752
  %3756 = vrot.lane.b32.xlu0 %v3754, 32
  %v3757 = vpop.permute.xlu0 %3756
  %3759 = vst.msk [vmem:[%s1441] sm:$0x3] %vm793, %v3757
  %3760 = vrot.lane.b32.xlu0 %v3754, 16
  %v3761 = vpop.permute.xlu0 %3760
  %3763 = vst.msk [vmem:[%s1446] sm:$0x3] %vm793, %v3761
  %v3764 = vld [vmem:[%s217] sm:$0x3]
  %v3765 = vsel %vm65, %v3757, 0
  %3767 = vmatprep.subr.mxu0 0.0
  %3768 = vmatpush1.msra.mxu0 0.0
  %3769 = vmatprep.subr.mxu0 0.0
  %3770 = vmatpush1.msra.mxu0 0.0
  %3771 = vmatprep.subr.mxu0 0.0
  %3772 = vmatpush1.msra.mxu0 0.0
  %3773 = vmatprep.subr.mxu0 0.0
  %3774 = vmatpush1.msra.mxu0 0.0
  %3775 = vmatprep.subr.mxu0 0.0
  %3776 = vmatpush1.msra.mxu0 0.0
  %3777 = vmatprep.subr.mxu0 0.0
  %3778 = vmatpush1.msra.mxu0 0.0
  %3779 = vmatprep.subr.mxu0 0.0
  %3780 = vmatpush1.msra.mxu0 0.0
  %3781 = vmatprep.subr.mxu0 0.0
  %3782 = vmatpush1.msra.mxu0 0.0
  %3783 = vmatprep.subr.mxu0 0.0
  %3784 = vmatpush1.msra.mxu0 0.0
  %3785 = vmatprep.subr.mxu0 0.0
  %3786 = vmatpush1.msra.mxu0 0.0
  %3787 = vmatprep.subr.mxu0 0.0
  %3788 = vmatpush1.msra.mxu0 0.0
  %3789 = vmatprep.subr.mxu0 0.0
  %3790 = vmatpush1.msra.mxu0 0.0
  %3791 = vmatprep.subr.mxu0 0.0
  %3792 = vmatpush1.msra.mxu0 %v3023
  %3793 = vmatprep.subr.mxu0 0.0
  %3794 = vmatpush1.msra.mxu0 %v3022
  %3795 = vmatprep.subr.mxu0 0.0
  %3796 = vmatpush1.msra.mxu0 %v3021
  %3797 = vmatprep.subr.mxu0 0.0
  %3798 = vmatpush1.msra.mxu0 %v3020
  %3799 = vmatprep.subr.mxu0 0.0
  %3800 = vmatpush2.msra.mxu0 0.0
  %3801 = vmatprep.subr.mxu0 0.0
  %3802 = vmatpush2.msra.mxu0 0.0
  %3803 = vmatprep.subr.mxu0 0.0
  %3804 = vmatpush2.msra.mxu0 0.0
  %3805 = vmatprep.subr.mxu0 0.0
  %3806 = vmatpush2.msra.mxu0 0.0
  %3807 = vmatprep.subr.mxu0 0.0
  %3808 = vmatpush2.msra.mxu0 0.0
  %3809 = vmatprep.subr.mxu0 0.0
  %3810 = vmatpush2.msra.mxu0 0.0
  %3811 = vmatprep.subr.mxu0 0.0
  %3812 = vmatpush2.msra.mxu0 0.0
  %3813 = vmatprep.subr.mxu0 0.0
  %3814 = vmatpush2.msra.mxu0 0.0
  %3815 = vmatprep.subr.mxu0 0.0
  %3816 = vmatpush2.msra.mxu0 0.0
  %3817 = vmatprep.subr.mxu0 0.0
  %3818 = vmatpush2.msra.mxu0 0.0
  %3819 = vmatprep.subr.mxu0 0.0
  %3820 = vmatpush2.msra.mxu0 0.0
  %3821 = vmatprep.subr.mxu0 0.0
  %3822 = vmatpush2.msra.mxu0 0.0
  %3823 = vmatprep.subr.mxu0 0.0
  %3824 = vmatpush2.msra.mxu0 0.0
  %3825 = vmatprep.subr.mxu0 0.0
  %3826 = vmatpush2.msra.mxu0 0.0
  %3827 = vmatprep.subr.mxu0 0.0
  %3828 = vmatpush2.msra.mxu0 0.0
  %3829 = vmatprep.subr.mxu0 0.0
  %3830 = vmatpush2.msra.mxu0 0.0
  %3831 = vmatprep.mubr.f32.mxu0 0.0
  %3832 = vmatmul.mubr.f32.gmra.mxu0 %v3765
  %v3833 = vpop.f32.mrf.mxu0
  %v3834 = vadd.f32 %v3764, %v3833
  %v3835 = vpop.f32.mrf.mxu0
  %3836 = vdwg.mxu0
  %v3837 = vxor.u32 %v3834, 2147483648
  %v3838 = vmul.f32 %v3837, 1.442695
  %v3839 = vpow.pop %v3838
  %v3840 = vadd.f32 %v3839, 1.0
  %v3841 = vrcp.pop %v3840
  %v3842 = vmul.f32 1.0, %v3841
  %v3843 = vtanh.pop %v3834
  %v3844 = vmul.f32 %v3842, %v3748
  %3846 = vrot.lane.b32.xlu0 %v3843, 64
  %v3847 = vpop.permute.xlu0 %3846
  %v3849 = vmul.f32 %v3842, %v3847
  %3851 = vrot.lane.b32.xlu0 %v3849, 32
  %v3852 = vpop.permute.xlu0 %3851
  %v3854 = vadd.f32 %v3844, %v3852
  %v3855 = vtanh.pop %v3854
  %3857 = vrot.lane.b32.xlu0 %v3855, 64
  %v3858 = vpop.permute.xlu0 %3857
  %v3860 = vmul.f32 %v3842, %v3858
  %3862 = vrot.lane.b32.xlu0 %v3860, 32
  %v3863 = vpop.permute.xlu0 %3862
  %3865 = vst.msk [vmem:[%s1549] sm:$0x3] %vm793, %v3863
  %3866 = vrot.lane.b32.xlu0 %v3860, 16
  %v3867 = vpop.permute.xlu0 %3866
  %3869 = vst.msk [vmem:[#allocation4] sm:$0x3] %vm793, %v3867
  %v3870 = vld [vmem:[%s9] sm:$0x1]
  %v3871 = vld [vmem:[%s10] sm:$0x1]
  %v3872 = vld [vmem:[#allocation3] sm:$0x3]
  %v3873 = vld [vmem:[#allocation3 + $0x2] sm:$0x3]
  %v3874 = vld [vmem:[#allocation3 + $0x4] sm:$0x3]
  %v3875 = vld [vmem:[#allocation3 + $0x6] sm:$0x3]
  %v3876 = vld [vmem:[#allocation3 + $0x8] sm:$0x3]
  %v3877 = vld [vmem:[#allocation3 + $0xa] sm:$0x3]
  %v3878 = vld [vmem:[#allocation3 + $0xc] sm:$0x3]
  %v3879 = vld [vmem:[#allocation3 + $0xe] sm:$0x3]
  %v3880 = vld [vmem:[#allocation4] sm:$0x3]
  %v3881 = vld [vmem:[#allocation4 + $0x2] sm:$0x3]
  %v3882 = vld [vmem:[#allocation4 + $0x4] sm:$0x3]
  %v3883 = vld [vmem:[#allocation4 + $0x6] sm:$0x3]
  %v3884 = vld [vmem:[#allocation4 + $0x8] sm:$0x3]
  %v3885 = vld [vmem:[#allocation4 + $0xa] sm:$0x3]
  %v3886 = vld [vmem:[#allocation4 + $0xc] sm:$0x3]
  %v3887 = vld [vmem:[#allocation4 + $0xe] sm:$0x3]
  %v3888 = vsel %vm793, %v3872, 0.0
  %3889 = vadd.xlane.f32.xlu0 %v3888
  %v3890 = vpop.xlane.xlu0 %3889
  %v3891 = vsel %vm793, %v3873, 0.0
  %3892 = vadd.xlane.f32.xlu0 %v3891
  %v3893 = vpop.xlane.xlu0 %3892
  %v3894 = vsel %vm793, %v3874, 0.0
  %3895 = vadd.xlane.f32.xlu0 %v3894
  %v3896 = vpop.xlane.xlu0 %3895
  %v3897 = vsel %vm793, %v3875, 0.0
  %3898 = vadd.xlane.f32.xlu0 %v3897
  %v3899 = vpop.xlane.xlu0 %3898
  %v3900 = vsel %vm793, %v3876, 0.0
  %3901 = vadd.xlane.f32.xlu0 %v3900
  %v3902 = vpop.xlane.xlu0 %3901
  %v3903 = vsel %vm793, %v3877, 0.0
  %3904 = vadd.xlane.f32.xlu0 %v3903
  %v3905 = vpop.xlane.xlu0 %3904
  %v3906 = vsel %vm793, %v3878, 0.0
  %3907 = vadd.xlane.f32.xlu0 %v3906
  %v3908 = vpop.xlane.xlu0 %3907
  %v3909 = vsel %vm793, %v3879, 0.0
  %3910 = vadd.xlane.f32.xlu0 %v3909
  %v3911 = vpop.xlane.xlu0 %3910
  %v3912 = vsel %vm793, %v3880, 0.0
  %3913 = vadd.xlane.f32.xlu0 %v3912
  %v3914 = vpop.xlane.xlu0 %3913
  %v3915 = vsel %vm793, %v3881, 0.0
  %3916 = vadd.xlane.f32.xlu0 %v3915
  %v3917 = vpop.xlane.xlu0 %3916
  %v3918 = vsel %vm793, %v3882, 0.0
  %3919 = vadd.xlane.f32.xlu0 %v3918
  %v3920 = vpop.xlane.xlu0 %3919
  %v3921 = vsel %vm793, %v3883, 0.0
  %3922 = vadd.xlane.f32.xlu0 %v3921
  %v3923 = vpop.xlane.xlu0 %3922
  %v3924 = vsel %vm793, %v3884, 0.0
  %3925 = vadd.xlane.f32.xlu0 %v3924
  %v3926 = vpop.xlane.xlu0 %3925
  %v3927 = vsel %vm793, %v3885, 0.0
  %3928 = vadd.xlane.f32.xlu0 %v3927
  %v3929 = vpop.xlane.xlu0 %3928
  %v3930 = vsel %vm793, %v3886, 0.0
  %3931 = vadd.xlane.f32.xlu0 %v3930
  %v3932 = vpop.xlane.xlu0 %3931
  %v3933 = vsel %vm793, %v3887, 0.0
  %3934 = vadd.xlane.f32.xlu0 %v3933
  %v3935 = vpop.xlane.xlu0 %3934
  %v3936 = vadd.f32 %v3890, %v3914
  %v3937 = vadd.f32 %v3893, %v3917
  %v3938 = vadd.f32 %v3896, %v3920
  %v3939 = vadd.f32 %v3899, %v3923
  %v3940 = vadd.f32 %v3902, %v3926
  %v3941 = vadd.f32 %v3905, %v3929
  %v3942 = vadd.f32 %v3908, %v3932
  %v3943 = vadd.f32 %v3911, %v3935
  %v3944 = vmul.f32 %v3936, %v1571
  %v3945 = vmul.f32 %v3937, %v1571
  %v3946 = vmul.f32 %v3938, %v1571
  %v3947 = vmul.f32 %v3939, %v1571
  %v3948 = vmul.f32 %v3940, %v1571
  %v3949 = vmul.f32 %v3941, %v1571
  %v3950 = vmul.f32 %v3942, %v1571
  %v3951 = vmul.f32 %v3943, %v1571
  %v3952 = vsub.f32 %v3872, %v3944
  %v3953 = vsub.f32 %v3873, %v3945
  %v3954 = vsub.f32 %v3874, %v3946
  %v3955 = vsub.f32 %v3875, %v3947
  %v3956 = vsub.f32 %v3876, %v3948
  %v3957 = vsub.f32 %v3877, %v3949
  %v3958 = vsub.f32 %v3878, %v3950
  %v3959 = vsub.f32 %v3879, %v3951
  %v3960 = vsub.f32 %v3880, %v3944
  %v3961 = vsub.f32 %v3881, %v3945
  %v3962 = vsub.f32 %v3882, %v3946
  %v3963 = vsub.f32 %v3883, %v3947
  %v3964 = vsub.f32 %v3884, %v3948
  %v3965 = vsub.f32 %v3885, %v3949
  %v3966 = vsub.f32 %v3886, %v3950
  %v3967 = vsub.f32 %v3887, %v3951
  %v3968 = vmul.f32 %v3952, %v3952
  %v3969 = vmul.f32 %v3953, %v3953
  %v3970 = vmul.f32 %v3954, %v3954
  %v3971 = vmul.f32 %v3955, %v3955
  %v3972 = vmul.f32 %v3956, %v3956
  %v3973 = vmul.f32 %v3957, %v3957
  %v3974 = vmul.f32 %v3958, %v3958
  %v3975 = vmul.f32 %v3959, %v3959
  %v3976 = vsel %vm793, %v3968, 0.0
  %3977 = vadd.xlane.f32.xlu0 %v3976
  %v3978 = vpop.xlane.xlu0 %3977
  %v3979 = vsel %vm793, %v3969, 0.0
  %3980 = vadd.xlane.f32.xlu0 %v3979
  %v3981 = vpop.xlane.xlu0 %3980
  %v3982 = vsel %vm793, %v3970, 0.0
  %3983 = vadd.xlane.f32.xlu0 %v3982
  %v3984 = vpop.xlane.xlu0 %3983
  %v3985 = vsel %vm793, %v3971, 0.0
  %3986 = vadd.xlane.f32.xlu0 %v3985
  %v3987 = vpop.xlane.xlu0 %3986
  %v3988 = vsel %vm793, %v3972, 0.0
  %3989 = vadd.xlane.f32.xlu0 %v3988
  %v3990 = vpop.xlane.xlu0 %3989
  %v3991 = vsel %vm793, %v3973, 0.0
  %3992 = vadd.xlane.f32.xlu0 %v3991
  %v3993 = vpop.xlane.xlu0 %3992
  %v3994 = vsel %vm793, %v3974, 0.0
  %3995 = vadd.xlane.f32.xlu0 %v3994
  %v3996 = vpop.xlane.xlu0 %3995
  %v3997 = vsel %vm793, %v3975, 0.0
  %3998 = vadd.xlane.f32.xlu0 %v3997
  %v3999 = vpop.xlane.xlu0 %3998
  %v4000 = vmul.f32 %v3960, %v3960
  %v4001 = vmul.f32 %v3961, %v3961
  %v4002 = vmul.f32 %v3962, %v3962
  %v4003 = vmul.f32 %v3963, %v3963
  %v4004 = vmul.f32 %v3964, %v3964
  %v4005 = vmul.f32 %v3965, %v3965
  %v4006 = vmul.f32 %v3966, %v3966
  %v4007 = vmul.f32 %v3967, %v3967
  %v4008 = vsel %vm793, %v4000, 0.0
  %4009 = vadd.xlane.f32.xlu0 %v4008
  %v4010 = vpop.xlane.xlu0 %4009
  %v4011 = vsel %vm793, %v4001, 0.0
  %4012 = vadd.xlane.f32.xlu0 %v4011
  %v4013 = vpop.xlane.xlu0 %4012
  %v4014 = vsel %vm793, %v4002, 0.0
  %4015 = vadd.xlane.f32.xlu0 %v4014
  %v4016 = vpop.xlane.xlu0 %4015
  %v4017 = vsel %vm793, %v4003, 0.0
  %4018 = vadd.xlane.f32.xlu0 %v4017
  %v4019 = vpop.xlane.xlu0 %4018
  %v4020 = vsel %vm793, %v4004, 0.0
  %4021 = vadd.xlane.f32.xlu0 %v4020
  %v4022 = vpop.xlane.xlu0 %4021
  %v4023 = vsel %vm793, %v4005, 0.0
  %4024 = vadd.xlane.f32.xlu0 %v4023
  %v4025 = vpop.xlane.xlu0 %4024
  %v4026 = vsel %vm793, %v4006, 0.0
  %4027 = vadd.xlane.f32.xlu0 %v4026
  %v4028 = vpop.xlane.xlu0 %4027
  %v4029 = vsel %vm793, %v4007, 0.0
  %4030 = vadd.xlane.f32.xlu0 %v4029
  %v4031 = vpop.xlane.xlu0 %4030
  %v4032 = vadd.f32 %v3978, %v4010
  %v4033 = vadd.f32 %v3981, %v4013
  %v4034 = vadd.f32 %v3984, %v4016
  %v4035 = vadd.f32 %v3987, %v4019
  %v4036 = vadd.f32 %v3990, %v4022
  %v4037 = vadd.f32 %v3993, %v4025
  %v4038 = vadd.f32 %v3996, %v4028
  %v4039 = vadd.f32 %v3999, %v4031
  %v4040 = vmul.f32 %v4032, %v1571
  %v4041 = vmul.f32 %v4033, %v1571
  %v4042 = vmul.f32 %v4034, %v1571
  %v4043 = vmul.f32 %v4035, %v1571
  %v4044 = vmul.f32 %v4036, %v1571
  %v4045 = vmul.f32 %v4037, %v1571
  %v4046 = vmul.f32 %v4038, %v1571
  %v4047 = vmul.f32 %v4039, %v1571
  %v4048 = vadd.f32 %v4040, 1e-05
  %v4049 = vadd.f32 %v4041, 1e-05
  %v4050 = vadd.f32 %v4042, 1e-05
  %v4051 = vadd.f32 %v4043, 1e-05
  %v4052 = vadd.f32 %v4044, 1e-05
  %v4053 = vadd.f32 %v4045, 1e-05
  %v4054 = vadd.f32 %v4046, 1e-05
  %v4055 = vadd.f32 %v4047, 1e-05
  %v4056 = vrsqrt.pop %v4048
  %v4057 = vrsqrt.pop %v4049
  %v4058 = vrsqrt.pop %v4050
  %v4059 = vrsqrt.pop %v4051
  %v4060 = vrsqrt.pop %v4052
  %v4061 = vrsqrt.pop %v4053
  %v4062 = vrsqrt.pop %v4054
  %v4063 = vrsqrt.pop %v4055
  %v4064 = vmul.f32 %v3952, %v4056
  %v4065 = vmul.f32 %v3953, %v4057
  %v4066 = vmul.f32 %v3954, %v4058
  %v4067 = vmul.f32 %v3955, %v4059
  %v4068 = vmul.f32 %v3956, %v4060
  %v4069 = vmul.f32 %v3957, %v4061
  %v4070 = vmul.f32 %v3958, %v4062
  %v4071 = vmul.f32 %v3959, %v4063
  %v4073 = vlaneseq
  %v4074 = vshrl.u32 %v4073, 7
  %v4075 = vsub.s32 0, %v4074
  %v4076 = vrot.slane %v3870, %v4075
  %v4078 = vmul.f32 %v4064, %v4076
  %v4079 = vmul.f32 %v4065, %v4076
  %v4080 = vmul.f32 %v4066, %v4076
  %v4081 = vmul.f32 %v4067, %v4076
  %v4082 = vmul.f32 %v4068, %v4076
  %v4083 = vmul.f32 %v4069, %v4076
  %v4084 = vmul.f32 %v4070, %v4076
  %v4085 = vmul.f32 %v4071, %v4076
  %v4087 = vlaneseq
  %v4088 = vshrl.u32 %v4087, 7
  %v4089 = vsub.s32 0, %v4088
  %v4090 = vrot.slane %v3871, %v4089
  %v4092 = vadd.f32 %v4078, %v4090
  %v4093 = vadd.f32 %v4079, %v4090
  %v4094 = vadd.f32 %v4080, %v4090
  %v4095 = vadd.f32 %v4081, %v4090
  %v4096 = vadd.f32 %v4082, %v4090
  %v4097 = vadd.f32 %v4083, %v4090
  %v4098 = vadd.f32 %v4084, %v4090
  %v4099 = vadd.f32 %v4085, %v4090
  %4100 = vst.msk [vmem:[%s11] sm:$0x3] %vm793, %v4092
  %4101 = vst.msk [vmem:[%s11 + $0x2] sm:$0x3] %vm793, %v4093
  %4102 = vst.msk [vmem:[%s11 + $0x4] sm:$0x3] %vm793, %v4094
  %4103 = vst.msk [vmem:[%s11 + $0x6] sm:$0x3] %vm793, %v4095
  %4104 = vst.msk [vmem:[%s11 + $0x8] sm:$0x3] %vm793, %v4096
  %4105 = vst.msk [vmem:[%s11 + $0xa] sm:$0x3] %vm793, %v4097
  %4106 = vst.msk [vmem:[%s11 + $0xc] sm:$0x3] %vm793, %v4098
  %4107 = vst.msk [vmem:[%s11 + $0xe] sm:$0x3] %vm793, %v4099
  %v4108 = vmul.f32 %v3960, %v4056
  %v4109 = vmul.f32 %v3961, %v4057
  %v4110 = vmul.f32 %v3962, %v4058
  %v4111 = vmul.f32 %v3963, %v4059
  %v4112 = vmul.f32 %v3964, %v4060
  %v4113 = vmul.f32 %v3965, %v4061
  %v4114 = vmul.f32 %v3966, %v4062
  %v4115 = vmul.f32 %v3967, %v4063
  %4116 = vrot.lane.b32.xlu0 %v4076, 112
  %v4117 = vpop.permute.xlu0 %4116
  %v4119 = vmul.f32 %v4108, %v4117
  %v4120 = vmul.f32 %v4109, %v4117
  %v4121 = vmul.f32 %v4110, %v4117
  %v4122 = vmul.f32 %v4111, %v4117
  %v4123 = vmul.f32 %v4112, %v4117
  %v4124 = vmul.f32 %v4113, %v4117
  %v4125 = vmul.f32 %v4114, %v4117
  %v4126 = vmul.f32 %v4115, %v4117
  %4127 = vrot.lane.b32.xlu0 %v4090, 112
  %v4128 = vpop.permute.xlu0 %4127
  %v4130 = vadd.f32 %v4119, %v4128
  %v4131 = vadd.f32 %v4120, %v4128
  %v4132 = vadd.f32 %v4121, %v4128
  %v4133 = vadd.f32 %v4122, %v4128
  %v4134 = vadd.f32 %v4123, %v4128
  %v4135 = vadd.f32 %v4124, %v4128
  %v4136 = vadd.f32 %v4125, %v4128
  %v4137 = vadd.f32 %v4126, %v4128
  %4146 = vrot.lane.b32.xlu0 %v4130, 16
  %v4147 = vpop.permute.xlu0 %4146
  %4148 = vrot.lane.b32.xlu0 %v4131, 16
  %v4149 = vpop.permute.xlu0 %4148
  %4150 = vrot.lane.b32.xlu0 %v4132, 16
  %v4151 = vpop.permute.xlu0 %4150
  %4152 = vrot.lane.b32.xlu0 %v4133, 16
  %v4153 = vpop.permute.xlu0 %4152
  %4154 = vrot.lane.b32.xlu0 %v4134, 16
  %v4155 = vpop.permute.xlu0 %4154
  %4156 = vrot.lane.b32.xlu0 %v4135, 16
  %v4157 = vpop.permute.xlu0 %4156
  %4158 = vrot.lane.b32.xlu0 %v4136, 16
  %v4159 = vpop.permute.xlu0 %4158
  %4160 = vrot.lane.b32.xlu0 %v4137, 16
  %v4161 = vpop.permute.xlu0 %4160
  %vm4170 = vcmask 255104
  %4171 = vst.msk [vmem:[%s11] sm:$0x3] %vm4170, %v4147
  %4172 = vst.msk [vmem:[%s11 + $0x2] sm:$0x3] %vm4170, %v4149
  %4173 = vst.msk [vmem:[%s11 + $0x4] sm:$0x3] %vm4170, %v4151
  %4174 = vst.msk [vmem:[%s11 + $0x6] sm:$0x3] %vm4170, %v4153
  %4175 = vst.msk [vmem:[%s11 + $0x8] sm:$0x3] %vm4170, %v4155
  %4176 = vst.msk [vmem:[%s11 + $0xa] sm:$0x3] %vm4170, %v4157
  %4177 = vst.msk [vmem:[%s11 + $0xc] sm:$0x3] %vm4170, %v4159
  %4178 = vst.msk [vmem:[%s11 + $0xe] sm:$0x3] %vm4170, %v4161
  // Predicated region
  $region46: #{_lambda_.1} parent=0 // pred_check
    _
  $region47: #{_lambda_.1} parent=0 // pred_check_branch
    %4180 = sbr.rel (0) target = $region49
  $region48: #{_lambda_.1} parent=0 // pred_region
    _
  $region49: #{_lambda_.1} parent=0 // pred_fallthru
    _
  // Predicated region
  $region50: #{_lambda_.1} parent=0 // pred_check
    _
  $region51: #{_lambda_.1} parent=0 // pred_check_branch
    %4182 = sbr.rel (0) target = $region53
  $region52: #{_lambda_.1} parent=0 // pred_region
    _
  $region53: #{_lambda_.1} parent=0 // pred_fallthru
    _

</llo_original>
